<compile_context>
chip_gen: v6e
topology: v6e:2x2x1
jax: 0.10.0
libtpu: 0.0.40
codegen_flags: <defaults>
</compile_context>

<pallas_src>
import functools

import jax
import jax.numpy as jnp
from jax.experimental import pallas as pl
from jax.experimental.pallas import tpu as pltpu

DIMS = (42, 1024, 512, 256, 128, 1)
K_PAD = 64            # fc1 input dim padded 42 -> 64 (col 42 is the constant-1 bias column)
ONES_COL = DIMS[0]    # 42
BIAS_PAD = 2048
# Lane offsets inside the packed (1, 2048) f32 bias/scale buffer (all 128-aligned).
_B2, _B3, _B4, _B5, _S2 = 0, 512, 768, 896, 1024


def _round_up(n, m):
    return ((n + m - 1) // m) * m


def mlp_kernel(x_ref, w1_ref, w2q_ref, w3_ref, w4_ref, w5_ref, b_ref, o_ref, w2_scr):
    # One-time dequant of the int8 fc2 weight into a VMEM-resident bf16 scratch
    # (per-output-channel scale folded in).  Grid is sequential ("arbitrary"), so step 0
    # runs first and the scratch persists across all later grid steps.
    @pl.when(pl.program_id(0) == 0)
    def _():
        w2_scr[...] = (w2q_ref[...].astype(jnp.float32)
                       * b_ref[:, _S2:_S2 + 512]).astype(jnp.bfloat16)

    # fc1: bias folded into row 42 of w1 (x's constant-1 column); bf16 MXU, f32 accumulate.
    h = jnp.dot(x_ref[...], w1_ref[...], preferred_element_type=jnp.float32)
    h = jnp.maximum(h, 0.0).astype(jnp.bfloat16)                              # (TM, 1024)
    # TODO(synk): nn.Dropout is eval-mode identity here; training-mode masking would use
    # pltpu.prng_seed + pltpu.stateful_bernoulli.

    # fc2 (int8 weight, dequantised once above).
    y = jnp.dot(h, w2_scr[...], preferred_element_type=jnp.float32)
    h = jnp.maximum(y + b_ref[:, _B2:_B2 + 512], 0.0).astype(jnp.bfloat16)    # (TM, 512)

    # fc3 / fc4.
    y = jnp.dot(h, w3_ref[...], preferred_element_type=jnp.float32)
    h = jnp.maximum(y + b_ref[:, _B3:_B3 + 256], 0.0).astype(jnp.bfloat16)    # (TM, 256)
    y = jnp.dot(h, w4_ref[...], preferred_element_type=jnp.float32)
    h = jnp.maximum(y + b_ref[:, _B4:_B4 + 128], 0.0).astype(jnp.bfloat16)    # (TM, 128)

    # fc5 (128 -> 1) lane-dense: (1,128) x (TM,128)^T -> (1, TM) so the write-back is an
    # unmasked lane-major store instead of a masked (TM, 1) partial store.
    out = jnp.einsum('od,md->om', w5_ref[...], h,
                     preferred_element_type=jnp.float32)
    o_ref[...] = (out + b_ref[:, _B5:_B5 + 1]).astype(o_ref.dtype)


def init_params(key):
    """Mimics nn.Linear's U(-1/sqrt(fan_in), 1/sqrt(fan_in)) init.

    Kernel storage layout:
      w1 : (64, 1024) bf16 — rows 0..41 = fc1 weight, row 42 = fc1 bias, rest zero.
      w2q: (1024, 512) int8 — per-output-channel absmax quantisation (scales in b_all).
      w3, w4: bf16 [in, out].   w5: (1, 128) bf16 (fc5 weight as a lane row).
      b_all: (1, 2048) f32 = [b2 | b3 | b4 | b5 | s2 | 0-pad], all offsets 128-aligned.
    """
    ws, bs = [], []
    for i in range(5):
        fan_in, fan_out = DIMS[i], DIMS[i + 1]
        key, kw, kb = jax.random.split(key, 3)
        bound = 1.0 / (fan_in ** 0.5)
        ws.append(jax.random.uniform(kw, (fan_in, fan_out), jnp.float32, -bound, bound))
        bs.append(jax.random.uniform(kb, (fan_out,), jnp.float32, -bound, bound))

    w1 = (jnp.zeros((K_PAD, 1024), jnp.float32)
          .at[:DIMS[0]].set(ws[0])
          .at[ONES_COL].set(bs[0])
          .astype(jnp.bfloat16))

    # int8 per-output-channel quantisation of the 1 MiB fc2 weight.
    s2 = jnp.max(jnp.abs(ws[1]), axis=0, keepdims=True) / 127.0               # (1, 512)
    s2 = jnp.where(s2 > 0, s2, 1.0)
    w2q = jnp.clip(jnp.round(ws[1] / s2), -127, 127).astype(jnp.int8)

    w3 = ws[2].astype(jnp.bfloat16)
    w4 = ws[3].astype(jnp.bfloat16)
    w5 = ws[4].reshape(1, 128).astype(jnp.bfloat16)

    b_all = (jnp.zeros((1, BIAS_PAD), jnp.float32)
             .at[0, _B2:_B2 + 512].set(bs[1])
             .at[0, _B3:_B3 + 256].set(bs[2])
             .at[0, _B4:_B4 + 128].set(bs[3])
             .at[0, _B5].set(bs[4][0])
             .at[0, _S2:_S2 + 512].set(s2[0]))
    return {"w1": w1, "w2q": w2q, "w3": w3, "w4": w4, "w5": w5, "b_all": b_all}


@functools.partial(jax.jit, static_argnames=("block_m",))
def feedforward_nn(x, params, *, block_m=512):
    assert block_m % 128 == 0, "block_m must be a multiple of 128 (lane-dense output tile)"
    batch, feat = x.shape
    assert feat == DIMS[0]

    # Small batches collapse to a single grid step; larger batches tile block_m rows per step.
    tm = min(block_m, _round_up(batch, 128))
    b_pad = _round_up(batch, tm)
    num_tiles = b_pad // tm

    # Pad batch to the tile multiple, pad features 42 -> 64 in bf16, and set the constant-1
    # fc1-bias column (halves the x HBM stream vs f32; padded rows are sliced off below).
    x_p = (jnp.zeros((b_pad, K_PAD), jnp.bfloat16)
           .at[:batch, :feat].set(x.astype(jnp.bfloat16))
           .at[:, ONES_COL].set(1.0))

    w1, w2q, w3, w4, w5, b_all = (params["w1"], params["w2q"], params["w3"],
                                  params["w4"], params["w5"], params["b_all"])

    def resident(a):
        # Full array, same block every step -> DMA'd once, VMEM-resident, single-buffered.
        return pl.BlockSpec(a.shape, lambda i: (0, 0), pipeline_mode=pl.Buffered(1))

    flops = 2 * b_pad * (K_PAD * 1024 + 1024 * 512 + 512 * 256 + 256 * 128 + 128)
    bytes_accessed = (x_p.size * 2 + b_pad * 4 + b_all.size * 4 + int(w2q.size)
                      + sum(int(w.size) * 2 for w in (w1, w3, w4, w5)))

    out = pl.pallas_call(
        mlp_kernel,
        out_shape=jax.ShapeDtypeStruct((1, b_pad), jnp.float32),
        grid_spec=pltpu.PrefetchScalarGridSpec(
            num_scalar_prefetch=0,
            grid=(num_tiles,),
            in_specs=[pl.BlockSpec((tm, K_PAD), lambda i: (i, 0)),
                      resident(w1), resident(w2q), resident(w3),
                      resident(w4), resident(w5), resident(b_all)],
            out_specs=pl.BlockSpec((1, tm), lambda i: (0, i)),
            scratch_shapes=[pltpu.VMEM((DIMS[1], DIMS[2]), jnp.bfloat16)],
        ),
        compiler_params=pltpu.CompilerParams(
            # "arbitrary": megacore 'parallel' would duplicate every resident weight per
            # TensorCore (weight-DMA-bound regime) and the dequant-once scratch needs a
            # sequential grid.
            dimension_semantics=("arbitrary",),
            vmem_limit_bytes=(32 * 1024 * 1024 if tm >= 1024 else None),
        ),
        cost_estimate=pl.CostEstimate(
            flops=flops, transcendentals=0, bytes_accessed=bytes_accessed),
    )(x_p, w1, w2q, w3, w4, w5, b_all)
    return out.reshape(b_pad, 1)[:batch]


def feedforward_nn_ref(x, params):
    """Pure-JAX reference using the same bf16/int8 numerics as the kernel."""
    batch, feat = x.shape
    x_p = (jnp.zeros((batch, K_PAD), jnp.bfloat16)
           .at[:, :feat].set(x.astype(jnp.bfloat16))
           .at[:, ONES_COL].set(1.0))
    b = params["b_all"][0]
    s2 = b[_S2:_S2 + 512]
    w2 = (params["w2q"].astype(jnp.float32) * s2[None, :]).astype(jnp.bfloat16)

    h = jnp.dot(x_p, params["w1"], preferred_element_type=jnp.float32)
    h = jnp.maximum(h, 0.0).astype(jnp.bfloat16)
    for w, lo, hi in ((w2, _B2, _B2 + 512),
                      (params["w3"], _B3, _B3 + 256),
                      (params["w4"], _B4, _B4 + 128)):
        y = jnp.dot(h, w, preferred_element_type=jnp.float32) + b[lo:hi]
        h = jnp.maximum(y, 0.0).astype(jnp.bfloat16)
    out = jnp.einsum('md,od->mo', h, params["w5"],
                     preferred_element_type=jnp.float32)
    return out + b[_B5]


if __name__ == "__main__":
    key = jax.random.PRNGKey(0)
    key, kx = jax.random.split(key)
    params = init_params(key)

    # batch=200 -> single 256-row grid step; batch=1000 @ block_m=256 -> 4-step batch grid.
    for batch, block_m in ((200, 512), (1000, 256)):
        x = jax.random.normal(jax.random.fold_in(kx, batch), (batch, DIMS[0]), jnp.float32)
        out = jax.block_until_ready(feedforward_nn(x, params, block_m=block_m))
        ref = feedforward_nn_ref(x, params)

        assert out.shape == (batch, 1), out.shape
        max_err = float(jnp.max(jnp.abs(out - ref)))
        assert jnp.allclose(out, ref, atol=2e-2, rtol=2e-2), max_err

    print("KERNEL_OK")
</pallas_src>

<mosaic_0001>
module attributes {stable_mosaic.version = 11 : i64} {
  func.func @mlp_kernel(%arg0: i32, %arg1: memref<256x64xbf16, #tpu.memory_space<vmem>>, %arg2: memref<64x1024xbf16, #tpu.memory_space<vmem>>, %arg3: memref<1024x512xi8, #tpu.memory_space<vmem>>, %arg4: memref<512x256xbf16, #tpu.memory_space<vmem>>, %arg5: memref<256x128xbf16, #tpu.memory_space<vmem>>, %arg6: memref<1x128xbf16, #tpu.memory_space<vmem>>, %arg7: memref<1x2048xf32, #tpu.memory_space<vmem>>, %arg8: memref<1x256xf32, #tpu.memory_space<vmem>>, %arg9: memref<1024x512xbf16, #tpu.memory_space<vmem>>) attributes {dimension_semantics = [#tpu.dimension_semantics<arbitrary>], iteration_bounds = array<i64: 1>, scalar_prefetch = 0 : i64, scratch_operands = 1 : i64, tpu.core_type = #tpu.core_type<tc>, window_params = [{transform_indices = @transform_0, window_bounds = array<i64: 256, 64>}, {pipeline_mode = #tpu.pipeline_mode<synchronous>, transform_indices = @transform_1, window_bounds = array<i64: 64, 1024>}, {pipeline_mode = #tpu.pipeline_mode<synchronous>, transform_indices = @transform_2, window_bounds = array<i64: 1024, 512>}, {pipeline_mode = #tpu.pipeline_mode<synchronous>, transform_indices = @transform_3, window_bounds = array<i64: 512, 256>}, {pipeline_mode = #tpu.pipeline_mode<synchronous>, transform_indices = @transform_4, window_bounds = array<i64: 256, 128>}, {pipeline_mode = #tpu.pipeline_mode<synchronous>, transform_indices = @transform_5, window_bounds = array<i64: 1, 128>}, {pipeline_mode = #tpu.pipeline_mode<synchronous>, transform_indices = @transform_6, window_bounds = array<i64: 1, 2048>}, {transform_indices = @transform_7, window_bounds = array<i64: 1, 256>}]} {
    %c0_i32 = arith.constant 0 : i32
    %0 = arith.cmpi eq, %arg0, %c0_i32 : i32
    %1 = arith.extui %0 : i1 to i32
    %c0_i32_0 = arith.constant 0 : i32
    %2 = arith.cmpi ne, %1, %c0_i32_0 : i32
    scf.if %2 {
      %c0_27 = arith.constant 0 : index
      %c0_28 = arith.constant 0 : index
      %39 = vector.load %arg3[%c0_27, %c0_28] : memref<1024x512xi8, #tpu.memory_space<vmem>>, vector<1024x512xi8>
      %40 = arith.sitofp %39 : vector<1024x512xi8> to vector<1024x512xf32>
      %c0_29 = arith.constant 0 : index
      %c1024 = arith.constant 1024 : index
      %41 = vector.load %arg7[%c0_29, %c1024] : memref<1x2048xf32, #tpu.memory_space<vmem>>, vector<1x512xf32>
      %42 = vector.broadcast %41 : vector<1x512xf32> to vector<1024x512xf32>
      %43 = arith.mulf %40, %42 : vector<1024x512xf32>
      %44 = arith.truncf %43 : vector<1024x512xf32> to vector<1024x512xbf16>
      %c0_30 = arith.constant 0 : index
      %c0_31 = arith.constant 0 : index
      %45 = vector.load %arg9[%c0_30, %c0_31] : memref<1024x512xbf16, #tpu.memory_space<vmem>>, vector<1024x512xbf16>
      tpu.vector_store %arg9[%c0_30, %c0_31], %44 {strides = array<i32>} : memref<1024x512xbf16, #tpu.memory_space<vmem>>, vector<1024x512xbf16>,
    } else {
    }
    %c0 = arith.constant 0 : index
    %c0_1 = arith.constant 0 : index
    %3 = vector.load %arg1[%c0, %c0_1] : memref<256x64xbf16, #tpu.memory_space<vmem>>, vector<256x64xbf16>
    %c0_2 = arith.constant 0 : index
    %c0_3 = arith.constant 0 : index
    %4 = vector.load %arg2[%c0_2, %c0_3] : memref<64x1024xbf16, #tpu.memory_space<vmem>>, vector<64x1024xbf16>
    %cst = arith.constant dense<0.000000e+00> : vector<256x1024xf32>
    %5 = tpu.matmul %3, %4, %cst {dimension_numbers = #tpu.dot_dimension_numbers<[1], [0], [0], [1], [0, 0, 1, 1], [], []>} : vector<256x64xbf16>, vector<64x1024xbf16>, vector<256x1024xf32> -> vector<256x1024xf32>
    %cst_4 = arith.constant 0.000000e+00 : f32
    %6 = vector.broadcast %cst_4 : f32 to vector<256x1024xf32>
    %7 = arith.maximumf %5, %6 : vector<256x1024xf32>
    %8 = arith.truncf %7 : vector<256x1024xf32> to vector<256x1024xbf16>
    %c0_5 = arith.constant 0 : index
    %c0_6 = arith.constant 0 : index
    %9 = vector.load %arg9[%c0_5, %c0_6] : memref<1024x512xbf16, #tpu.memory_space<vmem>>, vector<1024x512xbf16>
    %cst_7 = arith.constant dense<0.000000e+00> : vector<256x512xf32>
    %10 = tpu.matmul %8, %9, %cst_7 {dimension_numbers = #tpu.dot_dimension_numbers<[1], [0], [0], [1], [0, 0, 1, 1], [], []>} : vector<256x1024xbf16>, vector<1024x512xbf16>, vector<256x512xf32> -> vector<256x512xf32>
    %c0_8 = arith.constant 0 : index
    %c0_9 = arith.constant 0 : index
    %11 = vector.load %arg7[%c0_8, %c0_9] : memref<1x2048xf32, #tpu.memory_space<vmem>>, vector<1x512xf32>
    %12 = vector.broadcast %11 : vector<1x512xf32> to vector<256x512xf32>
    %13 = arith.addf %10, %12 : vector<256x512xf32>
    %cst_10 = arith.constant 0.000000e+00 : f32
    %14 = vector.broadcast %cst_10 : f32 to vector<256x512xf32>
    %15 = arith.maximumf %13, %14 : vector<256x512xf32>
    %16 = arith.truncf %15 : vector<256x512xf32> to vector<256x512xbf16>
    %c0_11 = arith.constant 0 : index
    %c0_12 = arith.constant 0 : index
    %17 = vector.load %arg4[%c0_11, %c0_12] : memref<512x256xbf16, #tpu.memory_space<vmem>>, vector<512x256xbf16>
    %cst_13 = arith.constant dense<0.000000e+00> : vector<256x256xf32>
    %18 = tpu.matmul %16, %17, %cst_13 {dimension_numbers = #tpu.dot_dimension_numbers<[1], [0], [0], [1], [0, 0, 1, 1], [], []>} : vector<256x512xbf16>, vector<512x256xbf16>, vector<256x256xf32> -> vector<256x256xf32>
    %c0_14 = arith.constant 0 : index
    %c512 = arith.constant 512 : index
    %19 = vector.load %arg7[%c0_14, %c512] : memref<1x2048xf32, #tpu.memory_space<vmem>>, vector<1x256xf32>
    %20 = vector.broadcast %19 : vector<1x256xf32> to vector<256x256xf32>
    %21 = arith.addf %18, %20 : vector<256x256xf32>
    %cst_15 = arith.constant 0.000000e+00 : f32
    %22 = vector.broadcast %cst_15 : f32 to vector<256x256xf32>
    %23 = arith.maximumf %21, %22 : vector<256x256xf32>
    %24 = arith.truncf %23 : vector<256x256xf32> to vector<256x256xbf16>
    %c0_16 = arith.constant 0 : index
    %c0_17 = arith.constant 0 : index
    %25 = vector.load %arg5[%c0_16, %c0_17] : memref<256x128xbf16, #tpu.memory_space<vmem>>, vector<256x128xbf16>
    %cst_18 = arith.constant dense<0.000000e+00> : vector<256x128xf32>
    %26 = tpu.matmul %24, %25, %cst_18 {dimension_numbers = #tpu.dot_dimension_numbers<[1], [0], [0], [1], [0, 0, 1, 1], [], []>} : vector<256x256xbf16>, vector<256x128xbf16>, vector<256x128xf32> -> vector<256x128xf32>
    %c0_19 = arith.constant 0 : index
    %c768 = arith.constant 768 : index
    %27 = vector.load %arg7[%c0_19, %c768] : memref<1x2048xf32, #tpu.memory_space<vmem>>, vector<1x128xf32>
    %28 = vector.broadcast %27 : vector<1x128xf32> to vector<256x128xf32>
    %29 = arith.addf %26, %28 : vector<256x128xf32>
    %cst_20 = arith.constant 0.000000e+00 : f32
    %30 = vector.broadcast %cst_20 : f32 to vector<256x128xf32>
    %31 = arith.maximumf %29, %30 : vector<256x128xf32>
    %32 = arith.truncf %31 : vector<256x128xf32> to vector<256x128xbf16>
    %c0_21 = arith.constant 0 : index
    %c0_22 = arith.constant 0 : index
    %33 = vector.load %arg6[%c0_21, %c0_22] : memref<1x128xbf16, #tpu.memory_space<vmem>>, vector<1x128xbf16>
    "tpu.trace_start"() <{level = 10 : i32, message = "od,md->om"}> : () -> ()
    %cst_23 = arith.constant dense<0.000000e+00> : vector<1x256xf32>
    %34 = tpu.matmul %33, %32, %cst_23 {dimension_numbers = #tpu.dot_dimension_numbers<[1], [1], [0], [0], [0, 0, 1, 0], [], []>} : vector<1x128xbf16>, vector<256x128xbf16>, vector<1x256xf32> -> vector<1x256xf32>
    "tpu.trace_stop"() : () -> ()
    %c0_24 = arith.constant 0 : index
    %c896 = arith.constant 896 : index
    %35 = vector.load %arg7[%c0_24, %c896] : memref<1x2048xf32, #tpu.memory_space<vmem>>, vector<1x1xf32>
    %36 = vector.broadcast %35 : vector<1x1xf32> to vector<1x256xf32>
    %37 = arith.addf %34, %36 : vector<1x256xf32>
    %c0_25 = arith.constant 0 : index
    %c0_26 = arith.constant 0 : index
    %38 = vector.load %arg8[%c0_25, %c0_26] : memref<1x256xf32, #tpu.memory_space<vmem>>, vector<1x256xf32>
    tpu.vector_store %arg8[%c0_25, %c0_26], %37 {strides = array<i32>} : memref<1x256xf32, #tpu.memory_space<vmem>>, vector<1x256xf32>,
    return
  }
  func.func @transform_0(%arg0: i32) -> (i32, i32) {
    %c0_i32 = arith.constant 0 : i32
    %c0_i32_0 = arith.constant 0 : i32
    return %arg0, %c0_i32 : i32, i32
  }
  func.func @transform_1(%arg0: i32) -> (i32, i32) {
    %c0_i32 = arith.constant 0 : i32
    %c0_i32_0 = arith.constant 0 : i32
    %c0_i32_1 = arith.constant 0 : i32
    return %c0_i32, %c0_i32_0 : i32, i32
  }
  func.func @transform_2(%arg0: i32) -> (i32, i32) {
    %c0_i32 = arith.constant 0 : i32
    %c0_i32_0 = arith.constant 0 : i32
    %c0_i32_1 = arith.constant 0 : i32
    return %c0_i32, %c0_i32_0 : i32, i32
  }
  func.func @transform_3(%arg0: i32) -> (i32, i32) {
    %c0_i32 = arith.constant 0 : i32
    %c0_i32_0 = arith.constant 0 : i32
    %c0_i32_1 = arith.constant 0 : i32
    return %c0_i32, %c0_i32_0 : i32, i32
  }
  func.func @transform_4(%arg0: i32) -> (i32, i32) {
    %c0_i32 = arith.constant 0 : i32
    %c0_i32_0 = arith.constant 0 : i32
    %c0_i32_1 = arith.constant 0 : i32
    return %c0_i32, %c0_i32_0 : i32, i32
  }
  func.func @transform_5(%arg0: i32) -> (i32, i32) {
    %c0_i32 = arith.constant 0 : i32
    %c0_i32_0 = arith.constant 0 : i32
    %c0_i32_1 = arith.constant 0 : i32
    return %c0_i32, %c0_i32_0 : i32, i32
  }
  func.func @transform_6(%arg0: i32) -> (i32, i32) {
    %c0_i32 = arith.constant 0 : i32
    %c0_i32_0 = arith.constant 0 : i32
    %c0_i32_1 = arith.constant 0 : i32
    return %c0_i32, %c0_i32_0 : i32, i32
  }
  func.func @transform_7(%arg0: i32) -> (i32, i32) {
    %c0_i32 = arith.constant 0 : i32
    %c0_i32_0 = arith.constant 0 : i32
    return %c0_i32, %arg0 : i32, i32
  }
}

</mosaic_0001>

<llo_original>
// kernel: feedforward_nn.1
$region0: #{feedforward_nn.1}
  #allocation0 [shape = 'u32[]', space=smem, size = 0x4, offset = 0x4, fixed_abs, tag = 'smem constant byte address 0x4 - core index']
  #allocation1 [shape = 'u32[144,128]{1,0:T(1,128)}', space=vmem, size = 0x12000, scoped, tag = 'internal scratch']
  #allocation2 [shape = 'bf16[1024,512]{1,0:T(8,128)(2,1)}', space=vmem, size = 0x100000, scoped, tag = 'scratch operand']
  %s0 = inlined_call_operand.vmem [shape: bf16[256,64], index: 0, kind: input, shape index: {}]
  %s1 = inlined_call_operand.vmem [shape: bf16[64,1024], index: 1, kind: input, shape index: {}]
  %s2 = inlined_call_operand.hbm [shape: s8[1024,512], index: 2, kind: input, shape index: {}]
  %s3 = inlined_call_operand.vmem [shape: bf16[512,256], index: 3, kind: input, shape index: {}]
  %s4 = inlined_call_operand.vmem [shape: bf16[256,128], index: 4, kind: input, shape index: {}]
  %s5 = inlined_call_operand.vmem [shape: bf16[1,128], index: 5, kind: input, shape index: {}]
  %s6 = inlined_call_operand.vmem [shape: f32[1,2048], index: 6, kind: input, shape index: {}]
  %s7 = inlined_call_operand.vmem [shape: f32[1,256], index: 7, kind: output, shape index: {}]
  %s8 = sld [smem:[#allocation0]]
  $region46: #{feedforward_nn.1} parent=0
    _
  %s10 = ssub.s32 1, %s8
  %s11 = scalar_select 0, %s10, %s8
  $region1: #{feedforward_nn.1} parent=0
    #allocation3 [shape = 'u8[524288]{0}', space=vmem, size = 0x80000, scoped, tag = 'input window, operand 2, single buffered']
    #allocation4 [shape = 's32[1]{0}', space=sflag, size = 0x4, scoped, tag = 'scoped memory for feedforward_nn.1']
    %12 = vsyncpa [#allocation4], 0
    // Predicated region
    $region2: #{feedforward_nn.1} parent=1 // pred_check
      _
    $region3: #{feedforward_nn.1} parent=1 // pred_check_branch
      %14 = sbr.rel (0) target = $region5
    $region4: #{feedforward_nn.1} parent=1 // pred_region
      _
    $region5: #{feedforward_nn.1} parent=1 // pred_fallthru
      _
    // Predicated region
    $region6: #{feedforward_nn.1} parent=1 // pred_check
      _
    $region7: #{feedforward_nn.1} parent=1 // pred_check_branch
      %16 = sbr.rel (0) target = $region9
    $region8: #{feedforward_nn.1} parent=1 // pred_region
      _
    $region9: #{feedforward_nn.1} parent=1 // pred_fallthru
      _
    // Predicated region
    $region10: #{feedforward_nn.1} parent=1 // pred_check
      _
    $region11: #{feedforward_nn.1} parent=1 // pred_check_branch
      %18 = sbr.rel (0) target = $region13
    $region12: #{feedforward_nn.1} parent=1 // pred_region
      %s20 = ssub.s32 16384, 16384
      %21 = vsyncadd [#allocation4], %s20
      %s22 = sshll.u32 [#allocation3], 4
      %s23 = int_to_ptr.vmem [resolvable:$true] %s22
      %28 = dma.hbm_to_vmem [thread:$0]  %s2, 16384, %s23, [#allocation4], 512, 512, 32
    $region13: #{feedforward_nn.1} parent=1 // pred_fallthru
      _
    // Predicated region
    $region14: #{feedforward_nn.1} parent=1 // pred_check
      _
    $region15: #{feedforward_nn.1} parent=1 // pred_check_branch
      %30 = sbr.rel (0) target = $region17
    $region16: #{feedforward_nn.1} parent=1 // pred_region
      _
    $region17: #{feedforward_nn.1} parent=1 // pred_fallthru
      _
    // Predicated region
    $region18: #{feedforward_nn.1} parent=1 // pred_check
      _
    $region19: #{feedforward_nn.1} parent=1 // pred_check_branch
      %32 = sbr.rel (0) target = $region21
    $region20: #{feedforward_nn.1} parent=1 // pred_region
      _
    $region21: #{feedforward_nn.1} parent=1 // pred_fallthru
      _
    // Predicated region
    $region22: #{feedforward_nn.1} parent=1 // pred_check
      _
    $region23: #{feedforward_nn.1} parent=1 // pred_check_branch
      %34 = sbr.rel (0) target = $region25
    $region24: #{feedforward_nn.1} parent=1 // pred_region
      _
    $region25: #{feedforward_nn.1} parent=1 // pred_fallthru
      _
    // Predicated region
    $region26: #{feedforward_nn.1} parent=1 // pred_check
      _
    $region27: #{feedforward_nn.1} parent=1 // pred_check_branch
      %36 = sbr.rel (0) target = $region29
    $region28: #{feedforward_nn.1} parent=1 // pred_region
      _
    $region29: #{feedforward_nn.1} parent=1 // pred_fallthru
      _
    // Predicated region
    $region30: #{feedforward_nn.1} parent=1 // pred_check
      _
    $region31: #{feedforward_nn.1} parent=1 // pred_check_branch
      %38 = sbr.rel (0) target = $region33
    $region32: #{feedforward_nn.1} parent=1 // pred_region
      %39 = dma.done [#allocation4], 16384
    $region33: #{feedforward_nn.1} parent=1 // pred_fallthru
      _
    %p41 = scmp.eq.s32.totalorder 0, 0
    // Predicated region
    $region34: #{feedforward_nn.1} parent=1 // pred_check
      %p42 = pneg %p41
    $region35: #{feedforward_nn.1} parent=1 // pred_check_branch
      %44 = sbr.rel (%p42) target = $region37
    $region36: #{feedforward_nn.1} parent=1 // pred_region
      %v45 = vld [vmem:[#allocation3] sm:$0xff]
      %v46 = vld [vmem:[#allocation3 + $0x8] sm:$0xff]
      %v47 = vld [vmem:[#allocation3 + $0x10] sm:$0xff]
      %v48 = vld [vmem:[#allocation3 + $0x18] sm:$0xff]
      %v49 = vld [vmem:[#allocation3 + $0x20] sm:$0xff]
      %v50 = vld [vmem:[#allocation3 + $0x28] sm:$0xff]
      %v51 = vld [vmem:[#allocation3 + $0x30] sm:$0xff]
      %v52 = vld [vmem:[#allocation3 + $0x38] sm:$0xff]
      %v53 = vld [vmem:[#allocation3 + $0x40] sm:$0xff]
      %v54 = vld [vmem:[#allocation3 + $0x48] sm:$0xff]
      %v55 = vld [vmem:[#allocation3 + $0x50] sm:$0xff]
      %v56 = vld [vmem:[#allocation3 + $0x58] sm:$0xff]
      %v57 = vld [vmem:[#allocation3 + $0x60] sm:$0xff]
      %v58 = vld [vmem:[#allocation3 + $0x68] sm:$0xff]
      %v59 = vld [vmem:[#allocation3 + $0x70] sm:$0xff]
      %v60 = vld [vmem:[#allocation3 + $0x78] sm:$0xff]
      %v61 = vld [vmem:[#allocation3 + $0x80] sm:$0xff]
      %v62 = vld [vmem:[#allocation3 + $0x88] sm:$0xff]
      %v63 = vld [vmem:[#allocation3 + $0x90] sm:$0xff]
      %v64 = vld [vmem:[#allocation3 + $0x98] sm:$0xff]
      %v65 = vld [vmem:[#allocation3 + $0xa0] sm:$0xff]
      %v66 = vld [vmem:[#allocation3 + $0xa8] sm:$0xff]
      %v67 = vld [vmem:[#allocation3 + $0xb0] sm:$0xff]
      %v68 = vld [vmem:[#allocation3 + $0xb8] sm:$0xff]
      %v69 = vld [vmem:[#allocation3 + $0xc0] sm:$0xff]
      %v70 = vld [vmem:[#allocation3 + $0xc8] sm:$0xff]
      %v71 = vld [vmem:[#allocation3 + $0xd0] sm:$0xff]
      %v72 = vld [vmem:[#allocation3 + $0xd8] sm:$0xff]
      %v73 = vld [vmem:[#allocation3 + $0xe0] sm:$0xff]
      %v74 = vld [vmem:[#allocation3 + $0xe8] sm:$0xff]
      %v75 = vld [vmem:[#allocation3 + $0xf0] sm:$0xff]
      %v76 = vld [vmem:[#allocation3 + $0xf8] sm:$0xff]
      %v77 = vld [vmem:[#allocation3 + $0x100] sm:$0xff]
      %v78 = vld [vmem:[#allocation3 + $0x108] sm:$0xff]
      %v79 = vld [vmem:[#allocation3 + $0x110] sm:$0xff]
      %v80 = vld [vmem:[#allocation3 + $0x118] sm:$0xff]
      %v81 = vld [vmem:[#allocation3 + $0x120] sm:$0xff]
      %v82 = vld [vmem:[#allocation3 + $0x128] sm:$0xff]
      %v83 = vld [vmem:[#allocation3 + $0x130] sm:$0xff]
      %v84 = vld [vmem:[#allocation3 + $0x138] sm:$0xff]
      %v85 = vld [vmem:[#allocation3 + $0x140] sm:$0xff]
      %v86 = vld [vmem:[#allocation3 + $0x148] sm:$0xff]
      %v87 = vld [vmem:[#allocation3 + $0x150] sm:$0xff]
      %v88 = vld [vmem:[#allocation3 + $0x158] sm:$0xff]
      %v89 = vld [vmem:[#allocation3 + $0x160] sm:$0xff]
      %v90 = vld [vmem:[#allocation3 + $0x168] sm:$0xff]
      %v91 = vld [vmem:[#allocation3 + $0x170] sm:$0xff]
      %v92 = vld [vmem:[#allocation3 + $0x178] sm:$0xff]
      %v93 = vld [vmem:[#allocation3 + $0x180] sm:$0xff]
      %v94 = vld [vmem:[#allocation3 + $0x188] sm:$0xff]
      %v95 = vld [vmem:[#allocation3 + $0x190] sm:$0xff]
      %v96 = vld [vmem:[#allocation3 + $0x198] sm:$0xff]
      %v97 = vld [vmem:[#allocation3 + $0x1a0] sm:$0xff]
      %v98 = vld [vmem:[#allocation3 + $0x1a8] sm:$0xff]
      %v99 = vld [vmem:[#allocation3 + $0x1b0] sm:$0xff]
      %v100 = vld [vmem:[#allocation3 + $0x1b8] sm:$0xff]
      %v101 = vld [vmem:[#allocation3 + $0x1c0] sm:$0xff]
      %v102 = vld [vmem:[#allocation3 + $0x1c8] sm:$0xff]
      %v103 = vld [vmem:[#allocation3 + $0x1d0] sm:$0xff]
      %v104 = vld [vmem:[#allocation3 + $0x1d8] sm:$0xff]
      %v105 = vld [vmem:[#allocation3 + $0x1e0] sm:$0xff]
      %v106 = vld [vmem:[#allocation3 + $0x1e8] sm:$0xff]
      %v107 = vld [vmem:[#allocation3 + $0x1f0] sm:$0xff]
      %v108 = vld [vmem:[#allocation3 + $0x1f8] sm:$0xff]
      %v109 = vld [vmem:[#allocation3 + $0x200] sm:$0xff]
      %v110 = vld [vmem:[#allocation3 + $0x208] sm:$0xff]
      %v111 = vld [vmem:[#allocation3 + $0x210] sm:$0xff]
      %v112 = vld [vmem:[#allocation3 + $0x218] sm:$0xff]
      %v113 = vld [vmem:[#allocation3 + $0x220] sm:$0xff]
      %v114 = vld [vmem:[#allocation3 + $0x228] sm:$0xff]
      %v115 = vld [vmem:[#allocation3 + $0x230] sm:$0xff]
      %v116 = vld [vmem:[#allocation3 + $0x238] sm:$0xff]
      %v117 = vld [vmem:[#allocation3 + $0x240] sm:$0xff]
      %v118 = vld [vmem:[#allocation3 + $0x248] sm:$0xff]
      %v119 = vld [vmem:[#allocation3 + $0x250] sm:$0xff]
      %v120 = vld [vmem:[#allocation3 + $0x258] sm:$0xff]
      %v121 = vld [vmem:[#allocation3 + $0x260] sm:$0xff]
      %v122 = vld [vmem:[#allocation3 + $0x268] sm:$0xff]
      %v123 = vld [vmem:[#allocation3 + $0x270] sm:$0xff]
      %v124 = vld [vmem:[#allocation3 + $0x278] sm:$0xff]
      %v125 = vld [vmem:[#allocation3 + $0x280] sm:$0xff]
      %v126 = vld [vmem:[#allocation3 + $0x288] sm:$0xff]
      %v127 = vld [vmem:[#allocation3 + $0x290] sm:$0xff]
      %v128 = vld [vmem:[#allocation3 + $0x298] sm:$0xff]
      %v129 = vld [vmem:[#allocation3 + $0x2a0] sm:$0xff]
      %v130 = vld [vmem:[#allocation3 + $0x2a8] sm:$0xff]
      %v131 = vld [vmem:[#allocation3 + $0x2b0] sm:$0xff]
      %v132 = vld [vmem:[#allocation3 + $0x2b8] sm:$0xff]
      %v133 = vld [vmem:[#allocation3 + $0x2c0] sm:$0xff]
      %v134 = vld [vmem:[#allocation3 + $0x2c8] sm:$0xff]
      %v135 = vld [vmem:[#allocation3 + $0x2d0] sm:$0xff]
      %v136 = vld [vmem:[#allocation3 + $0x2d8] sm:$0xff]
      %v137 = vld [vmem:[#allocation3 + $0x2e0] sm:$0xff]
      %v138 = vld [vmem:[#allocation3 + $0x2e8] sm:$0xff]
      %v139 = vld [vmem:[#allocation3 + $0x2f0] sm:$0xff]
      %v140 = vld [vmem:[#allocation3 + $0x2f8] sm:$0xff]
      %v141 = vld [vmem:[#allocation3 + $0x300] sm:$0xff]
      %v142 = vld [vmem:[#allocation3 + $0x308] sm:$0xff]
      %v143 = vld [vmem:[#allocation3 + $0x310] sm:$0xff]
      %v144 = vld [vmem:[#allocation3 + $0x318] sm:$0xff]
      %v145 = vld [vmem:[#allocation3 + $0x320] sm:$0xff]
      %v146 = vld [vmem:[#allocation3 + $0x328] sm:$0xff]
      %v147 = vld [vmem:[#allocation3 + $0x330] sm:$0xff]
      %v148 = vld [vmem:[#allocation3 + $0x338] sm:$0xff]
      %v149 = vld [vmem:[#allocation3 + $0x340] sm:$0xff]
      %v150 = vld [vmem:[#allocation3 + $0x348] sm:$0xff]
      %v151 = vld [vmem:[#allocation3 + $0x350] sm:$0xff]
      %v152 = vld [vmem:[#allocation3 + $0x358] sm:$0xff]
      %v153 = vld [vmem:[#allocation3 + $0x360] sm:$0xff]
      %v154 = vld [vmem:[#allocation3 + $0x368] sm:$0xff]
      %v155 = vld [vmem:[#allocation3 + $0x370] sm:$0xff]
      %v156 = vld [vmem:[#allocation3 + $0x378] sm:$0xff]
      %v157 = vld [vmem:[#allocation3 + $0x380] sm:$0xff]
      %v158 = vld [vmem:[#allocation3 + $0x388] sm:$0xff]
      %v159 = vld [vmem:[#allocation3 + $0x390] sm:$0xff]
      %v160 = vld [vmem:[#allocation3 + $0x398] sm:$0xff]
      %v161 = vld [vmem:[#allocation3 + $0x3a0] sm:$0xff]
      %v162 = vld [vmem:[#allocation3 + $0x3a8] sm:$0xff]
      %v163 = vld [vmem:[#allocation3 + $0x3b0] sm:$0xff]
      %v164 = vld [vmem:[#allocation3 + $0x3b8] sm:$0xff]
      %v165 = vld [vmem:[#allocation3 + $0x3c0] sm:$0xff]
      %v166 = vld [vmem:[#allocation3 + $0x3c8] sm:$0xff]
      %v167 = vld [vmem:[#allocation3 + $0x3d0] sm:$0xff]
      %v168 = vld [vmem:[#allocation3 + $0x3d8] sm:$0xff]
      %v169 = vld [vmem:[#allocation3 + $0x3e0] sm:$0xff]
      %v170 = vld [vmem:[#allocation3 + $0x3e8] sm:$0xff]
      %v171 = vld [vmem:[#allocation3 + $0x3f0] sm:$0xff]
      %v172 = vld [vmem:[#allocation3 + $0x3f8] sm:$0xff]
      %v173 = vunpack.c.0.s8 %v45
      %v174 = vunpack.c.0.s8 %v46
      %v175 = vunpack.c.0.s8 %v47
      %v176 = vunpack.c.0.s8 %v48
      %v177 = vunpack.c.1.s8 %v45
      %v178 = vunpack.c.1.s8 %v46
      %v179 = vunpack.c.1.s8 %v47
      %v180 = vunpack.c.1.s8 %v48
      %v181 = vunpack.c.2.s8 %v45
      %v182 = vunpack.c.2.s8 %v46
      %v183 = vunpack.c.2.s8 %v47
      %v184 = vunpack.c.2.s8 %v48
      %v185 = vunpack.c.3.s8 %v45
      %v186 = vunpack.c.3.s8 %v46
      %v187 = vunpack.c.3.s8 %v47
      %v188 = vunpack.c.3.s8 %v48
      %v189 = vunpack.c.0.s8 %v49
      %v190 = vunpack.c.0.s8 %v50
      %v191 = vunpack.c.0.s8 %v51
      %v192 = vunpack.c.0.s8 %v52
      %v193 = vunpack.c.1.s8 %v49
      %v194 = vunpack.c.1.s8 %v50
      %v195 = vunpack.c.1.s8 %v51
      %v196 = vunpack.c.1.s8 %v52
      %v197 = vunpack.c.2.s8 %v49
      %v198 = vunpack.c.2.s8 %v50
      %v199 = vunpack.c.2.s8 %v51
      %v200 = vunpack.c.2.s8 %v52
      %v201 = vunpack.c.3.s8 %v49
      %v202 = vunpack.c.3.s8 %v50
      %v203 = vunpack.c.3.s8 %v51
      %v204 = vunpack.c.3.s8 %v52
      %v205 = vunpack.c.0.s8 %v53
      %v206 = vunpack.c.0.s8 %v54
      %v207 = vunpack.c.0.s8 %v55
      %v208 = vunpack.c.0.s8 %v56
      %v209 = vunpack.c.1.s8 %v53
      %v210 = vunpack.c.1.s8 %v54
      %v211 = vunpack.c.1.s8 %v55
      %v212 = vunpack.c.1.s8 %v56
      %v213 = vunpack.c.2.s8 %v53
      %v214 = vunpack.c.2.s8 %v54
      %v215 = vunpack.c.2.s8 %v55
      %v216 = vunpack.c.2.s8 %v56
      %v217 = vunpack.c.3.s8 %v53
      %v218 = vunpack.c.3.s8 %v54
      %v219 = vunpack.c.3.s8 %v55
      %v220 = vunpack.c.3.s8 %v56
      %v221 = vunpack.c.0.s8 %v57
      %v222 = vunpack.c.0.s8 %v58
      %v223 = vunpack.c.0.s8 %v59
      %v224 = vunpack.c.0.s8 %v60
      %v225 = vunpack.c.1.s8 %v57
      %v226 = vunpack.c.1.s8 %v58
      %v227 = vunpack.c.1.s8 %v59
      %v228 = vunpack.c.1.s8 %v60
      %v229 = vunpack.c.2.s8 %v57
      %v230 = vunpack.c.2.s8 %v58
      %v231 = vunpack.c.2.s8 %v59
      %v232 = vunpack.c.2.s8 %v60
      %v233 = vunpack.c.3.s8 %v57
      %v234 = vunpack.c.3.s8 %v58
      %v235 = vunpack.c.3.s8 %v59
      %v236 = vunpack.c.3.s8 %v60
      %v237 = vunpack.c.0.s8 %v61
      %v238 = vunpack.c.0.s8 %v62
      %v239 = vunpack.c.0.s8 %v63
      %v240 = vunpack.c.0.s8 %v64
      %v241 = vunpack.c.1.s8 %v61
      %v242 = vunpack.c.1.s8 %v62
      %v243 = vunpack.c.1.s8 %v63
      %v244 = vunpack.c.1.s8 %v64
      %v245 = vunpack.c.2.s8 %v61
      %v246 = vunpack.c.2.s8 %v62
      %v247 = vunpack.c.2.s8 %v63
      %v248 = vunpack.c.2.s8 %v64
      %v249 = vunpack.c.3.s8 %v61
      %v250 = vunpack.c.3.s8 %v62
      %v251 = vunpack.c.3.s8 %v63
      %v252 = vunpack.c.3.s8 %v64
      %v253 = vunpack.c.0.s8 %v65
      %v254 = vunpack.c.0.s8 %v66
      %v255 = vunpack.c.0.s8 %v67
      %v256 = vunpack.c.0.s8 %v68
      %v257 = vunpack.c.1.s8 %v65
      %v258 = vunpack.c.1.s8 %v66
      %v259 = vunpack.c.1.s8 %v67
      %v260 = vunpack.c.1.s8 %v68
      %v261 = vunpack.c.2.s8 %v65
      %v262 = vunpack.c.2.s8 %v66
      %v263 = vunpack.c.2.s8 %v67
      %v264 = vunpack.c.2.s8 %v68
      %v265 = vunpack.c.3.s8 %v65
      %v266 = vunpack.c.3.s8 %v66
      %v267 = vunpack.c.3.s8 %v67
      %v268 = vunpack.c.3.s8 %v68
      %v269 = vunpack.c.0.s8 %v69
      %v270 = vunpack.c.0.s8 %v70
      %v271 = vunpack.c.0.s8 %v71
      %v272 = vunpack.c.0.s8 %v72
      %v273 = vunpack.c.1.s8 %v69
      %v274 = vunpack.c.1.s8 %v70
      %v275 = vunpack.c.1.s8 %v71
      %v276 = vunpack.c.1.s8 %v72
      %v277 = vunpack.c.2.s8 %v69
      %v278 = vunpack.c.2.s8 %v70
      %v279 = vunpack.c.2.s8 %v71
      %v280 = vunpack.c.2.s8 %v72
      %v281 = vunpack.c.3.s8 %v69
      %v282 = vunpack.c.3.s8 %v70
      %v283 = vunpack.c.3.s8 %v71
      %v284 = vunpack.c.3.s8 %v72
      %v285 = vunpack.c.0.s8 %v73
      %v286 = vunpack.c.0.s8 %v74
      %v287 = vunpack.c.0.s8 %v75
      %v288 = vunpack.c.0.s8 %v76
      %v289 = vunpack.c.1.s8 %v73
      %v290 = vunpack.c.1.s8 %v74
      %v291 = vunpack.c.1.s8 %v75
      %v292 = vunpack.c.1.s8 %v76
      %v293 = vunpack.c.2.s8 %v73
      %v294 = vunpack.c.2.s8 %v74
      %v295 = vunpack.c.2.s8 %v75
      %v296 = vunpack.c.2.s8 %v76
      %v297 = vunpack.c.3.s8 %v73
      %v298 = vunpack.c.3.s8 %v74
      %v299 = vunpack.c.3.s8 %v75
      %v300 = vunpack.c.3.s8 %v76
      %v301 = vunpack.c.0.s8 %v77
      %v302 = vunpack.c.0.s8 %v78
      %v303 = vunpack.c.0.s8 %v79
      %v304 = vunpack.c.0.s8 %v80
      %v305 = vunpack.c.1.s8 %v77
      %v306 = vunpack.c.1.s8 %v78
      %v307 = vunpack.c.1.s8 %v79
      %v308 = vunpack.c.1.s8 %v80
      %v309 = vunpack.c.2.s8 %v77
      %v310 = vunpack.c.2.s8 %v78
      %v311 = vunpack.c.2.s8 %v79
      %v312 = vunpack.c.2.s8 %v80
      %v313 = vunpack.c.3.s8 %v77
      %v314 = vunpack.c.3.s8 %v78
      %v315 = vunpack.c.3.s8 %v79
      %v316 = vunpack.c.3.s8 %v80
      %v317 = vunpack.c.0.s8 %v81
      %v318 = vunpack.c.0.s8 %v82
      %v319 = vunpack.c.0.s8 %v83
      %v320 = vunpack.c.0.s8 %v84
      %v321 = vunpack.c.1.s8 %v81
      %v322 = vunpack.c.1.s8 %v82
      %v323 = vunpack.c.1.s8 %v83
      %v324 = vunpack.c.1.s8 %v84
      %v325 = vunpack.c.2.s8 %v81
      %v326 = vunpack.c.2.s8 %v82
      %v327 = vunpack.c.2.s8 %v83
      %v328 = vunpack.c.2.s8 %v84
      %v329 = vunpack.c.3.s8 %v81
      %v330 = vunpack.c.3.s8 %v82
      %v331 = vunpack.c.3.s8 %v83
      %v332 = vunpack.c.3.s8 %v84
      %v333 = vunpack.c.0.s8 %v85
      %v334 = vunpack.c.0.s8 %v86
      %v335 = vunpack.c.0.s8 %v87
      %v336 = vunpack.c.0.s8 %v88
      %v337 = vunpack.c.1.s8 %v85
      %v338 = vunpack.c.1.s8 %v86
      %v339 = vunpack.c.1.s8 %v87
      %v340 = vunpack.c.1.s8 %v88
      %v341 = vunpack.c.2.s8 %v85
      %v342 = vunpack.c.2.s8 %v86
      %v343 = vunpack.c.2.s8 %v87
      %v344 = vunpack.c.2.s8 %v88
      %v345 = vunpack.c.3.s8 %v85
      %v346 = vunpack.c.3.s8 %v86
      %v347 = vunpack.c.3.s8 %v87
      %v348 = vunpack.c.3.s8 %v88
      %v349 = vunpack.c.0.s8 %v89
      %v350 = vunpack.c.0.s8 %v90
      %v351 = vunpack.c.0.s8 %v91
      %v352 = vunpack.c.0.s8 %v92
      %v353 = vunpack.c.1.s8 %v89
      %v354 = vunpack.c.1.s8 %v90
      %v355 = vunpack.c.1.s8 %v91
      %v356 = vunpack.c.1.s8 %v92
      %v357 = vunpack.c.2.s8 %v89
      %v358 = vunpack.c.2.s8 %v90
      %v359 = vunpack.c.2.s8 %v91
      %v360 = vunpack.c.2.s8 %v92
      %v361 = vunpack.c.3.s8 %v89
      %v362 = vunpack.c.3.s8 %v90
      %v363 = vunpack.c.3.s8 %v91
      %v364 = vunpack.c.3.s8 %v92
      %v365 = vunpack.c.0.s8 %v93
      %v366 = vunpack.c.0.s8 %v94
      %v367 = vunpack.c.0.s8 %v95
      %v368 = vunpack.c.0.s8 %v96
      %v369 = vunpack.c.1.s8 %v93
      %v370 = vunpack.c.1.s8 %v94
      %v371 = vunpack.c.1.s8 %v95
      %v372 = vunpack.c.1.s8 %v96
      %v373 = vunpack.c.2.s8 %v93
      %v374 = vunpack.c.2.s8 %v94
      %v375 = vunpack.c.2.s8 %v95
      %v376 = vunpack.c.2.s8 %v96
      %v377 = vunpack.c.3.s8 %v93
      %v378 = vunpack.c.3.s8 %v94
      %v379 = vunpack.c.3.s8 %v95
      %v380 = vunpack.c.3.s8 %v96
      %v381 = vunpack.c.0.s8 %v97
      %v382 = vunpack.c.0.s8 %v98
      %v383 = vunpack.c.0.s8 %v99
      %v384 = vunpack.c.0.s8 %v100
      %v385 = vunpack.c.1.s8 %v97
      %v386 = vunpack.c.1.s8 %v98
      %v387 = vunpack.c.1.s8 %v99
      %v388 = vunpack.c.1.s8 %v100
      %v389 = vunpack.c.2.s8 %v97
      %v390 = vunpack.c.2.s8 %v98
      %v391 = vunpack.c.2.s8 %v99
      %v392 = vunpack.c.2.s8 %v100
      %v393 = vunpack.c.3.s8 %v97
      %v394 = vunpack.c.3.s8 %v98
      %v395 = vunpack.c.3.s8 %v99
      %v396 = vunpack.c.3.s8 %v100
      %v397 = vunpack.c.0.s8 %v101
      %v398 = vunpack.c.0.s8 %v102
      %v399 = vunpack.c.0.s8 %v103
      %v400 = vunpack.c.0.s8 %v104
      %v401 = vunpack.c.1.s8 %v101
      %v402 = vunpack.c.1.s8 %v102
      %v403 = vunpack.c.1.s8 %v103
      %v404 = vunpack.c.1.s8 %v104
      %v405 = vunpack.c.2.s8 %v101
      %v406 = vunpack.c.2.s8 %v102
      %v407 = vunpack.c.2.s8 %v103
      %v408 = vunpack.c.2.s8 %v104
      %v409 = vunpack.c.3.s8 %v101
      %v410 = vunpack.c.3.s8 %v102
      %v411 = vunpack.c.3.s8 %v103
      %v412 = vunpack.c.3.s8 %v104
      %v413 = vunpack.c.0.s8 %v105
      %v414 = vunpack.c.0.s8 %v106
      %v415 = vunpack.c.0.s8 %v107
      %v416 = vunpack.c.0.s8 %v108
      %v417 = vunpack.c.1.s8 %v105
      %v418 = vunpack.c.1.s8 %v106
      %v419 = vunpack.c.1.s8 %v107
      %v420 = vunpack.c.1.s8 %v108
      %v421 = vunpack.c.2.s8 %v105
      %v422 = vunpack.c.2.s8 %v106
      %v423 = vunpack.c.2.s8 %v107
      %v424 = vunpack.c.2.s8 %v108
      %v425 = vunpack.c.3.s8 %v105
      %v426 = vunpack.c.3.s8 %v106
      %v427 = vunpack.c.3.s8 %v107
      %v428 = vunpack.c.3.s8 %v108
      %v429 = vunpack.c.0.s8 %v109
      %v430 = vunpack.c.0.s8 %v110
      %v431 = vunpack.c.0.s8 %v111
      %v432 = vunpack.c.0.s8 %v112
      %v433 = vunpack.c.1.s8 %v109
      %v434 = vunpack.c.1.s8 %v110
      %v435 = vunpack.c.1.s8 %v111
      %v436 = vunpack.c.1.s8 %v112
      %v437 = vunpack.c.2.s8 %v109
      %v438 = vunpack.c.2.s8 %v110
      %v439 = vunpack.c.2.s8 %v111
      %v440 = vunpack.c.2.s8 %v112
      %v441 = vunpack.c.3.s8 %v109
      %v442 = vunpack.c.3.s8 %v110
      %v443 = vunpack.c.3.s8 %v111
      %v444 = vunpack.c.3.s8 %v112
      %v445 = vunpack.c.0.s8 %v113
      %v446 = vunpack.c.0.s8 %v114
      %v447 = vunpack.c.0.s8 %v115
      %v448 = vunpack.c.0.s8 %v116
      %v449 = vunpack.c.1.s8 %v113
      %v450 = vunpack.c.1.s8 %v114
      %v451 = vunpack.c.1.s8 %v115
      %v452 = vunpack.c.1.s8 %v116
      %v453 = vunpack.c.2.s8 %v113
      %v454 = vunpack.c.2.s8 %v114
      %v455 = vunpack.c.2.s8 %v115
      %v456 = vunpack.c.2.s8 %v116
      %v457 = vunpack.c.3.s8 %v113
      %v458 = vunpack.c.3.s8 %v114
      %v459 = vunpack.c.3.s8 %v115
      %v460 = vunpack.c.3.s8 %v116
      %v461 = vunpack.c.0.s8 %v117
      %v462 = vunpack.c.0.s8 %v118
      %v463 = vunpack.c.0.s8 %v119
      %v464 = vunpack.c.0.s8 %v120
      %v465 = vunpack.c.1.s8 %v117
      %v466 = vunpack.c.1.s8 %v118
      %v467 = vunpack.c.1.s8 %v119
      %v468 = vunpack.c.1.s8 %v120
      %v469 = vunpack.c.2.s8 %v117
      %v470 = vunpack.c.2.s8 %v118
      %v471 = vunpack.c.2.s8 %v119
      %v472 = vunpack.c.2.s8 %v120
      %v473 = vunpack.c.3.s8 %v117
      %v474 = vunpack.c.3.s8 %v118
      %v475 = vunpack.c.3.s8 %v119
      %v476 = vunpack.c.3.s8 %v120
      %v477 = vunpack.c.0.s8 %v121
      %v478 = vunpack.c.0.s8 %v122
      %v479 = vunpack.c.0.s8 %v123
      %v480 = vunpack.c.0.s8 %v124
      %v481 = vunpack.c.1.s8 %v121
      %v482 = vunpack.c.1.s8 %v122
      %v483 = vunpack.c.1.s8 %v123
      %v484 = vunpack.c.1.s8 %v124
      %v485 = vunpack.c.2.s8 %v121
      %v486 = vunpack.c.2.s8 %v122
      %v487 = vunpack.c.2.s8 %v123
      %v488 = vunpack.c.2.s8 %v124
      %v489 = vunpack.c.3.s8 %v121
      %v490 = vunpack.c.3.s8 %v122
      %v491 = vunpack.c.3.s8 %v123
      %v492 = vunpack.c.3.s8 %v124
      %v493 = vunpack.c.0.s8 %v125
      %v494 = vunpack.c.0.s8 %v126
      %v495 = vunpack.c.0.s8 %v127
      %v496 = vunpack.c.0.s8 %v128
      %v497 = vunpack.c.1.s8 %v125
      %v498 = vunpack.c.1.s8 %v126
      %v499 = vunpack.c.1.s8 %v127
      %v500 = vunpack.c.1.s8 %v128
      %v501 = vunpack.c.2.s8 %v125
      %v502 = vunpack.c.2.s8 %v126
      %v503 = vunpack.c.2.s8 %v127
      %v504 = vunpack.c.2.s8 %v128
      %v505 = vunpack.c.3.s8 %v125
      %v506 = vunpack.c.3.s8 %v126
      %v507 = vunpack.c.3.s8 %v127
      %v508 = vunpack.c.3.s8 %v128
      %v509 = vunpack.c.0.s8 %v129
      %v510 = vunpack.c.0.s8 %v130
      %v511 = vunpack.c.0.s8 %v131
      %v512 = vunpack.c.0.s8 %v132
      %v513 = vunpack.c.1.s8 %v129
      %v514 = vunpack.c.1.s8 %v130
      %v515 = vunpack.c.1.s8 %v131
      %v516 = vunpack.c.1.s8 %v132
      %v517 = vunpack.c.2.s8 %v129
      %v518 = vunpack.c.2.s8 %v130
      %v519 = vunpack.c.2.s8 %v131
      %v520 = vunpack.c.2.s8 %v132
      %v521 = vunpack.c.3.s8 %v129
      %v522 = vunpack.c.3.s8 %v130
      %v523 = vunpack.c.3.s8 %v131
      %v524 = vunpack.c.3.s8 %v132
      %v525 = vunpack.c.0.s8 %v133
      %v526 = vunpack.c.0.s8 %v134
      %v527 = vunpack.c.0.s8 %v135
      %v528 = vunpack.c.0.s8 %v136
      %v529 = vunpack.c.1.s8 %v133
      %v530 = vunpack.c.1.s8 %v134
      %v531 = vunpack.c.1.s8 %v135
      %v532 = vunpack.c.1.s8 %v136
      %v533 = vunpack.c.2.s8 %v133
      %v534 = vunpack.c.2.s8 %v134
      %v535 = vunpack.c.2.s8 %v135
      %v536 = vunpack.c.2.s8 %v136
      %v537 = vunpack.c.3.s8 %v133
      %v538 = vunpack.c.3.s8 %v134
      %v539 = vunpack.c.3.s8 %v135
      %v540 = vunpack.c.3.s8 %v136
      %v541 = vunpack.c.0.s8 %v137
      %v542 = vunpack.c.0.s8 %v138
      %v543 = vunpack.c.0.s8 %v139
      %v544 = vunpack.c.0.s8 %v140
      %v545 = vunpack.c.1.s8 %v137
      %v546 = vunpack.c.1.s8 %v138
      %v547 = vunpack.c.1.s8 %v139
      %v548 = vunpack.c.1.s8 %v140
      %v549 = vunpack.c.2.s8 %v137
      %v550 = vunpack.c.2.s8 %v138
      %v551 = vunpack.c.2.s8 %v139
      %v552 = vunpack.c.2.s8 %v140
      %v553 = vunpack.c.3.s8 %v137
      %v554 = vunpack.c.3.s8 %v138
      %v555 = vunpack.c.3.s8 %v139
      %v556 = vunpack.c.3.s8 %v140
      %v557 = vunpack.c.0.s8 %v141
      %v558 = vunpack.c.0.s8 %v142
      %v559 = vunpack.c.0.s8 %v143
      %v560 = vunpack.c.0.s8 %v144
      %v561 = vunpack.c.1.s8 %v141
      %v562 = vunpack.c.1.s8 %v142
      %v563 = vunpack.c.1.s8 %v143
      %v564 = vunpack.c.1.s8 %v144
      %v565 = vunpack.c.2.s8 %v141
      %v566 = vunpack.c.2.s8 %v142
      %v567 = vunpack.c.2.s8 %v143
      %v568 = vunpack.c.2.s8 %v144
      %v569 = vunpack.c.3.s8 %v141
      %v570 = vunpack.c.3.s8 %v142
      %v571 = vunpack.c.3.s8 %v143
      %v572 = vunpack.c.3.s8 %v144
      %v573 = vunpack.c.0.s8 %v145
      %v574 = vunpack.c.0.s8 %v146
      %v575 = vunpack.c.0.s8 %v147
      %v576 = vunpack.c.0.s8 %v148
      %v577 = vunpack.c.1.s8 %v145
      %v578 = vunpack.c.1.s8 %v146
      %v579 = vunpack.c.1.s8 %v147
      %v580 = vunpack.c.1.s8 %v148
      %v581 = vunpack.c.2.s8 %v145
      %v582 = vunpack.c.2.s8 %v146
      %v583 = vunpack.c.2.s8 %v147
      %v584 = vunpack.c.2.s8 %v148
      %v585 = vunpack.c.3.s8 %v145
      %v586 = vunpack.c.3.s8 %v146
      %v587 = vunpack.c.3.s8 %v147
      %v588 = vunpack.c.3.s8 %v148
      %v589 = vunpack.c.0.s8 %v149
      %v590 = vunpack.c.0.s8 %v150
      %v591 = vunpack.c.0.s8 %v151
      %v592 = vunpack.c.0.s8 %v152
      %v593 = vunpack.c.1.s8 %v149
      %v594 = vunpack.c.1.s8 %v150
      %v595 = vunpack.c.1.s8 %v151
      %v596 = vunpack.c.1.s8 %v152
      %v597 = vunpack.c.2.s8 %v149
      %v598 = vunpack.c.2.s8 %v150
      %v599 = vunpack.c.2.s8 %v151
      %v600 = vunpack.c.2.s8 %v152
      %v601 = vunpack.c.3.s8 %v149
      %v602 = vunpack.c.3.s8 %v150
      %v603 = vunpack.c.3.s8 %v151
      %v604 = vunpack.c.3.s8 %v152
      %v605 = vunpack.c.0.s8 %v153
      %v606 = vunpack.c.0.s8 %v154
      %v607 = vunpack.c.0.s8 %v155
      %v608 = vunpack.c.0.s8 %v156
      %v609 = vunpack.c.1.s8 %v153
      %v610 = vunpack.c.1.s8 %v154
      %v611 = vunpack.c.1.s8 %v155
      %v612 = vunpack.c.1.s8 %v156
      %v613 = vunpack.c.2.s8 %v153
      %v614 = vunpack.c.2.s8 %v154
      %v615 = vunpack.c.2.s8 %v155
      %v616 = vunpack.c.2.s8 %v156
      %v617 = vunpack.c.3.s8 %v153
      %v618 = vunpack.c.3.s8 %v154
      %v619 = vunpack.c.3.s8 %v155
      %v620 = vunpack.c.3.s8 %v156
      %v621 = vunpack.c.0.s8 %v157
      %v622 = vunpack.c.0.s8 %v158
      %v623 = vunpack.c.0.s8 %v159
      %v624 = vunpack.c.0.s8 %v160
      %v625 = vunpack.c.1.s8 %v157
      %v626 = vunpack.c.1.s8 %v158
      %v627 = vunpack.c.1.s8 %v159
      %v628 = vunpack.c.1.s8 %v160
      %v629 = vunpack.c.2.s8 %v157
      %v630 = vunpack.c.2.s8 %v158
      %v631 = vunpack.c.2.s8 %v159
      %v632 = vunpack.c.2.s8 %v160
      %v633 = vunpack.c.3.s8 %v157
      %v634 = vunpack.c.3.s8 %v158
      %v635 = vunpack.c.3.s8 %v159
      %v636 = vunpack.c.3.s8 %v160
      %v637 = vunpack.c.0.s8 %v161
      %v638 = vunpack.c.0.s8 %v162
      %v639 = vunpack.c.0.s8 %v163
      %v640 = vunpack.c.0.s8 %v164
      %v641 = vunpack.c.1.s8 %v161
      %v642 = vunpack.c.1.s8 %v162
      %v643 = vunpack.c.1.s8 %v163
      %v644 = vunpack.c.1.s8 %v164
      %v645 = vunpack.c.2.s8 %v161
      %v646 = vunpack.c.2.s8 %v162
      %v647 = vunpack.c.2.s8 %v163
      %v648 = vunpack.c.2.s8 %v164
      %v649 = vunpack.c.3.s8 %v161
      %v650 = vunpack.c.3.s8 %v162
      %v651 = vunpack.c.3.s8 %v163
      %v652 = vunpack.c.3.s8 %v164
      %v653 = vunpack.c.0.s8 %v165
      %v654 = vunpack.c.0.s8 %v166
      %v655 = vunpack.c.0.s8 %v167
      %v656 = vunpack.c.0.s8 %v168
      %v657 = vunpack.c.1.s8 %v165
      %v658 = vunpack.c.1.s8 %v166
      %v659 = vunpack.c.1.s8 %v167
      %v660 = vunpack.c.1.s8 %v168
      %v661 = vunpack.c.2.s8 %v165
      %v662 = vunpack.c.2.s8 %v166
      %v663 = vunpack.c.2.s8 %v167
      %v664 = vunpack.c.2.s8 %v168
      %v665 = vunpack.c.3.s8 %v165
      %v666 = vunpack.c.3.s8 %v166
      %v667 = vunpack.c.3.s8 %v167
      %v668 = vunpack.c.3.s8 %v168
      %v669 = vunpack.c.0.s8 %v169
      %v670 = vunpack.c.0.s8 %v170
      %v671 = vunpack.c.0.s8 %v171
      %v672 = vunpack.c.0.s8 %v172
      %v673 = vunpack.c.1.s8 %v169
      %v674 = vunpack.c.1.s8 %v170
      %v675 = vunpack.c.1.s8 %v171
      %v676 = vunpack.c.1.s8 %v172
      %v677 = vunpack.c.2.s8 %v169
      %v678 = vunpack.c.2.s8 %v170
      %v679 = vunpack.c.2.s8 %v171
      %v680 = vunpack.c.2.s8 %v172
      %v681 = vunpack.c.3.s8 %v169
      %v682 = vunpack.c.3.s8 %v170
      %v683 = vunpack.c.3.s8 %v171
      %v684 = vunpack.c.3.s8 %v172
      %v685 = vcvt.s32.f32 %v173
      %v686 = vcvt.s32.f32 %v174
      %v687 = vcvt.s32.f32 %v175
      %v688 = vcvt.s32.f32 %v176
      %v689 = vcvt.s32.f32 %v177
      %v690 = vcvt.s32.f32 %v178
      %v691 = vcvt.s32.f32 %v179
      %v692 = vcvt.s32.f32 %v180
      %v693 = vcvt.s32.f32 %v181
      %v694 = vcvt.s32.f32 %v182
      %v695 = vcvt.s32.f32 %v183
      %v696 = vcvt.s32.f32 %v184
      %v697 = vcvt.s32.f32 %v185
      %v698 = vcvt.s32.f32 %v186
      %v699 = vcvt.s32.f32 %v187
      %v700 = vcvt.s32.f32 %v188
      %v701 = vcvt.s32.f32 %v189
      %v702 = vcvt.s32.f32 %v190
      %v703 = vcvt.s32.f32 %v191
      %v704 = vcvt.s32.f32 %v192
      %v705 = vcvt.s32.f32 %v193
      %v706 = vcvt.s32.f32 %v194
      %v707 = vcvt.s32.f32 %v195
      %v708 = vcvt.s32.f32 %v196
      %v709 = vcvt.s32.f32 %v197
      %v710 = vcvt.s32.f32 %v198
      %v711 = vcvt.s32.f32 %v199
      %v712 = vcvt.s32.f32 %v200
      %v713 = vcvt.s32.f32 %v201
      %v714 = vcvt.s32.f32 %v202
      %v715 = vcvt.s32.f32 %v203
      %v716 = vcvt.s32.f32 %v204
      %v717 = vcvt.s32.f32 %v205
      %v718 = vcvt.s32.f32 %v206
      %v719 = vcvt.s32.f32 %v207
      %v720 = vcvt.s32.f32 %v208
      %v721 = vcvt.s32.f32 %v209
      %v722 = vcvt.s32.f32 %v210
      %v723 = vcvt.s32.f32 %v211
      %v724 = vcvt.s32.f32 %v212
      %v725 = vcvt.s32.f32 %v213
      %v726 = vcvt.s32.f32 %v214
      %v727 = vcvt.s32.f32 %v215
      %v728 = vcvt.s32.f32 %v216
      %v729 = vcvt.s32.f32 %v217
      %v730 = vcvt.s32.f32 %v218
      %v731 = vcvt.s32.f32 %v219
      %v732 = vcvt.s32.f32 %v220
      %v733 = vcvt.s32.f32 %v221
      %v734 = vcvt.s32.f32 %v222
      %v735 = vcvt.s32.f32 %v223
      %v736 = vcvt.s32.f32 %v224
      %v737 = vcvt.s32.f32 %v225
      %v738 = vcvt.s32.f32 %v226
      %v739 = vcvt.s32.f32 %v227
      %v740 = vcvt.s32.f32 %v228
      %v741 = vcvt.s32.f32 %v229
      %v742 = vcvt.s32.f32 %v230
      %v743 = vcvt.s32.f32 %v231
      %v744 = vcvt.s32.f32 %v232
      %v745 = vcvt.s32.f32 %v233
      %v746 = vcvt.s32.f32 %v234
      %v747 = vcvt.s32.f32 %v235
      %v748 = vcvt.s32.f32 %v236
      %v749 = vcvt.s32.f32 %v237
      %v750 = vcvt.s32.f32 %v238
      %v751 = vcvt.s32.f32 %v239
      %v752 = vcvt.s32.f32 %v240
      %v753 = vcvt.s32.f32 %v241
      %v754 = vcvt.s32.f32 %v242
      %v755 = vcvt.s32.f32 %v243
      %v756 = vcvt.s32.f32 %v244
      %v757 = vcvt.s32.f32 %v245
      %v758 = vcvt.s32.f32 %v246
      %v759 = vcvt.s32.f32 %v247
      %v760 = vcvt.s32.f32 %v248
      %v761 = vcvt.s32.f32 %v249
      %v762 = vcvt.s32.f32 %v250
      %v763 = vcvt.s32.f32 %v251
      %v764 = vcvt.s32.f32 %v252
      %v765 = vcvt.s32.f32 %v253
      %v766 = vcvt.s32.f32 %v254
      %v767 = vcvt.s32.f32 %v255
      %v768 = vcvt.s32.f32 %v256
      %v769 = vcvt.s32.f32 %v257
      %v770 = vcvt.s32.f32 %v258
      %v771 = vcvt.s32.f32 %v259
      %v772 = vcvt.s32.f32 %v260
      %v773 = vcvt.s32.f32 %v261
      %v774 = vcvt.s32.f32 %v262
      %v775 = vcvt.s32.f32 %v263
      %v776 = vcvt.s32.f32 %v264
      %v777 = vcvt.s32.f32 %v265
      %v778 = vcvt.s32.f32 %v266
      %v779 = vcvt.s32.f32 %v267
      %v780 = vcvt.s32.f32 %v268
      %v781 = vcvt.s32.f32 %v269
      %v782 = vcvt.s32.f32 %v270
      %v783 = vcvt.s32.f32 %v271
      %v784 = vcvt.s32.f32 %v272
      %v785 = vcvt.s32.f32 %v273
      %v786 = vcvt.s32.f32 %v274
      %v787 = vcvt.s32.f32 %v275
      %v788 = vcvt.s32.f32 %v276
      %v789 = vcvt.s32.f32 %v277
      %v790 = vcvt.s32.f32 %v278
      %v791 = vcvt.s32.f32 %v279
      %v792 = vcvt.s32.f32 %v280
      %v793 = vcvt.s32.f32 %v281
      %v794 = vcvt.s32.f32 %v282
      %v795 = vcvt.s32.f32 %v283
      %v796 = vcvt.s32.f32 %v284
      %v797 = vcvt.s32.f32 %v285
      %v798 = vcvt.s32.f32 %v286
      %v799 = vcvt.s32.f32 %v287
      %v800 = vcvt.s32.f32 %v288
      %v801 = vcvt.s32.f32 %v289
      %v802 = vcvt.s32.f32 %v290
      %v803 = vcvt.s32.f32 %v291
      %v804 = vcvt.s32.f32 %v292
      %v805 = vcvt.s32.f32 %v293
      %v806 = vcvt.s32.f32 %v294
      %v807 = vcvt.s32.f32 %v295
      %v808 = vcvt.s32.f32 %v296
      %v809 = vcvt.s32.f32 %v297
      %v810 = vcvt.s32.f32 %v298
      %v811 = vcvt.s32.f32 %v299
      %v812 = vcvt.s32.f32 %v300
      %v813 = vcvt.s32.f32 %v301
      %v814 = vcvt.s32.f32 %v302
      %v815 = vcvt.s32.f32 %v303
      %v816 = vcvt.s32.f32 %v304
      %v817 = vcvt.s32.f32 %v305
      %v818 = vcvt.s32.f32 %v306
      %v819 = vcvt.s32.f32 %v307
      %v820 = vcvt.s32.f32 %v308
      %v821 = vcvt.s32.f32 %v309
      %v822 = vcvt.s32.f32 %v310
      %v823 = vcvt.s32.f32 %v311
      %v824 = vcvt.s32.f32 %v312
      %v825 = vcvt.s32.f32 %v313
      %v826 = vcvt.s32.f32 %v314
      %v827 = vcvt.s32.f32 %v315
      %v828 = vcvt.s32.f32 %v316
      %v829 = vcvt.s32.f32 %v317
      %v830 = vcvt.s32.f32 %v318
      %v831 = vcvt.s32.f32 %v319
      %v832 = vcvt.s32.f32 %v320
      %v833 = vcvt.s32.f32 %v321
      %v834 = vcvt.s32.f32 %v322
      %v835 = vcvt.s32.f32 %v323
      %v836 = vcvt.s32.f32 %v324
      %v837 = vcvt.s32.f32 %v325
      %v838 = vcvt.s32.f32 %v326
      %v839 = vcvt.s32.f32 %v327
      %v840 = vcvt.s32.f32 %v328
      %v841 = vcvt.s32.f32 %v329
      %v842 = vcvt.s32.f32 %v330
      %v843 = vcvt.s32.f32 %v331
      %v844 = vcvt.s32.f32 %v332
      %v845 = vcvt.s32.f32 %v333
      %v846 = vcvt.s32.f32 %v334
      %v847 = vcvt.s32.f32 %v335
      %v848 = vcvt.s32.f32 %v336
      %v849 = vcvt.s32.f32 %v337
      %v850 = vcvt.s32.f32 %v338
      %v851 = vcvt.s32.f32 %v339
      %v852 = vcvt.s32.f32 %v340
      %v853 = vcvt.s32.f32 %v341
      %v854 = vcvt.s32.f32 %v342
      %v855 = vcvt.s32.f32 %v343
      %v856 = vcvt.s32.f32 %v344
      %v857 = vcvt.s32.f32 %v345
      %v858 = vcvt.s32.f32 %v346
      %v859 = vcvt.s32.f32 %v347
      %v860 = vcvt.s32.f32 %v348
      %v861 = vcvt.s32.f32 %v349
      %v862 = vcvt.s32.f32 %v350
      %v863 = vcvt.s32.f32 %v351
      %v864 = vcvt.s32.f32 %v352
      %v865 = vcvt.s32.f32 %v353
      %v866 = vcvt.s32.f32 %v354
      %v867 = vcvt.s32.f32 %v355
      %v868 = vcvt.s32.f32 %v356
      %v869 = vcvt.s32.f32 %v357
      %v870 = vcvt.s32.f32 %v358
      %v871 = vcvt.s32.f32 %v359
      %v872 = vcvt.s32.f32 %v360
      %v873 = vcvt.s32.f32 %v361
      %v874 = vcvt.s32.f32 %v362
      %v875 = vcvt.s32.f32 %v363
      %v876 = vcvt.s32.f32 %v364
      %v877 = vcvt.s32.f32 %v365
      %v878 = vcvt.s32.f32 %v366
      %v879 = vcvt.s32.f32 %v367
      %v880 = vcvt.s32.f32 %v368
      %v881 = vcvt.s32.f32 %v369
      %v882 = vcvt.s32.f32 %v370
      %v883 = vcvt.s32.f32 %v371
      %v884 = vcvt.s32.f32 %v372
      %v885 = vcvt.s32.f32 %v373
      %v886 = vcvt.s32.f32 %v374
      %v887 = vcvt.s32.f32 %v375
      %v888 = vcvt.s32.f32 %v376
      %v889 = vcvt.s32.f32 %v377
      %v890 = vcvt.s32.f32 %v378
      %v891 = vcvt.s32.f32 %v379
      %v892 = vcvt.s32.f32 %v380
      %v893 = vcvt.s32.f32 %v381
      %v894 = vcvt.s32.f32 %v382
      %v895 = vcvt.s32.f32 %v383
      %v896 = vcvt.s32.f32 %v384
      %v897 = vcvt.s32.f32 %v385
      %v898 = vcvt.s32.f32 %v386
      %v899 = vcvt.s32.f32 %v387
      %v900 = vcvt.s32.f32 %v388
      %v901 = vcvt.s32.f32 %v389
      %v902 = vcvt.s32.f32 %v390
      %v903 = vcvt.s32.f32 %v391
      %v904 = vcvt.s32.f32 %v392
      %v905 = vcvt.s32.f32 %v393
      %v906 = vcvt.s32.f32 %v394
      %v907 = vcvt.s32.f32 %v395
      %v908 = vcvt.s32.f32 %v396
      %v909 = vcvt.s32.f32 %v397
      %v910 = vcvt.s32.f32 %v398
      %v911 = vcvt.s32.f32 %v399
      %v912 = vcvt.s32.f32 %v400
      %v913 = vcvt.s32.f32 %v401
      %v914 = vcvt.s32.f32 %v402
      %v915 = vcvt.s32.f32 %v403
      %v916 = vcvt.s32.f32 %v404
      %v917 = vcvt.s32.f32 %v405
      %v918 = vcvt.s32.f32 %v406
      %v919 = vcvt.s32.f32 %v407
      %v920 = vcvt.s32.f32 %v408
      %v921 = vcvt.s32.f32 %v409
      %v922 = vcvt.s32.f32 %v410
      %v923 = vcvt.s32.f32 %v411
      %v924 = vcvt.s32.f32 %v412
      %v925 = vcvt.s32.f32 %v413
      %v926 = vcvt.s32.f32 %v414
      %v927 = vcvt.s32.f32 %v415
      %v928 = vcvt.s32.f32 %v416
      %v929 = vcvt.s32.f32 %v417
      %v930 = vcvt.s32.f32 %v418
      %v931 = vcvt.s32.f32 %v419
      %v932 = vcvt.s32.f32 %v420
      %v933 = vcvt.s32.f32 %v421
      %v934 = vcvt.s32.f32 %v422
      %v935 = vcvt.s32.f32 %v423
      %v936 = vcvt.s32.f32 %v424
      %v937 = vcvt.s32.f32 %v425
      %v938 = vcvt.s32.f32 %v426
      %v939 = vcvt.s32.f32 %v427
      %v940 = vcvt.s32.f32 %v428
      %v941 = vcvt.s32.f32 %v429
      %v942 = vcvt.s32.f32 %v430
      %v943 = vcvt.s32.f32 %v431
      %v944 = vcvt.s32.f32 %v432
      %v945 = vcvt.s32.f32 %v433
      %v946 = vcvt.s32.f32 %v434
      %v947 = vcvt.s32.f32 %v435
      %v948 = vcvt.s32.f32 %v436
      %v949 = vcvt.s32.f32 %v437
      %v950 = vcvt.s32.f32 %v438
      %v951 = vcvt.s32.f32 %v439
      %v952 = vcvt.s32.f32 %v440
      %v953 = vcvt.s32.f32 %v441
      %v954 = vcvt.s32.f32 %v442
      %v955 = vcvt.s32.f32 %v443
      %v956 = vcvt.s32.f32 %v444
      %v957 = vcvt.s32.f32 %v445
      %v958 = vcvt.s32.f32 %v446
      %v959 = vcvt.s32.f32 %v447
      %v960 = vcvt.s32.f32 %v448
      %v961 = vcvt.s32.f32 %v449
      %v962 = vcvt.s32.f32 %v450
      %v963 = vcvt.s32.f32 %v451
      %v964 = vcvt.s32.f32 %v452
      %v965 = vcvt.s32.f32 %v453
      %v966 = vcvt.s32.f32 %v454
      %v967 = vcvt.s32.f32 %v455
      %v968 = vcvt.s32.f32 %v456
      %v969 = vcvt.s32.f32 %v457
      %v970 = vcvt.s32.f32 %v458
      %v971 = vcvt.s32.f32 %v459
      %v972 = vcvt.s32.f32 %v460
      %v973 = vcvt.s32.f32 %v461
      %v974 = vcvt.s32.f32 %v462
      %v975 = vcvt.s32.f32 %v463
      %v976 = vcvt.s32.f32 %v464
      %v977 = vcvt.s32.f32 %v465
      %v978 = vcvt.s32.f32 %v466
      %v979 = vcvt.s32.f32 %v467
      %v980 = vcvt.s32.f32 %v468
      %v981 = vcvt.s32.f32 %v469
      %v982 = vcvt.s32.f32 %v470
      %v983 = vcvt.s32.f32 %v471
      %v984 = vcvt.s32.f32 %v472
      %v985 = vcvt.s32.f32 %v473
      %v986 = vcvt.s32.f32 %v474
      %v987 = vcvt.s32.f32 %v475
      %v988 = vcvt.s32.f32 %v476
      %v989 = vcvt.s32.f32 %v477
      %v990 = vcvt.s32.f32 %v478
      %v991 = vcvt.s32.f32 %v479
      %v992 = vcvt.s32.f32 %v480
      %v993 = vcvt.s32.f32 %v481
      %v994 = vcvt.s32.f32 %v482
      %v995 = vcvt.s32.f32 %v483
      %v996 = vcvt.s32.f32 %v484
      %v997 = vcvt.s32.f32 %v485
      %v998 = vcvt.s32.f32 %v486
      %v999 = vcvt.s32.f32 %v487
      %v1000 = vcvt.s32.f32 %v488
      %v1001 = vcvt.s32.f32 %v489
      %v1002 = vcvt.s32.f32 %v490
      %v1003 = vcvt.s32.f32 %v491
      %v1004 = vcvt.s32.f32 %v492
      %v1005 = vcvt.s32.f32 %v493
      %v1006 = vcvt.s32.f32 %v494
      %v1007 = vcvt.s32.f32 %v495
      %v1008 = vcvt.s32.f32 %v496
      %v1009 = vcvt.s32.f32 %v497
      %v1010 = vcvt.s32.f32 %v498
      %v1011 = vcvt.s32.f32 %v499
      %v1012 = vcvt.s32.f32 %v500
      %v1013 = vcvt.s32.f32 %v501
      %v1014 = vcvt.s32.f32 %v502
      %v1015 = vcvt.s32.f32 %v503
      %v1016 = vcvt.s32.f32 %v504
      %v1017 = vcvt.s32.f32 %v505
      %v1018 = vcvt.s32.f32 %v506
      %v1019 = vcvt.s32.f32 %v507
      %v1020 = vcvt.s32.f32 %v508
      %v1021 = vcvt.s32.f32 %v509
      %v1022 = vcvt.s32.f32 %v510
      %v1023 = vcvt.s32.f32 %v511
      %v1024 = vcvt.s32.f32 %v512
      %v1025 = vcvt.s32.f32 %v513
      %v1026 = vcvt.s32.f32 %v514
      %v1027 = vcvt.s32.f32 %v515
      %v1028 = vcvt.s32.f32 %v516
      %v1029 = vcvt.s32.f32 %v517
      %v1030 = vcvt.s32.f32 %v518
      %v1031 = vcvt.s32.f32 %v519
      %v1032 = vcvt.s32.f32 %v520
      %v1033 = vcvt.s32.f32 %v521
      %v1034 = vcvt.s32.f32 %v522
      %v1035 = vcvt.s32.f32 %v523
      %v1036 = vcvt.s32.f32 %v524
      %v1037 = vcvt.s32.f32 %v525
      %v1038 = vcvt.s32.f32 %v526
      %v1039 = vcvt.s32.f32 %v527
      %v1040 = vcvt.s32.f32 %v528
      %v1041 = vcvt.s32.f32 %v529
      %v1042 = vcvt.s32.f32 %v530
      %v1043 = vcvt.s32.f32 %v531
      %v1044 = vcvt.s32.f32 %v532
      %v1045 = vcvt.s32.f32 %v533
      %v1046 = vcvt.s32.f32 %v534
      %v1047 = vcvt.s32.f32 %v535
      %v1048 = vcvt.s32.f32 %v536
      %v1049 = vcvt.s32.f32 %v537
      %v1050 = vcvt.s32.f32 %v538
      %v1051 = vcvt.s32.f32 %v539
      %v1052 = vcvt.s32.f32 %v540
      %v1053 = vcvt.s32.f32 %v541
      %v1054 = vcvt.s32.f32 %v542
      %v1055 = vcvt.s32.f32 %v543
      %v1056 = vcvt.s32.f32 %v544
      %v1057 = vcvt.s32.f32 %v545
      %v1058 = vcvt.s32.f32 %v546
      %v1059 = vcvt.s32.f32 %v547
      %v1060 = vcvt.s32.f32 %v548
      %v1061 = vcvt.s32.f32 %v549
      %v1062 = vcvt.s32.f32 %v550
      %v1063 = vcvt.s32.f32 %v551
      %v1064 = vcvt.s32.f32 %v552
      %v1065 = vcvt.s32.f32 %v553
      %v1066 = vcvt.s32.f32 %v554
      %v1067 = vcvt.s32.f32 %v555
      %v1068 = vcvt.s32.f32 %v556
      %v1069 = vcvt.s32.f32 %v557
      %v1070 = vcvt.s32.f32 %v558
      %v1071 = vcvt.s32.f32 %v559
      %v1072 = vcvt.s32.f32 %v560
      %v1073 = vcvt.s32.f32 %v561
      %v1074 = vcvt.s32.f32 %v562
      %v1075 = vcvt.s32.f32 %v563
      %v1076 = vcvt.s32.f32 %v564
      %v1077 = vcvt.s32.f32 %v565
      %v1078 = vcvt.s32.f32 %v566
      %v1079 = vcvt.s32.f32 %v567
      %v1080 = vcvt.s32.f32 %v568
      %v1081 = vcvt.s32.f32 %v569
      %v1082 = vcvt.s32.f32 %v570
      %v1083 = vcvt.s32.f32 %v571
      %v1084 = vcvt.s32.f32 %v572
      %v1085 = vcvt.s32.f32 %v573
      %v1086 = vcvt.s32.f32 %v574
      %v1087 = vcvt.s32.f32 %v575
      %v1088 = vcvt.s32.f32 %v576
      %v1089 = vcvt.s32.f32 %v577
      %v1090 = vcvt.s32.f32 %v578
      %v1091 = vcvt.s32.f32 %v579
      %v1092 = vcvt.s32.f32 %v580
      %v1093 = vcvt.s32.f32 %v581
      %v1094 = vcvt.s32.f32 %v582
      %v1095 = vcvt.s32.f32 %v583
      %v1096 = vcvt.s32.f32 %v584
      %v1097 = vcvt.s32.f32 %v585
      %v1098 = vcvt.s32.f32 %v586
      %v1099 = vcvt.s32.f32 %v587
      %v1100 = vcvt.s32.f32 %v588
      %v1101 = vcvt.s32.f32 %v589
      %v1102 = vcvt.s32.f32 %v590
      %v1103 = vcvt.s32.f32 %v591
      %v1104 = vcvt.s32.f32 %v592
      %v1105 = vcvt.s32.f32 %v593
      %v1106 = vcvt.s32.f32 %v594
      %v1107 = vcvt.s32.f32 %v595
      %v1108 = vcvt.s32.f32 %v596
      %v1109 = vcvt.s32.f32 %v597
      %v1110 = vcvt.s32.f32 %v598
      %v1111 = vcvt.s32.f32 %v599
      %v1112 = vcvt.s32.f32 %v600
      %v1113 = vcvt.s32.f32 %v601
      %v1114 = vcvt.s32.f32 %v602
      %v1115 = vcvt.s32.f32 %v603
      %v1116 = vcvt.s32.f32 %v604
      %v1117 = vcvt.s32.f32 %v605
      %v1118 = vcvt.s32.f32 %v606
      %v1119 = vcvt.s32.f32 %v607
      %v1120 = vcvt.s32.f32 %v608
      %v1121 = vcvt.s32.f32 %v609
      %v1122 = vcvt.s32.f32 %v610
      %v1123 = vcvt.s32.f32 %v611
      %v1124 = vcvt.s32.f32 %v612
      %v1125 = vcvt.s32.f32 %v613
      %v1126 = vcvt.s32.f32 %v614
      %v1127 = vcvt.s32.f32 %v615
      %v1128 = vcvt.s32.f32 %v616
      %v1129 = vcvt.s32.f32 %v617
      %v1130 = vcvt.s32.f32 %v618
      %v1131 = vcvt.s32.f32 %v619
      %v1132 = vcvt.s32.f32 %v620
      %v1133 = vcvt.s32.f32 %v621
      %v1134 = vcvt.s32.f32 %v622
      %v1135 = vcvt.s32.f32 %v623
      %v1136 = vcvt.s32.f32 %v624
      %v1137 = vcvt.s32.f32 %v625
      %v1138 = vcvt.s32.f32 %v626
      %v1139 = vcvt.s32.f32 %v627
      %v1140 = vcvt.s32.f32 %v628
      %v1141 = vcvt.s32.f32 %v629
      %v1142 = vcvt.s32.f32 %v630
      %v1143 = vcvt.s32.f32 %v631
      %v1144 = vcvt.s32.f32 %v632
      %v1145 = vcvt.s32.f32 %v633
      %v1146 = vcvt.s32.f32 %v634
      %v1147 = vcvt.s32.f32 %v635
      %v1148 = vcvt.s32.f32 %v636
      %v1149 = vcvt.s32.f32 %v637
      %v1150 = vcvt.s32.f32 %v638
      %v1151 = vcvt.s32.f32 %v639
      %v1152 = vcvt.s32.f32 %v640
      %v1153 = vcvt.s32.f32 %v641
      %v1154 = vcvt.s32.f32 %v642
      %v1155 = vcvt.s32.f32 %v643
      %v1156 = vcvt.s32.f32 %v644
      %v1157 = vcvt.s32.f32 %v645
      %v1158 = vcvt.s32.f32 %v646
      %v1159 = vcvt.s32.f32 %v647
      %v1160 = vcvt.s32.f32 %v648
      %v1161 = vcvt.s32.f32 %v649
      %v1162 = vcvt.s32.f32 %v650
      %v1163 = vcvt.s32.f32 %v651
      %v1164 = vcvt.s32.f32 %v652
      %v1165 = vcvt.s32.f32 %v653
      %v1166 = vcvt.s32.f32 %v654
      %v1167 = vcvt.s32.f32 %v655
      %v1168 = vcvt.s32.f32 %v656
      %v1169 = vcvt.s32.f32 %v657
      %v1170 = vcvt.s32.f32 %v658
      %v1171 = vcvt.s32.f32 %v659
      %v1172 = vcvt.s32.f32 %v660
      %v1173 = vcvt.s32.f32 %v661
      %v1174 = vcvt.s32.f32 %v662
      %v1175 = vcvt.s32.f32 %v663
      %v1176 = vcvt.s32.f32 %v664
      %v1177 = vcvt.s32.f32 %v665
      %v1178 = vcvt.s32.f32 %v666
      %v1179 = vcvt.s32.f32 %v667
      %v1180 = vcvt.s32.f32 %v668
      %v1181 = vcvt.s32.f32 %v669
      %v1182 = vcvt.s32.f32 %v670
      %v1183 = vcvt.s32.f32 %v671
      %v1184 = vcvt.s32.f32 %v672
      %v1185 = vcvt.s32.f32 %v673
      %v1186 = vcvt.s32.f32 %v674
      %v1187 = vcvt.s32.f32 %v675
      %v1188 = vcvt.s32.f32 %v676
      %v1189 = vcvt.s32.f32 %v677
      %v1190 = vcvt.s32.f32 %v678
      %v1191 = vcvt.s32.f32 %v679
      %v1192 = vcvt.s32.f32 %v680
      %v1193 = vcvt.s32.f32 %v681
      %v1194 = vcvt.s32.f32 %v682
      %v1195 = vcvt.s32.f32 %v683
      %v1196 = vcvt.s32.f32 %v684
      %v1197 = vld [vmem:[%s6 + $0x8] sm:$0xf]
      %v1199 = vlaneseq
      %v1200 = vshrl.u32 %v1199, 7
      %v1201 = vsub.s32 0, %v1200
      %v1202 = vrot.slane %v1197, %v1201
      %v1203 = vlaneseq
      %v1204 = vshrl.u32 %v1203, 7
      %v1205 = vsub.s32 1, %v1204
      %v1206 = vrot.slane %v1197, %v1205
      %v1207 = vlaneseq
      %v1208 = vshrl.u32 %v1207, 7
      %v1209 = vsub.s32 2, %v1208
      %v1210 = vrot.slane %v1197, %v1209
      %v1211 = vlaneseq
      %v1212 = vshrl.u32 %v1211, 7
      %v1213 = vsub.s32 3, %v1212
      %v1214 = vrot.slane %v1197, %v1213
      %v1219 = vmul.f32 %v685, %v1202
      %v1220 = vmul.f32 %v686, %v1206
      %v1221 = vmul.f32 %v687, %v1210
      %v1222 = vmul.f32 %v688, %v1214
      %v1223 = vmul.f32 %v689, %v1202
      %v1224 = vmul.f32 %v690, %v1206
      %v1225 = vmul.f32 %v691, %v1210
      %v1226 = vmul.f32 %v692, %v1214
      %v1227 = vmul.f32 %v693, %v1202
      %v1228 = vmul.f32 %v694, %v1206
      %v1229 = vmul.f32 %v695, %v1210
      %v1230 = vmul.f32 %v696, %v1214
      %v1231 = vmul.f32 %v697, %v1202
      %v1232 = vmul.f32 %v698, %v1206
      %v1233 = vmul.f32 %v699, %v1210
      %v1234 = vmul.f32 %v700, %v1214
      %v1235 = vmul.f32 %v701, %v1202
      %v1236 = vmul.f32 %v702, %v1206
      %v1237 = vmul.f32 %v703, %v1210
      %v1238 = vmul.f32 %v704, %v1214
      %v1239 = vmul.f32 %v705, %v1202
      %v1240 = vmul.f32 %v706, %v1206
      %v1241 = vmul.f32 %v707, %v1210
      %v1242 = vmul.f32 %v708, %v1214
      %v1243 = vmul.f32 %v709, %v1202
      %v1244 = vmul.f32 %v710, %v1206
      %v1245 = vmul.f32 %v711, %v1210
      %v1246 = vmul.f32 %v712, %v1214
      %v1247 = vmul.f32 %v713, %v1202
      %v1248 = vmul.f32 %v714, %v1206
      %v1249 = vmul.f32 %v715, %v1210
      %v1250 = vmul.f32 %v716, %v1214
      %v1251 = vmul.f32 %v717, %v1202
      %v1252 = vmul.f32 %v718, %v1206
      %v1253 = vmul.f32 %v719, %v1210
      %v1254 = vmul.f32 %v720, %v1214
      %v1255 = vmul.f32 %v721, %v1202
      %v1256 = vmul.f32 %v722, %v1206
      %v1257 = vmul.f32 %v723, %v1210
      %v1258 = vmul.f32 %v724, %v1214
      %v1259 = vmul.f32 %v725, %v1202
      %v1260 = vmul.f32 %v726, %v1206
      %v1261 = vmul.f32 %v727, %v1210
      %v1262 = vmul.f32 %v728, %v1214
      %v1263 = vmul.f32 %v729, %v1202
      %v1264 = vmul.f32 %v730, %v1206
      %v1265 = vmul.f32 %v731, %v1210
      %v1266 = vmul.f32 %v732, %v1214
      %v1267 = vmul.f32 %v733, %v1202
      %v1268 = vmul.f32 %v734, %v1206
      %v1269 = vmul.f32 %v735, %v1210
      %v1270 = vmul.f32 %v736, %v1214
      %v1271 = vmul.f32 %v737, %v1202
      %v1272 = vmul.f32 %v738, %v1206
      %v1273 = vmul.f32 %v739, %v1210
      %v1274 = vmul.f32 %v740, %v1214
      %v1275 = vmul.f32 %v741, %v1202
      %v1276 = vmul.f32 %v742, %v1206
      %v1277 = vmul.f32 %v743, %v1210
      %v1278 = vmul.f32 %v744, %v1214
      %v1279 = vmul.f32 %v745, %v1202
      %v1280 = vmul.f32 %v746, %v1206
      %v1281 = vmul.f32 %v747, %v1210
      %v1282 = vmul.f32 %v748, %v1214
      %v1283 = vmul.f32 %v749, %v1202
      %v1284 = vmul.f32 %v750, %v1206
      %v1285 = vmul.f32 %v751, %v1210
      %v1286 = vmul.f32 %v752, %v1214
      %v1287 = vmul.f32 %v753, %v1202
      %v1288 = vmul.f32 %v754, %v1206
      %v1289 = vmul.f32 %v755, %v1210
      %v1290 = vmul.f32 %v756, %v1214
      %v1291 = vmul.f32 %v757, %v1202
      %v1292 = vmul.f32 %v758, %v1206
      %v1293 = vmul.f32 %v759, %v1210
      %v1294 = vmul.f32 %v760, %v1214
      %v1295 = vmul.f32 %v761, %v1202
      %v1296 = vmul.f32 %v762, %v1206
      %v1297 = vmul.f32 %v763, %v1210
      %v1298 = vmul.f32 %v764, %v1214
      %v1299 = vmul.f32 %v765, %v1202
      %v1300 = vmul.f32 %v766, %v1206
      %v1301 = vmul.f32 %v767, %v1210
      %v1302 = vmul.f32 %v768, %v1214
      %v1303 = vmul.f32 %v769, %v1202
      %v1304 = vmul.f32 %v770, %v1206
      %v1305 = vmul.f32 %v771, %v1210
      %v1306 = vmul.f32 %v772, %v1214
      %v1307 = vmul.f32 %v773, %v1202
      %v1308 = vmul.f32 %v774, %v1206
      %v1309 = vmul.f32 %v775, %v1210
      %v1310 = vmul.f32 %v776, %v1214
      %v1311 = vmul.f32 %v777, %v1202
      %v1312 = vmul.f32 %v778, %v1206
      %v1313 = vmul.f32 %v779, %v1210
      %v1314 = vmul.f32 %v780, %v1214
      %v1315 = vmul.f32 %v781, %v1202
      %v1316 = vmul.f32 %v782, %v1206
      %v1317 = vmul.f32 %v783, %v1210
      %v1318 = vmul.f32 %v784, %v1214
      %v1319 = vmul.f32 %v785, %v1202
      %v1320 = vmul.f32 %v786, %v1206
      %v1321 = vmul.f32 %v787, %v1210
      %v1322 = vmul.f32 %v788, %v1214
      %v1323 = vmul.f32 %v789, %v1202
      %v1324 = vmul.f32 %v790, %v1206
      %v1325 = vmul.f32 %v791, %v1210
      %v1326 = vmul.f32 %v792, %v1214
      %v1327 = vmul.f32 %v793, %v1202
      %v1328 = vmul.f32 %v794, %v1206
      %v1329 = vmul.f32 %v795, %v1210
      %v1330 = vmul.f32 %v796, %v1214
      %v1331 = vmul.f32 %v797, %v1202
      %v1332 = vmul.f32 %v798, %v1206
      %v1333 = vmul.f32 %v799, %v1210
      %v1334 = vmul.f32 %v800, %v1214
      %v1335 = vmul.f32 %v801, %v1202
      %v1336 = vmul.f32 %v802, %v1206
      %v1337 = vmul.f32 %v803, %v1210
      %v1338 = vmul.f32 %v804, %v1214
      %v1339 = vmul.f32 %v805, %v1202
      %v1340 = vmul.f32 %v806, %v1206
      %v1341 = vmul.f32 %v807, %v1210
      %v1342 = vmul.f32 %v808, %v1214
      %v1343 = vmul.f32 %v809, %v1202
      %v1344 = vmul.f32 %v810, %v1206
      %v1345 = vmul.f32 %v811, %v1210
      %v1346 = vmul.f32 %v812, %v1214
      %v1347 = vmul.f32 %v813, %v1202
      %v1348 = vmul.f32 %v814, %v1206
      %v1349 = vmul.f32 %v815, %v1210
      %v1350 = vmul.f32 %v816, %v1214
      %v1351 = vmul.f32 %v817, %v1202
      %v1352 = vmul.f32 %v818, %v1206
      %v1353 = vmul.f32 %v819, %v1210
      %v1354 = vmul.f32 %v820, %v1214
      %v1355 = vmul.f32 %v821, %v1202
      %v1356 = vmul.f32 %v822, %v1206
      %v1357 = vmul.f32 %v823, %v1210
      %v1358 = vmul.f32 %v824, %v1214
      %v1359 = vmul.f32 %v825, %v1202
      %v1360 = vmul.f32 %v826, %v1206
      %v1361 = vmul.f32 %v827, %v1210
      %v1362 = vmul.f32 %v828, %v1214
      %v1363 = vmul.f32 %v829, %v1202
      %v1364 = vmul.f32 %v830, %v1206
      %v1365 = vmul.f32 %v831, %v1210
      %v1366 = vmul.f32 %v832, %v1214
      %v1367 = vmul.f32 %v833, %v1202
      %v1368 = vmul.f32 %v834, %v1206
      %v1369 = vmul.f32 %v835, %v1210
      %v1370 = vmul.f32 %v836, %v1214
      %v1371 = vmul.f32 %v837, %v1202
      %v1372 = vmul.f32 %v838, %v1206
      %v1373 = vmul.f32 %v839, %v1210
      %v1374 = vmul.f32 %v840, %v1214
      %v1375 = vmul.f32 %v841, %v1202
      %v1376 = vmul.f32 %v842, %v1206
      %v1377 = vmul.f32 %v843, %v1210
      %v1378 = vmul.f32 %v844, %v1214
      %v1379 = vmul.f32 %v845, %v1202
      %v1380 = vmul.f32 %v846, %v1206
      %v1381 = vmul.f32 %v847, %v1210
      %v1382 = vmul.f32 %v848, %v1214
      %v1383 = vmul.f32 %v849, %v1202
      %v1384 = vmul.f32 %v850, %v1206
      %v1385 = vmul.f32 %v851, %v1210
      %v1386 = vmul.f32 %v852, %v1214
      %v1387 = vmul.f32 %v853, %v1202
      %v1388 = vmul.f32 %v854, %v1206
      %v1389 = vmul.f32 %v855, %v1210
      %v1390 = vmul.f32 %v856, %v1214
      %v1391 = vmul.f32 %v857, %v1202
      %v1392 = vmul.f32 %v858, %v1206
      %v1393 = vmul.f32 %v859, %v1210
      %v1394 = vmul.f32 %v860, %v1214
      %v1395 = vmul.f32 %v861, %v1202
      %v1396 = vmul.f32 %v862, %v1206
      %v1397 = vmul.f32 %v863, %v1210
      %v1398 = vmul.f32 %v864, %v1214
      %v1399 = vmul.f32 %v865, %v1202
      %v1400 = vmul.f32 %v866, %v1206
      %v1401 = vmul.f32 %v867, %v1210
      %v1402 = vmul.f32 %v868, %v1214
      %v1403 = vmul.f32 %v869, %v1202
      %v1404 = vmul.f32 %v870, %v1206
      %v1405 = vmul.f32 %v871, %v1210
      %v1406 = vmul.f32 %v872, %v1214
      %v1407 = vmul.f32 %v873, %v1202
      %v1408 = vmul.f32 %v874, %v1206
      %v1409 = vmul.f32 %v875, %v1210
      %v1410 = vmul.f32 %v876, %v1214
      %v1411 = vmul.f32 %v877, %v1202
      %v1412 = vmul.f32 %v878, %v1206
      %v1413 = vmul.f32 %v879, %v1210
      %v1414 = vmul.f32 %v880, %v1214
      %v1415 = vmul.f32 %v881, %v1202
      %v1416 = vmul.f32 %v882, %v1206
      %v1417 = vmul.f32 %v883, %v1210
      %v1418 = vmul.f32 %v884, %v1214
      %v1419 = vmul.f32 %v885, %v1202
      %v1420 = vmul.f32 %v886, %v1206
      %v1421 = vmul.f32 %v887, %v1210
      %v1422 = vmul.f32 %v888, %v1214
      %v1423 = vmul.f32 %v889, %v1202
      %v1424 = vmul.f32 %v890, %v1206
      %v1425 = vmul.f32 %v891, %v1210
      %v1426 = vmul.f32 %v892, %v1214
      %v1427 = vmul.f32 %v893, %v1202
      %v1428 = vmul.f32 %v894, %v1206
      %v1429 = vmul.f32 %v895, %v1210
      %v1430 = vmul.f32 %v896, %v1214
      %v1431 = vmul.f32 %v897, %v1202
      %v1432 = vmul.f32 %v898, %v1206
      %v1433 = vmul.f32 %v899, %v1210
      %v1434 = vmul.f32 %v900, %v1214
      %v1435 = vmul.f32 %v901, %v1202
      %v1436 = vmul.f32 %v902, %v1206
      %v1437 = vmul.f32 %v903, %v1210
      %v1438 = vmul.f32 %v904, %v1214
      %v1439 = vmul.f32 %v905, %v1202
      %v1440 = vmul.f32 %v906, %v1206
      %v1441 = vmul.f32 %v907, %v1210
      %v1442 = vmul.f32 %v908, %v1214
      %v1443 = vmul.f32 %v909, %v1202
      %v1444 = vmul.f32 %v910, %v1206
      %v1445 = vmul.f32 %v911, %v1210
      %v1446 = vmul.f32 %v912, %v1214
      %v1447 = vmul.f32 %v913, %v1202
      %v1448 = vmul.f32 %v914, %v1206
      %v1449 = vmul.f32 %v915, %v1210
      %v1450 = vmul.f32 %v916, %v1214
      %v1451 = vmul.f32 %v917, %v1202
      %v1452 = vmul.f32 %v918, %v1206
      %v1453 = vmul.f32 %v919, %v1210
      %v1454 = vmul.f32 %v920, %v1214
      %v1455 = vmul.f32 %v921, %v1202
      %v1456 = vmul.f32 %v922, %v1206
      %v1457 = vmul.f32 %v923, %v1210
      %v1458 = vmul.f32 %v924, %v1214
      %v1459 = vmul.f32 %v925, %v1202
      %v1460 = vmul.f32 %v926, %v1206
      %v1461 = vmul.f32 %v927, %v1210
      %v1462 = vmul.f32 %v928, %v1214
      %v1463 = vmul.f32 %v929, %v1202
      %v1464 = vmul.f32 %v930, %v1206
      %v1465 = vmul.f32 %v931, %v1210
      %v1466 = vmul.f32 %v932, %v1214
      %v1467 = vmul.f32 %v933, %v1202
      %v1468 = vmul.f32 %v934, %v1206
      %v1469 = vmul.f32 %v935, %v1210
      %v1470 = vmul.f32 %v936, %v1214
      %v1471 = vmul.f32 %v937, %v1202
      %v1472 = vmul.f32 %v938, %v1206
      %v1473 = vmul.f32 %v939, %v1210
      %v1474 = vmul.f32 %v940, %v1214
      %v1475 = vmul.f32 %v941, %v1202
      %v1476 = vmul.f32 %v942, %v1206
      %v1477 = vmul.f32 %v943, %v1210
      %v1478 = vmul.f32 %v944, %v1214
      %v1479 = vmul.f32 %v945, %v1202
      %v1480 = vmul.f32 %v946, %v1206
      %v1481 = vmul.f32 %v947, %v1210
      %v1482 = vmul.f32 %v948, %v1214
      %v1483 = vmul.f32 %v949, %v1202
      %v1484 = vmul.f32 %v950, %v1206
      %v1485 = vmul.f32 %v951, %v1210
      %v1486 = vmul.f32 %v952, %v1214
      %v1487 = vmul.f32 %v953, %v1202
      %v1488 = vmul.f32 %v954, %v1206
      %v1489 = vmul.f32 %v955, %v1210
      %v1490 = vmul.f32 %v956, %v1214
      %v1491 = vmul.f32 %v957, %v1202
      %v1492 = vmul.f32 %v958, %v1206
      %v1493 = vmul.f32 %v959, %v1210
      %v1494 = vmul.f32 %v960, %v1214
      %v1495 = vmul.f32 %v961, %v1202
      %v1496 = vmul.f32 %v962, %v1206
      %v1497 = vmul.f32 %v963, %v1210
      %v1498 = vmul.f32 %v964, %v1214
      %v1499 = vmul.f32 %v965, %v1202
      %v1500 = vmul.f32 %v966, %v1206
      %v1501 = vmul.f32 %v967, %v1210
      %v1502 = vmul.f32 %v968, %v1214
      %v1503 = vmul.f32 %v969, %v1202
      %v1504 = vmul.f32 %v970, %v1206
      %v1505 = vmul.f32 %v971, %v1210
      %v1506 = vmul.f32 %v972, %v1214
      %v1507 = vmul.f32 %v973, %v1202
      %v1508 = vmul.f32 %v974, %v1206
      %v1509 = vmul.f32 %v975, %v1210
      %v1510 = vmul.f32 %v976, %v1214
      %v1511 = vmul.f32 %v977, %v1202
      %v1512 = vmul.f32 %v978, %v1206
      %v1513 = vmul.f32 %v979, %v1210
      %v1514 = vmul.f32 %v980, %v1214
      %v1515 = vmul.f32 %v981, %v1202
      %v1516 = vmul.f32 %v982, %v1206
      %v1517 = vmul.f32 %v983, %v1210
      %v1518 = vmul.f32 %v984, %v1214
      %v1519 = vmul.f32 %v985, %v1202
      %v1520 = vmul.f32 %v986, %v1206
      %v1521 = vmul.f32 %v987, %v1210
      %v1522 = vmul.f32 %v988, %v1214
      %v1523 = vmul.f32 %v989, %v1202
      %v1524 = vmul.f32 %v990, %v1206
      %v1525 = vmul.f32 %v991, %v1210
      %v1526 = vmul.f32 %v992, %v1214
      %v1527 = vmul.f32 %v993, %v1202
      %v1528 = vmul.f32 %v994, %v1206
      %v1529 = vmul.f32 %v995, %v1210
      %v1530 = vmul.f32 %v996, %v1214
      %v1531 = vmul.f32 %v997, %v1202
      %v1532 = vmul.f32 %v998, %v1206
      %v1533 = vmul.f32 %v999, %v1210
      %v1534 = vmul.f32 %v1000, %v1214
      %v1535 = vmul.f32 %v1001, %v1202
      %v1536 = vmul.f32 %v1002, %v1206
      %v1537 = vmul.f32 %v1003, %v1210
      %v1538 = vmul.f32 %v1004, %v1214
      %v1539 = vmul.f32 %v1005, %v1202
      %v1540 = vmul.f32 %v1006, %v1206
      %v1541 = vmul.f32 %v1007, %v1210
      %v1542 = vmul.f32 %v1008, %v1214
      %v1543 = vmul.f32 %v1009, %v1202
      %v1544 = vmul.f32 %v1010, %v1206
      %v1545 = vmul.f32 %v1011, %v1210
      %v1546 = vmul.f32 %v1012, %v1214
      %v1547 = vmul.f32 %v1013, %v1202
      %v1548 = vmul.f32 %v1014, %v1206
      %v1549 = vmul.f32 %v1015, %v1210
      %v1550 = vmul.f32 %v1016, %v1214
      %v1551 = vmul.f32 %v1017, %v1202
      %v1552 = vmul.f32 %v1018, %v1206
      %v1553 = vmul.f32 %v1019, %v1210
      %v1554 = vmul.f32 %v1020, %v1214
      %v1555 = vmul.f32 %v1021, %v1202
      %v1556 = vmul.f32 %v1022, %v1206
      %v1557 = vmul.f32 %v1023, %v1210
      %v1558 = vmul.f32 %v1024, %v1214
      %v1559 = vmul.f32 %v1025, %v1202
      %v1560 = vmul.f32 %v1026, %v1206
      %v1561 = vmul.f32 %v1027, %v1210
      %v1562 = vmul.f32 %v1028, %v1214
      %v1563 = vmul.f32 %v1029, %v1202
      %v1564 = vmul.f32 %v1030, %v1206
      %v1565 = vmul.f32 %v1031, %v1210
      %v1566 = vmul.f32 %v1032, %v1214
      %v1567 = vmul.f32 %v1033, %v1202
      %v1568 = vmul.f32 %v1034, %v1206
      %v1569 = vmul.f32 %v1035, %v1210
      %v1570 = vmul.f32 %v1036, %v1214
      %v1571 = vmul.f32 %v1037, %v1202
      %v1572 = vmul.f32 %v1038, %v1206
      %v1573 = vmul.f32 %v1039, %v1210
      %v1574 = vmul.f32 %v1040, %v1214
      %v1575 = vmul.f32 %v1041, %v1202
      %v1576 = vmul.f32 %v1042, %v1206
      %v1577 = vmul.f32 %v1043, %v1210
      %v1578 = vmul.f32 %v1044, %v1214
      %v1579 = vmul.f32 %v1045, %v1202
      %v1580 = vmul.f32 %v1046, %v1206
      %v1581 = vmul.f32 %v1047, %v1210
      %v1582 = vmul.f32 %v1048, %v1214
      %v1583 = vmul.f32 %v1049, %v1202
      %v1584 = vmul.f32 %v1050, %v1206
      %v1585 = vmul.f32 %v1051, %v1210
      %v1586 = vmul.f32 %v1052, %v1214
      %v1587 = vmul.f32 %v1053, %v1202
      %v1588 = vmul.f32 %v1054, %v1206
      %v1589 = vmul.f32 %v1055, %v1210
      %v1590 = vmul.f32 %v1056, %v1214
      %v1591 = vmul.f32 %v1057, %v1202
      %v1592 = vmul.f32 %v1058, %v1206
      %v1593 = vmul.f32 %v1059, %v1210
      %v1594 = vmul.f32 %v1060, %v1214
      %v1595 = vmul.f32 %v1061, %v1202
      %v1596 = vmul.f32 %v1062, %v1206
      %v1597 = vmul.f32 %v1063, %v1210
      %v1598 = vmul.f32 %v1064, %v1214
      %v1599 = vmul.f32 %v1065, %v1202
      %v1600 = vmul.f32 %v1066, %v1206
      %v1601 = vmul.f32 %v1067, %v1210
      %v1602 = vmul.f32 %v1068, %v1214
      %v1603 = vmul.f32 %v1069, %v1202
      %v1604 = vmul.f32 %v1070, %v1206
      %v1605 = vmul.f32 %v1071, %v1210
      %v1606 = vmul.f32 %v1072, %v1214
      %v1607 = vmul.f32 %v1073, %v1202
      %v1608 = vmul.f32 %v1074, %v1206
      %v1609 = vmul.f32 %v1075, %v1210
      %v1610 = vmul.f32 %v1076, %v1214
      %v1611 = vmul.f32 %v1077, %v1202
      %v1612 = vmul.f32 %v1078, %v1206
      %v1613 = vmul.f32 %v1079, %v1210
      %v1614 = vmul.f32 %v1080, %v1214
      %v1615 = vmul.f32 %v1081, %v1202
      %v1616 = vmul.f32 %v1082, %v1206
      %v1617 = vmul.f32 %v1083, %v1210
      %v1618 = vmul.f32 %v1084, %v1214
      %v1619 = vmul.f32 %v1085, %v1202
      %v1620 = vmul.f32 %v1086, %v1206
      %v1621 = vmul.f32 %v1087, %v1210
      %v1622 = vmul.f32 %v1088, %v1214
      %v1623 = vmul.f32 %v1089, %v1202
      %v1624 = vmul.f32 %v1090, %v1206
      %v1625 = vmul.f32 %v1091, %v1210
      %v1626 = vmul.f32 %v1092, %v1214
      %v1627 = vmul.f32 %v1093, %v1202
      %v1628 = vmul.f32 %v1094, %v1206
      %v1629 = vmul.f32 %v1095, %v1210
      %v1630 = vmul.f32 %v1096, %v1214
      %v1631 = vmul.f32 %v1097, %v1202
      %v1632 = vmul.f32 %v1098, %v1206
      %v1633 = vmul.f32 %v1099, %v1210
      %v1634 = vmul.f32 %v1100, %v1214
      %v1635 = vmul.f32 %v1101, %v1202
      %v1636 = vmul.f32 %v1102, %v1206
      %v1637 = vmul.f32 %v1103, %v1210
      %v1638 = vmul.f32 %v1104, %v1214
      %v1639 = vmul.f32 %v1105, %v1202
      %v1640 = vmul.f32 %v1106, %v1206
      %v1641 = vmul.f32 %v1107, %v1210
      %v1642 = vmul.f32 %v1108, %v1214
      %v1643 = vmul.f32 %v1109, %v1202
      %v1644 = vmul.f32 %v1110, %v1206
      %v1645 = vmul.f32 %v1111, %v1210
      %v1646 = vmul.f32 %v1112, %v1214
      %v1647 = vmul.f32 %v1113, %v1202
      %v1648 = vmul.f32 %v1114, %v1206
      %v1649 = vmul.f32 %v1115, %v1210
      %v1650 = vmul.f32 %v1116, %v1214
      %v1651 = vmul.f32 %v1117, %v1202
      %v1652 = vmul.f32 %v1118, %v1206
      %v1653 = vmul.f32 %v1119, %v1210
      %v1654 = vmul.f32 %v1120, %v1214
      %v1655 = vmul.f32 %v1121, %v1202
      %v1656 = vmul.f32 %v1122, %v1206
      %v1657 = vmul.f32 %v1123, %v1210
      %v1658 = vmul.f32 %v1124, %v1214
      %v1659 = vmul.f32 %v1125, %v1202
      %v1660 = vmul.f32 %v1126, %v1206
      %v1661 = vmul.f32 %v1127, %v1210
      %v1662 = vmul.f32 %v1128, %v1214
      %v1663 = vmul.f32 %v1129, %v1202
      %v1664 = vmul.f32 %v1130, %v1206
      %v1665 = vmul.f32 %v1131, %v1210
      %v1666 = vmul.f32 %v1132, %v1214
      %v1667 = vmul.f32 %v1133, %v1202
      %v1668 = vmul.f32 %v1134, %v1206
      %v1669 = vmul.f32 %v1135, %v1210
      %v1670 = vmul.f32 %v1136, %v1214
      %v1671 = vmul.f32 %v1137, %v1202
      %v1672 = vmul.f32 %v1138, %v1206
      %v1673 = vmul.f32 %v1139, %v1210
      %v1674 = vmul.f32 %v1140, %v1214
      %v1675 = vmul.f32 %v1141, %v1202
      %v1676 = vmul.f32 %v1142, %v1206
      %v1677 = vmul.f32 %v1143, %v1210
      %v1678 = vmul.f32 %v1144, %v1214
      %v1679 = vmul.f32 %v1145, %v1202
      %v1680 = vmul.f32 %v1146, %v1206
      %v1681 = vmul.f32 %v1147, %v1210
      %v1682 = vmul.f32 %v1148, %v1214
      %v1683 = vmul.f32 %v1149, %v1202
      %v1684 = vmul.f32 %v1150, %v1206
      %v1685 = vmul.f32 %v1151, %v1210
      %v1686 = vmul.f32 %v1152, %v1214
      %v1687 = vmul.f32 %v1153, %v1202
      %v1688 = vmul.f32 %v1154, %v1206
      %v1689 = vmul.f32 %v1155, %v1210
      %v1690 = vmul.f32 %v1156, %v1214
      %v1691 = vmul.f32 %v1157, %v1202
      %v1692 = vmul.f32 %v1158, %v1206
      %v1693 = vmul.f32 %v1159, %v1210
      %v1694 = vmul.f32 %v1160, %v1214
      %v1695 = vmul.f32 %v1161, %v1202
      %v1696 = vmul.f32 %v1162, %v1206
      %v1697 = vmul.f32 %v1163, %v1210
      %v1698 = vmul.f32 %v1164, %v1214
      %v1699 = vmul.f32 %v1165, %v1202
      %v1700 = vmul.f32 %v1166, %v1206
      %v1701 = vmul.f32 %v1167, %v1210
      %v1702 = vmul.f32 %v1168, %v1214
      %v1703 = vmul.f32 %v1169, %v1202
      %v1704 = vmul.f32 %v1170, %v1206
      %v1705 = vmul.f32 %v1171, %v1210
      %v1706 = vmul.f32 %v1172, %v1214
      %v1707 = vmul.f32 %v1173, %v1202
      %v1708 = vmul.f32 %v1174, %v1206
      %v1709 = vmul.f32 %v1175, %v1210
      %v1710 = vmul.f32 %v1176, %v1214
      %v1711 = vmul.f32 %v1177, %v1202
      %v1712 = vmul.f32 %v1178, %v1206
      %v1713 = vmul.f32 %v1179, %v1210
      %v1714 = vmul.f32 %v1180, %v1214
      %v1715 = vmul.f32 %v1181, %v1202
      %v1716 = vmul.f32 %v1182, %v1206
      %v1717 = vmul.f32 %v1183, %v1210
      %v1718 = vmul.f32 %v1184, %v1214
      %v1719 = vmul.f32 %v1185, %v1202
      %v1720 = vmul.f32 %v1186, %v1206
      %v1721 = vmul.f32 %v1187, %v1210
      %v1722 = vmul.f32 %v1188, %v1214
      %v1723 = vmul.f32 %v1189, %v1202
      %v1724 = vmul.f32 %v1190, %v1206
      %v1725 = vmul.f32 %v1191, %v1210
      %v1726 = vmul.f32 %v1192, %v1214
      %v1727 = vmul.f32 %v1193, %v1202
      %v1728 = vmul.f32 %v1194, %v1206
      %v1729 = vmul.f32 %v1195, %v1210
      %v1730 = vmul.f32 %v1196, %v1214
      %v1731 = vpack.c.bf16 %v1223, %v1219
      %v1732 = vpack.c.bf16 %v1224, %v1220
      %v1733 = vpack.c.bf16 %v1225, %v1221
      %v1734 = vpack.c.bf16 %v1226, %v1222
      %v1735 = vpack.c.bf16 %v1231, %v1227
      %v1736 = vpack.c.bf16 %v1232, %v1228
      %v1737 = vpack.c.bf16 %v1233, %v1229
      %v1738 = vpack.c.bf16 %v1234, %v1230
      %v1739 = vpack.c.bf16 %v1239, %v1235
      %v1740 = vpack.c.bf16 %v1240, %v1236
      %v1741 = vpack.c.bf16 %v1241, %v1237
      %v1742 = vpack.c.bf16 %v1242, %v1238
      %v1743 = vpack.c.bf16 %v1247, %v1243
      %v1744 = vpack.c.bf16 %v1248, %v1244
      %v1745 = vpack.c.bf16 %v1249, %v1245
      %v1746 = vpack.c.bf16 %v1250, %v1246
      %v1747 = vpack.c.bf16 %v1255, %v1251
      %v1748 = vpack.c.bf16 %v1256, %v1252
      %v1749 = vpack.c.bf16 %v1257, %v1253
      %v1750 = vpack.c.bf16 %v1258, %v1254
      %v1751 = vpack.c.bf16 %v1263, %v1259
      %v1752 = vpack.c.bf16 %v1264, %v1260
      %v1753 = vpack.c.bf16 %v1265, %v1261
      %v1754 = vpack.c.bf16 %v1266, %v1262
      %v1755 = vpack.c.bf16 %v1271, %v1267
      %v1756 = vpack.c.bf16 %v1272, %v1268
      %v1757 = vpack.c.bf16 %v1273, %v1269
      %v1758 = vpack.c.bf16 %v1274, %v1270
      %v1759 = vpack.c.bf16 %v1279, %v1275
      %v1760 = vpack.c.bf16 %v1280, %v1276
      %v1761 = vpack.c.bf16 %v1281, %v1277
      %v1762 = vpack.c.bf16 %v1282, %v1278
      %v1763 = vpack.c.bf16 %v1287, %v1283
      %v1764 = vpack.c.bf16 %v1288, %v1284
      %v1765 = vpack.c.bf16 %v1289, %v1285
      %v1766 = vpack.c.bf16 %v1290, %v1286
      %v1767 = vpack.c.bf16 %v1295, %v1291
      %v1768 = vpack.c.bf16 %v1296, %v1292
      %v1769 = vpack.c.bf16 %v1297, %v1293
      %v1770 = vpack.c.bf16 %v1298, %v1294
      %v1771 = vpack.c.bf16 %v1303, %v1299
      %v1772 = vpack.c.bf16 %v1304, %v1300
      %v1773 = vpack.c.bf16 %v1305, %v1301
      %v1774 = vpack.c.bf16 %v1306, %v1302
      %v1775 = vpack.c.bf16 %v1311, %v1307
      %v1776 = vpack.c.bf16 %v1312, %v1308
      %v1777 = vpack.c.bf16 %v1313, %v1309
      %v1778 = vpack.c.bf16 %v1314, %v1310
      %v1779 = vpack.c.bf16 %v1319, %v1315
      %v1780 = vpack.c.bf16 %v1320, %v1316
      %v1781 = vpack.c.bf16 %v1321, %v1317
      %v1782 = vpack.c.bf16 %v1322, %v1318
      %v1783 = vpack.c.bf16 %v1327, %v1323
      %v1784 = vpack.c.bf16 %v1328, %v1324
      %v1785 = vpack.c.bf16 %v1329, %v1325
      %v1786 = vpack.c.bf16 %v1330, %v1326
      %v1787 = vpack.c.bf16 %v1335, %v1331
      %v1788 = vpack.c.bf16 %v1336, %v1332
      %v1789 = vpack.c.bf16 %v1337, %v1333
      %v1790 = vpack.c.bf16 %v1338, %v1334
      %v1791 = vpack.c.bf16 %v1343, %v1339
      %v1792 = vpack.c.bf16 %v1344, %v1340
      %v1793 = vpack.c.bf16 %v1345, %v1341
      %v1794 = vpack.c.bf16 %v1346, %v1342
      %v1795 = vpack.c.bf16 %v1351, %v1347
      %v1796 = vpack.c.bf16 %v1352, %v1348
      %v1797 = vpack.c.bf16 %v1353, %v1349
      %v1798 = vpack.c.bf16 %v1354, %v1350
      %v1799 = vpack.c.bf16 %v1359, %v1355
      %v1800 = vpack.c.bf16 %v1360, %v1356
      %v1801 = vpack.c.bf16 %v1361, %v1357
      %v1802 = vpack.c.bf16 %v1362, %v1358
      %v1803 = vpack.c.bf16 %v1367, %v1363
      %v1804 = vpack.c.bf16 %v1368, %v1364
      %v1805 = vpack.c.bf16 %v1369, %v1365
      %v1806 = vpack.c.bf16 %v1370, %v1366
      %v1807 = vpack.c.bf16 %v1375, %v1371
      %v1808 = vpack.c.bf16 %v1376, %v1372
      %v1809 = vpack.c.bf16 %v1377, %v1373
      %v1810 = vpack.c.bf16 %v1378, %v1374
      %v1811 = vpack.c.bf16 %v1383, %v1379
      %v1812 = vpack.c.bf16 %v1384, %v1380
      %v1813 = vpack.c.bf16 %v1385, %v1381
      %v1814 = vpack.c.bf16 %v1386, %v1382
      %v1815 = vpack.c.bf16 %v1391, %v1387
      %v1816 = vpack.c.bf16 %v1392, %v1388
      %v1817 = vpack.c.bf16 %v1393, %v1389
      %v1818 = vpack.c.bf16 %v1394, %v1390
      %v1819 = vpack.c.bf16 %v1399, %v1395
      %v1820 = vpack.c.bf16 %v1400, %v1396
      %v1821 = vpack.c.bf16 %v1401, %v1397
      %v1822 = vpack.c.bf16 %v1402, %v1398
      %v1823 = vpack.c.bf16 %v1407, %v1403
      %v1824 = vpack.c.bf16 %v1408, %v1404
      %v1825 = vpack.c.bf16 %v1409, %v1405
      %v1826 = vpack.c.bf16 %v1410, %v1406
      %v1827 = vpack.c.bf16 %v1415, %v1411
      %v1828 = vpack.c.bf16 %v1416, %v1412
      %v1829 = vpack.c.bf16 %v1417, %v1413
      %v1830 = vpack.c.bf16 %v1418, %v1414
      %v1831 = vpack.c.bf16 %v1423, %v1419
      %v1832 = vpack.c.bf16 %v1424, %v1420
      %v1833 = vpack.c.bf16 %v1425, %v1421
      %v1834 = vpack.c.bf16 %v1426, %v1422
      %v1835 = vpack.c.bf16 %v1431, %v1427
      %v1836 = vpack.c.bf16 %v1432, %v1428
      %v1837 = vpack.c.bf16 %v1433, %v1429
      %v1838 = vpack.c.bf16 %v1434, %v1430
      %v1839 = vpack.c.bf16 %v1439, %v1435
      %v1840 = vpack.c.bf16 %v1440, %v1436
      %v1841 = vpack.c.bf16 %v1441, %v1437
      %v1842 = vpack.c.bf16 %v1442, %v1438
      %v1843 = vpack.c.bf16 %v1447, %v1443
      %v1844 = vpack.c.bf16 %v1448, %v1444
      %v1845 = vpack.c.bf16 %v1449, %v1445
      %v1846 = vpack.c.bf16 %v1450, %v1446
      %v1847 = vpack.c.bf16 %v1455, %v1451
      %v1848 = vpack.c.bf16 %v1456, %v1452
      %v1849 = vpack.c.bf16 %v1457, %v1453
      %v1850 = vpack.c.bf16 %v1458, %v1454
      %v1851 = vpack.c.bf16 %v1463, %v1459
      %v1852 = vpack.c.bf16 %v1464, %v1460
      %v1853 = vpack.c.bf16 %v1465, %v1461
      %v1854 = vpack.c.bf16 %v1466, %v1462
      %v1855 = vpack.c.bf16 %v1471, %v1467
      %v1856 = vpack.c.bf16 %v1472, %v1468
      %v1857 = vpack.c.bf16 %v1473, %v1469
      %v1858 = vpack.c.bf16 %v1474, %v1470
      %v1859 = vpack.c.bf16 %v1479, %v1475
      %v1860 = vpack.c.bf16 %v1480, %v1476
      %v1861 = vpack.c.bf16 %v1481, %v1477
      %v1862 = vpack.c.bf16 %v1482, %v1478
      %v1863 = vpack.c.bf16 %v1487, %v1483
      %v1864 = vpack.c.bf16 %v1488, %v1484
      %v1865 = vpack.c.bf16 %v1489, %v1485
      %v1866 = vpack.c.bf16 %v1490, %v1486
      %v1867 = vpack.c.bf16 %v1495, %v1491
      %v1868 = vpack.c.bf16 %v1496, %v1492
      %v1869 = vpack.c.bf16 %v1497, %v1493
      %v1870 = vpack.c.bf16 %v1498, %v1494
      %v1871 = vpack.c.bf16 %v1503, %v1499
      %v1872 = vpack.c.bf16 %v1504, %v1500
      %v1873 = vpack.c.bf16 %v1505, %v1501
      %v1874 = vpack.c.bf16 %v1506, %v1502
      %v1875 = vpack.c.bf16 %v1511, %v1507
      %v1876 = vpack.c.bf16 %v1512, %v1508
      %v1877 = vpack.c.bf16 %v1513, %v1509
      %v1878 = vpack.c.bf16 %v1514, %v1510
      %v1879 = vpack.c.bf16 %v1519, %v1515
      %v1880 = vpack.c.bf16 %v1520, %v1516
      %v1881 = vpack.c.bf16 %v1521, %v1517
      %v1882 = vpack.c.bf16 %v1522, %v1518
      %v1883 = vpack.c.bf16 %v1527, %v1523
      %v1884 = vpack.c.bf16 %v1528, %v1524
      %v1885 = vpack.c.bf16 %v1529, %v1525
      %v1886 = vpack.c.bf16 %v1530, %v1526
      %v1887 = vpack.c.bf16 %v1535, %v1531
      %v1888 = vpack.c.bf16 %v1536, %v1532
      %v1889 = vpack.c.bf16 %v1537, %v1533
      %v1890 = vpack.c.bf16 %v1538, %v1534
      %v1891 = vpack.c.bf16 %v1543, %v1539
      %v1892 = vpack.c.bf16 %v1544, %v1540
      %v1893 = vpack.c.bf16 %v1545, %v1541
      %v1894 = vpack.c.bf16 %v1546, %v1542
      %v1895 = vpack.c.bf16 %v1551, %v1547
      %v1896 = vpack.c.bf16 %v1552, %v1548
      %v1897 = vpack.c.bf16 %v1553, %v1549
      %v1898 = vpack.c.bf16 %v1554, %v1550
      %v1899 = vpack.c.bf16 %v1559, %v1555
      %v1900 = vpack.c.bf16 %v1560, %v1556
      %v1901 = vpack.c.bf16 %v1561, %v1557
      %v1902 = vpack.c.bf16 %v1562, %v1558
      %v1903 = vpack.c.bf16 %v1567, %v1563
      %v1904 = vpack.c.bf16 %v1568, %v1564
      %v1905 = vpack.c.bf16 %v1569, %v1565
      %v1906 = vpack.c.bf16 %v1570, %v1566
      %v1907 = vpack.c.bf16 %v1575, %v1571
      %v1908 = vpack.c.bf16 %v1576, %v1572
      %v1909 = vpack.c.bf16 %v1577, %v1573
      %v1910 = vpack.c.bf16 %v1578, %v1574
      %v1911 = vpack.c.bf16 %v1583, %v1579
      %v1912 = vpack.c.bf16 %v1584, %v1580
      %v1913 = vpack.c.bf16 %v1585, %v1581
      %v1914 = vpack.c.bf16 %v1586, %v1582
      %v1915 = vpack.c.bf16 %v1591, %v1587
      %v1916 = vpack.c.bf16 %v1592, %v1588
      %v1917 = vpack.c.bf16 %v1593, %v1589
      %v1918 = vpack.c.bf16 %v1594, %v1590
      %v1919 = vpack.c.bf16 %v1599, %v1595
      %v1920 = vpack.c.bf16 %v1600, %v1596
      %v1921 = vpack.c.bf16 %v1601, %v1597
      %v1922 = vpack.c.bf16 %v1602, %v1598
      %v1923 = vpack.c.bf16 %v1607, %v1603
      %v1924 = vpack.c.bf16 %v1608, %v1604
      %v1925 = vpack.c.bf16 %v1609, %v1605
      %v1926 = vpack.c.bf16 %v1610, %v1606
      %v1927 = vpack.c.bf16 %v1615, %v1611
      %v1928 = vpack.c.bf16 %v1616, %v1612
      %v1929 = vpack.c.bf16 %v1617, %v1613
      %v1930 = vpack.c.bf16 %v1618, %v1614
      %v1931 = vpack.c.bf16 %v1623, %v1619
      %v1932 = vpack.c.bf16 %v1624, %v1620
      %v1933 = vpack.c.bf16 %v1625, %v1621
      %v1934 = vpack.c.bf16 %v1626, %v1622
      %v1935 = vpack.c.bf16 %v1631, %v1627
      %v1936 = vpack.c.bf16 %v1632, %v1628
      %v1937 = vpack.c.bf16 %v1633, %v1629
      %v1938 = vpack.c.bf16 %v1634, %v1630
      %v1939 = vpack.c.bf16 %v1639, %v1635
      %v1940 = vpack.c.bf16 %v1640, %v1636
      %v1941 = vpack.c.bf16 %v1641, %v1637
      %v1942 = vpack.c.bf16 %v1642, %v1638
      %v1943 = vpack.c.bf16 %v1647, %v1643
      %v1944 = vpack.c.bf16 %v1648, %v1644
      %v1945 = vpack.c.bf16 %v1649, %v1645
      %v1946 = vpack.c.bf16 %v1650, %v1646
      %v1947 = vpack.c.bf16 %v1655, %v1651
      %v1948 = vpack.c.bf16 %v1656, %v1652
      %v1949 = vpack.c.bf16 %v1657, %v1653
      %v1950 = vpack.c.bf16 %v1658, %v1654
      %v1951 = vpack.c.bf16 %v1663, %v1659
      %v1952 = vpack.c.bf16 %v1664, %v1660
      %v1953 = vpack.c.bf16 %v1665, %v1661
      %v1954 = vpack.c.bf16 %v1666, %v1662
      %v1955 = vpack.c.bf16 %v1671, %v1667
      %v1956 = vpack.c.bf16 %v1672, %v1668
      %v1957 = vpack.c.bf16 %v1673, %v1669
      %v1958 = vpack.c.bf16 %v1674, %v1670
      %v1959 = vpack.c.bf16 %v1679, %v1675
      %v1960 = vpack.c.bf16 %v1680, %v1676
      %v1961 = vpack.c.bf16 %v1681, %v1677
      %v1962 = vpack.c.bf16 %v1682, %v1678
      %v1963 = vpack.c.bf16 %v1687, %v1683
      %v1964 = vpack.c.bf16 %v1688, %v1684
      %v1965 = vpack.c.bf16 %v1689, %v1685
      %v1966 = vpack.c.bf16 %v1690, %v1686
      %v1967 = vpack.c.bf16 %v1695, %v1691
      %v1968 = vpack.c.bf16 %v1696, %v1692
      %v1969 = vpack.c.bf16 %v1697, %v1693
      %v1970 = vpack.c.bf16 %v1698, %v1694
      %v1971 = vpack.c.bf16 %v1703, %v1699
      %v1972 = vpack.c.bf16 %v1704, %v1700
      %v1973 = vpack.c.bf16 %v1705, %v1701
      %v1974 = vpack.c.bf16 %v1706, %v1702
      %v1975 = vpack.c.bf16 %v1711, %v1707
      %v1976 = vpack.c.bf16 %v1712, %v1708
      %v1977 = vpack.c.bf16 %v1713, %v1709
      %v1978 = vpack.c.bf16 %v1714, %v1710
      %v1979 = vpack.c.bf16 %v1719, %v1715
      %v1980 = vpack.c.bf16 %v1720, %v1716
      %v1981 = vpack.c.bf16 %v1721, %v1717
      %v1982 = vpack.c.bf16 %v1722, %v1718
      %v1983 = vpack.c.bf16 %v1727, %v1723
      %v1984 = vpack.c.bf16 %v1728, %v1724
      %v1985 = vpack.c.bf16 %v1729, %v1725
      %v1986 = vpack.c.bf16 %v1730, %v1726
      %v2243 = vunpack.c.l.b16 %v1731
      %v2244 = vunpack.c.l.b16 %v1732
      %v2245 = vunpack.c.l.b16 %v1733
      %v2246 = vunpack.c.l.b16 %v1734
      %v2247 = vunpack.c.h.b16 %v1731
      %v2248 = vunpack.c.h.b16 %v1732
      %v2249 = vunpack.c.h.b16 %v1733
      %v2250 = vunpack.c.h.b16 %v1734
      %v2251 = vunpack.c.l.b16 %v1735
      %v2252 = vunpack.c.l.b16 %v1736
      %v2253 = vunpack.c.l.b16 %v1737
      %v2254 = vunpack.c.l.b16 %v1738
      %v2255 = vunpack.c.h.b16 %v1735
      %v2256 = vunpack.c.h.b16 %v1736
      %v2257 = vunpack.c.h.b16 %v1737
      %v2258 = vunpack.c.h.b16 %v1738
      %v2259 = vunpack.c.l.b16 %v1739
      %v2260 = vunpack.c.l.b16 %v1740
      %v2261 = vunpack.c.l.b16 %v1741
      %v2262 = vunpack.c.l.b16 %v1742
      %v2263 = vunpack.c.h.b16 %v1739
      %v2264 = vunpack.c.h.b16 %v1740
      %v2265 = vunpack.c.h.b16 %v1741
      %v2266 = vunpack.c.h.b16 %v1742
      %v2267 = vunpack.c.l.b16 %v1743
      %v2268 = vunpack.c.l.b16 %v1744
      %v2269 = vunpack.c.l.b16 %v1745
      %v2270 = vunpack.c.l.b16 %v1746
      %v2271 = vunpack.c.h.b16 %v1743
      %v2272 = vunpack.c.h.b16 %v1744
      %v2273 = vunpack.c.h.b16 %v1745
      %v2274 = vunpack.c.h.b16 %v1746
      %v2275 = vunpack.c.l.b16 %v1747
      %v2276 = vunpack.c.l.b16 %v1748
      %v2277 = vunpack.c.l.b16 %v1749
      %v2278 = vunpack.c.l.b16 %v1750
      %v2279 = vunpack.c.h.b16 %v1747
      %v2280 = vunpack.c.h.b16 %v1748
      %v2281 = vunpack.c.h.b16 %v1749
      %v2282 = vunpack.c.h.b16 %v1750
      %v2283 = vunpack.c.l.b16 %v1751
      %v2284 = vunpack.c.l.b16 %v1752
      %v2285 = vunpack.c.l.b16 %v1753
      %v2286 = vunpack.c.l.b16 %v1754
      %v2287 = vunpack.c.h.b16 %v1751
      %v2288 = vunpack.c.h.b16 %v1752
      %v2289 = vunpack.c.h.b16 %v1753
      %v2290 = vunpack.c.h.b16 %v1754
      %v2291 = vunpack.c.l.b16 %v1755
      %v2292 = vunpack.c.l.b16 %v1756
      %v2293 = vunpack.c.l.b16 %v1757
      %v2294 = vunpack.c.l.b16 %v1758
      %v2295 = vunpack.c.h.b16 %v1755
      %v2296 = vunpack.c.h.b16 %v1756
      %v2297 = vunpack.c.h.b16 %v1757
      %v2298 = vunpack.c.h.b16 %v1758
      %v2299 = vunpack.c.l.b16 %v1759
      %v2300 = vunpack.c.l.b16 %v1760
      %v2301 = vunpack.c.l.b16 %v1761
      %v2302 = vunpack.c.l.b16 %v1762
      %v2303 = vunpack.c.h.b16 %v1759
      %v2304 = vunpack.c.h.b16 %v1760
      %v2305 = vunpack.c.h.b16 %v1761
      %v2306 = vunpack.c.h.b16 %v1762
      %v2307 = vunpack.c.l.b16 %v1763
      %v2308 = vunpack.c.l.b16 %v1764
      %v2309 = vunpack.c.l.b16 %v1765
      %v2310 = vunpack.c.l.b16 %v1766
      %v2311 = vunpack.c.h.b16 %v1763
      %v2312 = vunpack.c.h.b16 %v1764
      %v2313 = vunpack.c.h.b16 %v1765
      %v2314 = vunpack.c.h.b16 %v1766
      %v2315 = vunpack.c.l.b16 %v1767
      %v2316 = vunpack.c.l.b16 %v1768
      %v2317 = vunpack.c.l.b16 %v1769
      %v2318 = vunpack.c.l.b16 %v1770
      %v2319 = vunpack.c.h.b16 %v1767
      %v2320 = vunpack.c.h.b16 %v1768
      %v2321 = vunpack.c.h.b16 %v1769
      %v2322 = vunpack.c.h.b16 %v1770
      %v2323 = vunpack.c.l.b16 %v1771
      %v2324 = vunpack.c.l.b16 %v1772
      %v2325 = vunpack.c.l.b16 %v1773
      %v2326 = vunpack.c.l.b16 %v1774
      %v2327 = vunpack.c.h.b16 %v1771
      %v2328 = vunpack.c.h.b16 %v1772
      %v2329 = vunpack.c.h.b16 %v1773
      %v2330 = vunpack.c.h.b16 %v1774
      %v2331 = vunpack.c.l.b16 %v1775
      %v2332 = vunpack.c.l.b16 %v1776
      %v2333 = vunpack.c.l.b16 %v1777
      %v2334 = vunpack.c.l.b16 %v1778
      %v2335 = vunpack.c.h.b16 %v1775
      %v2336 = vunpack.c.h.b16 %v1776
      %v2337 = vunpack.c.h.b16 %v1777
      %v2338 = vunpack.c.h.b16 %v1778
      %v2339 = vunpack.c.l.b16 %v1779
      %v2340 = vunpack.c.l.b16 %v1780
      %v2341 = vunpack.c.l.b16 %v1781
      %v2342 = vunpack.c.l.b16 %v1782
      %v2343 = vunpack.c.h.b16 %v1779
      %v2344 = vunpack.c.h.b16 %v1780
      %v2345 = vunpack.c.h.b16 %v1781
      %v2346 = vunpack.c.h.b16 %v1782
      %v2347 = vunpack.c.l.b16 %v1783
      %v2348 = vunpack.c.l.b16 %v1784
      %v2349 = vunpack.c.l.b16 %v1785
      %v2350 = vunpack.c.l.b16 %v1786
      %v2351 = vunpack.c.h.b16 %v1783
      %v2352 = vunpack.c.h.b16 %v1784
      %v2353 = vunpack.c.h.b16 %v1785
      %v2354 = vunpack.c.h.b16 %v1786
      %v2355 = vunpack.c.l.b16 %v1787
      %v2356 = vunpack.c.l.b16 %v1788
      %v2357 = vunpack.c.l.b16 %v1789
      %v2358 = vunpack.c.l.b16 %v1790
      %v2359 = vunpack.c.h.b16 %v1787
      %v2360 = vunpack.c.h.b16 %v1788
      %v2361 = vunpack.c.h.b16 %v1789
      %v2362 = vunpack.c.h.b16 %v1790
      %v2363 = vunpack.c.l.b16 %v1791
      %v2364 = vunpack.c.l.b16 %v1792
      %v2365 = vunpack.c.l.b16 %v1793
      %v2366 = vunpack.c.l.b16 %v1794
      %v2367 = vunpack.c.h.b16 %v1791
      %v2368 = vunpack.c.h.b16 %v1792
      %v2369 = vunpack.c.h.b16 %v1793
      %v2370 = vunpack.c.h.b16 %v1794
      %v2371 = vunpack.c.l.b16 %v1795
      %v2372 = vunpack.c.l.b16 %v1796
      %v2373 = vunpack.c.l.b16 %v1797
      %v2374 = vunpack.c.l.b16 %v1798
      %v2375 = vunpack.c.h.b16 %v1795
      %v2376 = vunpack.c.h.b16 %v1796
      %v2377 = vunpack.c.h.b16 %v1797
      %v2378 = vunpack.c.h.b16 %v1798
      %v2379 = vunpack.c.l.b16 %v1799
      %v2380 = vunpack.c.l.b16 %v1800
      %v2381 = vunpack.c.l.b16 %v1801
      %v2382 = vunpack.c.l.b16 %v1802
      %v2383 = vunpack.c.h.b16 %v1799
      %v2384 = vunpack.c.h.b16 %v1800
      %v2385 = vunpack.c.h.b16 %v1801
      %v2386 = vunpack.c.h.b16 %v1802
      %v2387 = vunpack.c.l.b16 %v1803
      %v2388 = vunpack.c.l.b16 %v1804
      %v2389 = vunpack.c.l.b16 %v1805
      %v2390 = vunpack.c.l.b16 %v1806
      %v2391 = vunpack.c.h.b16 %v1803
      %v2392 = vunpack.c.h.b16 %v1804
      %v2393 = vunpack.c.h.b16 %v1805
      %v2394 = vunpack.c.h.b16 %v1806
      %v2395 = vunpack.c.l.b16 %v1807
      %v2396 = vunpack.c.l.b16 %v1808
      %v2397 = vunpack.c.l.b16 %v1809
      %v2398 = vunpack.c.l.b16 %v1810
      %v2399 = vunpack.c.h.b16 %v1807
      %v2400 = vunpack.c.h.b16 %v1808
      %v2401 = vunpack.c.h.b16 %v1809
      %v2402 = vunpack.c.h.b16 %v1810
      %v2403 = vunpack.c.l.b16 %v1811
      %v2404 = vunpack.c.l.b16 %v1812
      %v2405 = vunpack.c.l.b16 %v1813
      %v2406 = vunpack.c.l.b16 %v1814
      %v2407 = vunpack.c.h.b16 %v1811
      %v2408 = vunpack.c.h.b16 %v1812
      %v2409 = vunpack.c.h.b16 %v1813
      %v2410 = vunpack.c.h.b16 %v1814
      %v2411 = vunpack.c.l.b16 %v1815
      %v2412 = vunpack.c.l.b16 %v1816
      %v2413 = vunpack.c.l.b16 %v1817
      %v2414 = vunpack.c.l.b16 %v1818
      %v2415 = vunpack.c.h.b16 %v1815
      %v2416 = vunpack.c.h.b16 %v1816
      %v2417 = vunpack.c.h.b16 %v1817
      %v2418 = vunpack.c.h.b16 %v1818
      %v2419 = vunpack.c.l.b16 %v1819
      %v2420 = vunpack.c.l.b16 %v1820
      %v2421 = vunpack.c.l.b16 %v1821
      %v2422 = vunpack.c.l.b16 %v1822
      %v2423 = vunpack.c.h.b16 %v1819
      %v2424 = vunpack.c.h.b16 %v1820
      %v2425 = vunpack.c.h.b16 %v1821
      %v2426 = vunpack.c.h.b16 %v1822
      %v2427 = vunpack.c.l.b16 %v1823
      %v2428 = vunpack.c.l.b16 %v1824
      %v2429 = vunpack.c.l.b16 %v1825
      %v2430 = vunpack.c.l.b16 %v1826
      %v2431 = vunpack.c.h.b16 %v1823
      %v2432 = vunpack.c.h.b16 %v1824
      %v2433 = vunpack.c.h.b16 %v1825
      %v2434 = vunpack.c.h.b16 %v1826
      %v2435 = vunpack.c.l.b16 %v1827
      %v2436 = vunpack.c.l.b16 %v1828
      %v2437 = vunpack.c.l.b16 %v1829
      %v2438 = vunpack.c.l.b16 %v1830
      %v2439 = vunpack.c.h.b16 %v1827
      %v2440 = vunpack.c.h.b16 %v1828
      %v2441 = vunpack.c.h.b16 %v1829
      %v2442 = vunpack.c.h.b16 %v1830
      %v2443 = vunpack.c.l.b16 %v1831
      %v2444 = vunpack.c.l.b16 %v1832
      %v2445 = vunpack.c.l.b16 %v1833
      %v2446 = vunpack.c.l.b16 %v1834
      %v2447 = vunpack.c.h.b16 %v1831
      %v2448 = vunpack.c.h.b16 %v1832
      %v2449 = vunpack.c.h.b16 %v1833
      %v2450 = vunpack.c.h.b16 %v1834
      %v2451 = vunpack.c.l.b16 %v1835
      %v2452 = vunpack.c.l.b16 %v1836
      %v2453 = vunpack.c.l.b16 %v1837
      %v2454 = vunpack.c.l.b16 %v1838
      %v2455 = vunpack.c.h.b16 %v1835
      %v2456 = vunpack.c.h.b16 %v1836
      %v2457 = vunpack.c.h.b16 %v1837
      %v2458 = vunpack.c.h.b16 %v1838
      %v2459 = vunpack.c.l.b16 %v1839
      %v2460 = vunpack.c.l.b16 %v1840
      %v2461 = vunpack.c.l.b16 %v1841
      %v2462 = vunpack.c.l.b16 %v1842
      %v2463 = vunpack.c.h.b16 %v1839
      %v2464 = vunpack.c.h.b16 %v1840
      %v2465 = vunpack.c.h.b16 %v1841
      %v2466 = vunpack.c.h.b16 %v1842
      %v2467 = vunpack.c.l.b16 %v1843
      %v2468 = vunpack.c.l.b16 %v1844
      %v2469 = vunpack.c.l.b16 %v1845
      %v2470 = vunpack.c.l.b16 %v1846
      %v2471 = vunpack.c.h.b16 %v1843
      %v2472 = vunpack.c.h.b16 %v1844
      %v2473 = vunpack.c.h.b16 %v1845
      %v2474 = vunpack.c.h.b16 %v1846
      %v2475 = vunpack.c.l.b16 %v1847
      %v2476 = vunpack.c.l.b16 %v1848
      %v2477 = vunpack.c.l.b16 %v1849
      %v2478 = vunpack.c.l.b16 %v1850
      %v2479 = vunpack.c.h.b16 %v1847
      %v2480 = vunpack.c.h.b16 %v1848
      %v2481 = vunpack.c.h.b16 %v1849
      %v2482 = vunpack.c.h.b16 %v1850
      %v2483 = vunpack.c.l.b16 %v1851
      %v2484 = vunpack.c.l.b16 %v1852
      %v2485 = vunpack.c.l.b16 %v1853
      %v2486 = vunpack.c.l.b16 %v1854
      %v2487 = vunpack.c.h.b16 %v1851
      %v2488 = vunpack.c.h.b16 %v1852
      %v2489 = vunpack.c.h.b16 %v1853
      %v2490 = vunpack.c.h.b16 %v1854
      %v2491 = vunpack.c.l.b16 %v1855
      %v2492 = vunpack.c.l.b16 %v1856
      %v2493 = vunpack.c.l.b16 %v1857
      %v2494 = vunpack.c.l.b16 %v1858
      %v2495 = vunpack.c.h.b16 %v1855
      %v2496 = vunpack.c.h.b16 %v1856
      %v2497 = vunpack.c.h.b16 %v1857
      %v2498 = vunpack.c.h.b16 %v1858
      %v2499 = vunpack.c.l.b16 %v1859
      %v2500 = vunpack.c.l.b16 %v1860
      %v2501 = vunpack.c.l.b16 %v1861
      %v2502 = vunpack.c.l.b16 %v1862
      %v2503 = vunpack.c.h.b16 %v1859
      %v2504 = vunpack.c.h.b16 %v1860
      %v2505 = vunpack.c.h.b16 %v1861
      %v2506 = vunpack.c.h.b16 %v1862
      %v2507 = vunpack.c.l.b16 %v1863
      %v2508 = vunpack.c.l.b16 %v1864
      %v2509 = vunpack.c.l.b16 %v1865
      %v2510 = vunpack.c.l.b16 %v1866
      %v2511 = vunpack.c.h.b16 %v1863
      %v2512 = vunpack.c.h.b16 %v1864
      %v2513 = vunpack.c.h.b16 %v1865
      %v2514 = vunpack.c.h.b16 %v1866
      %v2515 = vunpack.c.l.b16 %v1867
      %v2516 = vunpack.c.l.b16 %v1868
      %v2517 = vunpack.c.l.b16 %v1869
      %v2518 = vunpack.c.l.b16 %v1870
      %v2519 = vunpack.c.h.b16 %v1867
      %v2520 = vunpack.c.h.b16 %v1868
      %v2521 = vunpack.c.h.b16 %v1869
      %v2522 = vunpack.c.h.b16 %v1870
      %v2523 = vunpack.c.l.b16 %v1871
      %v2524 = vunpack.c.l.b16 %v1872
      %v2525 = vunpack.c.l.b16 %v1873
      %v2526 = vunpack.c.l.b16 %v1874
      %v2527 = vunpack.c.h.b16 %v1871
      %v2528 = vunpack.c.h.b16 %v1872
      %v2529 = vunpack.c.h.b16 %v1873
      %v2530 = vunpack.c.h.b16 %v1874
      %v2531 = vunpack.c.l.b16 %v1875
      %v2532 = vunpack.c.l.b16 %v1876
      %v2533 = vunpack.c.l.b16 %v1877
      %v2534 = vunpack.c.l.b16 %v1878
      %v2535 = vunpack.c.h.b16 %v1875
      %v2536 = vunpack.c.h.b16 %v1876
      %v2537 = vunpack.c.h.b16 %v1877
      %v2538 = vunpack.c.h.b16 %v1878
      %v2539 = vunpack.c.l.b16 %v1879
      %v2540 = vunpack.c.l.b16 %v1880
      %v2541 = vunpack.c.l.b16 %v1881
      %v2542 = vunpack.c.l.b16 %v1882
      %v2543 = vunpack.c.h.b16 %v1879
      %v2544 = vunpack.c.h.b16 %v1880
      %v2545 = vunpack.c.h.b16 %v1881
      %v2546 = vunpack.c.h.b16 %v1882
      %v2547 = vunpack.c.l.b16 %v1883
      %v2548 = vunpack.c.l.b16 %v1884
      %v2549 = vunpack.c.l.b16 %v1885
      %v2550 = vunpack.c.l.b16 %v1886
      %v2551 = vunpack.c.h.b16 %v1883
      %v2552 = vunpack.c.h.b16 %v1884
      %v2553 = vunpack.c.h.b16 %v1885
      %v2554 = vunpack.c.h.b16 %v1886
      %v2555 = vunpack.c.l.b16 %v1887
      %v2556 = vunpack.c.l.b16 %v1888
      %v2557 = vunpack.c.l.b16 %v1889
      %v2558 = vunpack.c.l.b16 %v1890
      %v2559 = vunpack.c.h.b16 %v1887
      %v2560 = vunpack.c.h.b16 %v1888
      %v2561 = vunpack.c.h.b16 %v1889
      %v2562 = vunpack.c.h.b16 %v1890
      %v2563 = vunpack.c.l.b16 %v1891
      %v2564 = vunpack.c.l.b16 %v1892
      %v2565 = vunpack.c.l.b16 %v1893
      %v2566 = vunpack.c.l.b16 %v1894
      %v2567 = vunpack.c.h.b16 %v1891
      %v2568 = vunpack.c.h.b16 %v1892
      %v2569 = vunpack.c.h.b16 %v1893
      %v2570 = vunpack.c.h.b16 %v1894
      %v2571 = vunpack.c.l.b16 %v1895
      %v2572 = vunpack.c.l.b16 %v1896
      %v2573 = vunpack.c.l.b16 %v1897
      %v2574 = vunpack.c.l.b16 %v1898
      %v2575 = vunpack.c.h.b16 %v1895
      %v2576 = vunpack.c.h.b16 %v1896
      %v2577 = vunpack.c.h.b16 %v1897
      %v2578 = vunpack.c.h.b16 %v1898
      %v2579 = vunpack.c.l.b16 %v1899
      %v2580 = vunpack.c.l.b16 %v1900
      %v2581 = vunpack.c.l.b16 %v1901
      %v2582 = vunpack.c.l.b16 %v1902
      %v2583 = vunpack.c.h.b16 %v1899
      %v2584 = vunpack.c.h.b16 %v1900
      %v2585 = vunpack.c.h.b16 %v1901
      %v2586 = vunpack.c.h.b16 %v1902
      %v2587 = vunpack.c.l.b16 %v1903
      %v2588 = vunpack.c.l.b16 %v1904
      %v2589 = vunpack.c.l.b16 %v1905
      %v2590 = vunpack.c.l.b16 %v1906
      %v2591 = vunpack.c.h.b16 %v1903
      %v2592 = vunpack.c.h.b16 %v1904
      %v2593 = vunpack.c.h.b16 %v1905
      %v2594 = vunpack.c.h.b16 %v1906
      %v2595 = vunpack.c.l.b16 %v1907
      %v2596 = vunpack.c.l.b16 %v1908
      %v2597 = vunpack.c.l.b16 %v1909
      %v2598 = vunpack.c.l.b16 %v1910
      %v2599 = vunpack.c.h.b16 %v1907
      %v2600 = vunpack.c.h.b16 %v1908
      %v2601 = vunpack.c.h.b16 %v1909
      %v2602 = vunpack.c.h.b16 %v1910
      %v2603 = vunpack.c.l.b16 %v1911
      %v2604 = vunpack.c.l.b16 %v1912
      %v2605 = vunpack.c.l.b16 %v1913
      %v2606 = vunpack.c.l.b16 %v1914
      %v2607 = vunpack.c.h.b16 %v1911
      %v2608 = vunpack.c.h.b16 %v1912
      %v2609 = vunpack.c.h.b16 %v1913
      %v2610 = vunpack.c.h.b16 %v1914
      %v2611 = vunpack.c.l.b16 %v1915
      %v2612 = vunpack.c.l.b16 %v1916
      %v2613 = vunpack.c.l.b16 %v1917
      %v2614 = vunpack.c.l.b16 %v1918
      %v2615 = vunpack.c.h.b16 %v1915
      %v2616 = vunpack.c.h.b16 %v1916
      %v2617 = vunpack.c.h.b16 %v1917
      %v2618 = vunpack.c.h.b16 %v1918
      %v2619 = vunpack.c.l.b16 %v1919
      %v2620 = vunpack.c.l.b16 %v1920
      %v2621 = vunpack.c.l.b16 %v1921
      %v2622 = vunpack.c.l.b16 %v1922
      %v2623 = vunpack.c.h.b16 %v1919
      %v2624 = vunpack.c.h.b16 %v1920
      %v2625 = vunpack.c.h.b16 %v1921
      %v2626 = vunpack.c.h.b16 %v1922
      %v2627 = vunpack.c.l.b16 %v1923
      %v2628 = vunpack.c.l.b16 %v1924
      %v2629 = vunpack.c.l.b16 %v1925
      %v2630 = vunpack.c.l.b16 %v1926
      %v2631 = vunpack.c.h.b16 %v1923
      %v2632 = vunpack.c.h.b16 %v1924
      %v2633 = vunpack.c.h.b16 %v1925
      %v2634 = vunpack.c.h.b16 %v1926
      %v2635 = vunpack.c.l.b16 %v1927
      %v2636 = vunpack.c.l.b16 %v1928
      %v2637 = vunpack.c.l.b16 %v1929
      %v2638 = vunpack.c.l.b16 %v1930
      %v2639 = vunpack.c.h.b16 %v1927
      %v2640 = vunpack.c.h.b16 %v1928
      %v2641 = vunpack.c.h.b16 %v1929
      %v2642 = vunpack.c.h.b16 %v1930
      %v2643 = vunpack.c.l.b16 %v1931
      %v2644 = vunpack.c.l.b16 %v1932
      %v2645 = vunpack.c.l.b16 %v1933
      %v2646 = vunpack.c.l.b16 %v1934
      %v2647 = vunpack.c.h.b16 %v1931
      %v2648 = vunpack.c.h.b16 %v1932
      %v2649 = vunpack.c.h.b16 %v1933
      %v2650 = vunpack.c.h.b16 %v1934
      %v2651 = vunpack.c.l.b16 %v1935
      %v2652 = vunpack.c.l.b16 %v1936
      %v2653 = vunpack.c.l.b16 %v1937
      %v2654 = vunpack.c.l.b16 %v1938
      %v2655 = vunpack.c.h.b16 %v1935
      %v2656 = vunpack.c.h.b16 %v1936
      %v2657 = vunpack.c.h.b16 %v1937
      %v2658 = vunpack.c.h.b16 %v1938
      %v2659 = vunpack.c.l.b16 %v1939
      %v2660 = vunpack.c.l.b16 %v1940
      %v2661 = vunpack.c.l.b16 %v1941
      %v2662 = vunpack.c.l.b16 %v1942
      %v2663 = vunpack.c.h.b16 %v1939
      %v2664 = vunpack.c.h.b16 %v1940
      %v2665 = vunpack.c.h.b16 %v1941
      %v2666 = vunpack.c.h.b16 %v1942
      %v2667 = vunpack.c.l.b16 %v1943
      %v2668 = vunpack.c.l.b16 %v1944
      %v2669 = vunpack.c.l.b16 %v1945
      %v2670 = vunpack.c.l.b16 %v1946
      %v2671 = vunpack.c.h.b16 %v1943
      %v2672 = vunpack.c.h.b16 %v1944
      %v2673 = vunpack.c.h.b16 %v1945
      %v2674 = vunpack.c.h.b16 %v1946
      %v2675 = vunpack.c.l.b16 %v1947
      %v2676 = vunpack.c.l.b16 %v1948
      %v2677 = vunpack.c.l.b16 %v1949
      %v2678 = vunpack.c.l.b16 %v1950
      %v2679 = vunpack.c.h.b16 %v1947
      %v2680 = vunpack.c.h.b16 %v1948
      %v2681 = vunpack.c.h.b16 %v1949
      %v2682 = vunpack.c.h.b16 %v1950
      %v2683 = vunpack.c.l.b16 %v1951
      %v2684 = vunpack.c.l.b16 %v1952
      %v2685 = vunpack.c.l.b16 %v1953
      %v2686 = vunpack.c.l.b16 %v1954
      %v2687 = vunpack.c.h.b16 %v1951
      %v2688 = vunpack.c.h.b16 %v1952
      %v2689 = vunpack.c.h.b16 %v1953
      %v2690 = vunpack.c.h.b16 %v1954
      %v2691 = vunpack.c.l.b16 %v1955
      %v2692 = vunpack.c.l.b16 %v1956
      %v2693 = vunpack.c.l.b16 %v1957
      %v2694 = vunpack.c.l.b16 %v1958
      %v2695 = vunpack.c.h.b16 %v1955
      %v2696 = vunpack.c.h.b16 %v1956
      %v2697 = vunpack.c.h.b16 %v1957
      %v2698 = vunpack.c.h.b16 %v1958
      %v2699 = vunpack.c.l.b16 %v1959
      %v2700 = vunpack.c.l.b16 %v1960
      %v2701 = vunpack.c.l.b16 %v1961
      %v2702 = vunpack.c.l.b16 %v1962
      %v2703 = vunpack.c.h.b16 %v1959
      %v2704 = vunpack.c.h.b16 %v1960
      %v2705 = vunpack.c.h.b16 %v1961
      %v2706 = vunpack.c.h.b16 %v1962
      %v2707 = vunpack.c.l.b16 %v1963
      %v2708 = vunpack.c.l.b16 %v1964
      %v2709 = vunpack.c.l.b16 %v1965
      %v2710 = vunpack.c.l.b16 %v1966
      %v2711 = vunpack.c.h.b16 %v1963
      %v2712 = vunpack.c.h.b16 %v1964
      %v2713 = vunpack.c.h.b16 %v1965
      %v2714 = vunpack.c.h.b16 %v1966
      %v2715 = vunpack.c.l.b16 %v1967
      %v2716 = vunpack.c.l.b16 %v1968
      %v2717 = vunpack.c.l.b16 %v1969
      %v2718 = vunpack.c.l.b16 %v1970
      %v2719 = vunpack.c.h.b16 %v1967
      %v2720 = vunpack.c.h.b16 %v1968
      %v2721 = vunpack.c.h.b16 %v1969
      %v2722 = vunpack.c.h.b16 %v1970
      %v2723 = vunpack.c.l.b16 %v1971
      %v2724 = vunpack.c.l.b16 %v1972
      %v2725 = vunpack.c.l.b16 %v1973
      %v2726 = vunpack.c.l.b16 %v1974
      %v2727 = vunpack.c.h.b16 %v1971
      %v2728 = vunpack.c.h.b16 %v1972
      %v2729 = vunpack.c.h.b16 %v1973
      %v2730 = vunpack.c.h.b16 %v1974
      %v2731 = vunpack.c.l.b16 %v1975
      %v2732 = vunpack.c.l.b16 %v1976
      %v2733 = vunpack.c.l.b16 %v1977
      %v2734 = vunpack.c.l.b16 %v1978
      %v2735 = vunpack.c.h.b16 %v1975
      %v2736 = vunpack.c.h.b16 %v1976
      %v2737 = vunpack.c.h.b16 %v1977
      %v2738 = vunpack.c.h.b16 %v1978
      %v2739 = vunpack.c.l.b16 %v1979
      %v2740 = vunpack.c.l.b16 %v1980
      %v2741 = vunpack.c.l.b16 %v1981
      %v2742 = vunpack.c.l.b16 %v1982
      %v2743 = vunpack.c.h.b16 %v1979
      %v2744 = vunpack.c.h.b16 %v1980
      %v2745 = vunpack.c.h.b16 %v1981
      %v2746 = vunpack.c.h.b16 %v1982
      %v2747 = vunpack.c.l.b16 %v1983
      %v2748 = vunpack.c.l.b16 %v1984
      %v2749 = vunpack.c.l.b16 %v1985
      %v2750 = vunpack.c.l.b16 %v1986
      %v2751 = vunpack.c.h.b16 %v1983
      %v2752 = vunpack.c.h.b16 %v1984
      %v2753 = vunpack.c.h.b16 %v1985
      %v2754 = vunpack.c.h.b16 %v1986
      %v2755 = vpack.c.b16 %v2244, %v2243
      %v2756 = vpack.c.b16 %v2246, %v2245
      %v2757 = vpack.c.b16 %v2248, %v2247
      %v2758 = vpack.c.b16 %v2250, %v2249
      %v2759 = vpack.c.b16 %v2252, %v2251
      %v2760 = vpack.c.b16 %v2254, %v2253
      %v2761 = vpack.c.b16 %v2256, %v2255
      %v2762 = vpack.c.b16 %v2258, %v2257
      %v2763 = vpack.c.b16 %v2260, %v2259
      %v2764 = vpack.c.b16 %v2262, %v2261
      %v2765 = vpack.c.b16 %v2264, %v2263
      %v2766 = vpack.c.b16 %v2266, %v2265
      %v2767 = vpack.c.b16 %v2268, %v2267
      %v2768 = vpack.c.b16 %v2270, %v2269
      %v2769 = vpack.c.b16 %v2272, %v2271
      %v2770 = vpack.c.b16 %v2274, %v2273
      %v2771 = vpack.c.b16 %v2276, %v2275
      %v2772 = vpack.c.b16 %v2278, %v2277
      %v2773 = vpack.c.b16 %v2280, %v2279
      %v2774 = vpack.c.b16 %v2282, %v2281
      %v2775 = vpack.c.b16 %v2284, %v2283
      %v2776 = vpack.c.b16 %v2286, %v2285
      %v2777 = vpack.c.b16 %v2288, %v2287
      %v2778 = vpack.c.b16 %v2290, %v2289
      %v2779 = vpack.c.b16 %v2292, %v2291
      %v2780 = vpack.c.b16 %v2294, %v2293
      %v2781 = vpack.c.b16 %v2296, %v2295
      %v2782 = vpack.c.b16 %v2298, %v2297
      %v2783 = vpack.c.b16 %v2300, %v2299
      %v2784 = vpack.c.b16 %v2302, %v2301
      %v2785 = vpack.c.b16 %v2304, %v2303
      %v2786 = vpack.c.b16 %v2306, %v2305
      %v2787 = vpack.c.b16 %v2308, %v2307
      %v2788 = vpack.c.b16 %v2310, %v2309
      %v2789 = vpack.c.b16 %v2312, %v2311
      %v2790 = vpack.c.b16 %v2314, %v2313
      %v2791 = vpack.c.b16 %v2316, %v2315
      %v2792 = vpack.c.b16 %v2318, %v2317
      %v2793 = vpack.c.b16 %v2320, %v2319
      %v2794 = vpack.c.b16 %v2322, %v2321
      %v2795 = vpack.c.b16 %v2324, %v2323
      %v2796 = vpack.c.b16 %v2326, %v2325
      %v2797 = vpack.c.b16 %v2328, %v2327
      %v2798 = vpack.c.b16 %v2330, %v2329
      %v2799 = vpack.c.b16 %v2332, %v2331
      %v2800 = vpack.c.b16 %v2334, %v2333
      %v2801 = vpack.c.b16 %v2336, %v2335
      %v2802 = vpack.c.b16 %v2338, %v2337
      %v2803 = vpack.c.b16 %v2340, %v2339
      %v2804 = vpack.c.b16 %v2342, %v2341
      %v2805 = vpack.c.b16 %v2344, %v2343
      %v2806 = vpack.c.b16 %v2346, %v2345
      %v2807 = vpack.c.b16 %v2348, %v2347
      %v2808 = vpack.c.b16 %v2350, %v2349
      %v2809 = vpack.c.b16 %v2352, %v2351
      %v2810 = vpack.c.b16 %v2354, %v2353
      %v2811 = vpack.c.b16 %v2356, %v2355
      %v2812 = vpack.c.b16 %v2358, %v2357
      %v2813 = vpack.c.b16 %v2360, %v2359
      %v2814 = vpack.c.b16 %v2362, %v2361
      %v2815 = vpack.c.b16 %v2364, %v2363
      %v2816 = vpack.c.b16 %v2366, %v2365
      %v2817 = vpack.c.b16 %v2368, %v2367
      %v2818 = vpack.c.b16 %v2370, %v2369
      %v2819 = vpack.c.b16 %v2372, %v2371
      %v2820 = vpack.c.b16 %v2374, %v2373
      %v2821 = vpack.c.b16 %v2376, %v2375
      %v2822 = vpack.c.b16 %v2378, %v2377
      %v2823 = vpack.c.b16 %v2380, %v2379
      %v2824 = vpack.c.b16 %v2382, %v2381
      %v2825 = vpack.c.b16 %v2384, %v2383
      %v2826 = vpack.c.b16 %v2386, %v2385
      %v2827 = vpack.c.b16 %v2388, %v2387
      %v2828 = vpack.c.b16 %v2390, %v2389
      %v2829 = vpack.c.b16 %v2392, %v2391
      %v2830 = vpack.c.b16 %v2394, %v2393
      %v2831 = vpack.c.b16 %v2396, %v2395
      %v2832 = vpack.c.b16 %v2398, %v2397
      %v2833 = vpack.c.b16 %v2400, %v2399
      %v2834 = vpack.c.b16 %v2402, %v2401
      %v2835 = vpack.c.b16 %v2404, %v2403
      %v2836 = vpack.c.b16 %v2406, %v2405
      %v2837 = vpack.c.b16 %v2408, %v2407
      %v2838 = vpack.c.b16 %v2410, %v2409
      %v2839 = vpack.c.b16 %v2412, %v2411
      %v2840 = vpack.c.b16 %v2414, %v2413
      %v2841 = vpack.c.b16 %v2416, %v2415
      %v2842 = vpack.c.b16 %v2418, %v2417
      %v2843 = vpack.c.b16 %v2420, %v2419
      %v2844 = vpack.c.b16 %v2422, %v2421
      %v2845 = vpack.c.b16 %v2424, %v2423
      %v2846 = vpack.c.b16 %v2426, %v2425
      %v2847 = vpack.c.b16 %v2428, %v2427
      %v2848 = vpack.c.b16 %v2430, %v2429
      %v2849 = vpack.c.b16 %v2432, %v2431
      %v2850 = vpack.c.b16 %v2434, %v2433
      %v2851 = vpack.c.b16 %v2436, %v2435
      %v2852 = vpack.c.b16 %v2438, %v2437
      %v2853 = vpack.c.b16 %v2440, %v2439
      %v2854 = vpack.c.b16 %v2442, %v2441
      %v2855 = vpack.c.b16 %v2444, %v2443
      %v2856 = vpack.c.b16 %v2446, %v2445
      %v2857 = vpack.c.b16 %v2448, %v2447
      %v2858 = vpack.c.b16 %v2450, %v2449
      %v2859 = vpack.c.b16 %v2452, %v2451
      %v2860 = vpack.c.b16 %v2454, %v2453
      %v2861 = vpack.c.b16 %v2456, %v2455
      %v2862 = vpack.c.b16 %v2458, %v2457
      %v2863 = vpack.c.b16 %v2460, %v2459
      %v2864 = vpack.c.b16 %v2462, %v2461
      %v2865 = vpack.c.b16 %v2464, %v2463
      %v2866 = vpack.c.b16 %v2466, %v2465
      %v2867 = vpack.c.b16 %v2468, %v2467
      %v2868 = vpack.c.b16 %v2470, %v2469
      %v2869 = vpack.c.b16 %v2472, %v2471
      %v2870 = vpack.c.b16 %v2474, %v2473
      %v2871 = vpack.c.b16 %v2476, %v2475
      %v2872 = vpack.c.b16 %v2478, %v2477
      %v2873 = vpack.c.b16 %v2480, %v2479
      %v2874 = vpack.c.b16 %v2482, %v2481
      %v2875 = vpack.c.b16 %v2484, %v2483
      %v2876 = vpack.c.b16 %v2486, %v2485
      %v2877 = vpack.c.b16 %v2488, %v2487
      %v2878 = vpack.c.b16 %v2490, %v2489
      %v2879 = vpack.c.b16 %v2492, %v2491
      %v2880 = vpack.c.b16 %v2494, %v2493
      %v2881 = vpack.c.b16 %v2496, %v2495
      %v2882 = vpack.c.b16 %v2498, %v2497
      %v2883 = vpack.c.b16 %v2500, %v2499
      %v2884 = vpack.c.b16 %v2502, %v2501
      %v2885 = vpack.c.b16 %v2504, %v2503
      %v2886 = vpack.c.b16 %v2506, %v2505
      %v2887 = vpack.c.b16 %v2508, %v2507
      %v2888 = vpack.c.b16 %v2510, %v2509
      %v2889 = vpack.c.b16 %v2512, %v2511
      %v2890 = vpack.c.b16 %v2514, %v2513
      %v2891 = vpack.c.b16 %v2516, %v2515
      %v2892 = vpack.c.b16 %v2518, %v2517
      %v2893 = vpack.c.b16 %v2520, %v2519
      %v2894 = vpack.c.b16 %v2522, %v2521
      %v2895 = vpack.c.b16 %v2524, %v2523
      %v2896 = vpack.c.b16 %v2526, %v2525
      %v2897 = vpack.c.b16 %v2528, %v2527
      %v2898 = vpack.c.b16 %v2530, %v2529
      %v2899 = vpack.c.b16 %v2532, %v2531
      %v2900 = vpack.c.b16 %v2534, %v2533
      %v2901 = vpack.c.b16 %v2536, %v2535
      %v2902 = vpack.c.b16 %v2538, %v2537
      %v2903 = vpack.c.b16 %v2540, %v2539
      %v2904 = vpack.c.b16 %v2542, %v2541
      %v2905 = vpack.c.b16 %v2544, %v2543
      %v2906 = vpack.c.b16 %v2546, %v2545
      %v2907 = vpack.c.b16 %v2548, %v2547
      %v2908 = vpack.c.b16 %v2550, %v2549
      %v2909 = vpack.c.b16 %v2552, %v2551
      %v2910 = vpack.c.b16 %v2554, %v2553
      %v2911 = vpack.c.b16 %v2556, %v2555
      %v2912 = vpack.c.b16 %v2558, %v2557
      %v2913 = vpack.c.b16 %v2560, %v2559
      %v2914 = vpack.c.b16 %v2562, %v2561
      %v2915 = vpack.c.b16 %v2564, %v2563
      %v2916 = vpack.c.b16 %v2566, %v2565
      %v2917 = vpack.c.b16 %v2568, %v2567
      %v2918 = vpack.c.b16 %v2570, %v2569
      %v2919 = vpack.c.b16 %v2572, %v2571
      %v2920 = vpack.c.b16 %v2574, %v2573
      %v2921 = vpack.c.b16 %v2576, %v2575
      %v2922 = vpack.c.b16 %v2578, %v2577
      %v2923 = vpack.c.b16 %v2580, %v2579
      %v2924 = vpack.c.b16 %v2582, %v2581
      %v2925 = vpack.c.b16 %v2584, %v2583
      %v2926 = vpack.c.b16 %v2586, %v2585
      %v2927 = vpack.c.b16 %v2588, %v2587
      %v2928 = vpack.c.b16 %v2590, %v2589
      %v2929 = vpack.c.b16 %v2592, %v2591
      %v2930 = vpack.c.b16 %v2594, %v2593
      %v2931 = vpack.c.b16 %v2596, %v2595
      %v2932 = vpack.c.b16 %v2598, %v2597
      %v2933 = vpack.c.b16 %v2600, %v2599
      %v2934 = vpack.c.b16 %v2602, %v2601
      %v2935 = vpack.c.b16 %v2604, %v2603
      %v2936 = vpack.c.b16 %v2606, %v2605
      %v2937 = vpack.c.b16 %v2608, %v2607
      %v2938 = vpack.c.b16 %v2610, %v2609
      %v2939 = vpack.c.b16 %v2612, %v2611
      %v2940 = vpack.c.b16 %v2614, %v2613
      %v2941 = vpack.c.b16 %v2616, %v2615
      %v2942 = vpack.c.b16 %v2618, %v2617
      %v2943 = vpack.c.b16 %v2620, %v2619
      %v2944 = vpack.c.b16 %v2622, %v2621
      %v2945 = vpack.c.b16 %v2624, %v2623
      %v2946 = vpack.c.b16 %v2626, %v2625
      %v2947 = vpack.c.b16 %v2628, %v2627
      %v2948 = vpack.c.b16 %v2630, %v2629
      %v2949 = vpack.c.b16 %v2632, %v2631
      %v2950 = vpack.c.b16 %v2634, %v2633
      %v2951 = vpack.c.b16 %v2636, %v2635
      %v2952 = vpack.c.b16 %v2638, %v2637
      %v2953 = vpack.c.b16 %v2640, %v2639
      %v2954 = vpack.c.b16 %v2642, %v2641
      %v2955 = vpack.c.b16 %v2644, %v2643
      %v2956 = vpack.c.b16 %v2646, %v2645
      %v2957 = vpack.c.b16 %v2648, %v2647
      %v2958 = vpack.c.b16 %v2650, %v2649
      %v2959 = vpack.c.b16 %v2652, %v2651
      %v2960 = vpack.c.b16 %v2654, %v2653
      %v2961 = vpack.c.b16 %v2656, %v2655
      %v2962 = vpack.c.b16 %v2658, %v2657
      %v2963 = vpack.c.b16 %v2660, %v2659
      %v2964 = vpack.c.b16 %v2662, %v2661
      %v2965 = vpack.c.b16 %v2664, %v2663
      %v2966 = vpack.c.b16 %v2666, %v2665
      %v2967 = vpack.c.b16 %v2668, %v2667
      %v2968 = vpack.c.b16 %v2670, %v2669
      %v2969 = vpack.c.b16 %v2672, %v2671
      %v2970 = vpack.c.b16 %v2674, %v2673
      %v2971 = vpack.c.b16 %v2676, %v2675
      %v2972 = vpack.c.b16 %v2678, %v2677
      %v2973 = vpack.c.b16 %v2680, %v2679
      %v2974 = vpack.c.b16 %v2682, %v2681
      %v2975 = vpack.c.b16 %v2684, %v2683
      %v2976 = vpack.c.b16 %v2686, %v2685
      %v2977 = vpack.c.b16 %v2688, %v2687
      %v2978 = vpack.c.b16 %v2690, %v2689
      %v2979 = vpack.c.b16 %v2692, %v2691
      %v2980 = vpack.c.b16 %v2694, %v2693
      %v2981 = vpack.c.b16 %v2696, %v2695
      %v2982 = vpack.c.b16 %v2698, %v2697
      %v2983 = vpack.c.b16 %v2700, %v2699
      %v2984 = vpack.c.b16 %v2702, %v2701
      %v2985 = vpack.c.b16 %v2704, %v2703
      %v2986 = vpack.c.b16 %v2706, %v2705
      %v2987 = vpack.c.b16 %v2708, %v2707
      %v2988 = vpack.c.b16 %v2710, %v2709
      %v2989 = vpack.c.b16 %v2712, %v2711
      %v2990 = vpack.c.b16 %v2714, %v2713
      %v2991 = vpack.c.b16 %v2716, %v2715
      %v2992 = vpack.c.b16 %v2718, %v2717
      %v2993 = vpack.c.b16 %v2720, %v2719
      %v2994 = vpack.c.b16 %v2722, %v2721
      %v2995 = vpack.c.b16 %v2724, %v2723
      %v2996 = vpack.c.b16 %v2726, %v2725
      %v2997 = vpack.c.b16 %v2728, %v2727
      %v2998 = vpack.c.b16 %v2730, %v2729
      %v2999 = vpack.c.b16 %v2732, %v2731
      %v3000 = vpack.c.b16 %v2734, %v2733
      %v3001 = vpack.c.b16 %v2736, %v2735
      %v3002 = vpack.c.b16 %v2738, %v2737
      %v3003 = vpack.c.b16 %v2740, %v2739
      %v3004 = vpack.c.b16 %v2742, %v2741
      %v3005 = vpack.c.b16 %v2744, %v2743
      %v3006 = vpack.c.b16 %v2746, %v2745
      %v3007 = vpack.c.b16 %v2748, %v2747
      %v3008 = vpack.c.b16 %v2750, %v2749
      %v3009 = vpack.c.b16 %v2752, %v2751
      %v3010 = vpack.c.b16 %v2754, %v2753
      %3267 = vst [vmem:[#allocation2] sm:$0xff] %v2755
      %3268 = vst [vmem:[#allocation2 + $0x8] sm:$0xff] %v2756
      %3269 = vst [vmem:[#allocation2 + $0x10] sm:$0xff] %v2757
      %3270 = vst [vmem:[#allocation2 + $0x18] sm:$0xff] %v2758
      %3271 = vst [vmem:[#allocation2 + $0x20] sm:$0xff] %v2759
      %3272 = vst [vmem:[#allocation2 + $0x28] sm:$0xff] %v2760
      %3273 = vst [vmem:[#allocation2 + $0x30] sm:$0xff] %v2761
      %3274 = vst [vmem:[#allocation2 + $0x38] sm:$0xff] %v2762
      %3275 = vst [vmem:[#allocation2 + $0x40] sm:$0xff] %v2763
      %3276 = vst [vmem:[#allocation2 + $0x48] sm:$0xff] %v2764
      %3277 = vst [vmem:[#allocation2 + $0x50] sm:$0xff] %v2765
      %3278 = vst [vmem:[#allocation2 + $0x58] sm:$0xff] %v2766
      %3279 = vst [vmem:[#allocation2 + $0x60] sm:$0xff] %v2767
      %3280 = vst [vmem:[#allocation2 + $0x68] sm:$0xff] %v2768
      %3281 = vst [vmem:[#allocation2 + $0x70] sm:$0xff] %v2769
      %3282 = vst [vmem:[#allocation2 + $0x78] sm:$0xff] %v2770
      %3283 = vst [vmem:[#allocation2 + $0x80] sm:$0xff] %v2771
      %3284 = vst [vmem:[#allocation2 + $0x88] sm:$0xff] %v2772
      %3285 = vst [vmem:[#allocation2 + $0x90] sm:$0xff] %v2773
      %3286 = vst [vmem:[#allocation2 + $0x98] sm:$0xff] %v2774
      %3287 = vst [vmem:[#allocation2 + $0xa0] sm:$0xff] %v2775
      %3288 = vst [vmem:[#allocation2 + $0xa8] sm:$0xff] %v2776
      %3289 = vst [vmem:[#allocation2 + $0xb0] sm:$0xff] %v2777
      %3290 = vst [vmem:[#allocation2 + $0xb8] sm:$0xff] %v2778
      %3291 = vst [vmem:[#allocation2 + $0xc0] sm:$0xff] %v2779
      %3292 = vst [vmem:[#allocation2 + $0xc8] sm:$0xff] %v2780
      %3293 = vst [vmem:[#allocation2 + $0xd0] sm:$0xff] %v2781
      %3294 = vst [vmem:[#allocation2 + $0xd8] sm:$0xff] %v2782
      %3295 = vst [vmem:[#allocation2 + $0xe0] sm:$0xff] %v2783
      %3296 = vst [vmem:[#allocation2 + $0xe8] sm:$0xff] %v2784
      %3297 = vst [vmem:[#allocation2 + $0xf0] sm:$0xff] %v2785
      %3298 = vst [vmem:[#allocation2 + $0xf8] sm:$0xff] %v2786
      %3299 = vst [vmem:[#allocation2 + $0x100] sm:$0xff] %v2787
      %3300 = vst [vmem:[#allocation2 + $0x108] sm:$0xff] %v2788
      %3301 = vst [vmem:[#allocation2 + $0x110] sm:$0xff] %v2789
      %3302 = vst [vmem:[#allocation2 + $0x118] sm:$0xff] %v2790
      %3303 = vst [vmem:[#allocation2 + $0x120] sm:$0xff] %v2791
      %3304 = vst [vmem:[#allocation2 + $0x128] sm:$0xff] %v2792
      %3305 = vst [vmem:[#allocation2 + $0x130] sm:$0xff] %v2793
      %3306 = vst [vmem:[#allocation2 + $0x138] sm:$0xff] %v2794
      %3307 = vst [vmem:[#allocation2 + $0x140] sm:$0xff] %v2795
      %3308 = vst [vmem:[#allocation2 + $0x148] sm:$0xff] %v2796
      %3309 = vst [vmem:[#allocation2 + $0x150] sm:$0xff] %v2797
      %3310 = vst [vmem:[#allocation2 + $0x158] sm:$0xff] %v2798
      %3311 = vst [vmem:[#allocation2 + $0x160] sm:$0xff] %v2799
      %3312 = vst [vmem:[#allocation2 + $0x168] sm:$0xff] %v2800
      %3313 = vst [vmem:[#allocation2 + $0x170] sm:$0xff] %v2801
      %3314 = vst [vmem:[#allocation2 + $0x178] sm:$0xff] %v2802
      %3315 = vst [vmem:[#allocation2 + $0x180] sm:$0xff] %v2803
      %3316 = vst [vmem:[#allocation2 + $0x188] sm:$0xff] %v2804
      %3317 = vst [vmem:[#allocation2 + $0x190] sm:$0xff] %v2805
      %3318 = vst [vmem:[#allocation2 + $0x198] sm:$0xff] %v2806
      %3319 = vst [vmem:[#allocation2 + $0x1a0] sm:$0xff] %v2807
      %3320 = vst [vmem:[#allocation2 + $0x1a8] sm:$0xff] %v2808
      %3321 = vst [vmem:[#allocation2 + $0x1b0] sm:$0xff] %v2809
      %3322 = vst [vmem:[#allocation2 + $0x1b8] sm:$0xff] %v2810
      %3323 = vst [vmem:[#allocation2 + $0x1c0] sm:$0xff] %v2811
      %3324 = vst [vmem:[#allocation2 + $0x1c8] sm:$0xff] %v2812
      %3325 = vst [vmem:[#allocation2 + $0x1d0] sm:$0xff] %v2813
      %3326 = vst [vmem:[#allocation2 + $0x1d8] sm:$0xff] %v2814
      %3327 = vst [vmem:[#allocation2 + $0x1e0] sm:$0xff] %v2815
      %3328 = vst [vmem:[#allocation2 + $0x1e8] sm:$0xff] %v2816
      %3329 = vst [vmem:[#allocation2 + $0x1f0] sm:$0xff] %v2817
      %3330 = vst [vmem:[#allocation2 + $0x1f8] sm:$0xff] %v2818
      %3331 = vst [vmem:[#allocation2 + $0x200] sm:$0xff] %v2819
      %3332 = vst [vmem:[#allocation2 + $0x208] sm:$0xff] %v2820
      %3333 = vst [vmem:[#allocation2 + $0x210] sm:$0xff] %v2821
      %3334 = vst [vmem:[#allocation2 + $0x218] sm:$0xff] %v2822
      %3335 = vst [vmem:[#allocation2 + $0x220] sm:$0xff] %v2823
      %3336 = vst [vmem:[#allocation2 + $0x228] sm:$0xff] %v2824
      %3337 = vst [vmem:[#allocation2 + $0x230] sm:$0xff] %v2825
      %3338 = vst [vmem:[#allocation2 + $0x238] sm:$0xff] %v2826
      %3339 = vst [vmem:[#allocation2 + $0x240] sm:$0xff] %v2827
      %3340 = vst [vmem:[#allocation2 + $0x248] sm:$0xff] %v2828
      %3341 = vst [vmem:[#allocation2 + $0x250] sm:$0xff] %v2829
      %3342 = vst [vmem:[#allocation2 + $0x258] sm:$0xff] %v2830
      %3343 = vst [vmem:[#allocation2 + $0x260] sm:$0xff] %v2831
      %3344 = vst [vmem:[#allocation2 + $0x268] sm:$0xff] %v2832
      %3345 = vst [vmem:[#allocation2 + $0x270] sm:$0xff] %v2833
      %3346 = vst [vmem:[#allocation2 + $0x278] sm:$0xff] %v2834
      %3347 = vst [vmem:[#allocation2 + $0x280] sm:$0xff] %v2835
      %3348 = vst [vmem:[#allocation2 + $0x288] sm:$0xff] %v2836
      %3349 = vst [vmem:[#allocation2 + $0x290] sm:$0xff] %v2837
      %3350 = vst [vmem:[#allocation2 + $0x298] sm:$0xff] %v2838
      %3351 = vst [vmem:[#allocation2 + $0x2a0] sm:$0xff] %v2839
      %3352 = vst [vmem:[#allocation2 + $0x2a8] sm:$0xff] %v2840
      %3353 = vst [vmem:[#allocation2 + $0x2b0] sm:$0xff] %v2841
      %3354 = vst [vmem:[#allocation2 + $0x2b8] sm:$0xff] %v2842
      %3355 = vst [vmem:[#allocation2 + $0x2c0] sm:$0xff] %v2843
      %3356 = vst [vmem:[#allocation2 + $0x2c8] sm:$0xff] %v2844
      %3357 = vst [vmem:[#allocation2 + $0x2d0] sm:$0xff] %v2845
      %3358 = vst [vmem:[#allocation2 + $0x2d8] sm:$0xff] %v2846
      %3359 = vst [vmem:[#allocation2 + $0x2e0] sm:$0xff] %v2847
      %3360 = vst [vmem:[#allocation2 + $0x2e8] sm:$0xff] %v2848
      %3361 = vst [vmem:[#allocation2 + $0x2f0] sm:$0xff] %v2849
      %3362 = vst [vmem:[#allocation2 + $0x2f8] sm:$0xff] %v2850
      %3363 = vst [vmem:[#allocation2 + $0x300] sm:$0xff] %v2851
      %3364 = vst [vmem:[#allocation2 + $0x308] sm:$0xff] %v2852
      %3365 = vst [vmem:[#allocation2 + $0x310] sm:$0xff] %v2853
      %3366 = vst [vmem:[#allocation2 + $0x318] sm:$0xff] %v2854
      %3367 = vst [vmem:[#allocation2 + $0x320] sm:$0xff] %v2855
      %3368 = vst [vmem:[#allocation2 + $0x328] sm:$0xff] %v2856
      %3369 = vst [vmem:[#allocation2 + $0x330] sm:$0xff] %v2857
      %3370 = vst [vmem:[#allocation2 + $0x338] sm:$0xff] %v2858
      %3371 = vst [vmem:[#allocation2 + $0x340] sm:$0xff] %v2859
      %3372 = vst [vmem:[#allocation2 + $0x348] sm:$0xff] %v2860
      %3373 = vst [vmem:[#allocation2 + $0x350] sm:$0xff] %v2861
      %3374 = vst [vmem:[#allocation2 + $0x358] sm:$0xff] %v2862
      %3375 = vst [vmem:[#allocation2 + $0x360] sm:$0xff] %v2863
      %3376 = vst [vmem:[#allocation2 + $0x368] sm:$0xff] %v2864
      %3377 = vst [vmem:[#allocation2 + $0x370] sm:$0xff] %v2865
      %3378 = vst [vmem:[#allocation2 + $0x378] sm:$0xff] %v2866
      %3379 = vst [vmem:[#allocation2 + $0x380] sm:$0xff] %v2867
      %3380 = vst [vmem:[#allocation2 + $0x388] sm:$0xff] %v2868
      %3381 = vst [vmem:[#allocation2 + $0x390] sm:$0xff] %v2869
      %3382 = vst [vmem:[#allocation2 + $0x398] sm:$0xff] %v2870
      %3383 = vst [vmem:[#allocation2 + $0x3a0] sm:$0xff] %v2871
      %3384 = vst [vmem:[#allocation2 + $0x3a8] sm:$0xff] %v2872
      %3385 = vst [vmem:[#allocation2 + $0x3b0] sm:$0xff] %v2873
      %3386 = vst [vmem:[#allocation2 + $0x3b8] sm:$0xff] %v2874
      %3387 = vst [vmem:[#allocation2 + $0x3c0] sm:$0xff] %v2875
      %3388 = vst [vmem:[#allocation2 + $0x3c8] sm:$0xff] %v2876
      %3389 = vst [vmem:[#allocation2 + $0x3d0] sm:$0xff] %v2877
      %3390 = vst [vmem:[#allocation2 + $0x3d8] sm:$0xff] %v2878
      %3391 = vst [vmem:[#allocation2 + $0x3e0] sm:$0xff] %v2879
      %3392 = vst [vmem:[#allocation2 + $0x3e8] sm:$0xff] %v2880
      %3393 = vst [vmem:[#allocation2 + $0x3f0] sm:$0xff] %v2881
      %3394 = vst [vmem:[#allocation2 + $0x3f8] sm:$0xff] %v2882
      %3395 = vst [vmem:[#allocation2 + $0x400] sm:$0xff] %v2883
      %3396 = vst [vmem:[#allocation2 + $0x408] sm:$0xff] %v2884
      %3397 = vst [vmem:[#allocation2 + $0x410] sm:$0xff] %v2885
      %3398 = vst [vmem:[#allocation2 + $0x418] sm:$0xff] %v2886
      %3399 = vst [vmem:[#allocation2 + $0x420] sm:$0xff] %v2887
      %3400 = vst [vmem:[#allocation2 + $0x428] sm:$0xff] %v2888
      %3401 = vst [vmem:[#allocation2 + $0x430] sm:$0xff] %v2889
      %3402 = vst [vmem:[#allocation2 + $0x438] sm:$0xff] %v2890
      %3403 = vst [vmem:[#allocation2 + $0x440] sm:$0xff] %v2891
      %3404 = vst [vmem:[#allocation2 + $0x448] sm:$0xff] %v2892
      %3405 = vst [vmem:[#allocation2 + $0x450] sm:$0xff] %v2893
      %3406 = vst [vmem:[#allocation2 + $0x458] sm:$0xff] %v2894
      %3407 = vst [vmem:[#allocation2 + $0x460] sm:$0xff] %v2895
      %3408 = vst [vmem:[#allocation2 + $0x468] sm:$0xff] %v2896
      %3409 = vst [vmem:[#allocation2 + $0x470] sm:$0xff] %v2897
      %3410 = vst [vmem:[#allocation2 + $0x478] sm:$0xff] %v2898
      %3411 = vst [vmem:[#allocation2 + $0x480] sm:$0xff] %v2899
      %3412 = vst [vmem:[#allocation2 + $0x488] sm:$0xff] %v2900
      %3413 = vst [vmem:[#allocation2 + $0x490] sm:$0xff] %v2901
      %3414 = vst [vmem:[#allocation2 + $0x498] sm:$0xff] %v2902
      %3415 = vst [vmem:[#allocation2 + $0x4a0] sm:$0xff] %v2903
      %3416 = vst [vmem:[#allocation2 + $0x4a8] sm:$0xff] %v2904
      %3417 = vst [vmem:[#allocation2 + $0x4b0] sm:$0xff] %v2905
      %3418 = vst [vmem:[#allocation2 + $0x4b8] sm:$0xff] %v2906
      %3419 = vst [vmem:[#allocation2 + $0x4c0] sm:$0xff] %v2907
      %3420 = vst [vmem:[#allocation2 + $0x4c8] sm:$0xff] %v2908
      %3421 = vst [vmem:[#allocation2 + $0x4d0] sm:$0xff] %v2909
      %3422 = vst [vmem:[#allocation2 + $0x4d8] sm:$0xff] %v2910
      %3423 = vst [vmem:[#allocation2 + $0x4e0] sm:$0xff] %v2911
      %3424 = vst [vmem:[#allocation2 + $0x4e8] sm:$0xff] %v2912
      %3425 = vst [vmem:[#allocation2 + $0x4f0] sm:$0xff] %v2913
      %3426 = vst [vmem:[#allocation2 + $0x4f8] sm:$0xff] %v2914
      %3427 = vst [vmem:[#allocation2 + $0x500] sm:$0xff] %v2915
      %3428 = vst [vmem:[#allocation2 + $0x508] sm:$0xff] %v2916
      %3429 = vst [vmem:[#allocation2 + $0x510] sm:$0xff] %v2917
      %3430 = vst [vmem:[#allocation2 + $0x518] sm:$0xff] %v2918
      %3431 = vst [vmem:[#allocation2 + $0x520] sm:$0xff] %v2919
      %3432 = vst [vmem:[#allocation2 + $0x528] sm:$0xff] %v2920
      %3433 = vst [vmem:[#allocation2 + $0x530] sm:$0xff] %v2921
      %3434 = vst [vmem:[#allocation2 + $0x538] sm:$0xff] %v2922
      %3435 = vst [vmem:[#allocation2 + $0x540] sm:$0xff] %v2923
      %3436 = vst [vmem:[#allocation2 + $0x548] sm:$0xff] %v2924
      %3437 = vst [vmem:[#allocation2 + $0x550] sm:$0xff] %v2925
      %3438 = vst [vmem:[#allocation2 + $0x558] sm:$0xff] %v2926
      %3439 = vst [vmem:[#allocation2 + $0x560] sm:$0xff] %v2927
      %3440 = vst [vmem:[#allocation2 + $0x568] sm:$0xff] %v2928
      %3441 = vst [vmem:[#allocation2 + $0x570] sm:$0xff] %v2929
      %3442 = vst [vmem:[#allocation2 + $0x578] sm:$0xff] %v2930
      %3443 = vst [vmem:[#allocation2 + $0x580] sm:$0xff] %v2931
      %3444 = vst [vmem:[#allocation2 + $0x588] sm:$0xff] %v2932
      %3445 = vst [vmem:[#allocation2 + $0x590] sm:$0xff] %v2933
      %3446 = vst [vmem:[#allocation2 + $0x598] sm:$0xff] %v2934
      %3447 = vst [vmem:[#allocation2 + $0x5a0] sm:$0xff] %v2935
      %3448 = vst [vmem:[#allocation2 + $0x5a8] sm:$0xff] %v2936
      %3449 = vst [vmem:[#allocation2 + $0x5b0] sm:$0xff] %v2937
      %3450 = vst [vmem:[#allocation2 + $0x5b8] sm:$0xff] %v2938
      %3451 = vst [vmem:[#allocation2 + $0x5c0] sm:$0xff] %v2939
      %3452 = vst [vmem:[#allocation2 + $0x5c8] sm:$0xff] %v2940
      %3453 = vst [vmem:[#allocation2 + $0x5d0] sm:$0xff] %v2941
      %3454 = vst [vmem:[#allocation2 + $0x5d8] sm:$0xff] %v2942
      %3455 = vst [vmem:[#allocation2 + $0x5e0] sm:$0xff] %v2943
      %3456 = vst [vmem:[#allocation2 + $0x5e8] sm:$0xff] %v2944
      %3457 = vst [vmem:[#allocation2 + $0x5f0] sm:$0xff] %v2945
      %3458 = vst [vmem:[#allocation2 + $0x5f8] sm:$0xff] %v2946
      %3459 = vst [vmem:[#allocation2 + $0x600] sm:$0xff] %v2947
      %3460 = vst [vmem:[#allocation2 + $0x608] sm:$0xff] %v2948
      %3461 = vst [vmem:[#allocation2 + $0x610] sm:$0xff] %v2949
      %3462 = vst [vmem:[#allocation2 + $0x618] sm:$0xff] %v2950
      %3463 = vst [vmem:[#allocation2 + $0x620] sm:$0xff] %v2951
      %3464 = vst [vmem:[#allocation2 + $0x628] sm:$0xff] %v2952
      %3465 = vst [vmem:[#allocation2 + $0x630] sm:$0xff] %v2953
      %3466 = vst [vmem:[#allocation2 + $0x638] sm:$0xff] %v2954
      %3467 = vst [vmem:[#allocation2 + $0x640] sm:$0xff] %v2955
      %3468 = vst [vmem:[#allocation2 + $0x648] sm:$0xff] %v2956
      %3469 = vst [vmem:[#allocation2 + $0x650] sm:$0xff] %v2957
      %3470 = vst [vmem:[#allocation2 + $0x658] sm:$0xff] %v2958
      %3471 = vst [vmem:[#allocation2 + $0x660] sm:$0xff] %v2959
      %3472 = vst [vmem:[#allocation2 + $0x668] sm:$0xff] %v2960
      %3473 = vst [vmem:[#allocation2 + $0x670] sm:$0xff] %v2961
      %3474 = vst [vmem:[#allocation2 + $0x678] sm:$0xff] %v2962
      %3475 = vst [vmem:[#allocation2 + $0x680] sm:$0xff] %v2963
      %3476 = vst [vmem:[#allocation2 + $0x688] sm:$0xff] %v2964
      %3477 = vst [vmem:[#allocation2 + $0x690] sm:$0xff] %v2965
      %3478 = vst [vmem:[#allocation2 + $0x698] sm:$0xff] %v2966
      %3479 = vst [vmem:[#allocation2 + $0x6a0] sm:$0xff] %v2967
      %3480 = vst [vmem:[#allocation2 + $0x6a8] sm:$0xff] %v2968
      %3481 = vst [vmem:[#allocation2 + $0x6b0] sm:$0xff] %v2969
      %3482 = vst [vmem:[#allocation2 + $0x6b8] sm:$0xff] %v2970
      %3483 = vst [vmem:[#allocation2 + $0x6c0] sm:$0xff] %v2971
      %3484 = vst [vmem:[#allocation2 + $0x6c8] sm:$0xff] %v2972
      %3485 = vst [vmem:[#allocation2 + $0x6d0] sm:$0xff] %v2973
      %3486 = vst [vmem:[#allocation2 + $0x6d8] sm:$0xff] %v2974
      %3487 = vst [vmem:[#allocation2 + $0x6e0] sm:$0xff] %v2975
      %3488 = vst [vmem:[#allocation2 + $0x6e8] sm:$0xff] %v2976
      %3489 = vst [vmem:[#allocation2 + $0x6f0] sm:$0xff] %v2977
      %3490 = vst [vmem:[#allocation2 + $0x6f8] sm:$0xff] %v2978
      %3491 = vst [vmem:[#allocation2 + $0x700] sm:$0xff] %v2979
      %3492 = vst [vmem:[#allocation2 + $0x708] sm:$0xff] %v2980
      %3493 = vst [vmem:[#allocation2 + $0x710] sm:$0xff] %v2981
      %3494 = vst [vmem:[#allocation2 + $0x718] sm:$0xff] %v2982
      %3495 = vst [vmem:[#allocation2 + $0x720] sm:$0xff] %v2983
      %3496 = vst [vmem:[#allocation2 + $0x728] sm:$0xff] %v2984
      %3497 = vst [vmem:[#allocation2 + $0x730] sm:$0xff] %v2985
      %3498 = vst [vmem:[#allocation2 + $0x738] sm:$0xff] %v2986
      %3499 = vst [vmem:[#allocation2 + $0x740] sm:$0xff] %v2987
      %3500 = vst [vmem:[#allocation2 + $0x748] sm:$0xff] %v2988
      %3501 = vst [vmem:[#allocation2 + $0x750] sm:$0xff] %v2989
      %3502 = vst [vmem:[#allocation2 + $0x758] sm:$0xff] %v2990
      %3503 = vst [vmem:[#allocation2 + $0x760] sm:$0xff] %v2991
      %3504 = vst [vmem:[#allocation2 + $0x768] sm:$0xff] %v2992
      %3505 = vst [vmem:[#allocation2 + $0x770] sm:$0xff] %v2993
      %3506 = vst [vmem:[#allocation2 + $0x778] sm:$0xff] %v2994
      %3507 = vst [vmem:[#allocation2 + $0x780] sm:$0xff] %v2995
      %3508 = vst [vmem:[#allocation2 + $0x788] sm:$0xff] %v2996
      %3509 = vst [vmem:[#allocation2 + $0x790] sm:$0xff] %v2997
      %3510 = vst [vmem:[#allocation2 + $0x798] sm:$0xff] %v2998
      %3511 = vst [vmem:[#allocation2 + $0x7a0] sm:$0xff] %v2999
      %3512 = vst [vmem:[#allocation2 + $0x7a8] sm:$0xff] %v3000
      %3513 = vst [vmem:[#allocation2 + $0x7b0] sm:$0xff] %v3001
      %3514 = vst [vmem:[#allocation2 + $0x7b8] sm:$0xff] %v3002
      %3515 = vst [vmem:[#allocation2 + $0x7c0] sm:$0xff] %v3003
      %3516 = vst [vmem:[#allocation2 + $0x7c8] sm:$0xff] %v3004
      %3517 = vst [vmem:[#allocation2 + $0x7d0] sm:$0xff] %v3005
      %3518 = vst [vmem:[#allocation2 + $0x7d8] sm:$0xff] %v3006
      %3519 = vst [vmem:[#allocation2 + $0x7e0] sm:$0xff] %v3007
      %3520 = vst [vmem:[#allocation2 + $0x7e8] sm:$0xff] %v3008
      %3521 = vst [vmem:[#allocation2 + $0x7f0] sm:$0xff] %v3009
      %3522 = vst [vmem:[#allocation2 + $0x7f8] sm:$0xff] %v3010
    $region37: #{feedforward_nn.1} parent=1 // pred_fallthru
      _
    %v3523 = vld [vmem:[%s0] sm:$0xf]
    %v3524 = vld [vmem:[%s0 + $0x4] sm:$0xf]
    %v3525 = vld [vmem:[%s0 + $0x8] sm:$0xf]
    %v3526 = vld [vmem:[%s0 + $0xc] sm:$0xf]
    %v3527 = vld [vmem:[%s0 + $0x10] sm:$0xf]
    %v3528 = vld [vmem:[%s0 + $0x14] sm:$0xf]
    %v3529 = vld [vmem:[%s0 + $0x18] sm:$0xf]
    %v3530 = vld [vmem:[%s0 + $0x1c] sm:$0xf]
    %v3531 = vld [vmem:[%s0 + $0x20] sm:$0xf]
    %v3532 = vld [vmem:[%s0 + $0x24] sm:$0xf]
    %v3533 = vld [vmem:[%s0 + $0x28] sm:$0xf]
    %v3534 = vld [vmem:[%s0 + $0x2c] sm:$0xf]
    %v3535 = vld [vmem:[%s0 + $0x30] sm:$0xf]
    %v3536 = vld [vmem:[%s0 + $0x34] sm:$0xf]
    %v3537 = vld [vmem:[%s0 + $0x38] sm:$0xf]
    %v3538 = vld [vmem:[%s0 + $0x3c] sm:$0xf]
    %v3539 = vld [vmem:[%s0 + $0x40] sm:$0xf]
    %v3540 = vld [vmem:[%s0 + $0x44] sm:$0xf]
    %v3541 = vld [vmem:[%s0 + $0x48] sm:$0xf]
    %v3542 = vld [vmem:[%s0 + $0x4c] sm:$0xf]
    %v3543 = vld [vmem:[%s0 + $0x50] sm:$0xf]
    %v3544 = vld [vmem:[%s0 + $0x54] sm:$0xf]
    %v3545 = vld [vmem:[%s0 + $0x58] sm:$0xf]
    %v3546 = vld [vmem:[%s0 + $0x5c] sm:$0xf]
    %v3547 = vld [vmem:[%s0 + $0x60] sm:$0xf]
    %v3548 = vld [vmem:[%s0 + $0x64] sm:$0xf]
    %v3549 = vld [vmem:[%s0 + $0x68] sm:$0xf]
    %v3550 = vld [vmem:[%s0 + $0x6c] sm:$0xf]
    %v3551 = vld [vmem:[%s0 + $0x70] sm:$0xf]
    %v3552 = vld [vmem:[%s0 + $0x74] sm:$0xf]
    %v3553 = vld [vmem:[%s0 + $0x78] sm:$0xf]
    %v3554 = vld [vmem:[%s0 + $0x7c] sm:$0xf]
    %v3555 = vld [vmem:[%s1] sm:$0xff]
    %v3556 = vld [vmem:[%s1 + $0x8] sm:$0xff]
    %v3557 = vld [vmem:[%s1 + $0x10] sm:$0xff]
    %v3558 = vld [vmem:[%s1 + $0x18] sm:$0xff]
    %v3559 = vld [vmem:[%s1 + $0x20] sm:$0xff]
    %v3560 = vld [vmem:[%s1 + $0x28] sm:$0xff]
    %v3561 = vld [vmem:[%s1 + $0x30] sm:$0xff]
    %v3562 = vld [vmem:[%s1 + $0x38] sm:$0xff]
    %v3563 = vld [vmem:[%s1 + $0x40] sm:$0xff]
    %v3564 = vld [vmem:[%s1 + $0x48] sm:$0xff]
    %v3565 = vld [vmem:[%s1 + $0x50] sm:$0xff]
    %v3566 = vld [vmem:[%s1 + $0x58] sm:$0xff]
    %v3567 = vld [vmem:[%s1 + $0x60] sm:$0xff]
    %v3568 = vld [vmem:[%s1 + $0x68] sm:$0xff]
    %v3569 = vld [vmem:[%s1 + $0x70] sm:$0xff]
    %v3570 = vld [vmem:[%s1 + $0x78] sm:$0xff]
    %v3571 = vld [vmem:[%s1 + $0x80] sm:$0xff]
    %v3572 = vld [vmem:[%s1 + $0x88] sm:$0xff]
    %v3573 = vld [vmem:[%s1 + $0x90] sm:$0xff]
    %v3574 = vld [vmem:[%s1 + $0x98] sm:$0xff]
    %v3575 = vld [vmem:[%s1 + $0xa0] sm:$0xff]
    %v3576 = vld [vmem:[%s1 + $0xa8] sm:$0xff]
    %v3577 = vld [vmem:[%s1 + $0xb0] sm:$0xff]
    %v3578 = vld [vmem:[%s1 + $0xb8] sm:$0xff]
    %v3579 = vld [vmem:[%s1 + $0xc0] sm:$0xff]
    %v3580 = vld [vmem:[%s1 + $0xc8] sm:$0xff]
    %v3581 = vld [vmem:[%s1 + $0xd0] sm:$0xff]
    %v3582 = vld [vmem:[%s1 + $0xd8] sm:$0xff]
    %v3583 = vld [vmem:[%s1 + $0xe0] sm:$0xff]
    %v3584 = vld [vmem:[%s1 + $0xe8] sm:$0xff]
    %v3585 = vld [vmem:[%s1 + $0xf0] sm:$0xff]
    %v3586 = vld [vmem:[%s1 + $0xf8] sm:$0xff]
    %v3619 = vunpack.c.l.b16 %v3523
    %v3620 = vunpack.c.l.b16 %v3524
    %v3621 = vunpack.c.l.b16 %v3525
    %v3622 = vunpack.c.l.b16 %v3526
    %v3623 = vunpack.c.l.b16 %v3527
    %v3624 = vunpack.c.l.b16 %v3528
    %v3625 = vunpack.c.l.b16 %v3529
    %v3626 = vunpack.c.l.b16 %v3530
    %v3627 = vunpack.c.l.b16 %v3531
    %v3628 = vunpack.c.l.b16 %v3532
    %v3629 = vunpack.c.l.b16 %v3533
    %v3630 = vunpack.c.l.b16 %v3534
    %v3631 = vunpack.c.l.b16 %v3535
    %v3632 = vunpack.c.l.b16 %v3536
    %v3633 = vunpack.c.l.b16 %v3537
    %v3634 = vunpack.c.l.b16 %v3538
    %v3635 = vunpack.c.l.b16 %v3539
    %v3636 = vunpack.c.l.b16 %v3540
    %v3637 = vunpack.c.l.b16 %v3541
    %v3638 = vunpack.c.l.b16 %v3542
    %v3639 = vunpack.c.l.b16 %v3543
    %v3640 = vunpack.c.l.b16 %v3544
    %v3641 = vunpack.c.l.b16 %v3545
    %v3642 = vunpack.c.l.b16 %v3546
    %v3643 = vunpack.c.l.b16 %v3547
    %v3644 = vunpack.c.l.b16 %v3548
    %v3645 = vunpack.c.l.b16 %v3549
    %v3646 = vunpack.c.l.b16 %v3550
    %v3647 = vunpack.c.l.b16 %v3551
    %v3648 = vunpack.c.l.b16 %v3552
    %v3649 = vunpack.c.l.b16 %v3553
    %v3650 = vunpack.c.l.b16 %v3554
    %v3651 = vpack.c.b16 %v3620, %v3619
    %v3652 = vpack.c.b16 %v3622, %v3621
    %v3653 = vpack.c.b16 %v3624, %v3623
    %v3654 = vpack.c.b16 %v3626, %v3625
    %v3655 = vpack.c.b16 %v3628, %v3627
    %v3656 = vpack.c.b16 %v3630, %v3629
    %v3657 = vpack.c.b16 %v3632, %v3631
    %v3658 = vpack.c.b16 %v3634, %v3633
    %v3659 = vpack.c.b16 %v3636, %v3635
    %v3660 = vpack.c.b16 %v3638, %v3637
    %v3661 = vpack.c.b16 %v3640, %v3639
    %v3662 = vpack.c.b16 %v3642, %v3641
    %v3663 = vpack.c.b16 %v3644, %v3643
    %v3664 = vpack.c.b16 %v3646, %v3645
    %v3665 = vpack.c.b16 %v3648, %v3647
    %v3666 = vpack.c.b16 %v3650, %v3649
    %v3699 = vunpack.c.l.b16 %v3555
    %v3700 = vunpack.c.h.b16 %v3555
    %v3701 = vunpack.c.l.b16 %v3556
    %v3702 = vunpack.c.h.b16 %v3556
    %v3703 = vunpack.c.l.b16 %v3557
    %v3704 = vunpack.c.h.b16 %v3557
    %v3705 = vunpack.c.l.b16 %v3558
    %v3706 = vunpack.c.h.b16 %v3558
    %v3707 = vunpack.c.l.b16 %v3559
    %v3708 = vunpack.c.h.b16 %v3559
    %v3709 = vunpack.c.l.b16 %v3560
    %v3710 = vunpack.c.h.b16 %v3560
    %v3711 = vunpack.c.l.b16 %v3561
    %v3712 = vunpack.c.h.b16 %v3561
    %v3713 = vunpack.c.l.b16 %v3562
    %v3714 = vunpack.c.h.b16 %v3562
    %v3715 = vunpack.c.l.b16 %v3563
    %v3716 = vunpack.c.h.b16 %v3563
    %v3717 = vunpack.c.l.b16 %v3564
    %v3718 = vunpack.c.h.b16 %v3564
    %v3719 = vunpack.c.l.b16 %v3565
    %v3720 = vunpack.c.h.b16 %v3565
    %v3721 = vunpack.c.l.b16 %v3566
    %v3722 = vunpack.c.h.b16 %v3566
    %v3723 = vunpack.c.l.b16 %v3567
    %v3724 = vunpack.c.h.b16 %v3567
    %v3725 = vunpack.c.l.b16 %v3568
    %v3726 = vunpack.c.h.b16 %v3568
    %v3727 = vunpack.c.l.b16 %v3569
    %v3728 = vunpack.c.h.b16 %v3569
    %v3729 = vunpack.c.l.b16 %v3570
    %v3730 = vunpack.c.h.b16 %v3570
    %v3731 = vunpack.c.l.b16 %v3571
    %v3732 = vunpack.c.h.b16 %v3571
    %v3733 = vunpack.c.l.b16 %v3572
    %v3734 = vunpack.c.h.b16 %v3572
    %v3735 = vunpack.c.l.b16 %v3573
    %v3736 = vunpack.c.h.b16 %v3573
    %v3737 = vunpack.c.l.b16 %v3574
    %v3738 = vunpack.c.h.b16 %v3574
    %v3739 = vunpack.c.l.b16 %v3575
    %v3740 = vunpack.c.h.b16 %v3575
    %v3741 = vunpack.c.l.b16 %v3576
    %v3742 = vunpack.c.h.b16 %v3576
    %v3743 = vunpack.c.l.b16 %v3577
    %v3744 = vunpack.c.h.b16 %v3577
    %v3745 = vunpack.c.l.b16 %v3578
    %v3746 = vunpack.c.h.b16 %v3578
    %v3747 = vunpack.c.l.b16 %v3579
    %v3748 = vunpack.c.h.b16 %v3579
    %v3749 = vunpack.c.l.b16 %v3580
    %v3750 = vunpack.c.h.b16 %v3580
    %v3751 = vunpack.c.l.b16 %v3581
    %v3752 = vunpack.c.h.b16 %v3581
    %v3753 = vunpack.c.l.b16 %v3582
    %v3754 = vunpack.c.h.b16 %v3582
    %v3755 = vunpack.c.l.b16 %v3583
    %v3756 = vunpack.c.h.b16 %v3583
    %v3757 = vunpack.c.l.b16 %v3584
    %v3758 = vunpack.c.h.b16 %v3584
    %v3759 = vunpack.c.l.b16 %v3585
    %v3760 = vunpack.c.h.b16 %v3585
    %v3761 = vunpack.c.l.b16 %v3586
    %v3762 = vunpack.c.h.b16 %v3586
    %v3763 = vpack.c.b16 %v3707, %v3699
    %v3764 = vpack.c.b16 %v3708, %v3700
    %v3765 = vpack.c.b16 %v3709, %v3701
    %v3766 = vpack.c.b16 %v3710, %v3702
    %v3767 = vpack.c.b16 %v3711, %v3703
    %v3768 = vpack.c.b16 %v3712, %v3704
    %v3769 = vpack.c.b16 %v3713, %v3705
    %v3770 = vpack.c.b16 %v3714, %v3706
    %v3771 = vpack.c.b16 %v3723, %v3715
    %v3772 = vpack.c.b16 %v3724, %v3716
    %v3773 = vpack.c.b16 %v3725, %v3717
    %v3774 = vpack.c.b16 %v3726, %v3718
    %v3775 = vpack.c.b16 %v3727, %v3719
    %v3776 = vpack.c.b16 %v3728, %v3720
    %v3777 = vpack.c.b16 %v3729, %v3721
    %v3778 = vpack.c.b16 %v3730, %v3722
    %v3779 = vpack.c.b16 %v3739, %v3731
    %v3780 = vpack.c.b16 %v3740, %v3732
    %v3781 = vpack.c.b16 %v3741, %v3733
    %v3782 = vpack.c.b16 %v3742, %v3734
    %v3783 = vpack.c.b16 %v3743, %v3735
    %v3784 = vpack.c.b16 %v3744, %v3736
    %v3785 = vpack.c.b16 %v3745, %v3737
    %v3786 = vpack.c.b16 %v3746, %v3738
    %v3787 = vpack.c.b16 %v3755, %v3747
    %v3788 = vpack.c.b16 %v3756, %v3748
    %v3789 = vpack.c.b16 %v3757, %v3749
    %v3790 = vpack.c.b16 %v3758, %v3750
    %v3791 = vpack.c.b16 %v3759, %v3751
    %v3792 = vpack.c.b16 %v3760, %v3752
    %v3793 = vpack.c.b16 %v3761, %v3753
    %v3794 = vpack.c.b16 %v3762, %v3754
    %vm3827 = vcmask 523264
    %v3829 = vsel %vm3827, %v3651, 0
    %v3832 = vsel %vm3827, %v3652, 0
    %v3835 = vsel %vm3827, %v3653, 0
    %v3838 = vsel %vm3827, %v3654, 0
    %v3841 = vsel %vm3827, %v3655, 0
    %v3844 = vsel %vm3827, %v3656, 0
    %v3847 = vsel %vm3827, %v3657, 0
    %v3850 = vsel %vm3827, %v3658, 0
    %v3853 = vsel %vm3827, %v3659, 0
    %v3856 = vsel %vm3827, %v3660, 0
    %v3859 = vsel %vm3827, %v3661, 0
    %v3862 = vsel %vm3827, %v3662, 0
    %v3865 = vsel %vm3827, %v3663, 0
    %v3868 = vsel %vm3827, %v3664, 0
    %v3871 = vsel %vm3827, %v3665, 0
    %v3874 = vsel %vm3827, %v3666, 0
    %3876 = vmatprep.subr.bf16.mxu0 0
    %3877 = vmatpush1.bf16.msra.mxu0 0
    %3878 = vmatprep.subr.bf16.mxu0 0
    %3879 = vmatpush1.bf16.msra.mxu0 0
    %3880 = vmatprep.subr.bf16.mxu0 0
    %3881 = vmatpush1.bf16.msra.mxu0 0
    %3882 = vmatprep.subr.bf16.mxu0 0
    %3883 = vmatpush1.bf16.msra.mxu0 0
    %3884 = vmatprep.subr.bf16.mxu0 %v3788
    %3885 = vmatpush1.bf16.msra.mxu0 %v3787
    %3886 = vmatprep.subr.bf16.mxu0 %v3780
    %3887 = vmatpush1.bf16.msra.mxu0 %v3779
    %3888 = vmatprep.subr.bf16.mxu0 %v3772
    %3889 = vmatpush1.bf16.msra.mxu0 %v3771
    %3890 = vmatprep.subr.bf16.mxu0 %v3764
    %3891 = vmatpush1.bf16.msra.mxu0 %v3763
    %3892 = vmatprep.subr.bf16.mxu0 0
    %3893 = vmatpush2.bf16.msra.mxu0 0
    %3894 = vmatprep.subr.bf16.mxu0 0
    %3895 = vmatpush2.bf16.msra.mxu0 0
    %3896 = vmatprep.subr.bf16.mxu0 0
    %3897 = vmatpush2.bf16.msra.mxu0 0
    %3898 = vmatprep.subr.bf16.mxu0 0
    %3899 = vmatpush2.bf16.msra.mxu0 0
    %3900 = vmatprep.subr.bf16.mxu0 0
    %3901 = vmatpush2.bf16.msra.mxu0 0
    %3902 = vmatprep.subr.bf16.mxu0 0
    %3903 = vmatpush2.bf16.msra.mxu0 0
    %3904 = vmatprep.subr.bf16.mxu0 0
    %3905 = vmatpush2.bf16.msra.mxu0 0
    %3906 = vmatprep.subr.bf16.mxu0 0
    %3907 = vmatpush2.bf16.msra.mxu0 0
    %3908 = vmatprep.mubr.bf16.mxu0 0
    %3909 = vmatmul.mubr.bf16.gmra.mxu0 %v3829
    %v3910 = vpop.f32.mrf.mxu0
    %v3911 = vadd.f32 0.0, %v3910
    %v3912 = vpop.f32.mrf.mxu0
    %v3913 = vadd.f32 0.0, %v3912
    %v3914 = vpop.f32.mrf.mxu0
    %v3915 = vadd.f32 0.0, %v3914
    %v3916 = vpop.f32.mrf.mxu0
    %v3917 = vadd.f32 0.0, %v3916
    %3918 = vmatprep.mubr.bf16.mxu0 0
    %3919 = vmatmul.mubr.bf16.gmra.mxu0 %v3832
    %v3920 = vpop.f32.mrf.mxu0
    %v3921 = vadd.f32 0.0, %v3920
    %v3922 = vpop.f32.mrf.mxu0
    %v3923 = vadd.f32 0.0, %v3922
    %v3924 = vpop.f32.mrf.mxu0
    %v3925 = vadd.f32 0.0, %v3924
    %v3926 = vpop.f32.mrf.mxu0
    %v3927 = vadd.f32 0.0, %v3926
    %3928 = vmatprep.mubr.bf16.mxu0 0
    %3929 = vmatmul.mubr.bf16.gmra.mxu0 %v3835
    %v3930 = vpop.f32.mrf.mxu0
    %v3931 = vadd.f32 0.0, %v3930
    %v3932 = vpop.f32.mrf.mxu0
    %v3933 = vadd.f32 0.0, %v3932
    %v3934 = vpop.f32.mrf.mxu0
    %v3935 = vadd.f32 0.0, %v3934
    %v3936 = vpop.f32.mrf.mxu0
    %v3937 = vadd.f32 0.0, %v3936
    %3938 = vmatprep.mubr.bf16.mxu0 0
    %3939 = vmatmul.mubr.bf16.gmra.mxu0 %v3838
    %v3940 = vpop.f32.mrf.mxu0
    %v3941 = vadd.f32 0.0, %v3940
    %v3942 = vpop.f32.mrf.mxu0
    %v3943 = vadd.f32 0.0, %v3942
    %v3944 = vpop.f32.mrf.mxu0
    %v3945 = vadd.f32 0.0, %v3944
    %v3946 = vpop.f32.mrf.mxu0
    %v3947 = vadd.f32 0.0, %v3946
    %3948 = vmatprep.mubr.bf16.mxu0 0
    %3949 = vmatmul.mubr.bf16.gmra.mxu0 %v3841
    %v3950 = vpop.f32.mrf.mxu0
    %v3951 = vadd.f32 0.0, %v3950
    %v3952 = vpop.f32.mrf.mxu0
    %v3953 = vadd.f32 0.0, %v3952
    %v3954 = vpop.f32.mrf.mxu0
    %v3955 = vadd.f32 0.0, %v3954
    %v3956 = vpop.f32.mrf.mxu0
    %v3957 = vadd.f32 0.0, %v3956
    %3958 = vmatprep.mubr.bf16.mxu0 0
    %3959 = vmatmul.mubr.bf16.gmra.mxu0 %v3844
    %v3960 = vpop.f32.mrf.mxu0
    %v3961 = vadd.f32 0.0, %v3960
    %v3962 = vpop.f32.mrf.mxu0
    %v3963 = vadd.f32 0.0, %v3962
    %v3964 = vpop.f32.mrf.mxu0
    %v3965 = vadd.f32 0.0, %v3964
    %v3966 = vpop.f32.mrf.mxu0
    %v3967 = vadd.f32 0.0, %v3966
    %3968 = vmatprep.mubr.bf16.mxu0 0
    %3969 = vmatmul.mubr.bf16.gmra.mxu0 %v3847
    %v3970 = vpop.f32.mrf.mxu0
    %v3971 = vadd.f32 0.0, %v3970
    %v3972 = vpop.f32.mrf.mxu0
    %v3973 = vadd.f32 0.0, %v3972
    %v3974 = vpop.f32.mrf.mxu0
    %v3975 = vadd.f32 0.0, %v3974
    %v3976 = vpop.f32.mrf.mxu0
    %v3977 = vadd.f32 0.0, %v3976
    %3978 = vmatprep.mubr.bf16.mxu0 0
    %3979 = vmatmul.mubr.bf16.gmra.mxu0 %v3850
    %v3980 = vpop.f32.mrf.mxu0
    %v3981 = vadd.f32 0.0, %v3980
    %v3982 = vpop.f32.mrf.mxu0
    %v3983 = vadd.f32 0.0, %v3982
    %v3984 = vpop.f32.mrf.mxu0
    %v3985 = vadd.f32 0.0, %v3984
    %v3986 = vpop.f32.mrf.mxu0
    %v3987 = vadd.f32 0.0, %v3986
    %3988 = vmatprep.mubr.bf16.mxu0 0
    %3989 = vmatmul.mubr.bf16.gmra.mxu0 %v3853
    %v3990 = vpop.f32.mrf.mxu0
    %v3991 = vadd.f32 0.0, %v3990
    %v3992 = vpop.f32.mrf.mxu0
    %v3993 = vadd.f32 0.0, %v3992
    %v3994 = vpop.f32.mrf.mxu0
    %v3995 = vadd.f32 0.0, %v3994
    %v3996 = vpop.f32.mrf.mxu0
    %v3997 = vadd.f32 0.0, %v3996
    %3998 = vmatprep.mubr.bf16.mxu0 0
    %3999 = vmatmul.mubr.bf16.gmra.mxu0 %v3856
    %v4000 = vpop.f32.mrf.mxu0
    %v4001 = vadd.f32 0.0, %v4000
    %v4002 = vpop.f32.mrf.mxu0
    %v4003 = vadd.f32 0.0, %v4002
    %v4004 = vpop.f32.mrf.mxu0
    %v4005 = vadd.f32 0.0, %v4004
    %v4006 = vpop.f32.mrf.mxu0
    %v4007 = vadd.f32 0.0, %v4006
    %4008 = vmatprep.mubr.bf16.mxu0 0
    %4009 = vmatmul.mubr.bf16.gmra.mxu0 %v3859
    %v4010 = vpop.f32.mrf.mxu0
    %v4011 = vadd.f32 0.0, %v4010
    %v4012 = vpop.f32.mrf.mxu0
    %v4013 = vadd.f32 0.0, %v4012
    %v4014 = vpop.f32.mrf.mxu0
    %v4015 = vadd.f32 0.0, %v4014
    %v4016 = vpop.f32.mrf.mxu0
    %v4017 = vadd.f32 0.0, %v4016
    %4018 = vmatprep.mubr.bf16.mxu0 0
    %4019 = vmatmul.mubr.bf16.gmra.mxu0 %v3862
    %v4020 = vpop.f32.mrf.mxu0
    %v4021 = vadd.f32 0.0, %v4020
    %v4022 = vpop.f32.mrf.mxu0
    %v4023 = vadd.f32 0.0, %v4022
    %v4024 = vpop.f32.mrf.mxu0
    %v4025 = vadd.f32 0.0, %v4024
    %v4026 = vpop.f32.mrf.mxu0
    %v4027 = vadd.f32 0.0, %v4026
    %4028 = vmatprep.mubr.bf16.mxu0 0
    %4029 = vmatmul.mubr.bf16.gmra.mxu0 %v3865
    %v4030 = vpop.f32.mrf.mxu0
    %v4031 = vadd.f32 0.0, %v4030
    %v4032 = vpop.f32.mrf.mxu0
    %v4033 = vadd.f32 0.0, %v4032
    %v4034 = vpop.f32.mrf.mxu0
    %v4035 = vadd.f32 0.0, %v4034
    %v4036 = vpop.f32.mrf.mxu0
    %v4037 = vadd.f32 0.0, %v4036
    %4038 = vmatprep.mubr.bf16.mxu0 0
    %4039 = vmatmul.mubr.bf16.gmra.mxu0 %v3868
    %v4040 = vpop.f32.mrf.mxu0
    %v4041 = vadd.f32 0.0, %v4040
    %v4042 = vpop.f32.mrf.mxu0
    %v4043 = vadd.f32 0.0, %v4042
    %v4044 = vpop.f32.mrf.mxu0
    %v4045 = vadd.f32 0.0, %v4044
    %v4046 = vpop.f32.mrf.mxu0
    %v4047 = vadd.f32 0.0, %v4046
    %4048 = vmatprep.mubr.bf16.mxu0 0
    %4049 = vmatmul.mubr.bf16.gmra.mxu0 %v3871
    %v4050 = vpop.f32.mrf.mxu0
    %v4051 = vadd.f32 0.0, %v4050
    %v4052 = vpop.f32.mrf.mxu0
    %v4053 = vadd.f32 0.0, %v4052
    %v4054 = vpop.f32.mrf.mxu0
    %v4055 = vadd.f32 0.0, %v4054
    %v4056 = vpop.f32.mrf.mxu0
    %v4057 = vadd.f32 0.0, %v4056
    %4058 = vmatprep.mubr.bf16.mxu0 0
    %4059 = vmatmul.mubr.bf16.gmra.mxu0 %v3874
    %v4060 = vpop.f32.mrf.mxu0
    %v4061 = vadd.f32 0.0, %v4060
    %v4062 = vpop.f32.mrf.mxu0
    %v4063 = vadd.f32 0.0, %v4062
    %v4064 = vpop.f32.mrf.mxu0
    %v4065 = vadd.f32 0.0, %v4064
    %v4066 = vpop.f32.mrf.mxu0
    %v4067 = vadd.f32 0.0, %v4066
    %4068 = vdwg.mxu0
    %4069 = vmatprep.subr.bf16.mxu0 0
    %4070 = vmatpush1.bf16.msra.mxu0 0
    %4071 = vmatprep.subr.bf16.mxu0 0
    %4072 = vmatpush1.bf16.msra.mxu0 0
    %4073 = vmatprep.subr.bf16.mxu0 0
    %4074 = vmatpush1.bf16.msra.mxu0 0
    %4075 = vmatprep.subr.bf16.mxu0 0
    %4076 = vmatpush1.bf16.msra.mxu0 0
    %4077 = vmatprep.subr.bf16.mxu0 %v3790
    %4078 = vmatpush1.bf16.msra.mxu0 %v3789
    %4079 = vmatprep.subr.bf16.mxu0 %v3782
    %4080 = vmatpush1.bf16.msra.mxu0 %v3781
    %4081 = vmatprep.subr.bf16.mxu0 %v3774
    %4082 = vmatpush1.bf16.msra.mxu0 %v3773
    %4083 = vmatprep.subr.bf16.mxu0 %v3766
    %4084 = vmatpush1.bf16.msra.mxu0 %v3765
    %4085 = vmatprep.subr.bf16.mxu0 0
    %4086 = vmatpush2.bf16.msra.mxu0 0
    %4087 = vmatprep.subr.bf16.mxu0 0
    %4088 = vmatpush2.bf16.msra.mxu0 0
    %4089 = vmatprep.subr.bf16.mxu0 0
    %4090 = vmatpush2.bf16.msra.mxu0 0
    %4091 = vmatprep.subr.bf16.mxu0 0
    %4092 = vmatpush2.bf16.msra.mxu0 0
    %4093 = vmatprep.subr.bf16.mxu0 0
    %4094 = vmatpush2.bf16.msra.mxu0 0
    %4095 = vmatprep.subr.bf16.mxu0 0
    %4096 = vmatpush2.bf16.msra.mxu0 0
    %4097 = vmatprep.subr.bf16.mxu0 0
    %4098 = vmatpush2.bf16.msra.mxu0 0
    %4099 = vmatprep.subr.bf16.mxu0 0
    %4100 = vmatpush2.bf16.msra.mxu0 0
    %4101 = vmatprep.mubr.bf16.mxu0 0
    %4102 = vmatmul.mubr.bf16.gmra.mxu0 %v3829
    %v4103 = vpop.f32.mrf.mxu0
    %v4104 = vadd.f32 0.0, %v4103
    %v4105 = vpop.f32.mrf.mxu0
    %v4106 = vadd.f32 0.0, %v4105
    %v4107 = vpop.f32.mrf.mxu0
    %v4108 = vadd.f32 0.0, %v4107
    %v4109 = vpop.f32.mrf.mxu0
    %v4110 = vadd.f32 0.0, %v4109
    %4111 = vmatprep.mubr.bf16.mxu0 0
    %4112 = vmatmul.mubr.bf16.gmra.mxu0 %v3832
    %v4113 = vpop.f32.mrf.mxu0
    %v4114 = vadd.f32 0.0, %v4113
    %v4115 = vpop.f32.mrf.mxu0
    %v4116 = vadd.f32 0.0, %v4115
    %v4117 = vpop.f32.mrf.mxu0
    %v4118 = vadd.f32 0.0, %v4117
    %v4119 = vpop.f32.mrf.mxu0
    %v4120 = vadd.f32 0.0, %v4119
    %4121 = vmatprep.mubr.bf16.mxu0 0
    %4122 = vmatmul.mubr.bf16.gmra.mxu0 %v3835
    %v4123 = vpop.f32.mrf.mxu0
    %v4124 = vadd.f32 0.0, %v4123
    %v4125 = vpop.f32.mrf.mxu0
    %v4126 = vadd.f32 0.0, %v4125
    %v4127 = vpop.f32.mrf.mxu0
    %v4128 = vadd.f32 0.0, %v4127
    %v4129 = vpop.f32.mrf.mxu0
    %v4130 = vadd.f32 0.0, %v4129
    %4131 = vmatprep.mubr.bf16.mxu0 0
    %4132 = vmatmul.mubr.bf16.gmra.mxu0 %v3838
    %v4133 = vpop.f32.mrf.mxu0
    %v4134 = vadd.f32 0.0, %v4133
    %v4135 = vpop.f32.mrf.mxu0
    %v4136 = vadd.f32 0.0, %v4135
    %v4137 = vpop.f32.mrf.mxu0
    %v4138 = vadd.f32 0.0, %v4137
    %v4139 = vpop.f32.mrf.mxu0
    %v4140 = vadd.f32 0.0, %v4139
    %4141 = vmatprep.mubr.bf16.mxu0 0
    %4142 = vmatmul.mubr.bf16.gmra.mxu0 %v3841
    %v4143 = vpop.f32.mrf.mxu0
    %v4144 = vadd.f32 0.0, %v4143
    %v4145 = vpop.f32.mrf.mxu0
    %v4146 = vadd.f32 0.0, %v4145
    %v4147 = vpop.f32.mrf.mxu0
    %v4148 = vadd.f32 0.0, %v4147
    %v4149 = vpop.f32.mrf.mxu0
    %v4150 = vadd.f32 0.0, %v4149
    %4151 = vmatprep.mubr.bf16.mxu0 0
    %4152 = vmatmul.mubr.bf16.gmra.mxu0 %v3844
    %v4153 = vpop.f32.mrf.mxu0
    %v4154 = vadd.f32 0.0, %v4153
    %v4155 = vpop.f32.mrf.mxu0
    %v4156 = vadd.f32 0.0, %v4155
    %v4157 = vpop.f32.mrf.mxu0
    %v4158 = vadd.f32 0.0, %v4157
    %v4159 = vpop.f32.mrf.mxu0
    %v4160 = vadd.f32 0.0, %v4159
    %4161 = vmatprep.mubr.bf16.mxu0 0
    %4162 = vmatmul.mubr.bf16.gmra.mxu0 %v3847
    %v4163 = vpop.f32.mrf.mxu0
    %v4164 = vadd.f32 0.0, %v4163
    %v4165 = vpop.f32.mrf.mxu0
    %v4166 = vadd.f32 0.0, %v4165
    %v4167 = vpop.f32.mrf.mxu0
    %v4168 = vadd.f32 0.0, %v4167
    %v4169 = vpop.f32.mrf.mxu0
    %v4170 = vadd.f32 0.0, %v4169
    %4171 = vmatprep.mubr.bf16.mxu0 0
    %4172 = vmatmul.mubr.bf16.gmra.mxu0 %v3850
    %v4173 = vpop.f32.mrf.mxu0
    %v4174 = vadd.f32 0.0, %v4173
    %v4175 = vpop.f32.mrf.mxu0
    %v4176 = vadd.f32 0.0, %v4175
    %v4177 = vpop.f32.mrf.mxu0
    %v4178 = vadd.f32 0.0, %v4177
    %v4179 = vpop.f32.mrf.mxu0
    %v4180 = vadd.f32 0.0, %v4179
    %4181 = vmatprep.mubr.bf16.mxu0 0
    %4182 = vmatmul.mubr.bf16.gmra.mxu0 %v3853
    %v4183 = vpop.f32.mrf.mxu0
    %v4184 = vadd.f32 0.0, %v4183
    %v4185 = vpop.f32.mrf.mxu0
    %v4186 = vadd.f32 0.0, %v4185
    %v4187 = vpop.f32.mrf.mxu0
    %v4188 = vadd.f32 0.0, %v4187
    %v4189 = vpop.f32.mrf.mxu0
    %v4190 = vadd.f32 0.0, %v4189
    %4191 = vmatprep.mubr.bf16.mxu0 0
    %4192 = vmatmul.mubr.bf16.gmra.mxu0 %v3856
    %v4193 = vpop.f32.mrf.mxu0
    %v4194 = vadd.f32 0.0, %v4193
    %v4195 = vpop.f32.mrf.mxu0
    %v4196 = vadd.f32 0.0, %v4195
    %v4197 = vpop.f32.mrf.mxu0
    %v4198 = vadd.f32 0.0, %v4197
    %v4199 = vpop.f32.mrf.mxu0
    %v4200 = vadd.f32 0.0, %v4199
    %4201 = vmatprep.mubr.bf16.mxu0 0
    %4202 = vmatmul.mubr.bf16.gmra.mxu0 %v3859
    %v4203 = vpop.f32.mrf.mxu0
    %v4204 = vadd.f32 0.0, %v4203
    %v4205 = vpop.f32.mrf.mxu0
    %v4206 = vadd.f32 0.0, %v4205
    %v4207 = vpop.f32.mrf.mxu0
    %v4208 = vadd.f32 0.0, %v4207
    %v4209 = vpop.f32.mrf.mxu0
    %v4210 = vadd.f32 0.0, %v4209
    %4211 = vmatprep.mubr.bf16.mxu0 0
    %4212 = vmatmul.mubr.bf16.gmra.mxu0 %v3862
    %v4213 = vpop.f32.mrf.mxu0
    %v4214 = vadd.f32 0.0, %v4213
    %v4215 = vpop.f32.mrf.mxu0
    %v4216 = vadd.f32 0.0, %v4215
    %v4217 = vpop.f32.mrf.mxu0
    %v4218 = vadd.f32 0.0, %v4217
    %v4219 = vpop.f32.mrf.mxu0
    %v4220 = vadd.f32 0.0, %v4219
    %4221 = vmatprep.mubr.bf16.mxu0 0
    %4222 = vmatmul.mubr.bf16.gmra.mxu0 %v3865
    %v4223 = vpop.f32.mrf.mxu0
    %v4224 = vadd.f32 0.0, %v4223
    %v4225 = vpop.f32.mrf.mxu0
    %v4226 = vadd.f32 0.0, %v4225
    %v4227 = vpop.f32.mrf.mxu0
    %v4228 = vadd.f32 0.0, %v4227
    %v4229 = vpop.f32.mrf.mxu0
    %v4230 = vadd.f32 0.0, %v4229
    %4231 = vmatprep.mubr.bf16.mxu0 0
    %4232 = vmatmul.mubr.bf16.gmra.mxu0 %v3868
    %v4233 = vpop.f32.mrf.mxu0
    %v4234 = vadd.f32 0.0, %v4233
    %v4235 = vpop.f32.mrf.mxu0
    %v4236 = vadd.f32 0.0, %v4235
    %v4237 = vpop.f32.mrf.mxu0
    %v4238 = vadd.f32 0.0, %v4237
    %v4239 = vpop.f32.mrf.mxu0
    %v4240 = vadd.f32 0.0, %v4239
    %4241 = vmatprep.mubr.bf16.mxu0 0
    %4242 = vmatmul.mubr.bf16.gmra.mxu0 %v3871
    %v4243 = vpop.f32.mrf.mxu0
    %v4244 = vadd.f32 0.0, %v4243
    %v4245 = vpop.f32.mrf.mxu0
    %v4246 = vadd.f32 0.0, %v4245
    %v4247 = vpop.f32.mrf.mxu0
    %v4248 = vadd.f32 0.0, %v4247
    %v4249 = vpop.f32.mrf.mxu0
    %v4250 = vadd.f32 0.0, %v4249
    %4251 = vmatprep.mubr.bf16.mxu0 0
    %4252 = vmatmul.mubr.bf16.gmra.mxu0 %v3874
    %v4253 = vpop.f32.mrf.mxu0
    %v4254 = vadd.f32 0.0, %v4253
    %v4255 = vpop.f32.mrf.mxu0
    %v4256 = vadd.f32 0.0, %v4255
    %v4257 = vpop.f32.mrf.mxu0
    %v4258 = vadd.f32 0.0, %v4257
    %v4259 = vpop.f32.mrf.mxu0
    %v4260 = vadd.f32 0.0, %v4259
    %4261 = vdwg.mxu0
    %4262 = vmatprep.subr.bf16.mxu0 0
    %4263 = vmatpush1.bf16.msra.mxu0 0
    %4264 = vmatprep.subr.bf16.mxu0 0
    %4265 = vmatpush1.bf16.msra.mxu0 0
    %4266 = vmatprep.subr.bf16.mxu0 0
    %4267 = vmatpush1.bf16.msra.mxu0 0
    %4268 = vmatprep.subr.bf16.mxu0 0
    %4269 = vmatpush1.bf16.msra.mxu0 0
    %4270 = vmatprep.subr.bf16.mxu0 %v3792
    %4271 = vmatpush1.bf16.msra.mxu0 %v3791
    %4272 = vmatprep.subr.bf16.mxu0 %v3784
    %4273 = vmatpush1.bf16.msra.mxu0 %v3783
    %4274 = vmatprep.subr.bf16.mxu0 %v3776
    %4275 = vmatpush1.bf16.msra.mxu0 %v3775
    %4276 = vmatprep.subr.bf16.mxu0 %v3768
    %4277 = vmatpush1.bf16.msra.mxu0 %v3767
    %4278 = vmatprep.subr.bf16.mxu0 0
    %4279 = vmatpush2.bf16.msra.mxu0 0
    %4280 = vmatprep.subr.bf16.mxu0 0
    %4281 = vmatpush2.bf16.msra.mxu0 0
    %4282 = vmatprep.subr.bf16.mxu0 0
    %4283 = vmatpush2.bf16.msra.mxu0 0
    %4284 = vmatprep.subr.bf16.mxu0 0
    %4285 = vmatpush2.bf16.msra.mxu0 0
    %4286 = vmatprep.subr.bf16.mxu0 0
    %4287 = vmatpush2.bf16.msra.mxu0 0
    %4288 = vmatprep.subr.bf16.mxu0 0
    %4289 = vmatpush2.bf16.msra.mxu0 0
    %4290 = vmatprep.subr.bf16.mxu0 0
    %4291 = vmatpush2.bf16.msra.mxu0 0
    %4292 = vmatprep.subr.bf16.mxu0 0
    %4293 = vmatpush2.bf16.msra.mxu0 0
    %4294 = vmatprep.mubr.bf16.mxu0 0
    %4295 = vmatmul.mubr.bf16.gmra.mxu0 %v3829
    %v4296 = vpop.f32.mrf.mxu0
    %v4297 = vadd.f32 0.0, %v4296
    %v4298 = vpop.f32.mrf.mxu0
    %v4299 = vadd.f32 0.0, %v4298
    %v4300 = vpop.f32.mrf.mxu0
    %v4301 = vadd.f32 0.0, %v4300
    %v4302 = vpop.f32.mrf.mxu0
    %v4303 = vadd.f32 0.0, %v4302
    %4304 = vmatprep.mubr.bf16.mxu0 0
    %4305 = vmatmul.mubr.bf16.gmra.mxu0 %v3832
    %v4306 = vpop.f32.mrf.mxu0
    %v4307 = vadd.f32 0.0, %v4306
    %v4308 = vpop.f32.mrf.mxu0
    %v4309 = vadd.f32 0.0, %v4308
    %v4310 = vpop.f32.mrf.mxu0
    %v4311 = vadd.f32 0.0, %v4310
    %v4312 = vpop.f32.mrf.mxu0
    %v4313 = vadd.f32 0.0, %v4312
    %4314 = vmatprep.mubr.bf16.mxu0 0
    %4315 = vmatmul.mubr.bf16.gmra.mxu0 %v3835
    %v4316 = vpop.f32.mrf.mxu0
    %v4317 = vadd.f32 0.0, %v4316
    %v4318 = vpop.f32.mrf.mxu0
    %v4319 = vadd.f32 0.0, %v4318
    %v4320 = vpop.f32.mrf.mxu0
    %v4321 = vadd.f32 0.0, %v4320
    %v4322 = vpop.f32.mrf.mxu0
    %v4323 = vadd.f32 0.0, %v4322
    %4324 = vmatprep.mubr.bf16.mxu0 0
    %4325 = vmatmul.mubr.bf16.gmra.mxu0 %v3838
    %v4326 = vpop.f32.mrf.mxu0
    %v4327 = vadd.f32 0.0, %v4326
    %v4328 = vpop.f32.mrf.mxu0
    %v4329 = vadd.f32 0.0, %v4328
    %v4330 = vpop.f32.mrf.mxu0
    %v4331 = vadd.f32 0.0, %v4330
    %v4332 = vpop.f32.mrf.mxu0
    %v4333 = vadd.f32 0.0, %v4332
    %4334 = vmatprep.mubr.bf16.mxu0 0
    %4335 = vmatmul.mubr.bf16.gmra.mxu0 %v3841
    %v4336 = vpop.f32.mrf.mxu0
    %v4337 = vadd.f32 0.0, %v4336
    %v4338 = vpop.f32.mrf.mxu0
    %v4339 = vadd.f32 0.0, %v4338
    %v4340 = vpop.f32.mrf.mxu0
    %v4341 = vadd.f32 0.0, %v4340
    %v4342 = vpop.f32.mrf.mxu0
    %v4343 = vadd.f32 0.0, %v4342
    %4344 = vmatprep.mubr.bf16.mxu0 0
    %4345 = vmatmul.mubr.bf16.gmra.mxu0 %v3844
    %v4346 = vpop.f32.mrf.mxu0
    %v4347 = vadd.f32 0.0, %v4346
    %v4348 = vpop.f32.mrf.mxu0
    %v4349 = vadd.f32 0.0, %v4348
    %v4350 = vpop.f32.mrf.mxu0
    %v4351 = vadd.f32 0.0, %v4350
    %v4352 = vpop.f32.mrf.mxu0
    %v4353 = vadd.f32 0.0, %v4352
    %4354 = vmatprep.mubr.bf16.mxu0 0
    %4355 = vmatmul.mubr.bf16.gmra.mxu0 %v3847
    %v4356 = vpop.f32.mrf.mxu0
    %v4357 = vadd.f32 0.0, %v4356
    %v4358 = vpop.f32.mrf.mxu0
    %v4359 = vadd.f32 0.0, %v4358
    %v4360 = vpop.f32.mrf.mxu0
    %v4361 = vadd.f32 0.0, %v4360
    %v4362 = vpop.f32.mrf.mxu0
    %v4363 = vadd.f32 0.0, %v4362
    %4364 = vmatprep.mubr.bf16.mxu0 0
    %4365 = vmatmul.mubr.bf16.gmra.mxu0 %v3850
    %v4366 = vpop.f32.mrf.mxu0
    %v4367 = vadd.f32 0.0, %v4366
    %v4368 = vpop.f32.mrf.mxu0
    %v4369 = vadd.f32 0.0, %v4368
    %v4370 = vpop.f32.mrf.mxu0
    %v4371 = vadd.f32 0.0, %v4370
    %v4372 = vpop.f32.mrf.mxu0
    %v4373 = vadd.f32 0.0, %v4372
    %4374 = vmatprep.mubr.bf16.mxu0 0
    %4375 = vmatmul.mubr.bf16.gmra.mxu0 %v3853
    %v4376 = vpop.f32.mrf.mxu0
    %v4377 = vadd.f32 0.0, %v4376
    %v4378 = vpop.f32.mrf.mxu0
    %v4379 = vadd.f32 0.0, %v4378
    %v4380 = vpop.f32.mrf.mxu0
    %v4381 = vadd.f32 0.0, %v4380
    %v4382 = vpop.f32.mrf.mxu0
    %v4383 = vadd.f32 0.0, %v4382
    %4384 = vmatprep.mubr.bf16.mxu0 0
    %4385 = vmatmul.mubr.bf16.gmra.mxu0 %v3856
    %v4386 = vpop.f32.mrf.mxu0
    %v4387 = vadd.f32 0.0, %v4386
    %v4388 = vpop.f32.mrf.mxu0
    %v4389 = vadd.f32 0.0, %v4388
    %v4390 = vpop.f32.mrf.mxu0
    %v4391 = vadd.f32 0.0, %v4390
    %v4392 = vpop.f32.mrf.mxu0
    %v4393 = vadd.f32 0.0, %v4392
    %4394 = vmatprep.mubr.bf16.mxu0 0
    %4395 = vmatmul.mubr.bf16.gmra.mxu0 %v3859
    %v4396 = vpop.f32.mrf.mxu0
    %v4397 = vadd.f32 0.0, %v4396
    %v4398 = vpop.f32.mrf.mxu0
    %v4399 = vadd.f32 0.0, %v4398
    %v4400 = vpop.f32.mrf.mxu0
    %v4401 = vadd.f32 0.0, %v4400
    %v4402 = vpop.f32.mrf.mxu0
    %v4403 = vadd.f32 0.0, %v4402
    %4404 = vmatprep.mubr.bf16.mxu0 0
    %4405 = vmatmul.mubr.bf16.gmra.mxu0 %v3862
    %v4406 = vpop.f32.mrf.mxu0
    %v4407 = vadd.f32 0.0, %v4406
    %v4408 = vpop.f32.mrf.mxu0
    %v4409 = vadd.f32 0.0, %v4408
    %v4410 = vpop.f32.mrf.mxu0
    %v4411 = vadd.f32 0.0, %v4410
    %v4412 = vpop.f32.mrf.mxu0
    %v4413 = vadd.f32 0.0, %v4412
    %4414 = vmatprep.mubr.bf16.mxu0 0
    %4415 = vmatmul.mubr.bf16.gmra.mxu0 %v3865
    %v4416 = vpop.f32.mrf.mxu0
    %v4417 = vadd.f32 0.0, %v4416
    %v4418 = vpop.f32.mrf.mxu0
    %v4419 = vadd.f32 0.0, %v4418
    %v4420 = vpop.f32.mrf.mxu0
    %v4421 = vadd.f32 0.0, %v4420
    %v4422 = vpop.f32.mrf.mxu0
    %v4423 = vadd.f32 0.0, %v4422
    %4424 = vmatprep.mubr.bf16.mxu0 0
    %4425 = vmatmul.mubr.bf16.gmra.mxu0 %v3868
    %v4426 = vpop.f32.mrf.mxu0
    %v4427 = vadd.f32 0.0, %v4426
    %v4428 = vpop.f32.mrf.mxu0
    %v4429 = vadd.f32 0.0, %v4428
    %v4430 = vpop.f32.mrf.mxu0
    %v4431 = vadd.f32 0.0, %v4430
    %v4432 = vpop.f32.mrf.mxu0
    %v4433 = vadd.f32 0.0, %v4432
    %4434 = vmatprep.mubr.bf16.mxu0 0
    %4435 = vmatmul.mubr.bf16.gmra.mxu0 %v3871
    %v4436 = vpop.f32.mrf.mxu0
    %v4437 = vadd.f32 0.0, %v4436
    %v4438 = vpop.f32.mrf.mxu0
    %v4439 = vadd.f32 0.0, %v4438
    %v4440 = vpop.f32.mrf.mxu0
    %v4441 = vadd.f32 0.0, %v4440
    %v4442 = vpop.f32.mrf.mxu0
    %v4443 = vadd.f32 0.0, %v4442
    %4444 = vmatprep.mubr.bf16.mxu0 0
    %4445 = vmatmul.mubr.bf16.gmra.mxu0 %v3874
    %v4446 = vpop.f32.mrf.mxu0
    %v4447 = vadd.f32 0.0, %v4446
    %v4448 = vpop.f32.mrf.mxu0
    %v4449 = vadd.f32 0.0, %v4448
    %v4450 = vpop.f32.mrf.mxu0
    %v4451 = vadd.f32 0.0, %v4450
    %v4452 = vpop.f32.mrf.mxu0
    %v4453 = vadd.f32 0.0, %v4452
    %4454 = vdwg.mxu0
    %4455 = vmatprep.subr.bf16.mxu0 0
    %4456 = vmatpush1.bf16.msra.mxu0 0
    %4457 = vmatprep.subr.bf16.mxu0 0
    %4458 = vmatpush1.bf16.msra.mxu0 0
    %4459 = vmatprep.subr.bf16.mxu0 0
    %4460 = vmatpush1.bf16.msra.mxu0 0
    %4461 = vmatprep.subr.bf16.mxu0 0
    %4462 = vmatpush1.bf16.msra.mxu0 0
    %4463 = vmatprep.subr.bf16.mxu0 %v3794
    %4464 = vmatpush1.bf16.msra.mxu0 %v3793
    %4465 = vmatprep.subr.bf16.mxu0 %v3786
    %4466 = vmatpush1.bf16.msra.mxu0 %v3785
    %4467 = vmatprep.subr.bf16.mxu0 %v3778
    %4468 = vmatpush1.bf16.msra.mxu0 %v3777
    %4469 = vmatprep.subr.bf16.mxu0 %v3770
    %4470 = vmatpush1.bf16.msra.mxu0 %v3769
    %4471 = vmatprep.subr.bf16.mxu0 0
    %4472 = vmatpush2.bf16.msra.mxu0 0
    %4473 = vmatprep.subr.bf16.mxu0 0
    %4474 = vmatpush2.bf16.msra.mxu0 0
    %4475 = vmatprep.subr.bf16.mxu0 0
    %4476 = vmatpush2.bf16.msra.mxu0 0
    %4477 = vmatprep.subr.bf16.mxu0 0
    %4478 = vmatpush2.bf16.msra.mxu0 0
    %4479 = vmatprep.subr.bf16.mxu0 0
    %4480 = vmatpush2.bf16.msra.mxu0 0
    %4481 = vmatprep.subr.bf16.mxu0 0
    %4482 = vmatpush2.bf16.msra.mxu0 0
    %4483 = vmatprep.subr.bf16.mxu0 0
    %4484 = vmatpush2.bf16.msra.mxu0 0
    %4485 = vmatprep.subr.bf16.mxu0 0
    %4486 = vmatpush2.bf16.msra.mxu0 0
    %4487 = vmatprep.mubr.bf16.mxu0 0
    %4488 = vmatmul.mubr.bf16.gmra.mxu0 %v3829
    %v4489 = vpop.f32.mrf.mxu0
    %v4490 = vadd.f32 0.0, %v4489
    %v4491 = vpop.f32.mrf.mxu0
    %v4492 = vadd.f32 0.0, %v4491
    %v4493 = vpop.f32.mrf.mxu0
    %v4494 = vadd.f32 0.0, %v4493
    %v4495 = vpop.f32.mrf.mxu0
    %v4496 = vadd.f32 0.0, %v4495
    %4497 = vmatprep.mubr.bf16.mxu0 0
    %4498 = vmatmul.mubr.bf16.gmra.mxu0 %v3832
    %v4499 = vpop.f32.mrf.mxu0
    %v4500 = vadd.f32 0.0, %v4499
    %v4501 = vpop.f32.mrf.mxu0
    %v4502 = vadd.f32 0.0, %v4501
    %v4503 = vpop.f32.mrf.mxu0
    %v4504 = vadd.f32 0.0, %v4503
    %v4505 = vpop.f32.mrf.mxu0
    %v4506 = vadd.f32 0.0, %v4505
    %4507 = vmatprep.mubr.bf16.mxu0 0
    %4508 = vmatmul.mubr.bf16.gmra.mxu0 %v3835
    %v4509 = vpop.f32.mrf.mxu0
    %v4510 = vadd.f32 0.0, %v4509
    %v4511 = vpop.f32.mrf.mxu0
    %v4512 = vadd.f32 0.0, %v4511
    %v4513 = vpop.f32.mrf.mxu0
    %v4514 = vadd.f32 0.0, %v4513
    %v4515 = vpop.f32.mrf.mxu0
    %v4516 = vadd.f32 0.0, %v4515
    %4517 = vmatprep.mubr.bf16.mxu0 0
    %4518 = vmatmul.mubr.bf16.gmra.mxu0 %v3838
    %v4519 = vpop.f32.mrf.mxu0
    %v4520 = vadd.f32 0.0, %v4519
    %v4521 = vpop.f32.mrf.mxu0
    %v4522 = vadd.f32 0.0, %v4521
    %v4523 = vpop.f32.mrf.mxu0
    %v4524 = vadd.f32 0.0, %v4523
    %v4525 = vpop.f32.mrf.mxu0
    %v4526 = vadd.f32 0.0, %v4525
    %4527 = vmatprep.mubr.bf16.mxu0 0
    %4528 = vmatmul.mubr.bf16.gmra.mxu0 %v3841
    %v4529 = vpop.f32.mrf.mxu0
    %v4530 = vadd.f32 0.0, %v4529
    %v4531 = vpop.f32.mrf.mxu0
    %v4532 = vadd.f32 0.0, %v4531
    %v4533 = vpop.f32.mrf.mxu0
    %v4534 = vadd.f32 0.0, %v4533
    %v4535 = vpop.f32.mrf.mxu0
    %v4536 = vadd.f32 0.0, %v4535
    %4537 = vmatprep.mubr.bf16.mxu0 0
    %4538 = vmatmul.mubr.bf16.gmra.mxu0 %v3844
    %v4539 = vpop.f32.mrf.mxu0
    %v4540 = vadd.f32 0.0, %v4539
    %v4541 = vpop.f32.mrf.mxu0
    %v4542 = vadd.f32 0.0, %v4541
    %v4543 = vpop.f32.mrf.mxu0
    %v4544 = vadd.f32 0.0, %v4543
    %v4545 = vpop.f32.mrf.mxu0
    %v4546 = vadd.f32 0.0, %v4545
    %4547 = vmatprep.mubr.bf16.mxu0 0
    %4548 = vmatmul.mubr.bf16.gmra.mxu0 %v3847
    %v4549 = vpop.f32.mrf.mxu0
    %v4550 = vadd.f32 0.0, %v4549
    %v4551 = vpop.f32.mrf.mxu0
    %v4552 = vadd.f32 0.0, %v4551
    %v4553 = vpop.f32.mrf.mxu0
    %v4554 = vadd.f32 0.0, %v4553
    %v4555 = vpop.f32.mrf.mxu0
    %v4556 = vadd.f32 0.0, %v4555
    %4557 = vmatprep.mubr.bf16.mxu0 0
    %4558 = vmatmul.mubr.bf16.gmra.mxu0 %v3850
    %v4559 = vpop.f32.mrf.mxu0
    %v4560 = vadd.f32 0.0, %v4559
    %v4561 = vpop.f32.mrf.mxu0
    %v4562 = vadd.f32 0.0, %v4561
    %v4563 = vpop.f32.mrf.mxu0
    %v4564 = vadd.f32 0.0, %v4563
    %v4565 = vpop.f32.mrf.mxu0
    %v4566 = vadd.f32 0.0, %v4565
    %4567 = vmatprep.mubr.bf16.mxu0 0
    %4568 = vmatmul.mubr.bf16.gmra.mxu0 %v3853
    %v4569 = vpop.f32.mrf.mxu0
    %v4570 = vadd.f32 0.0, %v4569
    %v4571 = vpop.f32.mrf.mxu0
    %v4572 = vadd.f32 0.0, %v4571
    %v4573 = vpop.f32.mrf.mxu0
    %v4574 = vadd.f32 0.0, %v4573
    %v4575 = vpop.f32.mrf.mxu0
    %v4576 = vadd.f32 0.0, %v4575
    %4577 = vmatprep.mubr.bf16.mxu0 0
    %4578 = vmatmul.mubr.bf16.gmra.mxu0 %v3856
    %v4579 = vpop.f32.mrf.mxu0
    %v4580 = vadd.f32 0.0, %v4579
    %v4581 = vpop.f32.mrf.mxu0
    %v4582 = vadd.f32 0.0, %v4581
    %v4583 = vpop.f32.mrf.mxu0
    %v4584 = vadd.f32 0.0, %v4583
    %v4585 = vpop.f32.mrf.mxu0
    %v4586 = vadd.f32 0.0, %v4585
    %4587 = vmatprep.mubr.bf16.mxu0 0
    %4588 = vmatmul.mubr.bf16.gmra.mxu0 %v3859
    %v4589 = vpop.f32.mrf.mxu0
    %v4590 = vadd.f32 0.0, %v4589
    %v4591 = vpop.f32.mrf.mxu0
    %v4592 = vadd.f32 0.0, %v4591
    %v4593 = vpop.f32.mrf.mxu0
    %v4594 = vadd.f32 0.0, %v4593
    %v4595 = vpop.f32.mrf.mxu0
    %v4596 = vadd.f32 0.0, %v4595
    %4597 = vmatprep.mubr.bf16.mxu0 0
    %4598 = vmatmul.mubr.bf16.gmra.mxu0 %v3862
    %v4599 = vpop.f32.mrf.mxu0
    %v4600 = vadd.f32 0.0, %v4599
    %v4601 = vpop.f32.mrf.mxu0
    %v4602 = vadd.f32 0.0, %v4601
    %v4603 = vpop.f32.mrf.mxu0
    %v4604 = vadd.f32 0.0, %v4603
    %v4605 = vpop.f32.mrf.mxu0
    %v4606 = vadd.f32 0.0, %v4605
    %4607 = vmatprep.mubr.bf16.mxu0 0
    %4608 = vmatmul.mubr.bf16.gmra.mxu0 %v3865
    %v4609 = vpop.f32.mrf.mxu0
    %v4610 = vadd.f32 0.0, %v4609
    %v4611 = vpop.f32.mrf.mxu0
    %v4612 = vadd.f32 0.0, %v4611
    %v4613 = vpop.f32.mrf.mxu0
    %v4614 = vadd.f32 0.0, %v4613
    %v4615 = vpop.f32.mrf.mxu0
    %v4616 = vadd.f32 0.0, %v4615
    %4617 = vmatprep.mubr.bf16.mxu0 0
    %4618 = vmatmul.mubr.bf16.gmra.mxu0 %v3868
    %v4619 = vpop.f32.mrf.mxu0
    %v4620 = vadd.f32 0.0, %v4619
    %v4621 = vpop.f32.mrf.mxu0
    %v4622 = vadd.f32 0.0, %v4621
    %v4623 = vpop.f32.mrf.mxu0
    %v4624 = vadd.f32 0.0, %v4623
    %v4625 = vpop.f32.mrf.mxu0
    %v4626 = vadd.f32 0.0, %v4625
    %4627 = vmatprep.mubr.bf16.mxu0 0
    %4628 = vmatmul.mubr.bf16.gmra.mxu0 %v3871
    %v4629 = vpop.f32.mrf.mxu0
    %v4630 = vadd.f32 0.0, %v4629
    %v4631 = vpop.f32.mrf.mxu0
    %v4632 = vadd.f32 0.0, %v4631
    %v4633 = vpop.f32.mrf.mxu0
    %v4634 = vadd.f32 0.0, %v4633
    %v4635 = vpop.f32.mrf.mxu0
    %v4636 = vadd.f32 0.0, %v4635
    %4637 = vmatprep.mubr.bf16.mxu0 0
    %4638 = vmatmul.mubr.bf16.gmra.mxu0 %v3874
    %v4639 = vpop.f32.mrf.mxu0
    %v4640 = vadd.f32 0.0, %v4639
    %v4641 = vpop.f32.mrf.mxu0
    %v4642 = vadd.f32 0.0, %v4641
    %v4643 = vpop.f32.mrf.mxu0
    %v4644 = vadd.f32 0.0, %v4643
    %v4645 = vpop.f32.mrf.mxu0
    %v4646 = vadd.f32 0.0, %v4645
    %4647 = vdwg.mxu0
    %v4648 = vmax.f32 %v3911, 0.0
    %v4649 = vmax.f32 %v3913, 0.0
    %v4650 = vmax.f32 %v4104, 0.0
    %v4651 = vmax.f32 %v4106, 0.0
    %v4652 = vmax.f32 %v4297, 0.0
    %v4653 = vmax.f32 %v4299, 0.0
    %v4654 = vmax.f32 %v4490, 0.0
    %v4655 = vmax.f32 %v4492, 0.0
    %v4656 = vmax.f32 %v3915, 0.0
    %v4657 = vmax.f32 %v3917, 0.0
    %v4658 = vmax.f32 %v4108, 0.0
    %v4659 = vmax.f32 %v4110, 0.0
    %v4660 = vmax.f32 %v4301, 0.0
    %v4661 = vmax.f32 %v4303, 0.0
    %v4662 = vmax.f32 %v4494, 0.0
    %v4663 = vmax.f32 %v4496, 0.0
    %v4664 = vmax.f32 %v3921, 0.0
    %v4665 = vmax.f32 %v3923, 0.0
    %v4666 = vmax.f32 %v4114, 0.0
    %v4667 = vmax.f32 %v4116, 0.0
    %v4668 = vmax.f32 %v4307, 0.0
    %v4669 = vmax.f32 %v4309, 0.0
    %v4670 = vmax.f32 %v4500, 0.0
    %v4671 = vmax.f32 %v4502, 0.0
    %v4672 = vmax.f32 %v3925, 0.0
    %v4673 = vmax.f32 %v3927, 0.0
    %v4674 = vmax.f32 %v4118, 0.0
    %v4675 = vmax.f32 %v4120, 0.0
    %v4676 = vmax.f32 %v4311, 0.0
    %v4677 = vmax.f32 %v4313, 0.0
    %v4678 = vmax.f32 %v4504, 0.0
    %v4679 = vmax.f32 %v4506, 0.0
    %v4680 = vmax.f32 %v3931, 0.0
    %v4681 = vmax.f32 %v3933, 0.0
    %v4682 = vmax.f32 %v4124, 0.0
    %v4683 = vmax.f32 %v4126, 0.0
    %v4684 = vmax.f32 %v4317, 0.0
    %v4685 = vmax.f32 %v4319, 0.0
    %v4686 = vmax.f32 %v4510, 0.0
    %v4687 = vmax.f32 %v4512, 0.0
    %v4688 = vmax.f32 %v3935, 0.0
    %v4689 = vmax.f32 %v3937, 0.0
    %v4690 = vmax.f32 %v4128, 0.0
    %v4691 = vmax.f32 %v4130, 0.0
    %v4692 = vmax.f32 %v4321, 0.0
    %v4693 = vmax.f32 %v4323, 0.0
    %v4694 = vmax.f32 %v4514, 0.0
    %v4695 = vmax.f32 %v4516, 0.0
    %v4696 = vmax.f32 %v3941, 0.0
    %v4697 = vmax.f32 %v3943, 0.0
    %v4698 = vmax.f32 %v4134, 0.0
    %v4699 = vmax.f32 %v4136, 0.0
    %v4700 = vmax.f32 %v4327, 0.0
    %v4701 = vmax.f32 %v4329, 0.0
    %v4702 = vmax.f32 %v4520, 0.0
    %v4703 = vmax.f32 %v4522, 0.0
    %v4704 = vmax.f32 %v3945, 0.0
    %v4705 = vmax.f32 %v3947, 0.0
    %v4706 = vmax.f32 %v4138, 0.0
    %v4707 = vmax.f32 %v4140, 0.0
    %v4708 = vmax.f32 %v4331, 0.0
    %v4709 = vmax.f32 %v4333, 0.0
    %v4710 = vmax.f32 %v4524, 0.0
    %v4711 = vmax.f32 %v4526, 0.0
    %v4712 = vmax.f32 %v3951, 0.0
    %v4713 = vmax.f32 %v3953, 0.0
    %v4714 = vmax.f32 %v4144, 0.0
    %v4715 = vmax.f32 %v4146, 0.0
    %v4716 = vmax.f32 %v4337, 0.0
    %v4717 = vmax.f32 %v4339, 0.0
    %v4718 = vmax.f32 %v4530, 0.0
    %v4719 = vmax.f32 %v4532, 0.0
    %v4720 = vmax.f32 %v3955, 0.0
    %v4721 = vmax.f32 %v3957, 0.0
    %v4722 = vmax.f32 %v4148, 0.0
    %v4723 = vmax.f32 %v4150, 0.0
    %v4724 = vmax.f32 %v4341, 0.0
    %v4725 = vmax.f32 %v4343, 0.0
    %v4726 = vmax.f32 %v4534, 0.0
    %v4727 = vmax.f32 %v4536, 0.0
    %v4728 = vmax.f32 %v3961, 0.0
    %v4729 = vmax.f32 %v3963, 0.0
    %v4730 = vmax.f32 %v4154, 0.0
    %v4731 = vmax.f32 %v4156, 0.0
    %v4732 = vmax.f32 %v4347, 0.0
    %v4733 = vmax.f32 %v4349, 0.0
    %v4734 = vmax.f32 %v4540, 0.0
    %v4735 = vmax.f32 %v4542, 0.0
    %v4736 = vmax.f32 %v3965, 0.0
    %v4737 = vmax.f32 %v3967, 0.0
    %v4738 = vmax.f32 %v4158, 0.0
    %v4739 = vmax.f32 %v4160, 0.0
    %v4740 = vmax.f32 %v4351, 0.0
    %v4741 = vmax.f32 %v4353, 0.0
    %v4742 = vmax.f32 %v4544, 0.0
    %v4743 = vmax.f32 %v4546, 0.0
    %v4744 = vmax.f32 %v3971, 0.0
    %v4745 = vmax.f32 %v3973, 0.0
    %v4746 = vmax.f32 %v4164, 0.0
    %v4747 = vmax.f32 %v4166, 0.0
    %v4748 = vmax.f32 %v4357, 0.0
    %v4749 = vmax.f32 %v4359, 0.0
    %v4750 = vmax.f32 %v4550, 0.0
    %v4751 = vmax.f32 %v4552, 0.0
    %v4752 = vmax.f32 %v3975, 0.0
    %v4753 = vmax.f32 %v3977, 0.0
    %v4754 = vmax.f32 %v4168, 0.0
    %v4755 = vmax.f32 %v4170, 0.0
    %v4756 = vmax.f32 %v4361, 0.0
    %v4757 = vmax.f32 %v4363, 0.0
    %v4758 = vmax.f32 %v4554, 0.0
    %v4759 = vmax.f32 %v4556, 0.0
    %v4760 = vmax.f32 %v3981, 0.0
    %v4761 = vmax.f32 %v3983, 0.0
    %v4762 = vmax.f32 %v4174, 0.0
    %v4763 = vmax.f32 %v4176, 0.0
    %v4764 = vmax.f32 %v4367, 0.0
    %v4765 = vmax.f32 %v4369, 0.0
    %v4766 = vmax.f32 %v4560, 0.0
    %v4767 = vmax.f32 %v4562, 0.0
    %v4768 = vmax.f32 %v3985, 0.0
    %v4769 = vmax.f32 %v3987, 0.0
    %v4770 = vmax.f32 %v4178, 0.0
    %v4771 = vmax.f32 %v4180, 0.0
    %v4772 = vmax.f32 %v4371, 0.0
    %v4773 = vmax.f32 %v4373, 0.0
    %v4774 = vmax.f32 %v4564, 0.0
    %v4775 = vmax.f32 %v4566, 0.0
    %v4776 = vmax.f32 %v3991, 0.0
    %v4777 = vmax.f32 %v3993, 0.0
    %v4778 = vmax.f32 %v4184, 0.0
    %v4779 = vmax.f32 %v4186, 0.0
    %v4780 = vmax.f32 %v4377, 0.0
    %v4781 = vmax.f32 %v4379, 0.0
    %v4782 = vmax.f32 %v4570, 0.0
    %v4783 = vmax.f32 %v4572, 0.0
    %v4784 = vmax.f32 %v3995, 0.0
    %v4785 = vmax.f32 %v3997, 0.0
    %v4786 = vmax.f32 %v4188, 0.0
    %v4787 = vmax.f32 %v4190, 0.0
    %v4788 = vmax.f32 %v4381, 0.0
    %v4789 = vmax.f32 %v4383, 0.0
    %v4790 = vmax.f32 %v4574, 0.0
    %v4791 = vmax.f32 %v4576, 0.0
    %v4792 = vmax.f32 %v4001, 0.0
    %v4793 = vmax.f32 %v4003, 0.0
    %v4794 = vmax.f32 %v4194, 0.0
    %v4795 = vmax.f32 %v4196, 0.0
    %v4796 = vmax.f32 %v4387, 0.0
    %v4797 = vmax.f32 %v4389, 0.0
    %v4798 = vmax.f32 %v4580, 0.0
    %v4799 = vmax.f32 %v4582, 0.0
    %v4800 = vmax.f32 %v4005, 0.0
    %v4801 = vmax.f32 %v4007, 0.0
    %v4802 = vmax.f32 %v4198, 0.0
    %v4803 = vmax.f32 %v4200, 0.0
    %v4804 = vmax.f32 %v4391, 0.0
    %v4805 = vmax.f32 %v4393, 0.0
    %v4806 = vmax.f32 %v4584, 0.0
    %v4807 = vmax.f32 %v4586, 0.0
    %v4808 = vmax.f32 %v4011, 0.0
    %v4809 = vmax.f32 %v4013, 0.0
    %v4810 = vmax.f32 %v4204, 0.0
    %v4811 = vmax.f32 %v4206, 0.0
    %v4812 = vmax.f32 %v4397, 0.0
    %v4813 = vmax.f32 %v4399, 0.0
    %v4814 = vmax.f32 %v4590, 0.0
    %v4815 = vmax.f32 %v4592, 0.0
    %v4816 = vmax.f32 %v4015, 0.0
    %v4817 = vmax.f32 %v4017, 0.0
    %v4818 = vmax.f32 %v4208, 0.0
    %v4819 = vmax.f32 %v4210, 0.0
    %v4820 = vmax.f32 %v4401, 0.0
    %v4821 = vmax.f32 %v4403, 0.0
    %v4822 = vmax.f32 %v4594, 0.0
    %v4823 = vmax.f32 %v4596, 0.0
    %v4824 = vmax.f32 %v4021, 0.0
    %v4825 = vmax.f32 %v4023, 0.0
    %v4826 = vmax.f32 %v4214, 0.0
    %v4827 = vmax.f32 %v4216, 0.0
    %v4828 = vmax.f32 %v4407, 0.0
    %v4829 = vmax.f32 %v4409, 0.0
    %v4830 = vmax.f32 %v4600, 0.0
    %v4831 = vmax.f32 %v4602, 0.0
    %v4832 = vmax.f32 %v4025, 0.0
    %v4833 = vmax.f32 %v4027, 0.0
    %v4834 = vmax.f32 %v4218, 0.0
    %v4835 = vmax.f32 %v4220, 0.0
    %v4836 = vmax.f32 %v4411, 0.0
    %v4837 = vmax.f32 %v4413, 0.0
    %v4838 = vmax.f32 %v4604, 0.0
    %v4839 = vmax.f32 %v4606, 0.0
    %v4840 = vmax.f32 %v4031, 0.0
    %v4841 = vmax.f32 %v4033, 0.0
    %v4842 = vmax.f32 %v4224, 0.0
    %v4843 = vmax.f32 %v4226, 0.0
    %v4844 = vmax.f32 %v4417, 0.0
    %v4845 = vmax.f32 %v4419, 0.0
    %v4846 = vmax.f32 %v4610, 0.0
    %v4847 = vmax.f32 %v4612, 0.0
    %v4848 = vmax.f32 %v4035, 0.0
    %v4849 = vmax.f32 %v4037, 0.0
    %v4850 = vmax.f32 %v4228, 0.0
    %v4851 = vmax.f32 %v4230, 0.0
    %v4852 = vmax.f32 %v4421, 0.0
    %v4853 = vmax.f32 %v4423, 0.0
    %v4854 = vmax.f32 %v4614, 0.0
    %v4855 = vmax.f32 %v4616, 0.0
    %v4856 = vmax.f32 %v4041, 0.0
    %v4857 = vmax.f32 %v4043, 0.0
    %v4858 = vmax.f32 %v4234, 0.0
    %v4859 = vmax.f32 %v4236, 0.0
    %v4860 = vmax.f32 %v4427, 0.0
    %v4861 = vmax.f32 %v4429, 0.0
    %v4862 = vmax.f32 %v4620, 0.0
    %v4863 = vmax.f32 %v4622, 0.0
    %v4864 = vmax.f32 %v4045, 0.0
    %v4865 = vmax.f32 %v4047, 0.0
    %v4866 = vmax.f32 %v4238, 0.0
    %v4867 = vmax.f32 %v4240, 0.0
    %v4868 = vmax.f32 %v4431, 0.0
    %v4869 = vmax.f32 %v4433, 0.0
    %v4870 = vmax.f32 %v4624, 0.0
    %v4871 = vmax.f32 %v4626, 0.0
    %v4872 = vmax.f32 %v4051, 0.0
    %v4873 = vmax.f32 %v4053, 0.0
    %v4874 = vmax.f32 %v4244, 0.0
    %v4875 = vmax.f32 %v4246, 0.0
    %v4876 = vmax.f32 %v4437, 0.0
    %v4877 = vmax.f32 %v4439, 0.0
    %v4878 = vmax.f32 %v4630, 0.0
    %v4879 = vmax.f32 %v4632, 0.0
    %v4880 = vmax.f32 %v4055, 0.0
    %v4881 = vmax.f32 %v4057, 0.0
    %v4882 = vmax.f32 %v4248, 0.0
    %v4883 = vmax.f32 %v4250, 0.0
    %v4884 = vmax.f32 %v4441, 0.0
    %v4885 = vmax.f32 %v4443, 0.0
    %v4886 = vmax.f32 %v4634, 0.0
    %v4887 = vmax.f32 %v4636, 0.0
    %v4888 = vmax.f32 %v4061, 0.0
    %v4889 = vmax.f32 %v4063, 0.0
    %v4890 = vmax.f32 %v4254, 0.0
    %v4891 = vmax.f32 %v4256, 0.0
    %v4892 = vmax.f32 %v4447, 0.0
    %v4893 = vmax.f32 %v4449, 0.0
    %v4894 = vmax.f32 %v4640, 0.0
    %v4895 = vmax.f32 %v4642, 0.0
    %v4896 = vmax.f32 %v4065, 0.0
    %v4897 = vmax.f32 %v4067, 0.0
    %v4898 = vmax.f32 %v4258, 0.0
    %v4899 = vmax.f32 %v4260, 0.0
    %v4900 = vmax.f32 %v4451, 0.0
    %v4901 = vmax.f32 %v4453, 0.0
    %v4902 = vmax.f32 %v4644, 0.0
    %v4903 = vmax.f32 %v4646, 0.0
    %v4904 = vpack.c.bf16 %v4656, %v4648
    %v4905 = vpack.c.bf16 %v4657, %v4649
    %v4906 = vpack.c.bf16 %v4658, %v4650
    %v4907 = vpack.c.bf16 %v4659, %v4651
    %v4908 = vpack.c.bf16 %v4660, %v4652
    %v4909 = vpack.c.bf16 %v4661, %v4653
    %v4910 = vpack.c.bf16 %v4662, %v4654
    %v4911 = vpack.c.bf16 %v4663, %v4655
    %v4912 = vpack.c.bf16 %v4672, %v4664
    %v4913 = vpack.c.bf16 %v4673, %v4665
    %v4914 = vpack.c.bf16 %v4674, %v4666
    %v4915 = vpack.c.bf16 %v4675, %v4667
    %v4916 = vpack.c.bf16 %v4676, %v4668
    %v4917 = vpack.c.bf16 %v4677, %v4669
    %v4918 = vpack.c.bf16 %v4678, %v4670
    %v4919 = vpack.c.bf16 %v4679, %v4671
    %v4920 = vpack.c.bf16 %v4688, %v4680
    %v4921 = vpack.c.bf16 %v4689, %v4681
    %v4922 = vpack.c.bf16 %v4690, %v4682
    %v4923 = vpack.c.bf16 %v4691, %v4683
    %v4924 = vpack.c.bf16 %v4692, %v4684
    %v4925 = vpack.c.bf16 %v4693, %v4685
    %v4926 = vpack.c.bf16 %v4694, %v4686
    %v4927 = vpack.c.bf16 %v4695, %v4687
    %v4928 = vpack.c.bf16 %v4704, %v4696
    %v4929 = vpack.c.bf16 %v4705, %v4697
    %v4930 = vpack.c.bf16 %v4706, %v4698
    %v4931 = vpack.c.bf16 %v4707, %v4699
    %v4932 = vpack.c.bf16 %v4708, %v4700
    %v4933 = vpack.c.bf16 %v4709, %v4701
    %v4934 = vpack.c.bf16 %v4710, %v4702
    %v4935 = vpack.c.bf16 %v4711, %v4703
    %v4936 = vpack.c.bf16 %v4720, %v4712
    %v4937 = vpack.c.bf16 %v4721, %v4713
    %v4938 = vpack.c.bf16 %v4722, %v4714
    %v4939 = vpack.c.bf16 %v4723, %v4715
    %v4940 = vpack.c.bf16 %v4724, %v4716
    %v4941 = vpack.c.bf16 %v4725, %v4717
    %v4942 = vpack.c.bf16 %v4726, %v4718
    %v4943 = vpack.c.bf16 %v4727, %v4719
    %v4944 = vpack.c.bf16 %v4736, %v4728
    %v4945 = vpack.c.bf16 %v4737, %v4729
    %v4946 = vpack.c.bf16 %v4738, %v4730
    %v4947 = vpack.c.bf16 %v4739, %v4731
    %v4948 = vpack.c.bf16 %v4740, %v4732
    %v4949 = vpack.c.bf16 %v4741, %v4733
    %v4950 = vpack.c.bf16 %v4742, %v4734
    %v4951 = vpack.c.bf16 %v4743, %v4735
    %v4952 = vpack.c.bf16 %v4752, %v4744
    %v4953 = vpack.c.bf16 %v4753, %v4745
    %v4954 = vpack.c.bf16 %v4754, %v4746
    %v4955 = vpack.c.bf16 %v4755, %v4747
    %v4956 = vpack.c.bf16 %v4756, %v4748
    %v4957 = vpack.c.bf16 %v4757, %v4749
    %v4958 = vpack.c.bf16 %v4758, %v4750
    %v4959 = vpack.c.bf16 %v4759, %v4751
    %v4960 = vpack.c.bf16 %v4768, %v4760
    %v4961 = vpack.c.bf16 %v4769, %v4761
    %v4962 = vpack.c.bf16 %v4770, %v4762
    %v4963 = vpack.c.bf16 %v4771, %v4763
    %v4964 = vpack.c.bf16 %v4772, %v4764
    %v4965 = vpack.c.bf16 %v4773, %v4765
    %v4966 = vpack.c.bf16 %v4774, %v4766
    %v4967 = vpack.c.bf16 %v4775, %v4767
    %v4968 = vpack.c.bf16 %v4784, %v4776
    %v4969 = vpack.c.bf16 %v4785, %v4777
    %v4970 = vpack.c.bf16 %v4786, %v4778
    %v4971 = vpack.c.bf16 %v4787, %v4779
    %v4972 = vpack.c.bf16 %v4788, %v4780
    %v4973 = vpack.c.bf16 %v4789, %v4781
    %v4974 = vpack.c.bf16 %v4790, %v4782
    %v4975 = vpack.c.bf16 %v4791, %v4783
    %v4976 = vpack.c.bf16 %v4800, %v4792
    %v4977 = vpack.c.bf16 %v4801, %v4793
    %v4978 = vpack.c.bf16 %v4802, %v4794
    %v4979 = vpack.c.bf16 %v4803, %v4795
    %v4980 = vpack.c.bf16 %v4804, %v4796
    %v4981 = vpack.c.bf16 %v4805, %v4797
    %v4982 = vpack.c.bf16 %v4806, %v4798
    %v4983 = vpack.c.bf16 %v4807, %v4799
    %v4984 = vpack.c.bf16 %v4816, %v4808
    %v4985 = vpack.c.bf16 %v4817, %v4809
    %v4986 = vpack.c.bf16 %v4818, %v4810
    %v4987 = vpack.c.bf16 %v4819, %v4811
    %v4988 = vpack.c.bf16 %v4820, %v4812
    %v4989 = vpack.c.bf16 %v4821, %v4813
    %v4990 = vpack.c.bf16 %v4822, %v4814
    %v4991 = vpack.c.bf16 %v4823, %v4815
    %v4992 = vpack.c.bf16 %v4832, %v4824
    %v4993 = vpack.c.bf16 %v4833, %v4825
    %v4994 = vpack.c.bf16 %v4834, %v4826
    %v4995 = vpack.c.bf16 %v4835, %v4827
    %v4996 = vpack.c.bf16 %v4836, %v4828
    %v4997 = vpack.c.bf16 %v4837, %v4829
    %v4998 = vpack.c.bf16 %v4838, %v4830
    %v4999 = vpack.c.bf16 %v4839, %v4831
    %v5000 = vpack.c.bf16 %v4848, %v4840
    %v5001 = vpack.c.bf16 %v4849, %v4841
    %v5002 = vpack.c.bf16 %v4850, %v4842
    %v5003 = vpack.c.bf16 %v4851, %v4843
    %v5004 = vpack.c.bf16 %v4852, %v4844
    %v5005 = vpack.c.bf16 %v4853, %v4845
    %v5006 = vpack.c.bf16 %v4854, %v4846
    %v5007 = vpack.c.bf16 %v4855, %v4847
    %v5008 = vpack.c.bf16 %v4864, %v4856
    %v5009 = vpack.c.bf16 %v4865, %v4857
    %v5010 = vpack.c.bf16 %v4866, %v4858
    %v5011 = vpack.c.bf16 %v4867, %v4859
    %v5012 = vpack.c.bf16 %v4868, %v4860
    %v5013 = vpack.c.bf16 %v4869, %v4861
    %v5014 = vpack.c.bf16 %v4870, %v4862
    %v5015 = vpack.c.bf16 %v4871, %v4863
    %v5016 = vpack.c.bf16 %v4880, %v4872
    %v5017 = vpack.c.bf16 %v4881, %v4873
    %v5018 = vpack.c.bf16 %v4882, %v4874
    %v5019 = vpack.c.bf16 %v4883, %v4875
    %v5020 = vpack.c.bf16 %v4884, %v4876
    %v5021 = vpack.c.bf16 %v4885, %v4877
    %v5022 = vpack.c.bf16 %v4886, %v4878
    %v5023 = vpack.c.bf16 %v4887, %v4879
    %v5024 = vpack.c.bf16 %v4896, %v4888
    %v5025 = vpack.c.bf16 %v4897, %v4889
    %v5026 = vpack.c.bf16 %v4898, %v4890
    %v5027 = vpack.c.bf16 %v4899, %v4891
    %v5028 = vpack.c.bf16 %v4900, %v4892
    %v5029 = vpack.c.bf16 %v4901, %v4893
    %v5030 = vpack.c.bf16 %v4902, %v4894
    %v5031 = vpack.c.bf16 %v4903, %v4895
    %v5032 = vld [vmem:[#allocation2] sm:$0xff]
    %v5033 = vld [vmem:[#allocation2 + $0x8] sm:$0xff]
    %v5034 = vld [vmem:[#allocation2 + $0x10] sm:$0xff]
    %v5035 = vld [vmem:[#allocation2 + $0x18] sm:$0xff]
    %v5036 = vld [vmem:[#allocation2 + $0x20] sm:$0xff]
    %v5037 = vld [vmem:[#allocation2 + $0x28] sm:$0xff]
    %v5038 = vld [vmem:[#allocation2 + $0x30] sm:$0xff]
    %v5039 = vld [vmem:[#allocation2 + $0x38] sm:$0xff]
    %v5040 = vld [vmem:[#allocation2 + $0x40] sm:$0xff]
    %v5041 = vld [vmem:[#allocation2 + $0x48] sm:$0xff]
    %v5042 = vld [vmem:[#allocation2 + $0x50] sm:$0xff]
    %v5043 = vld [vmem:[#allocation2 + $0x58] sm:$0xff]
    %v5044 = vld [vmem:[#allocation2 + $0x60] sm:$0xff]
    %v5045 = vld [vmem:[#allocation2 + $0x68] sm:$0xff]
    %v5046 = vld [vmem:[#allocation2 + $0x70] sm:$0xff]
    %v5047 = vld [vmem:[#allocation2 + $0x78] sm:$0xff]
    %v5048 = vld [vmem:[#allocation2 + $0x80] sm:$0xff]
    %v5049 = vld [vmem:[#allocation2 + $0x88] sm:$0xff]
    %v5050 = vld [vmem:[#allocation2 + $0x90] sm:$0xff]
    %v5051 = vld [vmem:[#allocation2 + $0x98] sm:$0xff]
    %v5052 = vld [vmem:[#allocation2 + $0xa0] sm:$0xff]
    %v5053 = vld [vmem:[#allocation2 + $0xa8] sm:$0xff]
    %v5054 = vld [vmem:[#allocation2 + $0xb0] sm:$0xff]
    %v5055 = vld [vmem:[#allocation2 + $0xb8] sm:$0xff]
    %v5056 = vld [vmem:[#allocation2 + $0xc0] sm:$0xff]
    %v5057 = vld [vmem:[#allocation2 + $0xc8] sm:$0xff]
    %v5058 = vld [vmem:[#allocation2 + $0xd0] sm:$0xff]
    %v5059 = vld [vmem:[#allocation2 + $0xd8] sm:$0xff]
    %v5060 = vld [vmem:[#allocation2 + $0xe0] sm:$0xff]
    %v5061 = vld [vmem:[#allocation2 + $0xe8] sm:$0xff]
    %v5062 = vld [vmem:[#allocation2 + $0xf0] sm:$0xff]
    %v5063 = vld [vmem:[#allocation2 + $0xf8] sm:$0xff]
    %v5064 = vld [vmem:[#allocation2 + $0x100] sm:$0xff]
    %v5065 = vld [vmem:[#allocation2 + $0x108] sm:$0xff]
    %v5066 = vld [vmem:[#allocation2 + $0x110] sm:$0xff]
    %v5067 = vld [vmem:[#allocation2 + $0x118] sm:$0xff]
    %v5068 = vld [vmem:[#allocation2 + $0x120] sm:$0xff]
    %v5069 = vld [vmem:[#allocation2 + $0x128] sm:$0xff]
    %v5070 = vld [vmem:[#allocation2 + $0x130] sm:$0xff]
    %v5071 = vld [vmem:[#allocation2 + $0x138] sm:$0xff]
    %v5072 = vld [vmem:[#allocation2 + $0x140] sm:$0xff]
    %v5073 = vld [vmem:[#allocation2 + $0x148] sm:$0xff]
    %v5074 = vld [vmem:[#allocation2 + $0x150] sm:$0xff]
    %v5075 = vld [vmem:[#allocation2 + $0x158] sm:$0xff]
    %v5076 = vld [vmem:[#allocation2 + $0x160] sm:$0xff]
    %v5077 = vld [vmem:[#allocation2 + $0x168] sm:$0xff]
    %v5078 = vld [vmem:[#allocation2 + $0x170] sm:$0xff]
    %v5079 = vld [vmem:[#allocation2 + $0x178] sm:$0xff]
    %v5080 = vld [vmem:[#allocation2 + $0x180] sm:$0xff]
    %v5081 = vld [vmem:[#allocation2 + $0x188] sm:$0xff]
    %v5082 = vld [vmem:[#allocation2 + $0x190] sm:$0xff]
    %v5083 = vld [vmem:[#allocation2 + $0x198] sm:$0xff]
    %v5084 = vld [vmem:[#allocation2 + $0x1a0] sm:$0xff]
    %v5085 = vld [vmem:[#allocation2 + $0x1a8] sm:$0xff]
    %v5086 = vld [vmem:[#allocation2 + $0x1b0] sm:$0xff]
    %v5087 = vld [vmem:[#allocation2 + $0x1b8] sm:$0xff]
    %v5088 = vld [vmem:[#allocation2 + $0x1c0] sm:$0xff]
    %v5089 = vld [vmem:[#allocation2 + $0x1c8] sm:$0xff]
    %v5090 = vld [vmem:[#allocation2 + $0x1d0] sm:$0xff]
    %v5091 = vld [vmem:[#allocation2 + $0x1d8] sm:$0xff]
    %v5092 = vld [vmem:[#allocation2 + $0x1e0] sm:$0xff]
    %v5093 = vld [vmem:[#allocation2 + $0x1e8] sm:$0xff]
    %v5094 = vld [vmem:[#allocation2 + $0x1f0] sm:$0xff]
    %v5095 = vld [vmem:[#allocation2 + $0x1f8] sm:$0xff]
    %v5096 = vld [vmem:[#allocation2 + $0x200] sm:$0xff]
    %v5097 = vld [vmem:[#allocation2 + $0x208] sm:$0xff]
    %v5098 = vld [vmem:[#allocation2 + $0x210] sm:$0xff]
    %v5099 = vld [vmem:[#allocation2 + $0x218] sm:$0xff]
    %v5100 = vld [vmem:[#allocation2 + $0x220] sm:$0xff]
    %v5101 = vld [vmem:[#allocation2 + $0x228] sm:$0xff]
    %v5102 = vld [vmem:[#allocation2 + $0x230] sm:$0xff]
    %v5103 = vld [vmem:[#allocation2 + $0x238] sm:$0xff]
    %v5104 = vld [vmem:[#allocation2 + $0x240] sm:$0xff]
    %v5105 = vld [vmem:[#allocation2 + $0x248] sm:$0xff]
    %v5106 = vld [vmem:[#allocation2 + $0x250] sm:$0xff]
    %v5107 = vld [vmem:[#allocation2 + $0x258] sm:$0xff]
    %v5108 = vld [vmem:[#allocation2 + $0x260] sm:$0xff]
    %v5109 = vld [vmem:[#allocation2 + $0x268] sm:$0xff]
    %v5110 = vld [vmem:[#allocation2 + $0x270] sm:$0xff]
    %v5111 = vld [vmem:[#allocation2 + $0x278] sm:$0xff]
    %v5112 = vld [vmem:[#allocation2 + $0x280] sm:$0xff]
    %v5113 = vld [vmem:[#allocation2 + $0x288] sm:$0xff]
    %v5114 = vld [vmem:[#allocation2 + $0x290] sm:$0xff]
    %v5115 = vld [vmem:[#allocation2 + $0x298] sm:$0xff]
    %v5116 = vld [vmem:[#allocation2 + $0x2a0] sm:$0xff]
    %v5117 = vld [vmem:[#allocation2 + $0x2a8] sm:$0xff]
    %v5118 = vld [vmem:[#allocation2 + $0x2b0] sm:$0xff]
    %v5119 = vld [vmem:[#allocation2 + $0x2b8] sm:$0xff]
    %v5120 = vld [vmem:[#allocation2 + $0x2c0] sm:$0xff]
    %v5121 = vld [vmem:[#allocation2 + $0x2c8] sm:$0xff]
    %v5122 = vld [vmem:[#allocation2 + $0x2d0] sm:$0xff]
    %v5123 = vld [vmem:[#allocation2 + $0x2d8] sm:$0xff]
    %v5124 = vld [vmem:[#allocation2 + $0x2e0] sm:$0xff]
    %v5125 = vld [vmem:[#allocation2 + $0x2e8] sm:$0xff]
    %v5126 = vld [vmem:[#allocation2 + $0x2f0] sm:$0xff]
    %v5127 = vld [vmem:[#allocation2 + $0x2f8] sm:$0xff]
    %v5128 = vld [vmem:[#allocation2 + $0x300] sm:$0xff]
    %v5129 = vld [vmem:[#allocation2 + $0x308] sm:$0xff]
    %v5130 = vld [vmem:[#allocation2 + $0x310] sm:$0xff]
    %v5131 = vld [vmem:[#allocation2 + $0x318] sm:$0xff]
    %v5132 = vld [vmem:[#allocation2 + $0x320] sm:$0xff]
    %v5133 = vld [vmem:[#allocation2 + $0x328] sm:$0xff]
    %v5134 = vld [vmem:[#allocation2 + $0x330] sm:$0xff]
    %v5135 = vld [vmem:[#allocation2 + $0x338] sm:$0xff]
    %v5136 = vld [vmem:[#allocation2 + $0x340] sm:$0xff]
    %v5137 = vld [vmem:[#allocation2 + $0x348] sm:$0xff]
    %v5138 = vld [vmem:[#allocation2 + $0x350] sm:$0xff]
    %v5139 = vld [vmem:[#allocation2 + $0x358] sm:$0xff]
    %v5140 = vld [vmem:[#allocation2 + $0x360] sm:$0xff]
    %v5141 = vld [vmem:[#allocation2 + $0x368] sm:$0xff]
    %v5142 = vld [vmem:[#allocation2 + $0x370] sm:$0xff]
    %v5143 = vld [vmem:[#allocation2 + $0x378] sm:$0xff]
    %v5144 = vld [vmem:[#allocation2 + $0x380] sm:$0xff]
    %v5145 = vld [vmem:[#allocation2 + $0x388] sm:$0xff]
    %v5146 = vld [vmem:[#allocation2 + $0x390] sm:$0xff]
    %v5147 = vld [vmem:[#allocation2 + $0x398] sm:$0xff]
    %v5148 = vld [vmem:[#allocation2 + $0x3a0] sm:$0xff]
    %v5149 = vld [vmem:[#allocation2 + $0x3a8] sm:$0xff]
    %v5150 = vld [vmem:[#allocation2 + $0x3b0] sm:$0xff]
    %v5151 = vld [vmem:[#allocation2 + $0x3b8] sm:$0xff]
    %v5152 = vld [vmem:[#allocation2 + $0x3c0] sm:$0xff]
    %v5153 = vld [vmem:[#allocation2 + $0x3c8] sm:$0xff]
    %v5154 = vld [vmem:[#allocation2 + $0x3d0] sm:$0xff]
    %v5155 = vld [vmem:[#allocation2 + $0x3d8] sm:$0xff]
    %v5156 = vld [vmem:[#allocation2 + $0x3e0] sm:$0xff]
    %v5157 = vld [vmem:[#allocation2 + $0x3e8] sm:$0xff]
    %v5158 = vld [vmem:[#allocation2 + $0x3f0] sm:$0xff]
    %v5159 = vld [vmem:[#allocation2 + $0x3f8] sm:$0xff]
    %v5160 = vld [vmem:[#allocation2 + $0x400] sm:$0xff]
    %v5161 = vld [vmem:[#allocation2 + $0x408] sm:$0xff]
    %v5162 = vld [vmem:[#allocation2 + $0x410] sm:$0xff]
    %v5163 = vld [vmem:[#allocation2 + $0x418] sm:$0xff]
    %v5164 = vld [vmem:[#allocation2 + $0x420] sm:$0xff]
    %v5165 = vld [vmem:[#allocation2 + $0x428] sm:$0xff]
    %v5166 = vld [vmem:[#allocation2 + $0x430] sm:$0xff]
    %v5167 = vld [vmem:[#allocation2 + $0x438] sm:$0xff]
    %v5168 = vld [vmem:[#allocation2 + $0x440] sm:$0xff]
    %v5169 = vld [vmem:[#allocation2 + $0x448] sm:$0xff]
    %v5170 = vld [vmem:[#allocation2 + $0x450] sm:$0xff]
    %v5171 = vld [vmem:[#allocation2 + $0x458] sm:$0xff]
    %v5172 = vld [vmem:[#allocation2 + $0x460] sm:$0xff]
    %v5173 = vld [vmem:[#allocation2 + $0x468] sm:$0xff]
    %v5174 = vld [vmem:[#allocation2 + $0x470] sm:$0xff]
    %v5175 = vld [vmem:[#allocation2 + $0x478] sm:$0xff]
    %v5176 = vld [vmem:[#allocation2 + $0x480] sm:$0xff]
    %v5177 = vld [vmem:[#allocation2 + $0x488] sm:$0xff]
    %v5178 = vld [vmem:[#allocation2 + $0x490] sm:$0xff]
    %v5179 = vld [vmem:[#allocation2 + $0x498] sm:$0xff]
    %v5180 = vld [vmem:[#allocation2 + $0x4a0] sm:$0xff]
    %v5181 = vld [vmem:[#allocation2 + $0x4a8] sm:$0xff]
    %v5182 = vld [vmem:[#allocation2 + $0x4b0] sm:$0xff]
    %v5183 = vld [vmem:[#allocation2 + $0x4b8] sm:$0xff]
    %v5184 = vld [vmem:[#allocation2 + $0x4c0] sm:$0xff]
    %v5185 = vld [vmem:[#allocation2 + $0x4c8] sm:$0xff]
    %v5186 = vld [vmem:[#allocation2 + $0x4d0] sm:$0xff]
    %v5187 = vld [vmem:[#allocation2 + $0x4d8] sm:$0xff]
    %v5188 = vld [vmem:[#allocation2 + $0x4e0] sm:$0xff]
    %v5189 = vld [vmem:[#allocation2 + $0x4e8] sm:$0xff]
    %v5190 = vld [vmem:[#allocation2 + $0x4f0] sm:$0xff]
    %v5191 = vld [vmem:[#allocation2 + $0x4f8] sm:$0xff]
    %v5192 = vld [vmem:[#allocation2 + $0x500] sm:$0xff]
    %v5193 = vld [vmem:[#allocation2 + $0x508] sm:$0xff]
    %v5194 = vld [vmem:[#allocation2 + $0x510] sm:$0xff]
    %v5195 = vld [vmem:[#allocation2 + $0x518] sm:$0xff]
    %v5196 = vld [vmem:[#allocation2 + $0x520] sm:$0xff]
    %v5197 = vld [vmem:[#allocation2 + $0x528] sm:$0xff]
    %v5198 = vld [vmem:[#allocation2 + $0x530] sm:$0xff]
    %v5199 = vld [vmem:[#allocation2 + $0x538] sm:$0xff]
    %v5200 = vld [vmem:[#allocation2 + $0x540] sm:$0xff]
    %v5201 = vld [vmem:[#allocation2 + $0x548] sm:$0xff]
    %v5202 = vld [vmem:[#allocation2 + $0x550] sm:$0xff]
    %v5203 = vld [vmem:[#allocation2 + $0x558] sm:$0xff]
    %v5204 = vld [vmem:[#allocation2 + $0x560] sm:$0xff]
    %v5205 = vld [vmem:[#allocation2 + $0x568] sm:$0xff]
    %v5206 = vld [vmem:[#allocation2 + $0x570] sm:$0xff]
    %v5207 = vld [vmem:[#allocation2 + $0x578] sm:$0xff]
    %v5208 = vld [vmem:[#allocation2 + $0x580] sm:$0xff]
    %v5209 = vld [vmem:[#allocation2 + $0x588] sm:$0xff]
    %v5210 = vld [vmem:[#allocation2 + $0x590] sm:$0xff]
    %v5211 = vld [vmem:[#allocation2 + $0x598] sm:$0xff]
    %v5212 = vld [vmem:[#allocation2 + $0x5a0] sm:$0xff]
    %v5213 = vld [vmem:[#allocation2 + $0x5a8] sm:$0xff]
    %v5214 = vld [vmem:[#allocation2 + $0x5b0] sm:$0xff]
    %v5215 = vld [vmem:[#allocation2 + $0x5b8] sm:$0xff]
    %v5216 = vld [vmem:[#allocation2 + $0x5c0] sm:$0xff]
    %v5217 = vld [vmem:[#allocation2 + $0x5c8] sm:$0xff]
    %v5218 = vld [vmem:[#allocation2 + $0x5d0] sm:$0xff]
    %v5219 = vld [vmem:[#allocation2 + $0x5d8] sm:$0xff]
    %v5220 = vld [vmem:[#allocation2 + $0x5e0] sm:$0xff]
    %v5221 = vld [vmem:[#allocation2 + $0x5e8] sm:$0xff]
    %v5222 = vld [vmem:[#allocation2 + $0x5f0] sm:$0xff]
    %v5223 = vld [vmem:[#allocation2 + $0x5f8] sm:$0xff]
    %v5224 = vld [vmem:[#allocation2 + $0x600] sm:$0xff]
    %v5225 = vld [vmem:[#allocation2 + $0x608] sm:$0xff]
    %v5226 = vld [vmem:[#allocation2 + $0x610] sm:$0xff]
    %v5227 = vld [vmem:[#allocation2 + $0x618] sm:$0xff]
    %v5228 = vld [vmem:[#allocation2 + $0x620] sm:$0xff]
    %v5229 = vld [vmem:[#allocation2 + $0x628] sm:$0xff]
    %v5230 = vld [vmem:[#allocation2 + $0x630] sm:$0xff]
    %v5231 = vld [vmem:[#allocation2 + $0x638] sm:$0xff]
    %v5232 = vld [vmem:[#allocation2 + $0x640] sm:$0xff]
    %v5233 = vld [vmem:[#allocation2 + $0x648] sm:$0xff]
    %v5234 = vld [vmem:[#allocation2 + $0x650] sm:$0xff]
    %v5235 = vld [vmem:[#allocation2 + $0x658] sm:$0xff]
    %v5236 = vld [vmem:[#allocation2 + $0x660] sm:$0xff]
    %v5237 = vld [vmem:[#allocation2 + $0x668] sm:$0xff]
    %v5238 = vld [vmem:[#allocation2 + $0x670] sm:$0xff]
    %v5239 = vld [vmem:[#allocation2 + $0x678] sm:$0xff]
    %v5240 = vld [vmem:[#allocation2 + $0x680] sm:$0xff]
    %v5241 = vld [vmem:[#allocation2 + $0x688] sm:$0xff]
    %v5242 = vld [vmem:[#allocation2 + $0x690] sm:$0xff]
    %v5243 = vld [vmem:[#allocation2 + $0x698] sm:$0xff]
    %v5244 = vld [vmem:[#allocation2 + $0x6a0] sm:$0xff]
    %v5245 = vld [vmem:[#allocation2 + $0x6a8] sm:$0xff]
    %v5246 = vld [vmem:[#allocation2 + $0x6b0] sm:$0xff]
    %v5247 = vld [vmem:[#allocation2 + $0x6b8] sm:$0xff]
    %v5248 = vld [vmem:[#allocation2 + $0x6c0] sm:$0xff]
    %v5249 = vld [vmem:[#allocation2 + $0x6c8] sm:$0xff]
    %v5250 = vld [vmem:[#allocation2 + $0x6d0] sm:$0xff]
    %v5251 = vld [vmem:[#allocation2 + $0x6d8] sm:$0xff]
    %v5252 = vld [vmem:[#allocation2 + $0x6e0] sm:$0xff]
    %v5253 = vld [vmem:[#allocation2 + $0x6e8] sm:$0xff]
    %v5254 = vld [vmem:[#allocation2 + $0x6f0] sm:$0xff]
    %v5255 = vld [vmem:[#allocation2 + $0x6f8] sm:$0xff]
    %v5256 = vld [vmem:[#allocation2 + $0x700] sm:$0xff]
    %v5257 = vld [vmem:[#allocation2 + $0x708] sm:$0xff]
    %v5258 = vld [vmem:[#allocation2 + $0x710] sm:$0xff]
    %v5259 = vld [vmem:[#allocation2 + $0x718] sm:$0xff]
    %v5260 = vld [vmem:[#allocation2 + $0x720] sm:$0xff]
    %v5261 = vld [vmem:[#allocation2 + $0x728] sm:$0xff]
    %v5262 = vld [vmem:[#allocation2 + $0x730] sm:$0xff]
    %v5263 = vld [vmem:[#allocation2 + $0x738] sm:$0xff]
    %v5264 = vld [vmem:[#allocation2 + $0x740] sm:$0xff]
    %v5265 = vld [vmem:[#allocation2 + $0x748] sm:$0xff]
    %v5266 = vld [vmem:[#allocation2 + $0x750] sm:$0xff]
    %v5267 = vld [vmem:[#allocation2 + $0x758] sm:$0xff]
    %v5268 = vld [vmem:[#allocation2 + $0x760] sm:$0xff]
    %v5269 = vld [vmem:[#allocation2 + $0x768] sm:$0xff]
    %v5270 = vld [vmem:[#allocation2 + $0x770] sm:$0xff]
    %v5271 = vld [vmem:[#allocation2 + $0x778] sm:$0xff]
    %v5272 = vld [vmem:[#allocation2 + $0x780] sm:$0xff]
    %v5273 = vld [vmem:[#allocation2 + $0x788] sm:$0xff]
    %v5274 = vld [vmem:[#allocation2 + $0x790] sm:$0xff]
    %v5275 = vld [vmem:[#allocation2 + $0x798] sm:$0xff]
    %v5276 = vld [vmem:[#allocation2 + $0x7a0] sm:$0xff]
    %v5277 = vld [vmem:[#allocation2 + $0x7a8] sm:$0xff]
    %v5278 = vld [vmem:[#allocation2 + $0x7b0] sm:$0xff]
    %v5279 = vld [vmem:[#allocation2 + $0x7b8] sm:$0xff]
    %v5280 = vld [vmem:[#allocation2 + $0x7c0] sm:$0xff]
    %v5281 = vld [vmem:[#allocation2 + $0x7c8] sm:$0xff]
    %v5282 = vld [vmem:[#allocation2 + $0x7d0] sm:$0xff]
    %v5283 = vld [vmem:[#allocation2 + $0x7d8] sm:$0xff]
    %v5284 = vld [vmem:[#allocation2 + $0x7e0] sm:$0xff]
    %v5285 = vld [vmem:[#allocation2 + $0x7e8] sm:$0xff]
    %v5286 = vld [vmem:[#allocation2 + $0x7f0] sm:$0xff]
    %v5287 = vld [vmem:[#allocation2 + $0x7f8] sm:$0xff]
    %v5288 = vld [vmem:[%s6] sm:$0xf]
    %v5290 = vlaneseq
    %v5291 = vshrl.u32 %v5290, 7
    %v5292 = vsub.s32 0, %v5291
    %v5293 = vrot.slane %v5288, %v5292
    %v5294 = vlaneseq
    %v5295 = vshrl.u32 %v5294, 7
    %v5296 = vsub.s32 1, %v5295
    %v5297 = vrot.slane %v5288, %v5296
    %v5298 = vlaneseq
    %v5299 = vshrl.u32 %v5298, 7
    %v5300 = vsub.s32 2, %v5299
    %v5301 = vrot.slane %v5288, %v5300
    %v5302 = vlaneseq
    %v5303 = vshrl.u32 %v5302, 7
    %v5304 = vsub.s32 3, %v5303
    %v5305 = vrot.slane %v5288, %v5304
    %v5566 = vunpack.c.l.b16 %v5032
    %v5567 = vunpack.c.h.b16 %v5032
    %v5568 = vunpack.c.l.b16 %v5033
    %v5569 = vunpack.c.h.b16 %v5033
    %v5570 = vunpack.c.l.b16 %v5034
    %v5571 = vunpack.c.h.b16 %v5034
    %v5572 = vunpack.c.l.b16 %v5035
    %v5573 = vunpack.c.h.b16 %v5035
    %v5574 = vunpack.c.l.b16 %v5036
    %v5575 = vunpack.c.h.b16 %v5036
    %v5576 = vunpack.c.l.b16 %v5037
    %v5577 = vunpack.c.h.b16 %v5037
    %v5578 = vunpack.c.l.b16 %v5038
    %v5579 = vunpack.c.h.b16 %v5038
    %v5580 = vunpack.c.l.b16 %v5039
    %v5581 = vunpack.c.h.b16 %v5039
    %v5582 = vunpack.c.l.b16 %v5040
    %v5583 = vunpack.c.h.b16 %v5040
    %v5584 = vunpack.c.l.b16 %v5041
    %v5585 = vunpack.c.h.b16 %v5041
    %v5586 = vunpack.c.l.b16 %v5042
    %v5587 = vunpack.c.h.b16 %v5042
    %v5588 = vunpack.c.l.b16 %v5043
    %v5589 = vunpack.c.h.b16 %v5043
    %v5590 = vunpack.c.l.b16 %v5044
    %v5591 = vunpack.c.h.b16 %v5044
    %v5592 = vunpack.c.l.b16 %v5045
    %v5593 = vunpack.c.h.b16 %v5045
    %v5594 = vunpack.c.l.b16 %v5046
    %v5595 = vunpack.c.h.b16 %v5046
    %v5596 = vunpack.c.l.b16 %v5047
    %v5597 = vunpack.c.h.b16 %v5047
    %v5598 = vunpack.c.l.b16 %v5048
    %v5599 = vunpack.c.h.b16 %v5048
    %v5600 = vunpack.c.l.b16 %v5049
    %v5601 = vunpack.c.h.b16 %v5049
    %v5602 = vunpack.c.l.b16 %v5050
    %v5603 = vunpack.c.h.b16 %v5050
    %v5604 = vunpack.c.l.b16 %v5051
    %v5605 = vunpack.c.h.b16 %v5051
    %v5606 = vunpack.c.l.b16 %v5052
    %v5607 = vunpack.c.h.b16 %v5052
    %v5608 = vunpack.c.l.b16 %v5053
    %v5609 = vunpack.c.h.b16 %v5053
    %v5610 = vunpack.c.l.b16 %v5054
    %v5611 = vunpack.c.h.b16 %v5054
    %v5612 = vunpack.c.l.b16 %v5055
    %v5613 = vunpack.c.h.b16 %v5055
    %v5614 = vunpack.c.l.b16 %v5056
    %v5615 = vunpack.c.h.b16 %v5056
    %v5616 = vunpack.c.l.b16 %v5057
    %v5617 = vunpack.c.h.b16 %v5057
    %v5618 = vunpack.c.l.b16 %v5058
    %v5619 = vunpack.c.h.b16 %v5058
    %v5620 = vunpack.c.l.b16 %v5059
    %v5621 = vunpack.c.h.b16 %v5059
    %v5622 = vunpack.c.l.b16 %v5060
    %v5623 = vunpack.c.h.b16 %v5060
    %v5624 = vunpack.c.l.b16 %v5061
    %v5625 = vunpack.c.h.b16 %v5061
    %v5626 = vunpack.c.l.b16 %v5062
    %v5627 = vunpack.c.h.b16 %v5062
    %v5628 = vunpack.c.l.b16 %v5063
    %v5629 = vunpack.c.h.b16 %v5063
    %v5630 = vunpack.c.l.b16 %v5064
    %v5631 = vunpack.c.h.b16 %v5064
    %v5632 = vunpack.c.l.b16 %v5065
    %v5633 = vunpack.c.h.b16 %v5065
    %v5634 = vunpack.c.l.b16 %v5066
    %v5635 = vunpack.c.h.b16 %v5066
    %v5636 = vunpack.c.l.b16 %v5067
    %v5637 = vunpack.c.h.b16 %v5067
    %v5638 = vunpack.c.l.b16 %v5068
    %v5639 = vunpack.c.h.b16 %v5068
    %v5640 = vunpack.c.l.b16 %v5069
    %v5641 = vunpack.c.h.b16 %v5069
    %v5642 = vunpack.c.l.b16 %v5070
    %v5643 = vunpack.c.h.b16 %v5070
    %v5644 = vunpack.c.l.b16 %v5071
    %v5645 = vunpack.c.h.b16 %v5071
    %v5646 = vunpack.c.l.b16 %v5072
    %v5647 = vunpack.c.h.b16 %v5072
    %v5648 = vunpack.c.l.b16 %v5073
    %v5649 = vunpack.c.h.b16 %v5073
    %v5650 = vunpack.c.l.b16 %v5074
    %v5651 = vunpack.c.h.b16 %v5074
    %v5652 = vunpack.c.l.b16 %v5075
    %v5653 = vunpack.c.h.b16 %v5075
    %v5654 = vunpack.c.l.b16 %v5076
    %v5655 = vunpack.c.h.b16 %v5076
    %v5656 = vunpack.c.l.b16 %v5077
    %v5657 = vunpack.c.h.b16 %v5077
    %v5658 = vunpack.c.l.b16 %v5078
    %v5659 = vunpack.c.h.b16 %v5078
    %v5660 = vunpack.c.l.b16 %v5079
    %v5661 = vunpack.c.h.b16 %v5079
    %v5662 = vunpack.c.l.b16 %v5080
    %v5663 = vunpack.c.h.b16 %v5080
    %v5664 = vunpack.c.l.b16 %v5081
    %v5665 = vunpack.c.h.b16 %v5081
    %v5666 = vunpack.c.l.b16 %v5082
    %v5667 = vunpack.c.h.b16 %v5082
    %v5668 = vunpack.c.l.b16 %v5083
    %v5669 = vunpack.c.h.b16 %v5083
    %v5670 = vunpack.c.l.b16 %v5084
    %v5671 = vunpack.c.h.b16 %v5084
    %v5672 = vunpack.c.l.b16 %v5085
    %v5673 = vunpack.c.h.b16 %v5085
    %v5674 = vunpack.c.l.b16 %v5086
    %v5675 = vunpack.c.h.b16 %v5086
    %v5676 = vunpack.c.l.b16 %v5087
    %v5677 = vunpack.c.h.b16 %v5087
    %v5678 = vunpack.c.l.b16 %v5088
    %v5679 = vunpack.c.h.b16 %v5088
    %v5680 = vunpack.c.l.b16 %v5089
    %v5681 = vunpack.c.h.b16 %v5089
    %v5682 = vunpack.c.l.b16 %v5090
    %v5683 = vunpack.c.h.b16 %v5090
    %v5684 = vunpack.c.l.b16 %v5091
    %v5685 = vunpack.c.h.b16 %v5091
    %v5686 = vunpack.c.l.b16 %v5092
    %v5687 = vunpack.c.h.b16 %v5092
    %v5688 = vunpack.c.l.b16 %v5093
    %v5689 = vunpack.c.h.b16 %v5093
    %v5690 = vunpack.c.l.b16 %v5094
    %v5691 = vunpack.c.h.b16 %v5094
    %v5692 = vunpack.c.l.b16 %v5095
    %v5693 = vunpack.c.h.b16 %v5095
    %v5694 = vunpack.c.l.b16 %v5096
    %v5695 = vunpack.c.h.b16 %v5096
    %v5696 = vunpack.c.l.b16 %v5097
    %v5697 = vunpack.c.h.b16 %v5097
    %v5698 = vunpack.c.l.b16 %v5098
    %v5699 = vunpack.c.h.b16 %v5098
    %v5700 = vunpack.c.l.b16 %v5099
    %v5701 = vunpack.c.h.b16 %v5099
    %v5702 = vunpack.c.l.b16 %v5100
    %v5703 = vunpack.c.h.b16 %v5100
    %v5704 = vunpack.c.l.b16 %v5101
    %v5705 = vunpack.c.h.b16 %v5101
    %v5706 = vunpack.c.l.b16 %v5102
    %v5707 = vunpack.c.h.b16 %v5102
    %v5708 = vunpack.c.l.b16 %v5103
    %v5709 = vunpack.c.h.b16 %v5103
    %v5710 = vunpack.c.l.b16 %v5104
    %v5711 = vunpack.c.h.b16 %v5104
    %v5712 = vunpack.c.l.b16 %v5105
    %v5713 = vunpack.c.h.b16 %v5105
    %v5714 = vunpack.c.l.b16 %v5106
    %v5715 = vunpack.c.h.b16 %v5106
    %v5716 = vunpack.c.l.b16 %v5107
    %v5717 = vunpack.c.h.b16 %v5107
    %v5718 = vunpack.c.l.b16 %v5108
    %v5719 = vunpack.c.h.b16 %v5108
    %v5720 = vunpack.c.l.b16 %v5109
    %v5721 = vunpack.c.h.b16 %v5109
    %v5722 = vunpack.c.l.b16 %v5110
    %v5723 = vunpack.c.h.b16 %v5110
    %v5724 = vunpack.c.l.b16 %v5111
    %v5725 = vunpack.c.h.b16 %v5111
    %v5726 = vunpack.c.l.b16 %v5112
    %v5727 = vunpack.c.h.b16 %v5112
    %v5728 = vunpack.c.l.b16 %v5113
    %v5729 = vunpack.c.h.b16 %v5113
    %v5730 = vunpack.c.l.b16 %v5114
    %v5731 = vunpack.c.h.b16 %v5114
    %v5732 = vunpack.c.l.b16 %v5115
    %v5733 = vunpack.c.h.b16 %v5115
    %v5734 = vunpack.c.l.b16 %v5116
    %v5735 = vunpack.c.h.b16 %v5116
    %v5736 = vunpack.c.l.b16 %v5117
    %v5737 = vunpack.c.h.b16 %v5117
    %v5738 = vunpack.c.l.b16 %v5118
    %v5739 = vunpack.c.h.b16 %v5118
    %v5740 = vunpack.c.l.b16 %v5119
    %v5741 = vunpack.c.h.b16 %v5119
    %v5742 = vunpack.c.l.b16 %v5120
    %v5743 = vunpack.c.h.b16 %v5120
    %v5744 = vunpack.c.l.b16 %v5121
    %v5745 = vunpack.c.h.b16 %v5121
    %v5746 = vunpack.c.l.b16 %v5122
    %v5747 = vunpack.c.h.b16 %v5122
    %v5748 = vunpack.c.l.b16 %v5123
    %v5749 = vunpack.c.h.b16 %v5123
    %v5750 = vunpack.c.l.b16 %v5124
    %v5751 = vunpack.c.h.b16 %v5124
    %v5752 = vunpack.c.l.b16 %v5125
    %v5753 = vunpack.c.h.b16 %v5125
    %v5754 = vunpack.c.l.b16 %v5126
    %v5755 = vunpack.c.h.b16 %v5126
    %v5756 = vunpack.c.l.b16 %v5127
    %v5757 = vunpack.c.h.b16 %v5127
    %v5758 = vunpack.c.l.b16 %v5128
    %v5759 = vunpack.c.h.b16 %v5128
    %v5760 = vunpack.c.l.b16 %v5129
    %v5761 = vunpack.c.h.b16 %v5129
    %v5762 = vunpack.c.l.b16 %v5130
    %v5763 = vunpack.c.h.b16 %v5130
    %v5764 = vunpack.c.l.b16 %v5131
    %v5765 = vunpack.c.h.b16 %v5131
    %v5766 = vunpack.c.l.b16 %v5132
    %v5767 = vunpack.c.h.b16 %v5132
    %v5768 = vunpack.c.l.b16 %v5133
    %v5769 = vunpack.c.h.b16 %v5133
    %v5770 = vunpack.c.l.b16 %v5134
    %v5771 = vunpack.c.h.b16 %v5134
    %v5772 = vunpack.c.l.b16 %v5135
    %v5773 = vunpack.c.h.b16 %v5135
    %v5774 = vunpack.c.l.b16 %v5136
    %v5775 = vunpack.c.h.b16 %v5136
    %v5776 = vunpack.c.l.b16 %v5137
    %v5777 = vunpack.c.h.b16 %v5137
    %v5778 = vunpack.c.l.b16 %v5138
    %v5779 = vunpack.c.h.b16 %v5138
    %v5780 = vunpack.c.l.b16 %v5139
    %v5781 = vunpack.c.h.b16 %v5139
    %v5782 = vunpack.c.l.b16 %v5140
    %v5783 = vunpack.c.h.b16 %v5140
    %v5784 = vunpack.c.l.b16 %v5141
    %v5785 = vunpack.c.h.b16 %v5141
    %v5786 = vunpack.c.l.b16 %v5142
    %v5787 = vunpack.c.h.b16 %v5142
    %v5788 = vunpack.c.l.b16 %v5143
    %v5789 = vunpack.c.h.b16 %v5143
    %v5790 = vunpack.c.l.b16 %v5144
    %v5791 = vunpack.c.h.b16 %v5144
    %v5792 = vunpack.c.l.b16 %v5145
    %v5793 = vunpack.c.h.b16 %v5145
    %v5794 = vunpack.c.l.b16 %v5146
    %v5795 = vunpack.c.h.b16 %v5146
    %v5796 = vunpack.c.l.b16 %v5147
    %v5797 = vunpack.c.h.b16 %v5147
    %v5798 = vunpack.c.l.b16 %v5148
    %v5799 = vunpack.c.h.b16 %v5148
    %v5800 = vunpack.c.l.b16 %v5149
    %v5801 = vunpack.c.h.b16 %v5149
    %v5802 = vunpack.c.l.b16 %v5150
    %v5803 = vunpack.c.h.b16 %v5150
    %v5804 = vunpack.c.l.b16 %v5151
    %v5805 = vunpack.c.h.b16 %v5151
    %v5806 = vunpack.c.l.b16 %v5152
    %v5807 = vunpack.c.h.b16 %v5152
    %v5808 = vunpack.c.l.b16 %v5153
    %v5809 = vunpack.c.h.b16 %v5153
    %v5810 = vunpack.c.l.b16 %v5154
    %v5811 = vunpack.c.h.b16 %v5154
    %v5812 = vunpack.c.l.b16 %v5155
    %v5813 = vunpack.c.h.b16 %v5155
    %v5814 = vunpack.c.l.b16 %v5156
    %v5815 = vunpack.c.h.b16 %v5156
    %v5816 = vunpack.c.l.b16 %v5157
    %v5817 = vunpack.c.h.b16 %v5157
    %v5818 = vunpack.c.l.b16 %v5158
    %v5819 = vunpack.c.h.b16 %v5158
    %v5820 = vunpack.c.l.b16 %v5159
    %v5821 = vunpack.c.h.b16 %v5159
    %v5822 = vunpack.c.l.b16 %v5160
    %v5823 = vunpack.c.h.b16 %v5160
    %v5824 = vunpack.c.l.b16 %v5161
    %v5825 = vunpack.c.h.b16 %v5161
    %v5826 = vunpack.c.l.b16 %v5162
    %v5827 = vunpack.c.h.b16 %v5162
    %v5828 = vunpack.c.l.b16 %v5163
    %v5829 = vunpack.c.h.b16 %v5163
    %v5830 = vunpack.c.l.b16 %v5164
    %v5831 = vunpack.c.h.b16 %v5164
    %v5832 = vunpack.c.l.b16 %v5165
    %v5833 = vunpack.c.h.b16 %v5165
    %v5834 = vunpack.c.l.b16 %v5166
    %v5835 = vunpack.c.h.b16 %v5166
    %v5836 = vunpack.c.l.b16 %v5167
    %v5837 = vunpack.c.h.b16 %v5167
    %v5838 = vunpack.c.l.b16 %v5168
    %v5839 = vunpack.c.h.b16 %v5168
    %v5840 = vunpack.c.l.b16 %v5169
    %v5841 = vunpack.c.h.b16 %v5169
    %v5842 = vunpack.c.l.b16 %v5170
    %v5843 = vunpack.c.h.b16 %v5170
    %v5844 = vunpack.c.l.b16 %v5171
    %v5845 = vunpack.c.h.b16 %v5171
    %v5846 = vunpack.c.l.b16 %v5172
    %v5847 = vunpack.c.h.b16 %v5172
    %v5848 = vunpack.c.l.b16 %v5173
    %v5849 = vunpack.c.h.b16 %v5173
    %v5850 = vunpack.c.l.b16 %v5174
    %v5851 = vunpack.c.h.b16 %v5174
    %v5852 = vunpack.c.l.b16 %v5175
    %v5853 = vunpack.c.h.b16 %v5175
    %v5854 = vunpack.c.l.b16 %v5176
    %v5855 = vunpack.c.h.b16 %v5176
    %v5856 = vunpack.c.l.b16 %v5177
    %v5857 = vunpack.c.h.b16 %v5177
    %v5858 = vunpack.c.l.b16 %v5178
    %v5859 = vunpack.c.h.b16 %v5178
    %v5860 = vunpack.c.l.b16 %v5179
    %v5861 = vunpack.c.h.b16 %v5179
    %v5862 = vunpack.c.l.b16 %v5180
    %v5863 = vunpack.c.h.b16 %v5180
    %v5864 = vunpack.c.l.b16 %v5181
    %v5865 = vunpack.c.h.b16 %v5181
    %v5866 = vunpack.c.l.b16 %v5182
    %v5867 = vunpack.c.h.b16 %v5182
    %v5868 = vunpack.c.l.b16 %v5183
    %v5869 = vunpack.c.h.b16 %v5183
    %v5870 = vunpack.c.l.b16 %v5184
    %v5871 = vunpack.c.h.b16 %v5184
    %v5872 = vunpack.c.l.b16 %v5185
    %v5873 = vunpack.c.h.b16 %v5185
    %v5874 = vunpack.c.l.b16 %v5186
    %v5875 = vunpack.c.h.b16 %v5186
    %v5876 = vunpack.c.l.b16 %v5187
    %v5877 = vunpack.c.h.b16 %v5187
    %v5878 = vunpack.c.l.b16 %v5188
    %v5879 = vunpack.c.h.b16 %v5188
    %v5880 = vunpack.c.l.b16 %v5189
    %v5881 = vunpack.c.h.b16 %v5189
    %v5882 = vunpack.c.l.b16 %v5190
    %v5883 = vunpack.c.h.b16 %v5190
    %v5884 = vunpack.c.l.b16 %v5191
    %v5885 = vunpack.c.h.b16 %v5191
    %v5886 = vunpack.c.l.b16 %v5192
    %v5887 = vunpack.c.h.b16 %v5192
    %v5888 = vunpack.c.l.b16 %v5193
    %v5889 = vunpack.c.h.b16 %v5193
    %v5890 = vunpack.c.l.b16 %v5194
    %v5891 = vunpack.c.h.b16 %v5194
    %v5892 = vunpack.c.l.b16 %v5195
    %v5893 = vunpack.c.h.b16 %v5195
    %v5894 = vunpack.c.l.b16 %v5196
    %v5895 = vunpack.c.h.b16 %v5196
    %v5896 = vunpack.c.l.b16 %v5197
    %v5897 = vunpack.c.h.b16 %v5197
    %v5898 = vunpack.c.l.b16 %v5198
    %v5899 = vunpack.c.h.b16 %v5198
    %v5900 = vunpack.c.l.b16 %v5199
    %v5901 = vunpack.c.h.b16 %v5199
    %v5902 = vunpack.c.l.b16 %v5200
    %v5903 = vunpack.c.h.b16 %v5200
    %v5904 = vunpack.c.l.b16 %v5201
    %v5905 = vunpack.c.h.b16 %v5201
    %v5906 = vunpack.c.l.b16 %v5202
    %v5907 = vunpack.c.h.b16 %v5202
    %v5908 = vunpack.c.l.b16 %v5203
    %v5909 = vunpack.c.h.b16 %v5203
    %v5910 = vunpack.c.l.b16 %v5204
    %v5911 = vunpack.c.h.b16 %v5204
    %v5912 = vunpack.c.l.b16 %v5205
    %v5913 = vunpack.c.h.b16 %v5205
    %v5914 = vunpack.c.l.b16 %v5206
    %v5915 = vunpack.c.h.b16 %v5206
    %v5916 = vunpack.c.l.b16 %v5207
    %v5917 = vunpack.c.h.b16 %v5207
    %v5918 = vunpack.c.l.b16 %v5208
    %v5919 = vunpack.c.h.b16 %v5208
    %v5920 = vunpack.c.l.b16 %v5209
    %v5921 = vunpack.c.h.b16 %v5209
    %v5922 = vunpack.c.l.b16 %v5210
    %v5923 = vunpack.c.h.b16 %v5210
    %v5924 = vunpack.c.l.b16 %v5211
    %v5925 = vunpack.c.h.b16 %v5211
    %v5926 = vunpack.c.l.b16 %v5212
    %v5927 = vunpack.c.h.b16 %v5212
    %v5928 = vunpack.c.l.b16 %v5213
    %v5929 = vunpack.c.h.b16 %v5213
    %v5930 = vunpack.c.l.b16 %v5214
    %v5931 = vunpack.c.h.b16 %v5214
    %v5932 = vunpack.c.l.b16 %v5215
    %v5933 = vunpack.c.h.b16 %v5215
    %v5934 = vunpack.c.l.b16 %v5216
    %v5935 = vunpack.c.h.b16 %v5216
    %v5936 = vunpack.c.l.b16 %v5217
    %v5937 = vunpack.c.h.b16 %v5217
    %v5938 = vunpack.c.l.b16 %v5218
    %v5939 = vunpack.c.h.b16 %v5218
    %v5940 = vunpack.c.l.b16 %v5219
    %v5941 = vunpack.c.h.b16 %v5219
    %v5942 = vunpack.c.l.b16 %v5220
    %v5943 = vunpack.c.h.b16 %v5220
    %v5944 = vunpack.c.l.b16 %v5221
    %v5945 = vunpack.c.h.b16 %v5221
    %v5946 = vunpack.c.l.b16 %v5222
    %v5947 = vunpack.c.h.b16 %v5222
    %v5948 = vunpack.c.l.b16 %v5223
    %v5949 = vunpack.c.h.b16 %v5223
    %v5950 = vunpack.c.l.b16 %v5224
    %v5951 = vunpack.c.h.b16 %v5224
    %v5952 = vunpack.c.l.b16 %v5225
    %v5953 = vunpack.c.h.b16 %v5225
    %v5954 = vunpack.c.l.b16 %v5226
    %v5955 = vunpack.c.h.b16 %v5226
    %v5956 = vunpack.c.l.b16 %v5227
    %v5957 = vunpack.c.h.b16 %v5227
    %v5958 = vunpack.c.l.b16 %v5228
    %v5959 = vunpack.c.h.b16 %v5228
    %v5960 = vunpack.c.l.b16 %v5229
    %v5961 = vunpack.c.h.b16 %v5229
    %v5962 = vunpack.c.l.b16 %v5230
    %v5963 = vunpack.c.h.b16 %v5230
    %v5964 = vunpack.c.l.b16 %v5231
    %v5965 = vunpack.c.h.b16 %v5231
    %v5966 = vunpack.c.l.b16 %v5232
    %v5967 = vunpack.c.h.b16 %v5232
    %v5968 = vunpack.c.l.b16 %v5233
    %v5969 = vunpack.c.h.b16 %v5233
    %v5970 = vunpack.c.l.b16 %v5234
    %v5971 = vunpack.c.h.b16 %v5234
    %v5972 = vunpack.c.l.b16 %v5235
    %v5973 = vunpack.c.h.b16 %v5235
    %v5974 = vunpack.c.l.b16 %v5236
    %v5975 = vunpack.c.h.b16 %v5236
    %v5976 = vunpack.c.l.b16 %v5237
    %v5977 = vunpack.c.h.b16 %v5237
    %v5978 = vunpack.c.l.b16 %v5238
    %v5979 = vunpack.c.h.b16 %v5238
    %v5980 = vunpack.c.l.b16 %v5239
    %v5981 = vunpack.c.h.b16 %v5239
    %v5982 = vunpack.c.l.b16 %v5240
    %v5983 = vunpack.c.h.b16 %v5240
    %v5984 = vunpack.c.l.b16 %v5241
    %v5985 = vunpack.c.h.b16 %v5241
    %v5986 = vunpack.c.l.b16 %v5242
    %v5987 = vunpack.c.h.b16 %v5242
    %v5988 = vunpack.c.l.b16 %v5243
    %v5989 = vunpack.c.h.b16 %v5243
    %v5990 = vunpack.c.l.b16 %v5244
    %v5991 = vunpack.c.h.b16 %v5244
    %v5992 = vunpack.c.l.b16 %v5245
    %v5993 = vunpack.c.h.b16 %v5245
    %v5994 = vunpack.c.l.b16 %v5246
    %v5995 = vunpack.c.h.b16 %v5246
    %v5996 = vunpack.c.l.b16 %v5247
    %v5997 = vunpack.c.h.b16 %v5247
    %v5998 = vunpack.c.l.b16 %v5248
    %v5999 = vunpack.c.h.b16 %v5248
    %v6000 = vunpack.c.l.b16 %v5249
    %v6001 = vunpack.c.h.b16 %v5249
    %v6002 = vunpack.c.l.b16 %v5250
    %v6003 = vunpack.c.h.b16 %v5250
    %v6004 = vunpack.c.l.b16 %v5251
    %v6005 = vunpack.c.h.b16 %v5251
    %v6006 = vunpack.c.l.b16 %v5252
    %v6007 = vunpack.c.h.b16 %v5252
    %v6008 = vunpack.c.l.b16 %v5253
    %v6009 = vunpack.c.h.b16 %v5253
    %v6010 = vunpack.c.l.b16 %v5254
    %v6011 = vunpack.c.h.b16 %v5254
    %v6012 = vunpack.c.l.b16 %v5255
    %v6013 = vunpack.c.h.b16 %v5255
    %v6014 = vunpack.c.l.b16 %v5256
    %v6015 = vunpack.c.h.b16 %v5256
    %v6016 = vunpack.c.l.b16 %v5257
    %v6017 = vunpack.c.h.b16 %v5257
    %v6018 = vunpack.c.l.b16 %v5258
    %v6019 = vunpack.c.h.b16 %v5258
    %v6020 = vunpack.c.l.b16 %v5259
    %v6021 = vunpack.c.h.b16 %v5259
    %v6022 = vunpack.c.l.b16 %v5260
    %v6023 = vunpack.c.h.b16 %v5260
    %v6024 = vunpack.c.l.b16 %v5261
    %v6025 = vunpack.c.h.b16 %v5261
    %v6026 = vunpack.c.l.b16 %v5262
    %v6027 = vunpack.c.h.b16 %v5262
    %v6028 = vunpack.c.l.b16 %v5263
    %v6029 = vunpack.c.h.b16 %v5263
    %v6030 = vunpack.c.l.b16 %v5264
    %v6031 = vunpack.c.h.b16 %v5264
    %v6032 = vunpack.c.l.b16 %v5265
    %v6033 = vunpack.c.h.b16 %v5265
    %v6034 = vunpack.c.l.b16 %v5266
    %v6035 = vunpack.c.h.b16 %v5266
    %v6036 = vunpack.c.l.b16 %v5267
    %v6037 = vunpack.c.h.b16 %v5267
    %v6038 = vunpack.c.l.b16 %v5268
    %v6039 = vunpack.c.h.b16 %v5268
    %v6040 = vunpack.c.l.b16 %v5269
    %v6041 = vunpack.c.h.b16 %v5269
    %v6042 = vunpack.c.l.b16 %v5270
    %v6043 = vunpack.c.h.b16 %v5270
    %v6044 = vunpack.c.l.b16 %v5271
    %v6045 = vunpack.c.h.b16 %v5271
    %v6046 = vunpack.c.l.b16 %v5272
    %v6047 = vunpack.c.h.b16 %v5272
    %v6048 = vunpack.c.l.b16 %v5273
    %v6049 = vunpack.c.h.b16 %v5273
    %v6050 = vunpack.c.l.b16 %v5274
    %v6051 = vunpack.c.h.b16 %v5274
    %v6052 = vunpack.c.l.b16 %v5275
    %v6053 = vunpack.c.h.b16 %v5275
    %v6054 = vunpack.c.l.b16 %v5276
    %v6055 = vunpack.c.h.b16 %v5276
    %v6056 = vunpack.c.l.b16 %v5277
    %v6057 = vunpack.c.h.b16 %v5277
    %v6058 = vunpack.c.l.b16 %v5278
    %v6059 = vunpack.c.h.b16 %v5278
    %v6060 = vunpack.c.l.b16 %v5279
    %v6061 = vunpack.c.h.b16 %v5279
    %v6062 = vunpack.c.l.b16 %v5280
    %v6063 = vunpack.c.h.b16 %v5280
    %v6064 = vunpack.c.l.b16 %v5281
    %v6065 = vunpack.c.h.b16 %v5281
    %v6066 = vunpack.c.l.b16 %v5282
    %v6067 = vunpack.c.h.b16 %v5282
    %v6068 = vunpack.c.l.b16 %v5283
    %v6069 = vunpack.c.h.b16 %v5283
    %v6070 = vunpack.c.l.b16 %v5284
    %v6071 = vunpack.c.h.b16 %v5284
    %v6072 = vunpack.c.l.b16 %v5285
    %v6073 = vunpack.c.h.b16 %v5285
    %v6074 = vunpack.c.l.b16 %v5286
    %v6075 = vunpack.c.h.b16 %v5286
    %v6076 = vunpack.c.l.b16 %v5287
    %v6077 = vunpack.c.h.b16 %v5287
    %v6078 = vpack.c.b16 %v5570, %v5566
    %v6079 = vpack.c.b16 %v5571, %v5567
    %v6080 = vpack.c.b16 %v5572, %v5568
    %v6081 = vpack.c.b16 %v5573, %v5569
    %v6082 = vpack.c.b16 %v5578, %v5574
    %v6083 = vpack.c.b16 %v5579, %v5575
    %v6084 = vpack.c.b16 %v5580, %v5576
    %v6085 = vpack.c.b16 %v5581, %v5577
    %v6086 = vpack.c.b16 %v5586, %v5582
    %v6087 = vpack.c.b16 %v5587, %v5583
    %v6088 = vpack.c.b16 %v5588, %v5584
    %v6089 = vpack.c.b16 %v5589, %v5585
    %v6090 = vpack.c.b16 %v5594, %v5590
    %v6091 = vpack.c.b16 %v5595, %v5591
    %v6092 = vpack.c.b16 %v5596, %v5592
    %v6093 = vpack.c.b16 %v5597, %v5593
    %v6094 = vpack.c.b16 %v5602, %v5598
    %v6095 = vpack.c.b16 %v5603, %v5599
    %v6096 = vpack.c.b16 %v5604, %v5600
    %v6097 = vpack.c.b16 %v5605, %v5601
    %v6098 = vpack.c.b16 %v5610, %v5606
    %v6099 = vpack.c.b16 %v5611, %v5607
    %v6100 = vpack.c.b16 %v5612, %v5608
    %v6101 = vpack.c.b16 %v5613, %v5609
    %v6102 = vpack.c.b16 %v5618, %v5614
    %v6103 = vpack.c.b16 %v5619, %v5615
    %v6104 = vpack.c.b16 %v5620, %v5616
    %v6105 = vpack.c.b16 %v5621, %v5617
    %v6106 = vpack.c.b16 %v5626, %v5622
    %v6107 = vpack.c.b16 %v5627, %v5623
    %v6108 = vpack.c.b16 %v5628, %v5624
    %v6109 = vpack.c.b16 %v5629, %v5625
    %v6110 = vpack.c.b16 %v5634, %v5630
    %v6111 = vpack.c.b16 %v5635, %v5631
    %v6112 = vpack.c.b16 %v5636, %v5632
    %v6113 = vpack.c.b16 %v5637, %v5633
    %v6114 = vpack.c.b16 %v5642, %v5638
    %v6115 = vpack.c.b16 %v5643, %v5639
    %v6116 = vpack.c.b16 %v5644, %v5640
    %v6117 = vpack.c.b16 %v5645, %v5641
    %v6118 = vpack.c.b16 %v5650, %v5646
    %v6119 = vpack.c.b16 %v5651, %v5647
    %v6120 = vpack.c.b16 %v5652, %v5648
    %v6121 = vpack.c.b16 %v5653, %v5649
    %v6122 = vpack.c.b16 %v5658, %v5654
    %v6123 = vpack.c.b16 %v5659, %v5655
    %v6124 = vpack.c.b16 %v5660, %v5656
    %v6125 = vpack.c.b16 %v5661, %v5657
    %v6126 = vpack.c.b16 %v5666, %v5662
    %v6127 = vpack.c.b16 %v5667, %v5663
    %v6128 = vpack.c.b16 %v5668, %v5664
    %v6129 = vpack.c.b16 %v5669, %v5665
    %v6130 = vpack.c.b16 %v5674, %v5670
    %v6131 = vpack.c.b16 %v5675, %v5671
    %v6132 = vpack.c.b16 %v5676, %v5672
    %v6133 = vpack.c.b16 %v5677, %v5673
    %v6134 = vpack.c.b16 %v5682, %v5678
    %v6135 = vpack.c.b16 %v5683, %v5679
    %v6136 = vpack.c.b16 %v5684, %v5680
    %v6137 = vpack.c.b16 %v5685, %v5681
    %v6138 = vpack.c.b16 %v5690, %v5686
    %v6139 = vpack.c.b16 %v5691, %v5687
    %v6140 = vpack.c.b16 %v5692, %v5688
    %v6141 = vpack.c.b16 %v5693, %v5689
    %v6142 = vpack.c.b16 %v5698, %v5694
    %v6143 = vpack.c.b16 %v5699, %v5695
    %v6144 = vpack.c.b16 %v5700, %v5696
    %v6145 = vpack.c.b16 %v5701, %v5697
    %v6146 = vpack.c.b16 %v5706, %v5702
    %v6147 = vpack.c.b16 %v5707, %v5703
    %v6148 = vpack.c.b16 %v5708, %v5704
    %v6149 = vpack.c.b16 %v5709, %v5705
    %v6150 = vpack.c.b16 %v5714, %v5710
    %v6151 = vpack.c.b16 %v5715, %v5711
    %v6152 = vpack.c.b16 %v5716, %v5712
    %v6153 = vpack.c.b16 %v5717, %v5713
    %v6154 = vpack.c.b16 %v5722, %v5718
    %v6155 = vpack.c.b16 %v5723, %v5719
    %v6156 = vpack.c.b16 %v5724, %v5720
    %v6157 = vpack.c.b16 %v5725, %v5721
    %v6158 = vpack.c.b16 %v5730, %v5726
    %v6159 = vpack.c.b16 %v5731, %v5727
    %v6160 = vpack.c.b16 %v5732, %v5728
    %v6161 = vpack.c.b16 %v5733, %v5729
    %v6162 = vpack.c.b16 %v5738, %v5734
    %v6163 = vpack.c.b16 %v5739, %v5735
    %v6164 = vpack.c.b16 %v5740, %v5736
    %v6165 = vpack.c.b16 %v5741, %v5737
    %v6166 = vpack.c.b16 %v5746, %v5742
    %v6167 = vpack.c.b16 %v5747, %v5743
    %v6168 = vpack.c.b16 %v5748, %v5744
    %v6169 = vpack.c.b16 %v5749, %v5745
    %v6170 = vpack.c.b16 %v5754, %v5750
    %v6171 = vpack.c.b16 %v5755, %v5751
    %v6172 = vpack.c.b16 %v5756, %v5752
    %v6173 = vpack.c.b16 %v5757, %v5753
    %v6174 = vpack.c.b16 %v5762, %v5758
    %v6175 = vpack.c.b16 %v5763, %v5759
    %v6176 = vpack.c.b16 %v5764, %v5760
    %v6177 = vpack.c.b16 %v5765, %v5761
    %v6178 = vpack.c.b16 %v5770, %v5766
    %v6179 = vpack.c.b16 %v5771, %v5767
    %v6180 = vpack.c.b16 %v5772, %v5768
    %v6181 = vpack.c.b16 %v5773, %v5769
    %v6182 = vpack.c.b16 %v5778, %v5774
    %v6183 = vpack.c.b16 %v5779, %v5775
    %v6184 = vpack.c.b16 %v5780, %v5776
    %v6185 = vpack.c.b16 %v5781, %v5777
    %v6186 = vpack.c.b16 %v5786, %v5782
    %v6187 = vpack.c.b16 %v5787, %v5783
    %v6188 = vpack.c.b16 %v5788, %v5784
    %v6189 = vpack.c.b16 %v5789, %v5785
    %v6190 = vpack.c.b16 %v5794, %v5790
    %v6191 = vpack.c.b16 %v5795, %v5791
    %v6192 = vpack.c.b16 %v5796, %v5792
    %v6193 = vpack.c.b16 %v5797, %v5793
    %v6194 = vpack.c.b16 %v5802, %v5798
    %v6195 = vpack.c.b16 %v5803, %v5799
    %v6196 = vpack.c.b16 %v5804, %v5800
    %v6197 = vpack.c.b16 %v5805, %v5801
    %v6198 = vpack.c.b16 %v5810, %v5806
    %v6199 = vpack.c.b16 %v5811, %v5807
    %v6200 = vpack.c.b16 %v5812, %v5808
    %v6201 = vpack.c.b16 %v5813, %v5809
    %v6202 = vpack.c.b16 %v5818, %v5814
    %v6203 = vpack.c.b16 %v5819, %v5815
    %v6204 = vpack.c.b16 %v5820, %v5816
    %v6205 = vpack.c.b16 %v5821, %v5817
    %v6206 = vpack.c.b16 %v5826, %v5822
    %v6207 = vpack.c.b16 %v5827, %v5823
    %v6208 = vpack.c.b16 %v5828, %v5824
    %v6209 = vpack.c.b16 %v5829, %v5825
    %v6210 = vpack.c.b16 %v5834, %v5830
    %v6211 = vpack.c.b16 %v5835, %v5831
    %v6212 = vpack.c.b16 %v5836, %v5832
    %v6213 = vpack.c.b16 %v5837, %v5833
    %v6214 = vpack.c.b16 %v5842, %v5838
    %v6215 = vpack.c.b16 %v5843, %v5839
    %v6216 = vpack.c.b16 %v5844, %v5840
    %v6217 = vpack.c.b16 %v5845, %v5841
    %v6218 = vpack.c.b16 %v5850, %v5846
    %v6219 = vpack.c.b16 %v5851, %v5847
    %v6220 = vpack.c.b16 %v5852, %v5848
    %v6221 = vpack.c.b16 %v5853, %v5849
    %v6222 = vpack.c.b16 %v5858, %v5854
    %v6223 = vpack.c.b16 %v5859, %v5855
    %v6224 = vpack.c.b16 %v5860, %v5856
    %v6225 = vpack.c.b16 %v5861, %v5857
    %v6226 = vpack.c.b16 %v5866, %v5862
    %v6227 = vpack.c.b16 %v5867, %v5863
    %v6228 = vpack.c.b16 %v5868, %v5864
    %v6229 = vpack.c.b16 %v5869, %v5865
    %v6230 = vpack.c.b16 %v5874, %v5870
    %v6231 = vpack.c.b16 %v5875, %v5871
    %v6232 = vpack.c.b16 %v5876, %v5872
    %v6233 = vpack.c.b16 %v5877, %v5873
    %v6234 = vpack.c.b16 %v5882, %v5878
    %v6235 = vpack.c.b16 %v5883, %v5879
    %v6236 = vpack.c.b16 %v5884, %v5880
    %v6237 = vpack.c.b16 %v5885, %v5881
    %v6238 = vpack.c.b16 %v5890, %v5886
    %v6239 = vpack.c.b16 %v5891, %v5887
    %v6240 = vpack.c.b16 %v5892, %v5888
    %v6241 = vpack.c.b16 %v5893, %v5889
    %v6242 = vpack.c.b16 %v5898, %v5894
    %v6243 = vpack.c.b16 %v5899, %v5895
    %v6244 = vpack.c.b16 %v5900, %v5896
    %v6245 = vpack.c.b16 %v5901, %v5897
    %v6246 = vpack.c.b16 %v5906, %v5902
    %v6247 = vpack.c.b16 %v5907, %v5903
    %v6248 = vpack.c.b16 %v5908, %v5904
    %v6249 = vpack.c.b16 %v5909, %v5905
    %v6250 = vpack.c.b16 %v5914, %v5910
    %v6251 = vpack.c.b16 %v5915, %v5911
    %v6252 = vpack.c.b16 %v5916, %v5912
    %v6253 = vpack.c.b16 %v5917, %v5913
    %v6254 = vpack.c.b16 %v5922, %v5918
    %v6255 = vpack.c.b16 %v5923, %v5919
    %v6256 = vpack.c.b16 %v5924, %v5920
    %v6257 = vpack.c.b16 %v5925, %v5921
    %v6258 = vpack.c.b16 %v5930, %v5926
    %v6259 = vpack.c.b16 %v5931, %v5927
    %v6260 = vpack.c.b16 %v5932, %v5928
    %v6261 = vpack.c.b16 %v5933, %v5929
    %v6262 = vpack.c.b16 %v5938, %v5934
    %v6263 = vpack.c.b16 %v5939, %v5935
    %v6264 = vpack.c.b16 %v5940, %v5936
    %v6265 = vpack.c.b16 %v5941, %v5937
    %v6266 = vpack.c.b16 %v5946, %v5942
    %v6267 = vpack.c.b16 %v5947, %v5943
    %v6268 = vpack.c.b16 %v5948, %v5944
    %v6269 = vpack.c.b16 %v5949, %v5945
    %v6270 = vpack.c.b16 %v5954, %v5950
    %v6271 = vpack.c.b16 %v5955, %v5951
    %v6272 = vpack.c.b16 %v5956, %v5952
    %v6273 = vpack.c.b16 %v5957, %v5953
    %v6274 = vpack.c.b16 %v5962, %v5958
    %v6275 = vpack.c.b16 %v5963, %v5959
    %v6276 = vpack.c.b16 %v5964, %v5960
    %v6277 = vpack.c.b16 %v5965, %v5961
    %v6278 = vpack.c.b16 %v5970, %v5966
    %v6279 = vpack.c.b16 %v5971, %v5967
    %v6280 = vpack.c.b16 %v5972, %v5968
    %v6281 = vpack.c.b16 %v5973, %v5969
    %v6282 = vpack.c.b16 %v5978, %v5974
    %v6283 = vpack.c.b16 %v5979, %v5975
    %v6284 = vpack.c.b16 %v5980, %v5976
    %v6285 = vpack.c.b16 %v5981, %v5977
    %v6286 = vpack.c.b16 %v5986, %v5982
    %v6287 = vpack.c.b16 %v5987, %v5983
    %v6288 = vpack.c.b16 %v5988, %v5984
    %v6289 = vpack.c.b16 %v5989, %v5985
    %v6290 = vpack.c.b16 %v5994, %v5990
    %v6291 = vpack.c.b16 %v5995, %v5991
    %v6292 = vpack.c.b16 %v5996, %v5992
    %v6293 = vpack.c.b16 %v5997, %v5993
    %v6294 = vpack.c.b16 %v6002, %v5998
    %v6295 = vpack.c.b16 %v6003, %v5999
    %v6296 = vpack.c.b16 %v6004, %v6000
    %v6297 = vpack.c.b16 %v6005, %v6001
    %v6298 = vpack.c.b16 %v6010, %v6006
    %v6299 = vpack.c.b16 %v6011, %v6007
    %v6300 = vpack.c.b16 %v6012, %v6008
    %v6301 = vpack.c.b16 %v6013, %v6009
    %v6302 = vpack.c.b16 %v6018, %v6014
    %v6303 = vpack.c.b16 %v6019, %v6015
    %v6304 = vpack.c.b16 %v6020, %v6016
    %v6305 = vpack.c.b16 %v6021, %v6017
    %v6306 = vpack.c.b16 %v6026, %v6022
    %v6307 = vpack.c.b16 %v6027, %v6023
    %v6308 = vpack.c.b16 %v6028, %v6024
    %v6309 = vpack.c.b16 %v6029, %v6025
    %v6310 = vpack.c.b16 %v6034, %v6030
    %v6311 = vpack.c.b16 %v6035, %v6031
    %v6312 = vpack.c.b16 %v6036, %v6032
    %v6313 = vpack.c.b16 %v6037, %v6033
    %v6314 = vpack.c.b16 %v6042, %v6038
    %v6315 = vpack.c.b16 %v6043, %v6039
    %v6316 = vpack.c.b16 %v6044, %v6040
    %v6317 = vpack.c.b16 %v6045, %v6041
    %v6318 = vpack.c.b16 %v6050, %v6046
    %v6319 = vpack.c.b16 %v6051, %v6047
    %v6320 = vpack.c.b16 %v6052, %v6048
    %v6321 = vpack.c.b16 %v6053, %v6049
    %v6322 = vpack.c.b16 %v6058, %v6054
    %v6323 = vpack.c.b16 %v6059, %v6055
    %v6324 = vpack.c.b16 %v6060, %v6056
    %v6325 = vpack.c.b16 %v6061, %v6057
    %v6326 = vpack.c.b16 %v6066, %v6062
    %v6327 = vpack.c.b16 %v6067, %v6063
    %v6328 = vpack.c.b16 %v6068, %v6064
    %v6329 = vpack.c.b16 %v6069, %v6065
    %v6330 = vpack.c.b16 %v6074, %v6070
    %v6331 = vpack.c.b16 %v6075, %v6071
    %v6332 = vpack.c.b16 %v6076, %v6072
    %v6333 = vpack.c.b16 %v6077, %v6073
    %6590 = vmatprep.subr.bf16.mxu0 %v6107
    %6591 = vmatpush1.bf16.msra.mxu0 %v6106
    %6592 = vmatprep.subr.bf16.mxu0 %v6103
    %6593 = vmatpush1.bf16.msra.mxu0 %v6102
    %6594 = vmatprep.subr.bf16.mxu0 %v6099
    %6595 = vmatpush1.bf16.msra.mxu0 %v6098
    %6596 = vmatprep.subr.bf16.mxu0 %v6095
    %6597 = vmatpush1.bf16.msra.mxu0 %v6094
    %6598 = vmatprep.subr.bf16.mxu0 %v6091
    %6599 = vmatpush1.bf16.msra.mxu0 %v6090
    %6600 = vmatprep.subr.bf16.mxu0 %v6087
    %6601 = vmatpush1.bf16.msra.mxu0 %v6086
    %6602 = vmatprep.subr.bf16.mxu0 %v6083
    %6603 = vmatpush1.bf16.msra.mxu0 %v6082
    %6604 = vmatprep.subr.bf16.mxu0 %v6079
    %6605 = vmatpush1.bf16.msra.mxu0 %v6078
    %6606 = vmatprep.subr.bf16.mxu0 %v6139
    %6607 = vmatpush2.bf16.msra.mxu0 %v6138
    %6608 = vmatprep.subr.bf16.mxu0 %v6135
    %6609 = vmatpush2.bf16.msra.mxu0 %v6134
    %6610 = vmatprep.subr.bf16.mxu0 %v6131
    %6611 = vmatpush2.bf16.msra.mxu0 %v6130
    %6612 = vmatprep.subr.bf16.mxu0 %v6127
    %6613 = vmatpush2.bf16.msra.mxu0 %v6126
    %6614 = vmatprep.subr.bf16.mxu0 %v6123
    %6615 = vmatpush2.bf16.msra.mxu0 %v6122
    %6616 = vmatprep.subr.bf16.mxu0 %v6119
    %6617 = vmatpush2.bf16.msra.mxu0 %v6118
    %6618 = vmatprep.subr.bf16.mxu0 %v6115
    %6619 = vmatpush2.bf16.msra.mxu0 %v6114
    %6620 = vmatprep.subr.bf16.mxu0 %v6111
    %6621 = vmatpush2.bf16.msra.mxu0 %v6110
    %6622 = vmatprep.mubr.bf16.mxu0 %v4905
    %6623 = vmatmul.mubr.bf16.gmra.mxu0 %v4904
    %v6624 = vpop.f32.mrf.mxu0
    %v6625 = vadd.f32 %v5293, %v6624
    %v6626 = vpop.f32.mrf.mxu0
    %v6627 = vadd.f32 %v5297, %v6626
    %v6628 = vpop.f32.mrf.mxu0
    %v6629 = vadd.f32 %v5293, %v6628
    %v6630 = vpop.f32.mrf.mxu0
    %v6631 = vadd.f32 %v5297, %v6630
    %6632 = vmatprep.mubr.bf16.mxu0 %v4913
    %6633 = vmatmul.mubr.bf16.gmra.mxu0 %v4912
    %v6634 = vpop.f32.mrf.mxu0
    %v6635 = vadd.f32 %v5293, %v6634
    %v6636 = vpop.f32.mrf.mxu0
    %v6637 = vadd.f32 %v5297, %v6636
    %v6638 = vpop.f32.mrf.mxu0
    %v6639 = vadd.f32 %v5293, %v6638
    %v6640 = vpop.f32.mrf.mxu0
    %v6641 = vadd.f32 %v5297, %v6640
    %6642 = vmatprep.mubr.bf16.mxu0 %v4921
    %6643 = vmatmul.mubr.bf16.gmra.mxu0 %v4920
    %v6644 = vpop.f32.mrf.mxu0
    %v6645 = vadd.f32 %v5293, %v6644
    %v6646 = vpop.f32.mrf.mxu0
    %v6647 = vadd.f32 %v5297, %v6646
    %v6648 = vpop.f32.mrf.mxu0
    %v6649 = vadd.f32 %v5293, %v6648
    %v6650 = vpop.f32.mrf.mxu0
    %v6651 = vadd.f32 %v5297, %v6650
    %6652 = vmatprep.mubr.bf16.mxu0 %v4929
    %6653 = vmatmul.mubr.bf16.gmra.mxu0 %v4928
    %v6654 = vpop.f32.mrf.mxu0
    %v6655 = vadd.f32 %v5293, %v6654
    %v6656 = vpop.f32.mrf.mxu0
    %v6657 = vadd.f32 %v5297, %v6656
    %v6658 = vpop.f32.mrf.mxu0
    %v6659 = vadd.f32 %v5293, %v6658
    %v6660 = vpop.f32.mrf.mxu0
    %v6661 = vadd.f32 %v5297, %v6660
    %6662 = vmatprep.mubr.bf16.mxu0 %v4937
    %6663 = vmatmul.mubr.bf16.gmra.mxu0 %v4936
    %v6664 = vpop.f32.mrf.mxu0
    %v6665 = vadd.f32 %v5293, %v6664
    %v6666 = vpop.f32.mrf.mxu0
    %v6667 = vadd.f32 %v5297, %v6666
    %v6668 = vpop.f32.mrf.mxu0
    %v6669 = vadd.f32 %v5293, %v6668
    %v6670 = vpop.f32.mrf.mxu0
    %v6671 = vadd.f32 %v5297, %v6670
    %6672 = vmatprep.mubr.bf16.mxu0 %v4945
    %6673 = vmatmul.mubr.bf16.gmra.mxu0 %v4944
    %v6674 = vpop.f32.mrf.mxu0
    %v6675 = vadd.f32 %v5293, %v6674
    %v6676 = vpop.f32.mrf.mxu0
    %v6677 = vadd.f32 %v5297, %v6676
    %v6678 = vpop.f32.mrf.mxu0
    %v6679 = vadd.f32 %v5293, %v6678
    %v6680 = vpop.f32.mrf.mxu0
    %v6681 = vadd.f32 %v5297, %v6680
    %6682 = vmatprep.mubr.bf16.mxu0 %v4953
    %6683 = vmatmul.mubr.bf16.gmra.mxu0 %v4952
    %v6684 = vpop.f32.mrf.mxu0
    %v6685 = vadd.f32 %v5293, %v6684
    %v6686 = vpop.f32.mrf.mxu0
    %v6687 = vadd.f32 %v5297, %v6686
    %v6688 = vpop.f32.mrf.mxu0
    %v6689 = vadd.f32 %v5293, %v6688
    %v6690 = vpop.f32.mrf.mxu0
    %v6691 = vadd.f32 %v5297, %v6690
    %6692 = vmatprep.mubr.bf16.mxu0 %v4961
    %6693 = vmatmul.mubr.bf16.gmra.mxu0 %v4960
    %v6694 = vpop.f32.mrf.mxu0
    %v6695 = vadd.f32 %v5293, %v6694
    %v6696 = vpop.f32.mrf.mxu0
    %v6697 = vadd.f32 %v5297, %v6696
    %v6698 = vpop.f32.mrf.mxu0
    %v6699 = vadd.f32 %v5293, %v6698
    %v6700 = vpop.f32.mrf.mxu0
    %v6701 = vadd.f32 %v5297, %v6700
    %6702 = vmatprep.mubr.bf16.mxu0 %v4969
    %6703 = vmatmul.mubr.bf16.gmra.mxu0 %v4968
    %v6704 = vpop.f32.mrf.mxu0
    %v6705 = vadd.f32 %v5293, %v6704
    %v6706 = vpop.f32.mrf.mxu0
    %v6707 = vadd.f32 %v5297, %v6706
    %v6708 = vpop.f32.mrf.mxu0
    %v6709 = vadd.f32 %v5293, %v6708
    %v6710 = vpop.f32.mrf.mxu0
    %v6711 = vadd.f32 %v5297, %v6710
    %6712 = vmatprep.mubr.bf16.mxu0 %v4977
    %6713 = vmatmul.mubr.bf16.gmra.mxu0 %v4976
    %v6714 = vpop.f32.mrf.mxu0
    %v6715 = vadd.f32 %v5293, %v6714
    %v6716 = vpop.f32.mrf.mxu0
    %v6717 = vadd.f32 %v5297, %v6716
    %v6718 = vpop.f32.mrf.mxu0
    %v6719 = vadd.f32 %v5293, %v6718
    %v6720 = vpop.f32.mrf.mxu0
    %v6721 = vadd.f32 %v5297, %v6720
    %6722 = vmatprep.mubr.bf16.mxu0 %v4985
    %6723 = vmatmul.mubr.bf16.gmra.mxu0 %v4984
    %v6724 = vpop.f32.mrf.mxu0
    %v6725 = vadd.f32 %v5293, %v6724
    %v6726 = vpop.f32.mrf.mxu0
    %v6727 = vadd.f32 %v5297, %v6726
    %v6728 = vpop.f32.mrf.mxu0
    %v6729 = vadd.f32 %v5293, %v6728
    %v6730 = vpop.f32.mrf.mxu0
    %v6731 = vadd.f32 %v5297, %v6730
    %6732 = vmatprep.mubr.bf16.mxu0 %v4993
    %6733 = vmatmul.mubr.bf16.gmra.mxu0 %v4992
    %v6734 = vpop.f32.mrf.mxu0
    %v6735 = vadd.f32 %v5293, %v6734
    %v6736 = vpop.f32.mrf.mxu0
    %v6737 = vadd.f32 %v5297, %v6736
    %v6738 = vpop.f32.mrf.mxu0
    %v6739 = vadd.f32 %v5293, %v6738
    %v6740 = vpop.f32.mrf.mxu0
    %v6741 = vadd.f32 %v5297, %v6740
    %6742 = vmatprep.mubr.bf16.mxu0 %v5001
    %6743 = vmatmul.mubr.bf16.gmra.mxu0 %v5000
    %v6744 = vpop.f32.mrf.mxu0
    %v6745 = vadd.f32 %v5293, %v6744
    %v6746 = vpop.f32.mrf.mxu0
    %v6747 = vadd.f32 %v5297, %v6746
    %v6748 = vpop.f32.mrf.mxu0
    %v6749 = vadd.f32 %v5293, %v6748
    %v6750 = vpop.f32.mrf.mxu0
    %v6751 = vadd.f32 %v5297, %v6750
    %6752 = vmatprep.mubr.bf16.mxu0 %v5009
    %6753 = vmatmul.mubr.bf16.gmra.mxu0 %v5008
    %v6754 = vpop.f32.mrf.mxu0
    %v6755 = vadd.f32 %v5293, %v6754
    %v6756 = vpop.f32.mrf.mxu0
    %v6757 = vadd.f32 %v5297, %v6756
    %v6758 = vpop.f32.mrf.mxu0
    %v6759 = vadd.f32 %v5293, %v6758
    %v6760 = vpop.f32.mrf.mxu0
    %v6761 = vadd.f32 %v5297, %v6760
    %6762 = vmatprep.mubr.bf16.mxu0 %v5017
    %6763 = vmatmul.mubr.bf16.gmra.mxu0 %v5016
    %v6764 = vpop.f32.mrf.mxu0
    %v6765 = vadd.f32 %v5293, %v6764
    %v6766 = vpop.f32.mrf.mxu0
    %v6767 = vadd.f32 %v5297, %v6766
    %v6768 = vpop.f32.mrf.mxu0
    %v6769 = vadd.f32 %v5293, %v6768
    %v6770 = vpop.f32.mrf.mxu0
    %v6771 = vadd.f32 %v5297, %v6770
    %6772 = vmatprep.mubr.bf16.mxu0 %v5025
    %6773 = vmatmul.mubr.bf16.gmra.mxu0 %v5024
    %v6774 = vpop.f32.mrf.mxu0
    %v6775 = vadd.f32 %v5293, %v6774
    %v6776 = vpop.f32.mrf.mxu0
    %v6777 = vadd.f32 %v5297, %v6776
    %v6778 = vpop.f32.mrf.mxu0
    %v6779 = vadd.f32 %v5293, %v6778
    %v6780 = vpop.f32.mrf.mxu0
    %v6781 = vadd.f32 %v5297, %v6780
    %6782 = vdwg.mxu0
    %6783 = vmatprep.subr.bf16.mxu0 %v6171
    %6784 = vmatpush1.bf16.msra.mxu0 %v6170
    %6785 = vmatprep.subr.bf16.mxu0 %v6167
    %6786 = vmatpush1.bf16.msra.mxu0 %v6166
    %6787 = vmatprep.subr.bf16.mxu0 %v6163
    %6788 = vmatpush1.bf16.msra.mxu0 %v6162
    %6789 = vmatprep.subr.bf16.mxu0 %v6159
    %6790 = vmatpush1.bf16.msra.mxu0 %v6158
    %6791 = vmatprep.subr.bf16.mxu0 %v6155
    %6792 = vmatpush1.bf16.msra.mxu0 %v6154
    %6793 = vmatprep.subr.bf16.mxu0 %v6151
    %6794 = vmatpush1.bf16.msra.mxu0 %v6150
    %6795 = vmatprep.subr.bf16.mxu0 %v6147
    %6796 = vmatpush1.bf16.msra.mxu0 %v6146
    %6797 = vmatprep.subr.bf16.mxu0 %v6143
    %6798 = vmatpush1.bf16.msra.mxu0 %v6142
    %6799 = vmatprep.subr.bf16.mxu0 %v6203
    %6800 = vmatpush2.bf16.msra.mxu0 %v6202
    %6801 = vmatprep.subr.bf16.mxu0 %v6199
    %6802 = vmatpush2.bf16.msra.mxu0 %v6198
    %6803 = vmatprep.subr.bf16.mxu0 %v6195
    %6804 = vmatpush2.bf16.msra.mxu0 %v6194
    %6805 = vmatprep.subr.bf16.mxu0 %v6191
    %6806 = vmatpush2.bf16.msra.mxu0 %v6190
    %6807 = vmatprep.subr.bf16.mxu0 %v6187
    %6808 = vmatpush2.bf16.msra.mxu0 %v6186
    %6809 = vmatprep.subr.bf16.mxu0 %v6183
    %6810 = vmatpush2.bf16.msra.mxu0 %v6182
    %6811 = vmatprep.subr.bf16.mxu0 %v6179
    %6812 = vmatpush2.bf16.msra.mxu0 %v6178
    %6813 = vmatprep.subr.bf16.mxu0 %v6175
    %6814 = vmatpush2.bf16.msra.mxu0 %v6174
    %6815 = vmatprep.mubr.bf16.mxu0 %v4907
    %6816 = vmatmul.mubr.bf16.gmra.mxu0 %v4906
    %v6817 = vpop.f32.mrf.mxu0
    %v6818 = vadd.f32 %v6625, %v6817
    %v6819 = vpop.f32.mrf.mxu0
    %v6820 = vadd.f32 %v6627, %v6819
    %v6821 = vpop.f32.mrf.mxu0
    %v6822 = vadd.f32 %v6629, %v6821
    %v6823 = vpop.f32.mrf.mxu0
    %v6824 = vadd.f32 %v6631, %v6823
    %6825 = vmatprep.mubr.bf16.mxu0 %v4915
    %6826 = vmatmul.mubr.bf16.gmra.mxu0 %v4914
    %v6827 = vpop.f32.mrf.mxu0
    %v6828 = vadd.f32 %v6635, %v6827
    %v6829 = vpop.f32.mrf.mxu0
    %v6830 = vadd.f32 %v6637, %v6829
    %v6831 = vpop.f32.mrf.mxu0
    %v6832 = vadd.f32 %v6639, %v6831
    %v6833 = vpop.f32.mrf.mxu0
    %v6834 = vadd.f32 %v6641, %v6833
    %6835 = vmatprep.mubr.bf16.mxu0 %v4923
    %6836 = vmatmul.mubr.bf16.gmra.mxu0 %v4922
    %v6837 = vpop.f32.mrf.mxu0
    %v6838 = vadd.f32 %v6645, %v6837
    %v6839 = vpop.f32.mrf.mxu0
    %v6840 = vadd.f32 %v6647, %v6839
    %v6841 = vpop.f32.mrf.mxu0
    %v6842 = vadd.f32 %v6649, %v6841
    %v6843 = vpop.f32.mrf.mxu0
    %v6844 = vadd.f32 %v6651, %v6843
    %6845 = vmatprep.mubr.bf16.mxu0 %v4931
    %6846 = vmatmul.mubr.bf16.gmra.mxu0 %v4930
    %v6847 = vpop.f32.mrf.mxu0
    %v6848 = vadd.f32 %v6655, %v6847
    %v6849 = vpop.f32.mrf.mxu0
    %v6850 = vadd.f32 %v6657, %v6849
    %v6851 = vpop.f32.mrf.mxu0
    %v6852 = vadd.f32 %v6659, %v6851
    %v6853 = vpop.f32.mrf.mxu0
    %v6854 = vadd.f32 %v6661, %v6853
    %6855 = vmatprep.mubr.bf16.mxu0 %v4939
    %6856 = vmatmul.mubr.bf16.gmra.mxu0 %v4938
    %v6857 = vpop.f32.mrf.mxu0
    %v6858 = vadd.f32 %v6665, %v6857
    %v6859 = vpop.f32.mrf.mxu0
    %v6860 = vadd.f32 %v6667, %v6859
    %v6861 = vpop.f32.mrf.mxu0
    %v6862 = vadd.f32 %v6669, %v6861
    %v6863 = vpop.f32.mrf.mxu0
    %v6864 = vadd.f32 %v6671, %v6863
    %6865 = vmatprep.mubr.bf16.mxu0 %v4947
    %6866 = vmatmul.mubr.bf16.gmra.mxu0 %v4946
    %v6867 = vpop.f32.mrf.mxu0
    %v6868 = vadd.f32 %v6675, %v6867
    %v6869 = vpop.f32.mrf.mxu0
    %v6870 = vadd.f32 %v6677, %v6869
    %v6871 = vpop.f32.mrf.mxu0
    %v6872 = vadd.f32 %v6679, %v6871
    %v6873 = vpop.f32.mrf.mxu0
    %v6874 = vadd.f32 %v6681, %v6873
    %6875 = vmatprep.mubr.bf16.mxu0 %v4955
    %6876 = vmatmul.mubr.bf16.gmra.mxu0 %v4954
    %v6877 = vpop.f32.mrf.mxu0
    %v6878 = vadd.f32 %v6685, %v6877
    %v6879 = vpop.f32.mrf.mxu0
    %v6880 = vadd.f32 %v6687, %v6879
    %v6881 = vpop.f32.mrf.mxu0
    %v6882 = vadd.f32 %v6689, %v6881
    %v6883 = vpop.f32.mrf.mxu0
    %v6884 = vadd.f32 %v6691, %v6883
    %6885 = vmatprep.mubr.bf16.mxu0 %v4963
    %6886 = vmatmul.mubr.bf16.gmra.mxu0 %v4962
    %v6887 = vpop.f32.mrf.mxu0
    %v6888 = vadd.f32 %v6695, %v6887
    %v6889 = vpop.f32.mrf.mxu0
    %v6890 = vadd.f32 %v6697, %v6889
    %v6891 = vpop.f32.mrf.mxu0
    %v6892 = vadd.f32 %v6699, %v6891
    %v6893 = vpop.f32.mrf.mxu0
    %v6894 = vadd.f32 %v6701, %v6893
    %6895 = vmatprep.mubr.bf16.mxu0 %v4971
    %6896 = vmatmul.mubr.bf16.gmra.mxu0 %v4970
    %v6897 = vpop.f32.mrf.mxu0
    %v6898 = vadd.f32 %v6705, %v6897
    %v6899 = vpop.f32.mrf.mxu0
    %v6900 = vadd.f32 %v6707, %v6899
    %v6901 = vpop.f32.mrf.mxu0
    %v6902 = vadd.f32 %v6709, %v6901
    %v6903 = vpop.f32.mrf.mxu0
    %v6904 = vadd.f32 %v6711, %v6903
    %6905 = vmatprep.mubr.bf16.mxu0 %v4979
    %6906 = vmatmul.mubr.bf16.gmra.mxu0 %v4978
    %v6907 = vpop.f32.mrf.mxu0
    %v6908 = vadd.f32 %v6715, %v6907
    %v6909 = vpop.f32.mrf.mxu0
    %v6910 = vadd.f32 %v6717, %v6909
    %v6911 = vpop.f32.mrf.mxu0
    %v6912 = vadd.f32 %v6719, %v6911
    %v6913 = vpop.f32.mrf.mxu0
    %v6914 = vadd.f32 %v6721, %v6913
    %6915 = vmatprep.mubr.bf16.mxu0 %v4987
    %6916 = vmatmul.mubr.bf16.gmra.mxu0 %v4986
    %v6917 = vpop.f32.mrf.mxu0
    %v6918 = vadd.f32 %v6725, %v6917
    %v6919 = vpop.f32.mrf.mxu0
    %v6920 = vadd.f32 %v6727, %v6919
    %v6921 = vpop.f32.mrf.mxu0
    %v6922 = vadd.f32 %v6729, %v6921
    %v6923 = vpop.f32.mrf.mxu0
    %v6924 = vadd.f32 %v6731, %v6923
    %6925 = vmatprep.mubr.bf16.mxu0 %v4995
    %6926 = vmatmul.mubr.bf16.gmra.mxu0 %v4994
    %v6927 = vpop.f32.mrf.mxu0
    %v6928 = vadd.f32 %v6735, %v6927
    %v6929 = vpop.f32.mrf.mxu0
    %v6930 = vadd.f32 %v6737, %v6929
    %v6931 = vpop.f32.mrf.mxu0
    %v6932 = vadd.f32 %v6739, %v6931
    %v6933 = vpop.f32.mrf.mxu0
    %v6934 = vadd.f32 %v6741, %v6933
    %6935 = vmatprep.mubr.bf16.mxu0 %v5003
    %6936 = vmatmul.mubr.bf16.gmra.mxu0 %v5002
    %v6937 = vpop.f32.mrf.mxu0
    %v6938 = vadd.f32 %v6745, %v6937
    %v6939 = vpop.f32.mrf.mxu0
    %v6940 = vadd.f32 %v6747, %v6939
    %v6941 = vpop.f32.mrf.mxu0
    %v6942 = vadd.f32 %v6749, %v6941
    %v6943 = vpop.f32.mrf.mxu0
    %v6944 = vadd.f32 %v6751, %v6943
    %6945 = vmatprep.mubr.bf16.mxu0 %v5011
    %6946 = vmatmul.mubr.bf16.gmra.mxu0 %v5010
    %v6947 = vpop.f32.mrf.mxu0
    %v6948 = vadd.f32 %v6755, %v6947
    %v6949 = vpop.f32.mrf.mxu0
    %v6950 = vadd.f32 %v6757, %v6949
    %v6951 = vpop.f32.mrf.mxu0
    %v6952 = vadd.f32 %v6759, %v6951
    %v6953 = vpop.f32.mrf.mxu0
    %v6954 = vadd.f32 %v6761, %v6953
    %6955 = vmatprep.mubr.bf16.mxu0 %v5019
    %6956 = vmatmul.mubr.bf16.gmra.mxu0 %v5018
    %v6957 = vpop.f32.mrf.mxu0
    %v6958 = vadd.f32 %v6765, %v6957
    %v6959 = vpop.f32.mrf.mxu0
    %v6960 = vadd.f32 %v6767, %v6959
    %v6961 = vpop.f32.mrf.mxu0
    %v6962 = vadd.f32 %v6769, %v6961
    %v6963 = vpop.f32.mrf.mxu0
    %v6964 = vadd.f32 %v6771, %v6963
    %6965 = vmatprep.mubr.bf16.mxu0 %v5027
    %6966 = vmatmul.mubr.bf16.gmra.mxu0 %v5026
    %v6967 = vpop.f32.mrf.mxu0
    %v6968 = vadd.f32 %v6775, %v6967
    %v6969 = vpop.f32.mrf.mxu0
    %v6970 = vadd.f32 %v6777, %v6969
    %v6971 = vpop.f32.mrf.mxu0
    %v6972 = vadd.f32 %v6779, %v6971
    %v6973 = vpop.f32.mrf.mxu0
    %v6974 = vadd.f32 %v6781, %v6973
    %6975 = vdwg.mxu0
    %6976 = vmatprep.subr.bf16.mxu0 %v6235
    %6977 = vmatpush1.bf16.msra.mxu0 %v6234
    %6978 = vmatprep.subr.bf16.mxu0 %v6231
    %6979 = vmatpush1.bf16.msra.mxu0 %v6230
    %6980 = vmatprep.subr.bf16.mxu0 %v6227
    %6981 = vmatpush1.bf16.msra.mxu0 %v6226
    %6982 = vmatprep.subr.bf16.mxu0 %v6223
    %6983 = vmatpush1.bf16.msra.mxu0 %v6222
    %6984 = vmatprep.subr.bf16.mxu0 %v6219
    %6985 = vmatpush1.bf16.msra.mxu0 %v6218
    %6986 = vmatprep.subr.bf16.mxu0 %v6215
    %6987 = vmatpush1.bf16.msra.mxu0 %v6214
    %6988 = vmatprep.subr.bf16.mxu0 %v6211
    %6989 = vmatpush1.bf16.msra.mxu0 %v6210
    %6990 = vmatprep.subr.bf16.mxu0 %v6207
    %6991 = vmatpush1.bf16.msra.mxu0 %v6206
    %6992 = vmatprep.subr.bf16.mxu0 %v6267
    %6993 = vmatpush2.bf16.msra.mxu0 %v6266
    %6994 = vmatprep.subr.bf16.mxu0 %v6263
    %6995 = vmatpush2.bf16.msra.mxu0 %v6262
    %6996 = vmatprep.subr.bf16.mxu0 %v6259
    %6997 = vmatpush2.bf16.msra.mxu0 %v6258
    %6998 = vmatprep.subr.bf16.mxu0 %v6255
    %6999 = vmatpush2.bf16.msra.mxu0 %v6254
    %7000 = vmatprep.subr.bf16.mxu0 %v6251
    %7001 = vmatpush2.bf16.msra.mxu0 %v6250
    %7002 = vmatprep.subr.bf16.mxu0 %v6247
    %7003 = vmatpush2.bf16.msra.mxu0 %v6246
    %7004 = vmatprep.subr.bf16.mxu0 %v6243
    %7005 = vmatpush2.bf16.msra.mxu0 %v6242
    %7006 = vmatprep.subr.bf16.mxu0 %v6239
    %7007 = vmatpush2.bf16.msra.mxu0 %v6238
    %7008 = vmatprep.mubr.bf16.mxu0 %v4909
    %7009 = vmatmul.mubr.bf16.gmra.mxu0 %v4908
    %v7010 = vpop.f32.mrf.mxu0
    %v7011 = vadd.f32 %v6818, %v7010
    %v7012 = vpop.f32.mrf.mxu0
    %v7013 = vadd.f32 %v6820, %v7012
    %v7014 = vpop.f32.mrf.mxu0
    %v7015 = vadd.f32 %v6822, %v7014
    %v7016 = vpop.f32.mrf.mxu0
    %v7017 = vadd.f32 %v6824, %v7016
    %7018 = vmatprep.mubr.bf16.mxu0 %v4917
    %7019 = vmatmul.mubr.bf16.gmra.mxu0 %v4916
    %v7020 = vpop.f32.mrf.mxu0
    %v7021 = vadd.f32 %v6828, %v7020
    %v7022 = vpop.f32.mrf.mxu0
    %v7023 = vadd.f32 %v6830, %v7022
    %v7024 = vpop.f32.mrf.mxu0
    %v7025 = vadd.f32 %v6832, %v7024
    %v7026 = vpop.f32.mrf.mxu0
    %v7027 = vadd.f32 %v6834, %v7026
    %7028 = vmatprep.mubr.bf16.mxu0 %v4925
    %7029 = vmatmul.mubr.bf16.gmra.mxu0 %v4924
    %v7030 = vpop.f32.mrf.mxu0
    %v7031 = vadd.f32 %v6838, %v7030
    %v7032 = vpop.f32.mrf.mxu0
    %v7033 = vadd.f32 %v6840, %v7032
    %v7034 = vpop.f32.mrf.mxu0
    %v7035 = vadd.f32 %v6842, %v7034
    %v7036 = vpop.f32.mrf.mxu0
    %v7037 = vadd.f32 %v6844, %v7036
    %7038 = vmatprep.mubr.bf16.mxu0 %v4933
    %7039 = vmatmul.mubr.bf16.gmra.mxu0 %v4932
    %v7040 = vpop.f32.mrf.mxu0
    %v7041 = vadd.f32 %v6848, %v7040
    %v7042 = vpop.f32.mrf.mxu0
    %v7043 = vadd.f32 %v6850, %v7042
    %v7044 = vpop.f32.mrf.mxu0
    %v7045 = vadd.f32 %v6852, %v7044
    %v7046 = vpop.f32.mrf.mxu0
    %v7047 = vadd.f32 %v6854, %v7046
    %7048 = vmatprep.mubr.bf16.mxu0 %v4941
    %7049 = vmatmul.mubr.bf16.gmra.mxu0 %v4940
    %v7050 = vpop.f32.mrf.mxu0
    %v7051 = vadd.f32 %v6858, %v7050
    %v7052 = vpop.f32.mrf.mxu0
    %v7053 = vadd.f32 %v6860, %v7052
    %v7054 = vpop.f32.mrf.mxu0
    %v7055 = vadd.f32 %v6862, %v7054
    %v7056 = vpop.f32.mrf.mxu0
    %v7057 = vadd.f32 %v6864, %v7056
    %7058 = vmatprep.mubr.bf16.mxu0 %v4949
    %7059 = vmatmul.mubr.bf16.gmra.mxu0 %v4948
    %v7060 = vpop.f32.mrf.mxu0
    %v7061 = vadd.f32 %v6868, %v7060
    %v7062 = vpop.f32.mrf.mxu0
    %v7063 = vadd.f32 %v6870, %v7062
    %v7064 = vpop.f32.mrf.mxu0
    %v7065 = vadd.f32 %v6872, %v7064
    %v7066 = vpop.f32.mrf.mxu0
    %v7067 = vadd.f32 %v6874, %v7066
    %7068 = vmatprep.mubr.bf16.mxu0 %v4957
    %7069 = vmatmul.mubr.bf16.gmra.mxu0 %v4956
    %v7070 = vpop.f32.mrf.mxu0
    %v7071 = vadd.f32 %v6878, %v7070
    %v7072 = vpop.f32.mrf.mxu0
    %v7073 = vadd.f32 %v6880, %v7072
    %v7074 = vpop.f32.mrf.mxu0
    %v7075 = vadd.f32 %v6882, %v7074
    %v7076 = vpop.f32.mrf.mxu0
    %v7077 = vadd.f32 %v6884, %v7076
    %7078 = vmatprep.mubr.bf16.mxu0 %v4965
    %7079 = vmatmul.mubr.bf16.gmra.mxu0 %v4964
    %v7080 = vpop.f32.mrf.mxu0
    %v7081 = vadd.f32 %v6888, %v7080
    %v7082 = vpop.f32.mrf.mxu0
    %v7083 = vadd.f32 %v6890, %v7082
    %v7084 = vpop.f32.mrf.mxu0
    %v7085 = vadd.f32 %v6892, %v7084
    %v7086 = vpop.f32.mrf.mxu0
    %v7087 = vadd.f32 %v6894, %v7086
    %7088 = vmatprep.mubr.bf16.mxu0 %v4973
    %7089 = vmatmul.mubr.bf16.gmra.mxu0 %v4972
    %v7090 = vpop.f32.mrf.mxu0
    %v7091 = vadd.f32 %v6898, %v7090
    %v7092 = vpop.f32.mrf.mxu0
    %v7093 = vadd.f32 %v6900, %v7092
    %v7094 = vpop.f32.mrf.mxu0
    %v7095 = vadd.f32 %v6902, %v7094
    %v7096 = vpop.f32.mrf.mxu0
    %v7097 = vadd.f32 %v6904, %v7096
    %7098 = vmatprep.mubr.bf16.mxu0 %v4981
    %7099 = vmatmul.mubr.bf16.gmra.mxu0 %v4980
    %v7100 = vpop.f32.mrf.mxu0
    %v7101 = vadd.f32 %v6908, %v7100
    %v7102 = vpop.f32.mrf.mxu0
    %v7103 = vadd.f32 %v6910, %v7102
    %v7104 = vpop.f32.mrf.mxu0
    %v7105 = vadd.f32 %v6912, %v7104
    %v7106 = vpop.f32.mrf.mxu0
    %v7107 = vadd.f32 %v6914, %v7106
    %7108 = vmatprep.mubr.bf16.mxu0 %v4989
    %7109 = vmatmul.mubr.bf16.gmra.mxu0 %v4988
    %v7110 = vpop.f32.mrf.mxu0
    %v7111 = vadd.f32 %v6918, %v7110
    %v7112 = vpop.f32.mrf.mxu0
    %v7113 = vadd.f32 %v6920, %v7112
    %v7114 = vpop.f32.mrf.mxu0
    %v7115 = vadd.f32 %v6922, %v7114
    %v7116 = vpop.f32.mrf.mxu0
    %v7117 = vadd.f32 %v6924, %v7116
    %7118 = vmatprep.mubr.bf16.mxu0 %v4997
    %7119 = vmatmul.mubr.bf16.gmra.mxu0 %v4996
    %v7120 = vpop.f32.mrf.mxu0
    %v7121 = vadd.f32 %v6928, %v7120
    %v7122 = vpop.f32.mrf.mxu0
    %v7123 = vadd.f32 %v6930, %v7122
    %v7124 = vpop.f32.mrf.mxu0
    %v7125 = vadd.f32 %v6932, %v7124
    %v7126 = vpop.f32.mrf.mxu0
    %v7127 = vadd.f32 %v6934, %v7126
    %7128 = vmatprep.mubr.bf16.mxu0 %v5005
    %7129 = vmatmul.mubr.bf16.gmra.mxu0 %v5004
    %v7130 = vpop.f32.mrf.mxu0
    %v7131 = vadd.f32 %v6938, %v7130
    %v7132 = vpop.f32.mrf.mxu0
    %v7133 = vadd.f32 %v6940, %v7132
    %v7134 = vpop.f32.mrf.mxu0
    %v7135 = vadd.f32 %v6942, %v7134
    %v7136 = vpop.f32.mrf.mxu0
    %v7137 = vadd.f32 %v6944, %v7136
    %7138 = vmatprep.mubr.bf16.mxu0 %v5013
    %7139 = vmatmul.mubr.bf16.gmra.mxu0 %v5012
    %v7140 = vpop.f32.mrf.mxu0
    %v7141 = vadd.f32 %v6948, %v7140
    %v7142 = vpop.f32.mrf.mxu0
    %v7143 = vadd.f32 %v6950, %v7142
    %v7144 = vpop.f32.mrf.mxu0
    %v7145 = vadd.f32 %v6952, %v7144
    %v7146 = vpop.f32.mrf.mxu0
    %v7147 = vadd.f32 %v6954, %v7146
    %7148 = vmatprep.mubr.bf16.mxu0 %v5021
    %7149 = vmatmul.mubr.bf16.gmra.mxu0 %v5020
    %v7150 = vpop.f32.mrf.mxu0
    %v7151 = vadd.f32 %v6958, %v7150
    %v7152 = vpop.f32.mrf.mxu0
    %v7153 = vadd.f32 %v6960, %v7152
    %v7154 = vpop.f32.mrf.mxu0
    %v7155 = vadd.f32 %v6962, %v7154
    %v7156 = vpop.f32.mrf.mxu0
    %v7157 = vadd.f32 %v6964, %v7156
    %7158 = vmatprep.mubr.bf16.mxu0 %v5029
    %7159 = vmatmul.mubr.bf16.gmra.mxu0 %v5028
    %v7160 = vpop.f32.mrf.mxu0
    %v7161 = vadd.f32 %v6968, %v7160
    %v7162 = vpop.f32.mrf.mxu0
    %v7163 = vadd.f32 %v6970, %v7162
    %v7164 = vpop.f32.mrf.mxu0
    %v7165 = vadd.f32 %v6972, %v7164
    %v7166 = vpop.f32.mrf.mxu0
    %v7167 = vadd.f32 %v6974, %v7166
    %7168 = vdwg.mxu0
    %7169 = vmatprep.subr.bf16.mxu0 %v6299
    %7170 = vmatpush1.bf16.msra.mxu0 %v6298
    %7171 = vmatprep.subr.bf16.mxu0 %v6295
    %7172 = vmatpush1.bf16.msra.mxu0 %v6294
    %7173 = vmatprep.subr.bf16.mxu0 %v6291
    %7174 = vmatpush1.bf16.msra.mxu0 %v6290
    %7175 = vmatprep.subr.bf16.mxu0 %v6287
    %7176 = vmatpush1.bf16.msra.mxu0 %v6286
    %7177 = vmatprep.subr.bf16.mxu0 %v6283
    %7178 = vmatpush1.bf16.msra.mxu0 %v6282
    %7179 = vmatprep.subr.bf16.mxu0 %v6279
    %7180 = vmatpush1.bf16.msra.mxu0 %v6278
    %7181 = vmatprep.subr.bf16.mxu0 %v6275
    %7182 = vmatpush1.bf16.msra.mxu0 %v6274
    %7183 = vmatprep.subr.bf16.mxu0 %v6271
    %7184 = vmatpush1.bf16.msra.mxu0 %v6270
    %7185 = vmatprep.subr.bf16.mxu0 %v6331
    %7186 = vmatpush2.bf16.msra.mxu0 %v6330
    %7187 = vmatprep.subr.bf16.mxu0 %v6327
    %7188 = vmatpush2.bf16.msra.mxu0 %v6326
    %7189 = vmatprep.subr.bf16.mxu0 %v6323
    %7190 = vmatpush2.bf16.msra.mxu0 %v6322
    %7191 = vmatprep.subr.bf16.mxu0 %v6319
    %7192 = vmatpush2.bf16.msra.mxu0 %v6318
    %7193 = vmatprep.subr.bf16.mxu0 %v6315
    %7194 = vmatpush2.bf16.msra.mxu0 %v6314
    %7195 = vmatprep.subr.bf16.mxu0 %v6311
    %7196 = vmatpush2.bf16.msra.mxu0 %v6310
    %7197 = vmatprep.subr.bf16.mxu0 %v6307
    %7198 = vmatpush2.bf16.msra.mxu0 %v6306
    %7199 = vmatprep.subr.bf16.mxu0 %v6303
    %7200 = vmatpush2.bf16.msra.mxu0 %v6302
    %7201 = vmatprep.mubr.bf16.mxu0 %v4911
    %7202 = vmatmul.mubr.bf16.gmra.mxu0 %v4910
    %v7203 = vpop.f32.mrf.mxu0
    %v7204 = vadd.f32 %v7011, %v7203
    %v7205 = vpop.f32.mrf.mxu0
    %v7206 = vadd.f32 %v7013, %v7205
    %v7207 = vpop.f32.mrf.mxu0
    %v7208 = vadd.f32 %v7015, %v7207
    %v7209 = vpop.f32.mrf.mxu0
    %v7210 = vadd.f32 %v7017, %v7209
    %7211 = vmatprep.mubr.bf16.mxu0 %v4919
    %7212 = vmatmul.mubr.bf16.gmra.mxu0 %v4918
    %v7213 = vpop.f32.mrf.mxu0
    %v7214 = vadd.f32 %v7021, %v7213
    %v7215 = vpop.f32.mrf.mxu0
    %v7216 = vadd.f32 %v7023, %v7215
    %v7217 = vpop.f32.mrf.mxu0
    %v7218 = vadd.f32 %v7025, %v7217
    %v7219 = vpop.f32.mrf.mxu0
    %v7220 = vadd.f32 %v7027, %v7219
    %7221 = vmatprep.mubr.bf16.mxu0 %v4927
    %7222 = vmatmul.mubr.bf16.gmra.mxu0 %v4926
    %v7223 = vpop.f32.mrf.mxu0
    %v7224 = vadd.f32 %v7031, %v7223
    %v7225 = vpop.f32.mrf.mxu0
    %v7226 = vadd.f32 %v7033, %v7225
    %v7227 = vpop.f32.mrf.mxu0
    %v7228 = vadd.f32 %v7035, %v7227
    %v7229 = vpop.f32.mrf.mxu0
    %v7230 = vadd.f32 %v7037, %v7229
    %7231 = vmatprep.mubr.bf16.mxu0 %v4935
    %7232 = vmatmul.mubr.bf16.gmra.mxu0 %v4934
    %v7233 = vpop.f32.mrf.mxu0
    %v7234 = vadd.f32 %v7041, %v7233
    %v7235 = vpop.f32.mrf.mxu0
    %v7236 = vadd.f32 %v7043, %v7235
    %v7237 = vpop.f32.mrf.mxu0
    %v7238 = vadd.f32 %v7045, %v7237
    %v7239 = vpop.f32.mrf.mxu0
    %v7240 = vadd.f32 %v7047, %v7239
    %7241 = vmatprep.mubr.bf16.mxu0 %v4943
    %7242 = vmatmul.mubr.bf16.gmra.mxu0 %v4942
    %v7243 = vpop.f32.mrf.mxu0
    %v7244 = vadd.f32 %v7051, %v7243
    %v7245 = vpop.f32.mrf.mxu0
    %v7246 = vadd.f32 %v7053, %v7245
    %v7247 = vpop.f32.mrf.mxu0
    %v7248 = vadd.f32 %v7055, %v7247
    %v7249 = vpop.f32.mrf.mxu0
    %v7250 = vadd.f32 %v7057, %v7249
    %7251 = vmatprep.mubr.bf16.mxu0 %v4951
    %7252 = vmatmul.mubr.bf16.gmra.mxu0 %v4950
    %v7253 = vpop.f32.mrf.mxu0
    %v7254 = vadd.f32 %v7061, %v7253
    %v7255 = vpop.f32.mrf.mxu0
    %v7256 = vadd.f32 %v7063, %v7255
    %v7257 = vpop.f32.mrf.mxu0
    %v7258 = vadd.f32 %v7065, %v7257
    %v7259 = vpop.f32.mrf.mxu0
    %v7260 = vadd.f32 %v7067, %v7259
    %7261 = vmatprep.mubr.bf16.mxu0 %v4959
    %7262 = vmatmul.mubr.bf16.gmra.mxu0 %v4958
    %v7263 = vpop.f32.mrf.mxu0
    %v7264 = vadd.f32 %v7071, %v7263
    %v7265 = vpop.f32.mrf.mxu0
    %v7266 = vadd.f32 %v7073, %v7265
    %v7267 = vpop.f32.mrf.mxu0
    %v7268 = vadd.f32 %v7075, %v7267
    %v7269 = vpop.f32.mrf.mxu0
    %v7270 = vadd.f32 %v7077, %v7269
    %7271 = vmatprep.mubr.bf16.mxu0 %v4967
    %7272 = vmatmul.mubr.bf16.gmra.mxu0 %v4966
    %v7273 = vpop.f32.mrf.mxu0
    %v7274 = vadd.f32 %v7081, %v7273
    %v7275 = vpop.f32.mrf.mxu0
    %v7276 = vadd.f32 %v7083, %v7275
    %v7277 = vpop.f32.mrf.mxu0
    %v7278 = vadd.f32 %v7085, %v7277
    %v7279 = vpop.f32.mrf.mxu0
    %v7280 = vadd.f32 %v7087, %v7279
    %7281 = vmatprep.mubr.bf16.mxu0 %v4975
    %7282 = vmatmul.mubr.bf16.gmra.mxu0 %v4974
    %v7283 = vpop.f32.mrf.mxu0
    %v7284 = vadd.f32 %v7091, %v7283
    %v7285 = vpop.f32.mrf.mxu0
    %v7286 = vadd.f32 %v7093, %v7285
    %v7287 = vpop.f32.mrf.mxu0
    %v7288 = vadd.f32 %v7095, %v7287
    %v7289 = vpop.f32.mrf.mxu0
    %v7290 = vadd.f32 %v7097, %v7289
    %7291 = vmatprep.mubr.bf16.mxu0 %v4983
    %7292 = vmatmul.mubr.bf16.gmra.mxu0 %v4982
    %v7293 = vpop.f32.mrf.mxu0
    %v7294 = vadd.f32 %v7101, %v7293
    %v7295 = vpop.f32.mrf.mxu0
    %v7296 = vadd.f32 %v7103, %v7295
    %v7297 = vpop.f32.mrf.mxu0
    %v7298 = vadd.f32 %v7105, %v7297
    %v7299 = vpop.f32.mrf.mxu0
    %v7300 = vadd.f32 %v7107, %v7299
    %7301 = vmatprep.mubr.bf16.mxu0 %v4991
    %7302 = vmatmul.mubr.bf16.gmra.mxu0 %v4990
    %v7303 = vpop.f32.mrf.mxu0
    %v7304 = vadd.f32 %v7111, %v7303
    %v7305 = vpop.f32.mrf.mxu0
    %v7306 = vadd.f32 %v7113, %v7305
    %v7307 = vpop.f32.mrf.mxu0
    %v7308 = vadd.f32 %v7115, %v7307
    %v7309 = vpop.f32.mrf.mxu0
    %v7310 = vadd.f32 %v7117, %v7309
    %7311 = vmatprep.mubr.bf16.mxu0 %v4999
    %7312 = vmatmul.mubr.bf16.gmra.mxu0 %v4998
    %v7313 = vpop.f32.mrf.mxu0
    %v7314 = vadd.f32 %v7121, %v7313
    %v7315 = vpop.f32.mrf.mxu0
    %v7316 = vadd.f32 %v7123, %v7315
    %v7317 = vpop.f32.mrf.mxu0
    %v7318 = vadd.f32 %v7125, %v7317
    %v7319 = vpop.f32.mrf.mxu0
    %v7320 = vadd.f32 %v7127, %v7319
    %7321 = vmatprep.mubr.bf16.mxu0 %v5007
    %7322 = vmatmul.mubr.bf16.gmra.mxu0 %v5006
    %v7323 = vpop.f32.mrf.mxu0
    %v7324 = vadd.f32 %v7131, %v7323
    %v7325 = vpop.f32.mrf.mxu0
    %v7326 = vadd.f32 %v7133, %v7325
    %v7327 = vpop.f32.mrf.mxu0
    %v7328 = vadd.f32 %v7135, %v7327
    %v7329 = vpop.f32.mrf.mxu0
    %v7330 = vadd.f32 %v7137, %v7329
    %7331 = vmatprep.mubr.bf16.mxu0 %v5015
    %7332 = vmatmul.mubr.bf16.gmra.mxu0 %v5014
    %v7333 = vpop.f32.mrf.mxu0
    %v7334 = vadd.f32 %v7141, %v7333
    %v7335 = vpop.f32.mrf.mxu0
    %v7336 = vadd.f32 %v7143, %v7335
    %v7337 = vpop.f32.mrf.mxu0
    %v7338 = vadd.f32 %v7145, %v7337
    %v7339 = vpop.f32.mrf.mxu0
    %v7340 = vadd.f32 %v7147, %v7339
    %7341 = vmatprep.mubr.bf16.mxu0 %v5023
    %7342 = vmatmul.mubr.bf16.gmra.mxu0 %v5022
    %v7343 = vpop.f32.mrf.mxu0
    %v7344 = vadd.f32 %v7151, %v7343
    %v7345 = vpop.f32.mrf.mxu0
    %v7346 = vadd.f32 %v7153, %v7345
    %v7347 = vpop.f32.mrf.mxu0
    %v7348 = vadd.f32 %v7155, %v7347
    %v7349 = vpop.f32.mrf.mxu0
    %v7350 = vadd.f32 %v7157, %v7349
    %7351 = vmatprep.mubr.bf16.mxu0 %v5031
    %7352 = vmatmul.mubr.bf16.gmra.mxu0 %v5030
    %v7353 = vpop.f32.mrf.mxu0
    %v7354 = vadd.f32 %v7161, %v7353
    %v7355 = vpop.f32.mrf.mxu0
    %v7356 = vadd.f32 %v7163, %v7355
    %v7357 = vpop.f32.mrf.mxu0
    %v7358 = vadd.f32 %v7165, %v7357
    %v7359 = vpop.f32.mrf.mxu0
    %v7360 = vadd.f32 %v7167, %v7359
    %7361 = vdwg.mxu0
    %7362 = vmatprep.subr.bf16.mxu0 %v6109
    %7363 = vmatpush1.bf16.msra.mxu0 %v6108
    %7364 = vmatprep.subr.bf16.mxu0 %v6105
    %7365 = vmatpush1.bf16.msra.mxu0 %v6104
    %7366 = vmatprep.subr.bf16.mxu0 %v6101
    %7367 = vmatpush1.bf16.msra.mxu0 %v6100
    %7368 = vmatprep.subr.bf16.mxu0 %v6097
    %7369 = vmatpush1.bf16.msra.mxu0 %v6096
    %7370 = vmatprep.subr.bf16.mxu0 %v6093
    %7371 = vmatpush1.bf16.msra.mxu0 %v6092
    %7372 = vmatprep.subr.bf16.mxu0 %v6089
    %7373 = vmatpush1.bf16.msra.mxu0 %v6088
    %7374 = vmatprep.subr.bf16.mxu0 %v6085
    %7375 = vmatpush1.bf16.msra.mxu0 %v6084
    %7376 = vmatprep.subr.bf16.mxu0 %v6081
    %7377 = vmatpush1.bf16.msra.mxu0 %v6080
    %7378 = vmatprep.subr.bf16.mxu0 %v6141
    %7379 = vmatpush2.bf16.msra.mxu0 %v6140
    %7380 = vmatprep.subr.bf16.mxu0 %v6137
    %7381 = vmatpush2.bf16.msra.mxu0 %v6136
    %7382 = vmatprep.subr.bf16.mxu0 %v6133
    %7383 = vmatpush2.bf16.msra.mxu0 %v6132
    %7384 = vmatprep.subr.bf16.mxu0 %v6129
    %7385 = vmatpush2.bf16.msra.mxu0 %v6128
    %7386 = vmatprep.subr.bf16.mxu0 %v6125
    %7387 = vmatpush2.bf16.msra.mxu0 %v6124
    %7388 = vmatprep.subr.bf16.mxu0 %v6121
    %7389 = vmatpush2.bf16.msra.mxu0 %v6120
    %7390 = vmatprep.subr.bf16.mxu0 %v6117
    %7391 = vmatpush2.bf16.msra.mxu0 %v6116
    %7392 = vmatprep.subr.bf16.mxu0 %v6113
    %7393 = vmatpush2.bf16.msra.mxu0 %v6112
    %7394 = vmatprep.mubr.bf16.mxu0 %v4905
    %7395 = vmatmul.mubr.bf16.gmra.mxu0 %v4904
    %v7396 = vpop.f32.mrf.mxu0
    %v7397 = vadd.f32 %v5301, %v7396
    %v7398 = vpop.f32.mrf.mxu0
    %v7399 = vadd.f32 %v5305, %v7398
    %v7400 = vpop.f32.mrf.mxu0
    %v7401 = vadd.f32 %v5301, %v7400
    %v7402 = vpop.f32.mrf.mxu0
    %v7403 = vadd.f32 %v5305, %v7402
    %7404 = vmatprep.mubr.bf16.mxu0 %v4913
    %7405 = vmatmul.mubr.bf16.gmra.mxu0 %v4912
    %v7406 = vpop.f32.mrf.mxu0
    %v7407 = vadd.f32 %v5301, %v7406
    %v7408 = vpop.f32.mrf.mxu0
    %v7409 = vadd.f32 %v5305, %v7408
    %v7410 = vpop.f32.mrf.mxu0
    %v7411 = vadd.f32 %v5301, %v7410
    %v7412 = vpop.f32.mrf.mxu0
    %v7413 = vadd.f32 %v5305, %v7412
    %7414 = vmatprep.mubr.bf16.mxu0 %v4921
    %7415 = vmatmul.mubr.bf16.gmra.mxu0 %v4920
    %v7416 = vpop.f32.mrf.mxu0
    %v7417 = vadd.f32 %v5301, %v7416
    %v7418 = vpop.f32.mrf.mxu0
    %v7419 = vadd.f32 %v5305, %v7418
    %v7420 = vpop.f32.mrf.mxu0
    %v7421 = vadd.f32 %v5301, %v7420
    %v7422 = vpop.f32.mrf.mxu0
    %v7423 = vadd.f32 %v5305, %v7422
    %7424 = vmatprep.mubr.bf16.mxu0 %v4929
    %7425 = vmatmul.mubr.bf16.gmra.mxu0 %v4928
    %v7426 = vpop.f32.mrf.mxu0
    %v7427 = vadd.f32 %v5301, %v7426
    %v7428 = vpop.f32.mrf.mxu0
    %v7429 = vadd.f32 %v5305, %v7428
    %v7430 = vpop.f32.mrf.mxu0
    %v7431 = vadd.f32 %v5301, %v7430
    %v7432 = vpop.f32.mrf.mxu0
    %v7433 = vadd.f32 %v5305, %v7432
    %7434 = vmatprep.mubr.bf16.mxu0 %v4937
    %7435 = vmatmul.mubr.bf16.gmra.mxu0 %v4936
    %v7436 = vpop.f32.mrf.mxu0
    %v7437 = vadd.f32 %v5301, %v7436
    %v7438 = vpop.f32.mrf.mxu0
    %v7439 = vadd.f32 %v5305, %v7438
    %v7440 = vpop.f32.mrf.mxu0
    %v7441 = vadd.f32 %v5301, %v7440
    %v7442 = vpop.f32.mrf.mxu0
    %v7443 = vadd.f32 %v5305, %v7442
    %7444 = vmatprep.mubr.bf16.mxu0 %v4945
    %7445 = vmatmul.mubr.bf16.gmra.mxu0 %v4944
    %v7446 = vpop.f32.mrf.mxu0
    %v7447 = vadd.f32 %v5301, %v7446
    %v7448 = vpop.f32.mrf.mxu0
    %v7449 = vadd.f32 %v5305, %v7448
    %v7450 = vpop.f32.mrf.mxu0
    %v7451 = vadd.f32 %v5301, %v7450
    %v7452 = vpop.f32.mrf.mxu0
    %v7453 = vadd.f32 %v5305, %v7452
    %7454 = vmatprep.mubr.bf16.mxu0 %v4953
    %7455 = vmatmul.mubr.bf16.gmra.mxu0 %v4952
    %v7456 = vpop.f32.mrf.mxu0
    %v7457 = vadd.f32 %v5301, %v7456
    %v7458 = vpop.f32.mrf.mxu0
    %v7459 = vadd.f32 %v5305, %v7458
    %v7460 = vpop.f32.mrf.mxu0
    %v7461 = vadd.f32 %v5301, %v7460
    %v7462 = vpop.f32.mrf.mxu0
    %v7463 = vadd.f32 %v5305, %v7462
    %7464 = vmatprep.mubr.bf16.mxu0 %v4961
    %7465 = vmatmul.mubr.bf16.gmra.mxu0 %v4960
    %v7466 = vpop.f32.mrf.mxu0
    %v7467 = vadd.f32 %v5301, %v7466
    %v7468 = vpop.f32.mrf.mxu0
    %v7469 = vadd.f32 %v5305, %v7468
    %v7470 = vpop.f32.mrf.mxu0
    %v7471 = vadd.f32 %v5301, %v7470
    %v7472 = vpop.f32.mrf.mxu0
    %v7473 = vadd.f32 %v5305, %v7472
    %7474 = vmatprep.mubr.bf16.mxu0 %v4969
    %7475 = vmatmul.mubr.bf16.gmra.mxu0 %v4968
    %v7476 = vpop.f32.mrf.mxu0
    %v7477 = vadd.f32 %v5301, %v7476
    %v7478 = vpop.f32.mrf.mxu0
    %v7479 = vadd.f32 %v5305, %v7478
    %v7480 = vpop.f32.mrf.mxu0
    %v7481 = vadd.f32 %v5301, %v7480
    %v7482 = vpop.f32.mrf.mxu0
    %v7483 = vadd.f32 %v5305, %v7482
    %7484 = vmatprep.mubr.bf16.mxu0 %v4977
    %7485 = vmatmul.mubr.bf16.gmra.mxu0 %v4976
    %v7486 = vpop.f32.mrf.mxu0
    %v7487 = vadd.f32 %v5301, %v7486
    %v7488 = vpop.f32.mrf.mxu0
    %v7489 = vadd.f32 %v5305, %v7488
    %v7490 = vpop.f32.mrf.mxu0
    %v7491 = vadd.f32 %v5301, %v7490
    %v7492 = vpop.f32.mrf.mxu0
    %v7493 = vadd.f32 %v5305, %v7492
    %7494 = vmatprep.mubr.bf16.mxu0 %v4985
    %7495 = vmatmul.mubr.bf16.gmra.mxu0 %v4984
    %v7496 = vpop.f32.mrf.mxu0
    %v7497 = vadd.f32 %v5301, %v7496
    %v7498 = vpop.f32.mrf.mxu0
    %v7499 = vadd.f32 %v5305, %v7498
    %v7500 = vpop.f32.mrf.mxu0
    %v7501 = vadd.f32 %v5301, %v7500
    %v7502 = vpop.f32.mrf.mxu0
    %v7503 = vadd.f32 %v5305, %v7502
    %7504 = vmatprep.mubr.bf16.mxu0 %v4993
    %7505 = vmatmul.mubr.bf16.gmra.mxu0 %v4992
    %v7506 = vpop.f32.mrf.mxu0
    %v7507 = vadd.f32 %v5301, %v7506
    %v7508 = vpop.f32.mrf.mxu0
    %v7509 = vadd.f32 %v5305, %v7508
    %v7510 = vpop.f32.mrf.mxu0
    %v7511 = vadd.f32 %v5301, %v7510
    %v7512 = vpop.f32.mrf.mxu0
    %v7513 = vadd.f32 %v5305, %v7512
    %7514 = vmatprep.mubr.bf16.mxu0 %v5001
    %7515 = vmatmul.mubr.bf16.gmra.mxu0 %v5000
    %v7516 = vpop.f32.mrf.mxu0
    %v7517 = vadd.f32 %v5301, %v7516
    %v7518 = vpop.f32.mrf.mxu0
    %v7519 = vadd.f32 %v5305, %v7518
    %v7520 = vpop.f32.mrf.mxu0
    %v7521 = vadd.f32 %v5301, %v7520
    %v7522 = vpop.f32.mrf.mxu0
    %v7523 = vadd.f32 %v5305, %v7522
    %7524 = vmatprep.mubr.bf16.mxu0 %v5009
    %7525 = vmatmul.mubr.bf16.gmra.mxu0 %v5008
    %v7526 = vpop.f32.mrf.mxu0
    %v7527 = vadd.f32 %v5301, %v7526
    %v7528 = vpop.f32.mrf.mxu0
    %v7529 = vadd.f32 %v5305, %v7528
    %v7530 = vpop.f32.mrf.mxu0
    %v7531 = vadd.f32 %v5301, %v7530
    %v7532 = vpop.f32.mrf.mxu0
    %v7533 = vadd.f32 %v5305, %v7532
    %7534 = vmatprep.mubr.bf16.mxu0 %v5017
    %7535 = vmatmul.mubr.bf16.gmra.mxu0 %v5016
    %v7536 = vpop.f32.mrf.mxu0
    %v7537 = vadd.f32 %v5301, %v7536
    %v7538 = vpop.f32.mrf.mxu0
    %v7539 = vadd.f32 %v5305, %v7538
    %v7540 = vpop.f32.mrf.mxu0
    %v7541 = vadd.f32 %v5301, %v7540
    %v7542 = vpop.f32.mrf.mxu0
    %v7543 = vadd.f32 %v5305, %v7542
    %7544 = vmatprep.mubr.bf16.mxu0 %v5025
    %7545 = vmatmul.mubr.bf16.gmra.mxu0 %v5024
    %v7546 = vpop.f32.mrf.mxu0
    %v7547 = vadd.f32 %v5301, %v7546
    %v7548 = vpop.f32.mrf.mxu0
    %v7549 = vadd.f32 %v5305, %v7548
    %v7550 = vpop.f32.mrf.mxu0
    %v7551 = vadd.f32 %v5301, %v7550
    %v7552 = vpop.f32.mrf.mxu0
    %v7553 = vadd.f32 %v5305, %v7552
    %7554 = vdwg.mxu0
    %7555 = vmatprep.subr.bf16.mxu0 %v6173
    %7556 = vmatpush1.bf16.msra.mxu0 %v6172
    %7557 = vmatprep.subr.bf16.mxu0 %v6169
    %7558 = vmatpush1.bf16.msra.mxu0 %v6168
    %7559 = vmatprep.subr.bf16.mxu0 %v6165
    %7560 = vmatpush1.bf16.msra.mxu0 %v6164
    %7561 = vmatprep.subr.bf16.mxu0 %v6161
    %7562 = vmatpush1.bf16.msra.mxu0 %v6160
    %7563 = vmatprep.subr.bf16.mxu0 %v6157
    %7564 = vmatpush1.bf16.msra.mxu0 %v6156
    %7565 = vmatprep.subr.bf16.mxu0 %v6153
    %7566 = vmatpush1.bf16.msra.mxu0 %v6152
    %7567 = vmatprep.subr.bf16.mxu0 %v6149
    %7568 = vmatpush1.bf16.msra.mxu0 %v6148
    %7569 = vmatprep.subr.bf16.mxu0 %v6145
    %7570 = vmatpush1.bf16.msra.mxu0 %v6144
    %7571 = vmatprep.subr.bf16.mxu0 %v6205
    %7572 = vmatpush2.bf16.msra.mxu0 %v6204
    %7573 = vmatprep.subr.bf16.mxu0 %v6201
    %7574 = vmatpush2.bf16.msra.mxu0 %v6200
    %7575 = vmatprep.subr.bf16.mxu0 %v6197
    %7576 = vmatpush2.bf16.msra.mxu0 %v6196
    %7577 = vmatprep.subr.bf16.mxu0 %v6193
    %7578 = vmatpush2.bf16.msra.mxu0 %v6192
    %7579 = vmatprep.subr.bf16.mxu0 %v6189
    %7580 = vmatpush2.bf16.msra.mxu0 %v6188
    %7581 = vmatprep.subr.bf16.mxu0 %v6185
    %7582 = vmatpush2.bf16.msra.mxu0 %v6184
    %7583 = vmatprep.subr.bf16.mxu0 %v6181
    %7584 = vmatpush2.bf16.msra.mxu0 %v6180
    %7585 = vmatprep.subr.bf16.mxu0 %v6177
    %7586 = vmatpush2.bf16.msra.mxu0 %v6176
    %7587 = vmatprep.mubr.bf16.mxu0 %v4907
    %7588 = vmatmul.mubr.bf16.gmra.mxu0 %v4906
    %v7589 = vpop.f32.mrf.mxu0
    %v7590 = vadd.f32 %v7397, %v7589
    %v7591 = vpop.f32.mrf.mxu0
    %v7592 = vadd.f32 %v7399, %v7591
    %v7593 = vpop.f32.mrf.mxu0
    %v7594 = vadd.f32 %v7401, %v7593
    %v7595 = vpop.f32.mrf.mxu0
    %v7596 = vadd.f32 %v7403, %v7595
    %7597 = vmatprep.mubr.bf16.mxu0 %v4915
    %7598 = vmatmul.mubr.bf16.gmra.mxu0 %v4914
    %v7599 = vpop.f32.mrf.mxu0
    %v7600 = vadd.f32 %v7407, %v7599
    %v7601 = vpop.f32.mrf.mxu0
    %v7602 = vadd.f32 %v7409, %v7601
    %v7603 = vpop.f32.mrf.mxu0
    %v7604 = vadd.f32 %v7411, %v7603
    %v7605 = vpop.f32.mrf.mxu0
    %v7606 = vadd.f32 %v7413, %v7605
    %7607 = vmatprep.mubr.bf16.mxu0 %v4923
    %7608 = vmatmul.mubr.bf16.gmra.mxu0 %v4922
    %v7609 = vpop.f32.mrf.mxu0
    %v7610 = vadd.f32 %v7417, %v7609
    %v7611 = vpop.f32.mrf.mxu0
    %v7612 = vadd.f32 %v7419, %v7611
    %v7613 = vpop.f32.mrf.mxu0
    %v7614 = vadd.f32 %v7421, %v7613
    %v7615 = vpop.f32.mrf.mxu0
    %v7616 = vadd.f32 %v7423, %v7615
    %7617 = vmatprep.mubr.bf16.mxu0 %v4931
    %7618 = vmatmul.mubr.bf16.gmra.mxu0 %v4930
    %v7619 = vpop.f32.mrf.mxu0
    %v7620 = vadd.f32 %v7427, %v7619
    %v7621 = vpop.f32.mrf.mxu0
    %v7622 = vadd.f32 %v7429, %v7621
    %v7623 = vpop.f32.mrf.mxu0
    %v7624 = vadd.f32 %v7431, %v7623
    %v7625 = vpop.f32.mrf.mxu0
    %v7626 = vadd.f32 %v7433, %v7625
    %7627 = vmatprep.mubr.bf16.mxu0 %v4939
    %7628 = vmatmul.mubr.bf16.gmra.mxu0 %v4938
    %v7629 = vpop.f32.mrf.mxu0
    %v7630 = vadd.f32 %v7437, %v7629
    %v7631 = vpop.f32.mrf.mxu0
    %v7632 = vadd.f32 %v7439, %v7631
    %v7633 = vpop.f32.mrf.mxu0
    %v7634 = vadd.f32 %v7441, %v7633
    %v7635 = vpop.f32.mrf.mxu0
    %v7636 = vadd.f32 %v7443, %v7635
    %7637 = vmatprep.mubr.bf16.mxu0 %v4947
    %7638 = vmatmul.mubr.bf16.gmra.mxu0 %v4946
    %v7639 = vpop.f32.mrf.mxu0
    %v7640 = vadd.f32 %v7447, %v7639
    %v7641 = vpop.f32.mrf.mxu0
    %v7642 = vadd.f32 %v7449, %v7641
    %v7643 = vpop.f32.mrf.mxu0
    %v7644 = vadd.f32 %v7451, %v7643
    %v7645 = vpop.f32.mrf.mxu0
    %v7646 = vadd.f32 %v7453, %v7645
    %7647 = vmatprep.mubr.bf16.mxu0 %v4955
    %7648 = vmatmul.mubr.bf16.gmra.mxu0 %v4954
    %v7649 = vpop.f32.mrf.mxu0
    %v7650 = vadd.f32 %v7457, %v7649
    %v7651 = vpop.f32.mrf.mxu0
    %v7652 = vadd.f32 %v7459, %v7651
    %v7653 = vpop.f32.mrf.mxu0
    %v7654 = vadd.f32 %v7461, %v7653
    %v7655 = vpop.f32.mrf.mxu0
    %v7656 = vadd.f32 %v7463, %v7655
    %7657 = vmatprep.mubr.bf16.mxu0 %v4963
    %7658 = vmatmul.mubr.bf16.gmra.mxu0 %v4962
    %v7659 = vpop.f32.mrf.mxu0
    %v7660 = vadd.f32 %v7467, %v7659
    %v7661 = vpop.f32.mrf.mxu0
    %v7662 = vadd.f32 %v7469, %v7661
    %v7663 = vpop.f32.mrf.mxu0
    %v7664 = vadd.f32 %v7471, %v7663
    %v7665 = vpop.f32.mrf.mxu0
    %v7666 = vadd.f32 %v7473, %v7665
    %7667 = vmatprep.mubr.bf16.mxu0 %v4971
    %7668 = vmatmul.mubr.bf16.gmra.mxu0 %v4970
    %v7669 = vpop.f32.mrf.mxu0
    %v7670 = vadd.f32 %v7477, %v7669
    %v7671 = vpop.f32.mrf.mxu0
    %v7672 = vadd.f32 %v7479, %v7671
    %v7673 = vpop.f32.mrf.mxu0
    %v7674 = vadd.f32 %v7481, %v7673
    %v7675 = vpop.f32.mrf.mxu0
    %v7676 = vadd.f32 %v7483, %v7675
    %7677 = vmatprep.mubr.bf16.mxu0 %v4979
    %7678 = vmatmul.mubr.bf16.gmra.mxu0 %v4978
    %v7679 = vpop.f32.mrf.mxu0
    %v7680 = vadd.f32 %v7487, %v7679
    %v7681 = vpop.f32.mrf.mxu0
    %v7682 = vadd.f32 %v7489, %v7681
    %v7683 = vpop.f32.mrf.mxu0
    %v7684 = vadd.f32 %v7491, %v7683
    %v7685 = vpop.f32.mrf.mxu0
    %v7686 = vadd.f32 %v7493, %v7685
    %7687 = vmatprep.mubr.bf16.mxu0 %v4987
    %7688 = vmatmul.mubr.bf16.gmra.mxu0 %v4986
    %v7689 = vpop.f32.mrf.mxu0
    %v7690 = vadd.f32 %v7497, %v7689
    %v7691 = vpop.f32.mrf.mxu0
    %v7692 = vadd.f32 %v7499, %v7691
    %v7693 = vpop.f32.mrf.mxu0
    %v7694 = vadd.f32 %v7501, %v7693
    %v7695 = vpop.f32.mrf.mxu0
    %v7696 = vadd.f32 %v7503, %v7695
    %7697 = vmatprep.mubr.bf16.mxu0 %v4995
    %7698 = vmatmul.mubr.bf16.gmra.mxu0 %v4994
    %v7699 = vpop.f32.mrf.mxu0
    %v7700 = vadd.f32 %v7507, %v7699
    %v7701 = vpop.f32.mrf.mxu0
    %v7702 = vadd.f32 %v7509, %v7701
    %v7703 = vpop.f32.mrf.mxu0
    %v7704 = vadd.f32 %v7511, %v7703
    %v7705 = vpop.f32.mrf.mxu0
    %v7706 = vadd.f32 %v7513, %v7705
    %7707 = vmatprep.mubr.bf16.mxu0 %v5003
    %7708 = vmatmul.mubr.bf16.gmra.mxu0 %v5002
    %v7709 = vpop.f32.mrf.mxu0
    %v7710 = vadd.f32 %v7517, %v7709
    %v7711 = vpop.f32.mrf.mxu0
    %v7712 = vadd.f32 %v7519, %v7711
    %v7713 = vpop.f32.mrf.mxu0
    %v7714 = vadd.f32 %v7521, %v7713
    %v7715 = vpop.f32.mrf.mxu0
    %v7716 = vadd.f32 %v7523, %v7715
    %7717 = vmatprep.mubr.bf16.mxu0 %v5011
    %7718 = vmatmul.mubr.bf16.gmra.mxu0 %v5010
    %v7719 = vpop.f32.mrf.mxu0
    %v7720 = vadd.f32 %v7527, %v7719
    %v7721 = vpop.f32.mrf.mxu0
    %v7722 = vadd.f32 %v7529, %v7721
    %v7723 = vpop.f32.mrf.mxu0
    %v7724 = vadd.f32 %v7531, %v7723
    %v7725 = vpop.f32.mrf.mxu0
    %v7726 = vadd.f32 %v7533, %v7725
    %7727 = vmatprep.mubr.bf16.mxu0 %v5019
    %7728 = vmatmul.mubr.bf16.gmra.mxu0 %v5018
    %v7729 = vpop.f32.mrf.mxu0
    %v7730 = vadd.f32 %v7537, %v7729
    %v7731 = vpop.f32.mrf.mxu0
    %v7732 = vadd.f32 %v7539, %v7731
    %v7733 = vpop.f32.mrf.mxu0
    %v7734 = vadd.f32 %v7541, %v7733
    %v7735 = vpop.f32.mrf.mxu0
    %v7736 = vadd.f32 %v7543, %v7735
    %7737 = vmatprep.mubr.bf16.mxu0 %v5027
    %7738 = vmatmul.mubr.bf16.gmra.mxu0 %v5026
    %v7739 = vpop.f32.mrf.mxu0
    %v7740 = vadd.f32 %v7547, %v7739
    %v7741 = vpop.f32.mrf.mxu0
    %v7742 = vadd.f32 %v7549, %v7741
    %v7743 = vpop.f32.mrf.mxu0
    %v7744 = vadd.f32 %v7551, %v7743
    %v7745 = vpop.f32.mrf.mxu0
    %v7746 = vadd.f32 %v7553, %v7745
    %7747 = vdwg.mxu0
    %7748 = vmatprep.subr.bf16.mxu0 %v6237
    %7749 = vmatpush1.bf16.msra.mxu0 %v6236
    %7750 = vmatprep.subr.bf16.mxu0 %v6233
    %7751 = vmatpush1.bf16.msra.mxu0 %v6232
    %7752 = vmatprep.subr.bf16.mxu0 %v6229
    %7753 = vmatpush1.bf16.msra.mxu0 %v6228
    %7754 = vmatprep.subr.bf16.mxu0 %v6225
    %7755 = vmatpush1.bf16.msra.mxu0 %v6224
    %7756 = vmatprep.subr.bf16.mxu0 %v6221
    %7757 = vmatpush1.bf16.msra.mxu0 %v6220
    %7758 = vmatprep.subr.bf16.mxu0 %v6217
    %7759 = vmatpush1.bf16.msra.mxu0 %v6216
    %7760 = vmatprep.subr.bf16.mxu0 %v6213
    %7761 = vmatpush1.bf16.msra.mxu0 %v6212
    %7762 = vmatprep.subr.bf16.mxu0 %v6209
    %7763 = vmatpush1.bf16.msra.mxu0 %v6208
    %7764 = vmatprep.subr.bf16.mxu0 %v6269
    %7765 = vmatpush2.bf16.msra.mxu0 %v6268
    %7766 = vmatprep.subr.bf16.mxu0 %v6265
    %7767 = vmatpush2.bf16.msra.mxu0 %v6264
    %7768 = vmatprep.subr.bf16.mxu0 %v6261
    %7769 = vmatpush2.bf16.msra.mxu0 %v6260
    %7770 = vmatprep.subr.bf16.mxu0 %v6257
    %7771 = vmatpush2.bf16.msra.mxu0 %v6256
    %7772 = vmatprep.subr.bf16.mxu0 %v6253
    %7773 = vmatpush2.bf16.msra.mxu0 %v6252
    %7774 = vmatprep.subr.bf16.mxu0 %v6249
    %7775 = vmatpush2.bf16.msra.mxu0 %v6248
    %7776 = vmatprep.subr.bf16.mxu0 %v6245
    %7777 = vmatpush2.bf16.msra.mxu0 %v6244
    %7778 = vmatprep.subr.bf16.mxu0 %v6241
    %7779 = vmatpush2.bf16.msra.mxu0 %v6240
    %7780 = vmatprep.mubr.bf16.mxu0 %v4909
    %7781 = vmatmul.mubr.bf16.gmra.mxu0 %v4908
    %v7782 = vpop.f32.mrf.mxu0
    %v7783 = vadd.f32 %v7590, %v7782
    %v7784 = vpop.f32.mrf.mxu0
    %v7785 = vadd.f32 %v7592, %v7784
    %v7786 = vpop.f32.mrf.mxu0
    %v7787 = vadd.f32 %v7594, %v7786
    %v7788 = vpop.f32.mrf.mxu0
    %v7789 = vadd.f32 %v7596, %v7788
    %7790 = vmatprep.mubr.bf16.mxu0 %v4917
    %7791 = vmatmul.mubr.bf16.gmra.mxu0 %v4916
    %v7792 = vpop.f32.mrf.mxu0
    %v7793 = vadd.f32 %v7600, %v7792
    %v7794 = vpop.f32.mrf.mxu0
    %v7795 = vadd.f32 %v7602, %v7794
    %v7796 = vpop.f32.mrf.mxu0
    %v7797 = vadd.f32 %v7604, %v7796
    %v7798 = vpop.f32.mrf.mxu0
    %v7799 = vadd.f32 %v7606, %v7798
    %7800 = vmatprep.mubr.bf16.mxu0 %v4925
    %7801 = vmatmul.mubr.bf16.gmra.mxu0 %v4924
    %v7802 = vpop.f32.mrf.mxu0
    %v7803 = vadd.f32 %v7610, %v7802
    %v7804 = vpop.f32.mrf.mxu0
    %v7805 = vadd.f32 %v7612, %v7804
    %v7806 = vpop.f32.mrf.mxu0
    %v7807 = vadd.f32 %v7614, %v7806
    %v7808 = vpop.f32.mrf.mxu0
    %v7809 = vadd.f32 %v7616, %v7808
    %7810 = vmatprep.mubr.bf16.mxu0 %v4933
    %7811 = vmatmul.mubr.bf16.gmra.mxu0 %v4932
    %v7812 = vpop.f32.mrf.mxu0
    %v7813 = vadd.f32 %v7620, %v7812
    %v7814 = vpop.f32.mrf.mxu0
    %v7815 = vadd.f32 %v7622, %v7814
    %v7816 = vpop.f32.mrf.mxu0
    %v7817 = vadd.f32 %v7624, %v7816
    %v7818 = vpop.f32.mrf.mxu0
    %v7819 = vadd.f32 %v7626, %v7818
    %7820 = vmatprep.mubr.bf16.mxu0 %v4941
    %7821 = vmatmul.mubr.bf16.gmra.mxu0 %v4940
    %v7822 = vpop.f32.mrf.mxu0
    %v7823 = vadd.f32 %v7630, %v7822
    %v7824 = vpop.f32.mrf.mxu0
    %v7825 = vadd.f32 %v7632, %v7824
    %v7826 = vpop.f32.mrf.mxu0
    %v7827 = vadd.f32 %v7634, %v7826
    %v7828 = vpop.f32.mrf.mxu0
    %v7829 = vadd.f32 %v7636, %v7828
    %7830 = vmatprep.mubr.bf16.mxu0 %v4949
    %7831 = vmatmul.mubr.bf16.gmra.mxu0 %v4948
    %v7832 = vpop.f32.mrf.mxu0
    %v7833 = vadd.f32 %v7640, %v7832
    %v7834 = vpop.f32.mrf.mxu0
    %v7835 = vadd.f32 %v7642, %v7834
    %v7836 = vpop.f32.mrf.mxu0
    %v7837 = vadd.f32 %v7644, %v7836
    %v7838 = vpop.f32.mrf.mxu0
    %v7839 = vadd.f32 %v7646, %v7838
    %7840 = vmatprep.mubr.bf16.mxu0 %v4957
    %7841 = vmatmul.mubr.bf16.gmra.mxu0 %v4956
    %v7842 = vpop.f32.mrf.mxu0
    %v7843 = vadd.f32 %v7650, %v7842
    %v7844 = vpop.f32.mrf.mxu0
    %v7845 = vadd.f32 %v7652, %v7844
    %v7846 = vpop.f32.mrf.mxu0
    %v7847 = vadd.f32 %v7654, %v7846
    %v7848 = vpop.f32.mrf.mxu0
    %v7849 = vadd.f32 %v7656, %v7848
    %7850 = vmatprep.mubr.bf16.mxu0 %v4965
    %7851 = vmatmul.mubr.bf16.gmra.mxu0 %v4964
    %v7852 = vpop.f32.mrf.mxu0
    %v7853 = vadd.f32 %v7660, %v7852
    %v7854 = vpop.f32.mrf.mxu0
    %v7855 = vadd.f32 %v7662, %v7854
    %v7856 = vpop.f32.mrf.mxu0
    %v7857 = vadd.f32 %v7664, %v7856
    %v7858 = vpop.f32.mrf.mxu0
    %v7859 = vadd.f32 %v7666, %v7858
    %7860 = vmatprep.mubr.bf16.mxu0 %v4973
    %7861 = vmatmul.mubr.bf16.gmra.mxu0 %v4972
    %v7862 = vpop.f32.mrf.mxu0
    %v7863 = vadd.f32 %v7670, %v7862
    %v7864 = vpop.f32.mrf.mxu0
    %v7865 = vadd.f32 %v7672, %v7864
    %v7866 = vpop.f32.mrf.mxu0
    %v7867 = vadd.f32 %v7674, %v7866
    %v7868 = vpop.f32.mrf.mxu0
    %v7869 = vadd.f32 %v7676, %v7868
    %7870 = vmatprep.mubr.bf16.mxu0 %v4981
    %7871 = vmatmul.mubr.bf16.gmra.mxu0 %v4980
    %v7872 = vpop.f32.mrf.mxu0
    %v7873 = vadd.f32 %v7680, %v7872
    %v7874 = vpop.f32.mrf.mxu0
    %v7875 = vadd.f32 %v7682, %v7874
    %v7876 = vpop.f32.mrf.mxu0
    %v7877 = vadd.f32 %v7684, %v7876
    %v7878 = vpop.f32.mrf.mxu0
    %v7879 = vadd.f32 %v7686, %v7878
    %7880 = vmatprep.mubr.bf16.mxu0 %v4989
    %7881 = vmatmul.mubr.bf16.gmra.mxu0 %v4988
    %v7882 = vpop.f32.mrf.mxu0
    %v7883 = vadd.f32 %v7690, %v7882
    %v7884 = vpop.f32.mrf.mxu0
    %v7885 = vadd.f32 %v7692, %v7884
    %v7886 = vpop.f32.mrf.mxu0
    %v7887 = vadd.f32 %v7694, %v7886
    %v7888 = vpop.f32.mrf.mxu0
    %v7889 = vadd.f32 %v7696, %v7888
    %7890 = vmatprep.mubr.bf16.mxu0 %v4997
    %7891 = vmatmul.mubr.bf16.gmra.mxu0 %v4996
    %v7892 = vpop.f32.mrf.mxu0
    %v7893 = vadd.f32 %v7700, %v7892
    %v7894 = vpop.f32.mrf.mxu0
    %v7895 = vadd.f32 %v7702, %v7894
    %v7896 = vpop.f32.mrf.mxu0
    %v7897 = vadd.f32 %v7704, %v7896
    %v7898 = vpop.f32.mrf.mxu0
    %v7899 = vadd.f32 %v7706, %v7898
    %7900 = vmatprep.mubr.bf16.mxu0 %v5005
    %7901 = vmatmul.mubr.bf16.gmra.mxu0 %v5004
    %v7902 = vpop.f32.mrf.mxu0
    %v7903 = vadd.f32 %v7710, %v7902
    %v7904 = vpop.f32.mrf.mxu0
    %v7905 = vadd.f32 %v7712, %v7904
    %v7906 = vpop.f32.mrf.mxu0
    %v7907 = vadd.f32 %v7714, %v7906
    %v7908 = vpop.f32.mrf.mxu0
    %v7909 = vadd.f32 %v7716, %v7908
    %7910 = vmatprep.mubr.bf16.mxu0 %v5013
    %7911 = vmatmul.mubr.bf16.gmra.mxu0 %v5012
    %v7912 = vpop.f32.mrf.mxu0
    %v7913 = vadd.f32 %v7720, %v7912
    %v7914 = vpop.f32.mrf.mxu0
    %v7915 = vadd.f32 %v7722, %v7914
    %v7916 = vpop.f32.mrf.mxu0
    %v7917 = vadd.f32 %v7724, %v7916
    %v7918 = vpop.f32.mrf.mxu0
    %v7919 = vadd.f32 %v7726, %v7918
    %7920 = vmatprep.mubr.bf16.mxu0 %v5021
    %7921 = vmatmul.mubr.bf16.gmra.mxu0 %v5020
    %v7922 = vpop.f32.mrf.mxu0
    %v7923 = vadd.f32 %v7730, %v7922
    %v7924 = vpop.f32.mrf.mxu0
    %v7925 = vadd.f32 %v7732, %v7924
    %v7926 = vpop.f32.mrf.mxu0
    %v7927 = vadd.f32 %v7734, %v7926
    %v7928 = vpop.f32.mrf.mxu0
    %v7929 = vadd.f32 %v7736, %v7928
    %7930 = vmatprep.mubr.bf16.mxu0 %v5029
    %7931 = vmatmul.mubr.bf16.gmra.mxu0 %v5028
    %v7932 = vpop.f32.mrf.mxu0
    %v7933 = vadd.f32 %v7740, %v7932
    %v7934 = vpop.f32.mrf.mxu0
    %v7935 = vadd.f32 %v7742, %v7934
    %v7936 = vpop.f32.mrf.mxu0
    %v7937 = vadd.f32 %v7744, %v7936
    %v7938 = vpop.f32.mrf.mxu0
    %v7939 = vadd.f32 %v7746, %v7938
    %7940 = vdwg.mxu0
    %7941 = vmatprep.subr.bf16.mxu0 %v6301
    %7942 = vmatpush1.bf16.msra.mxu0 %v6300
    %7943 = vmatprep.subr.bf16.mxu0 %v6297
    %7944 = vmatpush1.bf16.msra.mxu0 %v6296
    %7945 = vmatprep.subr.bf16.mxu0 %v6293
    %7946 = vmatpush1.bf16.msra.mxu0 %v6292
    %7947 = vmatprep.subr.bf16.mxu0 %v6289
    %7948 = vmatpush1.bf16.msra.mxu0 %v6288
    %7949 = vmatprep.subr.bf16.mxu0 %v6285
    %7950 = vmatpush1.bf16.msra.mxu0 %v6284
    %7951 = vmatprep.subr.bf16.mxu0 %v6281
    %7952 = vmatpush1.bf16.msra.mxu0 %v6280
    %7953 = vmatprep.subr.bf16.mxu0 %v6277
    %7954 = vmatpush1.bf16.msra.mxu0 %v6276
    %7955 = vmatprep.subr.bf16.mxu0 %v6273
    %7956 = vmatpush1.bf16.msra.mxu0 %v6272
    %7957 = vmatprep.subr.bf16.mxu0 %v6333
    %7958 = vmatpush2.bf16.msra.mxu0 %v6332
    %7959 = vmatprep.subr.bf16.mxu0 %v6329
    %7960 = vmatpush2.bf16.msra.mxu0 %v6328
    %7961 = vmatprep.subr.bf16.mxu0 %v6325
    %7962 = vmatpush2.bf16.msra.mxu0 %v6324
    %7963 = vmatprep.subr.bf16.mxu0 %v6321
    %7964 = vmatpush2.bf16.msra.mxu0 %v6320
    %7965 = vmatprep.subr.bf16.mxu0 %v6317
    %7966 = vmatpush2.bf16.msra.mxu0 %v6316
    %7967 = vmatprep.subr.bf16.mxu0 %v6313
    %7968 = vmatpush2.bf16.msra.mxu0 %v6312
    %7969 = vmatprep.subr.bf16.mxu0 %v6309
    %7970 = vmatpush2.bf16.msra.mxu0 %v6308
    %7971 = vmatprep.subr.bf16.mxu0 %v6305
    %7972 = vmatpush2.bf16.msra.mxu0 %v6304
    %7973 = vmatprep.mubr.bf16.mxu0 %v4911
    %7974 = vmatmul.mubr.bf16.gmra.mxu0 %v4910
    %v7975 = vpop.f32.mrf.mxu0
    %v7976 = vadd.f32 %v7783, %v7975
    %v7977 = vpop.f32.mrf.mxu0
    %v7978 = vadd.f32 %v7785, %v7977
    %v7979 = vpop.f32.mrf.mxu0
    %v7980 = vadd.f32 %v7787, %v7979
    %v7981 = vpop.f32.mrf.mxu0
    %v7982 = vadd.f32 %v7789, %v7981
    %7983 = vmatprep.mubr.bf16.mxu0 %v4919
    %7984 = vmatmul.mubr.bf16.gmra.mxu0 %v4918
    %v7985 = vpop.f32.mrf.mxu0
    %v7986 = vadd.f32 %v7793, %v7985
    %v7987 = vpop.f32.mrf.mxu0
    %v7988 = vadd.f32 %v7795, %v7987
    %v7989 = vpop.f32.mrf.mxu0
    %v7990 = vadd.f32 %v7797, %v7989
    %v7991 = vpop.f32.mrf.mxu0
    %v7992 = vadd.f32 %v7799, %v7991
    %7993 = vmatprep.mubr.bf16.mxu0 %v4927
    %7994 = vmatmul.mubr.bf16.gmra.mxu0 %v4926
    %v7995 = vpop.f32.mrf.mxu0
    %v7996 = vadd.f32 %v7803, %v7995
    %v7997 = vpop.f32.mrf.mxu0
    %v7998 = vadd.f32 %v7805, %v7997
    %v7999 = vpop.f32.mrf.mxu0
    %v8000 = vadd.f32 %v7807, %v7999
    %v8001 = vpop.f32.mrf.mxu0
    %v8002 = vadd.f32 %v7809, %v8001
    %8003 = vmatprep.mubr.bf16.mxu0 %v4935
    %8004 = vmatmul.mubr.bf16.gmra.mxu0 %v4934
    %v8005 = vpop.f32.mrf.mxu0
    %v8006 = vadd.f32 %v7813, %v8005
    %v8007 = vpop.f32.mrf.mxu0
    %v8008 = vadd.f32 %v7815, %v8007
    %v8009 = vpop.f32.mrf.mxu0
    %v8010 = vadd.f32 %v7817, %v8009
    %v8011 = vpop.f32.mrf.mxu0
    %v8012 = vadd.f32 %v7819, %v8011
    %8013 = vmatprep.mubr.bf16.mxu0 %v4943
    %8014 = vmatmul.mubr.bf16.gmra.mxu0 %v4942
    %v8015 = vpop.f32.mrf.mxu0
    %v8016 = vadd.f32 %v7823, %v8015
    %v8017 = vpop.f32.mrf.mxu0
    %v8018 = vadd.f32 %v7825, %v8017
    %v8019 = vpop.f32.mrf.mxu0
    %v8020 = vadd.f32 %v7827, %v8019
    %v8021 = vpop.f32.mrf.mxu0
    %v8022 = vadd.f32 %v7829, %v8021
    %8023 = vmatprep.mubr.bf16.mxu0 %v4951
    %8024 = vmatmul.mubr.bf16.gmra.mxu0 %v4950
    %v8025 = vpop.f32.mrf.mxu0
    %v8026 = vadd.f32 %v7833, %v8025
    %v8027 = vpop.f32.mrf.mxu0
    %v8028 = vadd.f32 %v7835, %v8027
    %v8029 = vpop.f32.mrf.mxu0
    %v8030 = vadd.f32 %v7837, %v8029
    %v8031 = vpop.f32.mrf.mxu0
    %v8032 = vadd.f32 %v7839, %v8031
    %8033 = vmatprep.mubr.bf16.mxu0 %v4959
    %8034 = vmatmul.mubr.bf16.gmra.mxu0 %v4958
    %v8035 = vpop.f32.mrf.mxu0
    %v8036 = vadd.f32 %v7843, %v8035
    %v8037 = vpop.f32.mrf.mxu0
    %v8038 = vadd.f32 %v7845, %v8037
    %v8039 = vpop.f32.mrf.mxu0
    %v8040 = vadd.f32 %v7847, %v8039
    %v8041 = vpop.f32.mrf.mxu0
    %v8042 = vadd.f32 %v7849, %v8041
    %8043 = vmatprep.mubr.bf16.mxu0 %v4967
    %8044 = vmatmul.mubr.bf16.gmra.mxu0 %v4966
    %v8045 = vpop.f32.mrf.mxu0
    %v8046 = vadd.f32 %v7853, %v8045
    %v8047 = vpop.f32.mrf.mxu0
    %v8048 = vadd.f32 %v7855, %v8047
    %v8049 = vpop.f32.mrf.mxu0
    %v8050 = vadd.f32 %v7857, %v8049
    %v8051 = vpop.f32.mrf.mxu0
    %v8052 = vadd.f32 %v7859, %v8051
    %8053 = vmatprep.mubr.bf16.mxu0 %v4975
    %8054 = vmatmul.mubr.bf16.gmra.mxu0 %v4974
    %v8055 = vpop.f32.mrf.mxu0
    %v8056 = vadd.f32 %v7863, %v8055
    %v8057 = vpop.f32.mrf.mxu0
    %v8058 = vadd.f32 %v7865, %v8057
    %v8059 = vpop.f32.mrf.mxu0
    %v8060 = vadd.f32 %v7867, %v8059
    %v8061 = vpop.f32.mrf.mxu0
    %v8062 = vadd.f32 %v7869, %v8061
    %8063 = vmatprep.mubr.bf16.mxu0 %v4983
    %8064 = vmatmul.mubr.bf16.gmra.mxu0 %v4982
    %v8065 = vpop.f32.mrf.mxu0
    %v8066 = vadd.f32 %v7873, %v8065
    %v8067 = vpop.f32.mrf.mxu0
    %v8068 = vadd.f32 %v7875, %v8067
    %v8069 = vpop.f32.mrf.mxu0
    %v8070 = vadd.f32 %v7877, %v8069
    %v8071 = vpop.f32.mrf.mxu0
    %v8072 = vadd.f32 %v7879, %v8071
    %8073 = vmatprep.mubr.bf16.mxu0 %v4991
    %8074 = vmatmul.mubr.bf16.gmra.mxu0 %v4990
    %v8075 = vpop.f32.mrf.mxu0
    %v8076 = vadd.f32 %v7883, %v8075
    %v8077 = vpop.f32.mrf.mxu0
    %v8078 = vadd.f32 %v7885, %v8077
    %v8079 = vpop.f32.mrf.mxu0
    %v8080 = vadd.f32 %v7887, %v8079
    %v8081 = vpop.f32.mrf.mxu0
    %v8082 = vadd.f32 %v7889, %v8081
    %8083 = vmatprep.mubr.bf16.mxu0 %v4999
    %8084 = vmatmul.mubr.bf16.gmra.mxu0 %v4998
    %v8085 = vpop.f32.mrf.mxu0
    %v8086 = vadd.f32 %v7893, %v8085
    %v8087 = vpop.f32.mrf.mxu0
    %v8088 = vadd.f32 %v7895, %v8087
    %v8089 = vpop.f32.mrf.mxu0
    %v8090 = vadd.f32 %v7897, %v8089
    %v8091 = vpop.f32.mrf.mxu0
    %v8092 = vadd.f32 %v7899, %v8091
    %8093 = vmatprep.mubr.bf16.mxu0 %v5007
    %8094 = vmatmul.mubr.bf16.gmra.mxu0 %v5006
    %v8095 = vpop.f32.mrf.mxu0
    %v8096 = vadd.f32 %v7903, %v8095
    %v8097 = vpop.f32.mrf.mxu0
    %v8098 = vadd.f32 %v7905, %v8097
    %v8099 = vpop.f32.mrf.mxu0
    %v8100 = vadd.f32 %v7907, %v8099
    %v8101 = vpop.f32.mrf.mxu0
    %v8102 = vadd.f32 %v7909, %v8101
    %8103 = vmatprep.mubr.bf16.mxu0 %v5015
    %8104 = vmatmul.mubr.bf16.gmra.mxu0 %v5014
    %v8105 = vpop.f32.mrf.mxu0
    %v8106 = vadd.f32 %v7913, %v8105
    %v8107 = vpop.f32.mrf.mxu0
    %v8108 = vadd.f32 %v7915, %v8107
    %v8109 = vpop.f32.mrf.mxu0
    %v8110 = vadd.f32 %v7917, %v8109
    %v8111 = vpop.f32.mrf.mxu0
    %v8112 = vadd.f32 %v7919, %v8111
    %8113 = vmatprep.mubr.bf16.mxu0 %v5023
    %8114 = vmatmul.mubr.bf16.gmra.mxu0 %v5022
    %v8115 = vpop.f32.mrf.mxu0
    %v8116 = vadd.f32 %v7923, %v8115
    %v8117 = vpop.f32.mrf.mxu0
    %v8118 = vadd.f32 %v7925, %v8117
    %v8119 = vpop.f32.mrf.mxu0
    %v8120 = vadd.f32 %v7927, %v8119
    %v8121 = vpop.f32.mrf.mxu0
    %v8122 = vadd.f32 %v7929, %v8121
    %8123 = vmatprep.mubr.bf16.mxu0 %v5031
    %8124 = vmatmul.mubr.bf16.gmra.mxu0 %v5030
    %v8125 = vpop.f32.mrf.mxu0
    %v8126 = vadd.f32 %v7933, %v8125
    %v8127 = vpop.f32.mrf.mxu0
    %v8128 = vadd.f32 %v7935, %v8127
    %v8129 = vpop.f32.mrf.mxu0
    %v8130 = vadd.f32 %v7937, %v8129
    %v8131 = vpop.f32.mrf.mxu0
    %v8132 = vadd.f32 %v7939, %v8131
    %8133 = vdwg.mxu0
    %v8134 = vmax.f32 %v7204, 0.0
    %v8135 = vmax.f32 %v7206, 0.0
    %v8136 = vmax.f32 %v7976, 0.0
    %v8137 = vmax.f32 %v7978, 0.0
    %v8138 = vmax.f32 %v7208, 0.0
    %v8139 = vmax.f32 %v7210, 0.0
    %v8140 = vmax.f32 %v7980, 0.0
    %v8141 = vmax.f32 %v7982, 0.0
    %v8142 = vmax.f32 %v7214, 0.0
    %v8143 = vmax.f32 %v7216, 0.0
    %v8144 = vmax.f32 %v7986, 0.0
    %v8145 = vmax.f32 %v7988, 0.0
    %v8146 = vmax.f32 %v7218, 0.0
    %v8147 = vmax.f32 %v7220, 0.0
    %v8148 = vmax.f32 %v7990, 0.0
    %v8149 = vmax.f32 %v7992, 0.0
    %v8150 = vmax.f32 %v7224, 0.0
    %v8151 = vmax.f32 %v7226, 0.0
    %v8152 = vmax.f32 %v7996, 0.0
    %v8153 = vmax.f32 %v7998, 0.0
    %v8154 = vmax.f32 %v7228, 0.0
    %v8155 = vmax.f32 %v7230, 0.0
    %v8156 = vmax.f32 %v8000, 0.0
    %v8157 = vmax.f32 %v8002, 0.0
    %v8158 = vmax.f32 %v7234, 0.0
    %v8159 = vmax.f32 %v7236, 0.0
    %v8160 = vmax.f32 %v8006, 0.0
    %v8161 = vmax.f32 %v8008, 0.0
    %v8162 = vmax.f32 %v7238, 0.0
    %v8163 = vmax.f32 %v7240, 0.0
    %v8164 = vmax.f32 %v8010, 0.0
    %v8165 = vmax.f32 %v8012, 0.0
    %v8166 = vmax.f32 %v7244, 0.0
    %v8167 = vmax.f32 %v7246, 0.0
    %v8168 = vmax.f32 %v8016, 0.0
    %v8169 = vmax.f32 %v8018, 0.0
    %v8170 = vmax.f32 %v7248, 0.0
    %v8171 = vmax.f32 %v7250, 0.0
    %v8172 = vmax.f32 %v8020, 0.0
    %v8173 = vmax.f32 %v8022, 0.0
    %v8174 = vmax.f32 %v7254, 0.0
    %v8175 = vmax.f32 %v7256, 0.0
    %v8176 = vmax.f32 %v8026, 0.0
    %v8177 = vmax.f32 %v8028, 0.0
    %v8178 = vmax.f32 %v7258, 0.0
    %v8179 = vmax.f32 %v7260, 0.0
    %v8180 = vmax.f32 %v8030, 0.0
    %v8181 = vmax.f32 %v8032, 0.0
    %v8182 = vmax.f32 %v7264, 0.0
    %v8183 = vmax.f32 %v7266, 0.0
    %v8184 = vmax.f32 %v8036, 0.0
    %v8185 = vmax.f32 %v8038, 0.0
    %v8186 = vmax.f32 %v7268, 0.0
    %v8187 = vmax.f32 %v7270, 0.0
    %v8188 = vmax.f32 %v8040, 0.0
    %v8189 = vmax.f32 %v8042, 0.0
    %v8190 = vmax.f32 %v7274, 0.0
    %v8191 = vmax.f32 %v7276, 0.0
    %v8192 = vmax.f32 %v8046, 0.0
    %v8193 = vmax.f32 %v8048, 0.0
    %v8194 = vmax.f32 %v7278, 0.0
    %v8195 = vmax.f32 %v7280, 0.0
    %v8196 = vmax.f32 %v8050, 0.0
    %v8197 = vmax.f32 %v8052, 0.0
    %v8198 = vmax.f32 %v7284, 0.0
    %v8199 = vmax.f32 %v7286, 0.0
    %v8200 = vmax.f32 %v8056, 0.0
    %v8201 = vmax.f32 %v8058, 0.0
    %v8202 = vmax.f32 %v7288, 0.0
    %v8203 = vmax.f32 %v7290, 0.0
    %v8204 = vmax.f32 %v8060, 0.0
    %v8205 = vmax.f32 %v8062, 0.0
    %v8206 = vmax.f32 %v7294, 0.0
    %v8207 = vmax.f32 %v7296, 0.0
    %v8208 = vmax.f32 %v8066, 0.0
    %v8209 = vmax.f32 %v8068, 0.0
    %v8210 = vmax.f32 %v7298, 0.0
    %v8211 = vmax.f32 %v7300, 0.0
    %v8212 = vmax.f32 %v8070, 0.0
    %v8213 = vmax.f32 %v8072, 0.0
    %v8214 = vmax.f32 %v7304, 0.0
    %v8215 = vmax.f32 %v7306, 0.0
    %v8216 = vmax.f32 %v8076, 0.0
    %v8217 = vmax.f32 %v8078, 0.0
    %v8218 = vmax.f32 %v7308, 0.0
    %v8219 = vmax.f32 %v7310, 0.0
    %v8220 = vmax.f32 %v8080, 0.0
    %v8221 = vmax.f32 %v8082, 0.0
    %v8222 = vmax.f32 %v7314, 0.0
    %v8223 = vmax.f32 %v7316, 0.0
    %v8224 = vmax.f32 %v8086, 0.0
    %v8225 = vmax.f32 %v8088, 0.0
    %v8226 = vmax.f32 %v7318, 0.0
    %v8227 = vmax.f32 %v7320, 0.0
    %v8228 = vmax.f32 %v8090, 0.0
    %v8229 = vmax.f32 %v8092, 0.0
    %v8230 = vmax.f32 %v7324, 0.0
    %v8231 = vmax.f32 %v7326, 0.0
    %v8232 = vmax.f32 %v8096, 0.0
    %v8233 = vmax.f32 %v8098, 0.0
    %v8234 = vmax.f32 %v7328, 0.0
    %v8235 = vmax.f32 %v7330, 0.0
    %v8236 = vmax.f32 %v8100, 0.0
    %v8237 = vmax.f32 %v8102, 0.0
    %v8238 = vmax.f32 %v7334, 0.0
    %v8239 = vmax.f32 %v7336, 0.0
    %v8240 = vmax.f32 %v8106, 0.0
    %v8241 = vmax.f32 %v8108, 0.0
    %v8242 = vmax.f32 %v7338, 0.0
    %v8243 = vmax.f32 %v7340, 0.0
    %v8244 = vmax.f32 %v8110, 0.0
    %v8245 = vmax.f32 %v8112, 0.0
    %v8246 = vmax.f32 %v7344, 0.0
    %v8247 = vmax.f32 %v7346, 0.0
    %v8248 = vmax.f32 %v8116, 0.0
    %v8249 = vmax.f32 %v8118, 0.0
    %v8250 = vmax.f32 %v7348, 0.0
    %v8251 = vmax.f32 %v7350, 0.0
    %v8252 = vmax.f32 %v8120, 0.0
    %v8253 = vmax.f32 %v8122, 0.0
    %v8254 = vmax.f32 %v7354, 0.0
    %v8255 = vmax.f32 %v7356, 0.0
    %v8256 = vmax.f32 %v8126, 0.0
    %v8257 = vmax.f32 %v8128, 0.0
    %v8258 = vmax.f32 %v7358, 0.0
    %v8259 = vmax.f32 %v7360, 0.0
    %v8260 = vmax.f32 %v8130, 0.0
    %v8261 = vmax.f32 %v8132, 0.0
    %v8262 = vpack.c.bf16 %v8138, %v8134
    %v8263 = vpack.c.bf16 %v8139, %v8135
    %v8264 = vpack.c.bf16 %v8140, %v8136
    %v8265 = vpack.c.bf16 %v8141, %v8137
    %v8266 = vpack.c.bf16 %v8146, %v8142
    %v8267 = vpack.c.bf16 %v8147, %v8143
    %v8268 = vpack.c.bf16 %v8148, %v8144
    %v8269 = vpack.c.bf16 %v8149, %v8145
    %v8270 = vpack.c.bf16 %v8154, %v8150
    %v8271 = vpack.c.bf16 %v8155, %v8151
    %v8272 = vpack.c.bf16 %v8156, %v8152
    %v8273 = vpack.c.bf16 %v8157, %v8153
    %v8274 = vpack.c.bf16 %v8162, %v8158
    %v8275 = vpack.c.bf16 %v8163, %v8159
    %v8276 = vpack.c.bf16 %v8164, %v8160
    %v8277 = vpack.c.bf16 %v8165, %v8161
    %v8278 = vpack.c.bf16 %v8170, %v8166
    %v8279 = vpack.c.bf16 %v8171, %v8167
    %v8280 = vpack.c.bf16 %v8172, %v8168
    %v8281 = vpack.c.bf16 %v8173, %v8169
    %v8282 = vpack.c.bf16 %v8178, %v8174
    %v8283 = vpack.c.bf16 %v8179, %v8175
    %v8284 = vpack.c.bf16 %v8180, %v8176
    %v8285 = vpack.c.bf16 %v8181, %v8177
    %v8286 = vpack.c.bf16 %v8186, %v8182
    %v8287 = vpack.c.bf16 %v8187, %v8183
    %v8288 = vpack.c.bf16 %v8188, %v8184
    %v8289 = vpack.c.bf16 %v8189, %v8185
    %v8290 = vpack.c.bf16 %v8194, %v8190
    %v8291 = vpack.c.bf16 %v8195, %v8191
    %v8292 = vpack.c.bf16 %v8196, %v8192
    %v8293 = vpack.c.bf16 %v8197, %v8193
    %v8294 = vpack.c.bf16 %v8202, %v8198
    %v8295 = vpack.c.bf16 %v8203, %v8199
    %v8296 = vpack.c.bf16 %v8204, %v8200
    %v8297 = vpack.c.bf16 %v8205, %v8201
    %v8298 = vpack.c.bf16 %v8210, %v8206
    %v8299 = vpack.c.bf16 %v8211, %v8207
    %v8300 = vpack.c.bf16 %v8212, %v8208
    %v8301 = vpack.c.bf16 %v8213, %v8209
    %v8302 = vpack.c.bf16 %v8218, %v8214
    %v8303 = vpack.c.bf16 %v8219, %v8215
    %v8304 = vpack.c.bf16 %v8220, %v8216
    %v8305 = vpack.c.bf16 %v8221, %v8217
    %v8306 = vpack.c.bf16 %v8226, %v8222
    %v8307 = vpack.c.bf16 %v8227, %v8223
    %v8308 = vpack.c.bf16 %v8228, %v8224
    %v8309 = vpack.c.bf16 %v8229, %v8225
    %v8310 = vpack.c.bf16 %v8234, %v8230
    %v8311 = vpack.c.bf16 %v8235, %v8231
    %v8312 = vpack.c.bf16 %v8236, %v8232
    %v8313 = vpack.c.bf16 %v8237, %v8233
    %v8314 = vpack.c.bf16 %v8242, %v8238
    %v8315 = vpack.c.bf16 %v8243, %v8239
    %v8316 = vpack.c.bf16 %v8244, %v8240
    %v8317 = vpack.c.bf16 %v8245, %v8241
    %v8318 = vpack.c.bf16 %v8250, %v8246
    %v8319 = vpack.c.bf16 %v8251, %v8247
    %v8320 = vpack.c.bf16 %v8252, %v8248
    %v8321 = vpack.c.bf16 %v8253, %v8249
    %v8322 = vpack.c.bf16 %v8258, %v8254
    %v8323 = vpack.c.bf16 %v8259, %v8255
    %v8324 = vpack.c.bf16 %v8260, %v8256
    %v8325 = vpack.c.bf16 %v8261, %v8257
    %v8326 = vld [vmem:[%s3] sm:$0xff]
    %v8327 = vld [vmem:[%s3 + $0x8] sm:$0xff]
    %v8328 = vld [vmem:[%s3 + $0x10] sm:$0xff]
    %v8329 = vld [vmem:[%s3 + $0x18] sm:$0xff]
    %v8330 = vld [vmem:[%s3 + $0x20] sm:$0xff]
    %v8331 = vld [vmem:[%s3 + $0x28] sm:$0xff]
    %v8332 = vld [vmem:[%s3 + $0x30] sm:$0xff]
    %v8333 = vld [vmem:[%s3 + $0x38] sm:$0xff]
    %v8334 = vld [vmem:[%s3 + $0x40] sm:$0xff]
    %v8335 = vld [vmem:[%s3 + $0x48] sm:$0xff]
    %v8336 = vld [vmem:[%s3 + $0x50] sm:$0xff]
    %v8337 = vld [vmem:[%s3 + $0x58] sm:$0xff]
    %v8338 = vld [vmem:[%s3 + $0x60] sm:$0xff]
    %v8339 = vld [vmem:[%s3 + $0x68] sm:$0xff]
    %v8340 = vld [vmem:[%s3 + $0x70] sm:$0xff]
    %v8341 = vld [vmem:[%s3 + $0x78] sm:$0xff]
    %v8342 = vld [vmem:[%s3 + $0x80] sm:$0xff]
    %v8343 = vld [vmem:[%s3 + $0x88] sm:$0xff]
    %v8344 = vld [vmem:[%s3 + $0x90] sm:$0xff]
    %v8345 = vld [vmem:[%s3 + $0x98] sm:$0xff]
    %v8346 = vld [vmem:[%s3 + $0xa0] sm:$0xff]
    %v8347 = vld [vmem:[%s3 + $0xa8] sm:$0xff]
    %v8348 = vld [vmem:[%s3 + $0xb0] sm:$0xff]
    %v8349 = vld [vmem:[%s3 + $0xb8] sm:$0xff]
    %v8350 = vld [vmem:[%s3 + $0xc0] sm:$0xff]
    %v8351 = vld [vmem:[%s3 + $0xc8] sm:$0xff]
    %v8352 = vld [vmem:[%s3 + $0xd0] sm:$0xff]
    %v8353 = vld [vmem:[%s3 + $0xd8] sm:$0xff]
    %v8354 = vld [vmem:[%s3 + $0xe0] sm:$0xff]
    %v8355 = vld [vmem:[%s3 + $0xe8] sm:$0xff]
    %v8356 = vld [vmem:[%s3 + $0xf0] sm:$0xff]
    %v8357 = vld [vmem:[%s3 + $0xf8] sm:$0xff]
    %v8358 = vld [vmem:[%s3 + $0x100] sm:$0xff]
    %v8359 = vld [vmem:[%s3 + $0x108] sm:$0xff]
    %v8360 = vld [vmem:[%s3 + $0x110] sm:$0xff]
    %v8361 = vld [vmem:[%s3 + $0x118] sm:$0xff]
    %v8362 = vld [vmem:[%s3 + $0x120] sm:$0xff]
    %v8363 = vld [vmem:[%s3 + $0x128] sm:$0xff]
    %v8364 = vld [vmem:[%s3 + $0x130] sm:$0xff]
    %v8365 = vld [vmem:[%s3 + $0x138] sm:$0xff]
    %v8366 = vld [vmem:[%s3 + $0x140] sm:$0xff]
    %v8367 = vld [vmem:[%s3 + $0x148] sm:$0xff]
    %v8368 = vld [vmem:[%s3 + $0x150] sm:$0xff]
    %v8369 = vld [vmem:[%s3 + $0x158] sm:$0xff]
    %v8370 = vld [vmem:[%s3 + $0x160] sm:$0xff]
    %v8371 = vld [vmem:[%s3 + $0x168] sm:$0xff]
    %v8372 = vld [vmem:[%s3 + $0x170] sm:$0xff]
    %v8373 = vld [vmem:[%s3 + $0x178] sm:$0xff]
    %v8374 = vld [vmem:[%s3 + $0x180] sm:$0xff]
    %v8375 = vld [vmem:[%s3 + $0x188] sm:$0xff]
    %v8376 = vld [vmem:[%s3 + $0x190] sm:$0xff]
    %v8377 = vld [vmem:[%s3 + $0x198] sm:$0xff]
    %v8378 = vld [vmem:[%s3 + $0x1a0] sm:$0xff]
    %v8379 = vld [vmem:[%s3 + $0x1a8] sm:$0xff]
    %v8380 = vld [vmem:[%s3 + $0x1b0] sm:$0xff]
    %v8381 = vld [vmem:[%s3 + $0x1b8] sm:$0xff]
    %v8382 = vld [vmem:[%s3 + $0x1c0] sm:$0xff]
    %v8383 = vld [vmem:[%s3 + $0x1c8] sm:$0xff]
    %v8384 = vld [vmem:[%s3 + $0x1d0] sm:$0xff]
    %v8385 = vld [vmem:[%s3 + $0x1d8] sm:$0xff]
    %v8386 = vld [vmem:[%s3 + $0x1e0] sm:$0xff]
    %v8387 = vld [vmem:[%s3 + $0x1e8] sm:$0xff]
    %v8388 = vld [vmem:[%s3 + $0x1f0] sm:$0xff]
    %v8389 = vld [vmem:[%s3 + $0x1f8] sm:$0xff]
    %v8390 = vld [vmem:[%s6 + $0x4] sm:$0x3]
    %v8392 = vlaneseq
    %v8393 = vshrl.u32 %v8392, 7
    %v8394 = vsub.s32 0, %v8393
    %v8395 = vrot.slane %v8390, %v8394
    %v8396 = vlaneseq
    %v8397 = vshrl.u32 %v8396, 7
    %v8398 = vsub.s32 1, %v8397
    %v8399 = vrot.slane %v8390, %v8398
    %v8466 = vunpack.c.l.b16 %v8326
    %v8467 = vunpack.c.h.b16 %v8326
    %v8468 = vunpack.c.l.b16 %v8327
    %v8469 = vunpack.c.h.b16 %v8327
    %v8470 = vunpack.c.l.b16 %v8328
    %v8471 = vunpack.c.h.b16 %v8328
    %v8472 = vunpack.c.l.b16 %v8329
    %v8473 = vunpack.c.h.b16 %v8329
    %v8474 = vunpack.c.l.b16 %v8330
    %v8475 = vunpack.c.h.b16 %v8330
    %v8476 = vunpack.c.l.b16 %v8331
    %v8477 = vunpack.c.h.b16 %v8331
    %v8478 = vunpack.c.l.b16 %v8332
    %v8479 = vunpack.c.h.b16 %v8332
    %v8480 = vunpack.c.l.b16 %v8333
    %v8481 = vunpack.c.h.b16 %v8333
    %v8482 = vunpack.c.l.b16 %v8334
    %v8483 = vunpack.c.h.b16 %v8334
    %v8484 = vunpack.c.l.b16 %v8335
    %v8485 = vunpack.c.h.b16 %v8335
    %v8486 = vunpack.c.l.b16 %v8336
    %v8487 = vunpack.c.h.b16 %v8336
    %v8488 = vunpack.c.l.b16 %v8337
    %v8489 = vunpack.c.h.b16 %v8337
    %v8490 = vunpack.c.l.b16 %v8338
    %v8491 = vunpack.c.h.b16 %v8338
    %v8492 = vunpack.c.l.b16 %v8339
    %v8493 = vunpack.c.h.b16 %v8339
    %v8494 = vunpack.c.l.b16 %v8340
    %v8495 = vunpack.c.h.b16 %v8340
    %v8496 = vunpack.c.l.b16 %v8341
    %v8497 = vunpack.c.h.b16 %v8341
    %v8498 = vunpack.c.l.b16 %v8342
    %v8499 = vunpack.c.h.b16 %v8342
    %v8500 = vunpack.c.l.b16 %v8343
    %v8501 = vunpack.c.h.b16 %v8343
    %v8502 = vunpack.c.l.b16 %v8344
    %v8503 = vunpack.c.h.b16 %v8344
    %v8504 = vunpack.c.l.b16 %v8345
    %v8505 = vunpack.c.h.b16 %v8345
    %v8506 = vunpack.c.l.b16 %v8346
    %v8507 = vunpack.c.h.b16 %v8346
    %v8508 = vunpack.c.l.b16 %v8347
    %v8509 = vunpack.c.h.b16 %v8347
    %v8510 = vunpack.c.l.b16 %v8348
    %v8511 = vunpack.c.h.b16 %v8348
    %v8512 = vunpack.c.l.b16 %v8349
    %v8513 = vunpack.c.h.b16 %v8349
    %v8514 = vunpack.c.l.b16 %v8350
    %v8515 = vunpack.c.h.b16 %v8350
    %v8516 = vunpack.c.l.b16 %v8351
    %v8517 = vunpack.c.h.b16 %v8351
    %v8518 = vunpack.c.l.b16 %v8352
    %v8519 = vunpack.c.h.b16 %v8352
    %v8520 = vunpack.c.l.b16 %v8353
    %v8521 = vunpack.c.h.b16 %v8353
    %v8522 = vunpack.c.l.b16 %v8354
    %v8523 = vunpack.c.h.b16 %v8354
    %v8524 = vunpack.c.l.b16 %v8355
    %v8525 = vunpack.c.h.b16 %v8355
    %v8526 = vunpack.c.l.b16 %v8356
    %v8527 = vunpack.c.h.b16 %v8356
    %v8528 = vunpack.c.l.b16 %v8357
    %v8529 = vunpack.c.h.b16 %v8357
    %v8530 = vunpack.c.l.b16 %v8358
    %v8531 = vunpack.c.h.b16 %v8358
    %v8532 = vunpack.c.l.b16 %v8359
    %v8533 = vunpack.c.h.b16 %v8359
    %v8534 = vunpack.c.l.b16 %v8360
    %v8535 = vunpack.c.h.b16 %v8360
    %v8536 = vunpack.c.l.b16 %v8361
    %v8537 = vunpack.c.h.b16 %v8361
    %v8538 = vunpack.c.l.b16 %v8362
    %v8539 = vunpack.c.h.b16 %v8362
    %v8540 = vunpack.c.l.b16 %v8363
    %v8541 = vunpack.c.h.b16 %v8363
    %v8542 = vunpack.c.l.b16 %v8364
    %v8543 = vunpack.c.h.b16 %v8364
    %v8544 = vunpack.c.l.b16 %v8365
    %v8545 = vunpack.c.h.b16 %v8365
    %v8546 = vunpack.c.l.b16 %v8366
    %v8547 = vunpack.c.h.b16 %v8366
    %v8548 = vunpack.c.l.b16 %v8367
    %v8549 = vunpack.c.h.b16 %v8367
    %v8550 = vunpack.c.l.b16 %v8368
    %v8551 = vunpack.c.h.b16 %v8368
    %v8552 = vunpack.c.l.b16 %v8369
    %v8553 = vunpack.c.h.b16 %v8369
    %v8554 = vunpack.c.l.b16 %v8370
    %v8555 = vunpack.c.h.b16 %v8370
    %v8556 = vunpack.c.l.b16 %v8371
    %v8557 = vunpack.c.h.b16 %v8371
    %v8558 = vunpack.c.l.b16 %v8372
    %v8559 = vunpack.c.h.b16 %v8372
    %v8560 = vunpack.c.l.b16 %v8373
    %v8561 = vunpack.c.h.b16 %v8373
    %v8562 = vunpack.c.l.b16 %v8374
    %v8563 = vunpack.c.h.b16 %v8374
    %v8564 = vunpack.c.l.b16 %v8375
    %v8565 = vunpack.c.h.b16 %v8375
    %v8566 = vunpack.c.l.b16 %v8376
    %v8567 = vunpack.c.h.b16 %v8376
    %v8568 = vunpack.c.l.b16 %v8377
    %v8569 = vunpack.c.h.b16 %v8377
    %v8570 = vunpack.c.l.b16 %v8378
    %v8571 = vunpack.c.h.b16 %v8378
    %v8572 = vunpack.c.l.b16 %v8379
    %v8573 = vunpack.c.h.b16 %v8379
    %v8574 = vunpack.c.l.b16 %v8380
    %v8575 = vunpack.c.h.b16 %v8380
    %v8576 = vunpack.c.l.b16 %v8381
    %v8577 = vunpack.c.h.b16 %v8381
    %v8578 = vunpack.c.l.b16 %v8382
    %v8579 = vunpack.c.h.b16 %v8382
    %v8580 = vunpack.c.l.b16 %v8383
    %v8581 = vunpack.c.h.b16 %v8383
    %v8582 = vunpack.c.l.b16 %v8384
    %v8583 = vunpack.c.h.b16 %v8384
    %v8584 = vunpack.c.l.b16 %v8385
    %v8585 = vunpack.c.h.b16 %v8385
    %v8586 = vunpack.c.l.b16 %v8386
    %v8587 = vunpack.c.h.b16 %v8386
    %v8588 = vunpack.c.l.b16 %v8387
    %v8589 = vunpack.c.h.b16 %v8387
    %v8590 = vunpack.c.l.b16 %v8388
    %v8591 = vunpack.c.h.b16 %v8388
    %v8592 = vunpack.c.l.b16 %v8389
    %v8593 = vunpack.c.h.b16 %v8389
    %v8594 = vpack.c.b16 %v8468, %v8466
    %v8595 = vpack.c.b16 %v8469, %v8467
    %v8596 = vpack.c.b16 %v8472, %v8470
    %v8597 = vpack.c.b16 %v8473, %v8471
    %v8598 = vpack.c.b16 %v8476, %v8474
    %v8599 = vpack.c.b16 %v8477, %v8475
    %v8600 = vpack.c.b16 %v8480, %v8478
    %v8601 = vpack.c.b16 %v8481, %v8479
    %v8602 = vpack.c.b16 %v8484, %v8482
    %v8603 = vpack.c.b16 %v8485, %v8483
    %v8604 = vpack.c.b16 %v8488, %v8486
    %v8605 = vpack.c.b16 %v8489, %v8487
    %v8606 = vpack.c.b16 %v8492, %v8490
    %v8607 = vpack.c.b16 %v8493, %v8491
    %v8608 = vpack.c.b16 %v8496, %v8494
    %v8609 = vpack.c.b16 %v8497, %v8495
    %v8610 = vpack.c.b16 %v8500, %v8498
    %v8611 = vpack.c.b16 %v8501, %v8499
    %v8612 = vpack.c.b16 %v8504, %v8502
    %v8613 = vpack.c.b16 %v8505, %v8503
    %v8614 = vpack.c.b16 %v8508, %v8506
    %v8615 = vpack.c.b16 %v8509, %v8507
    %v8616 = vpack.c.b16 %v8512, %v8510
    %v8617 = vpack.c.b16 %v8513, %v8511
    %v8618 = vpack.c.b16 %v8516, %v8514
    %v8619 = vpack.c.b16 %v8517, %v8515
    %v8620 = vpack.c.b16 %v8520, %v8518
    %v8621 = vpack.c.b16 %v8521, %v8519
    %v8622 = vpack.c.b16 %v8524, %v8522
    %v8623 = vpack.c.b16 %v8525, %v8523
    %v8624 = vpack.c.b16 %v8528, %v8526
    %v8625 = vpack.c.b16 %v8529, %v8527
    %v8626 = vpack.c.b16 %v8532, %v8530
    %v8627 = vpack.c.b16 %v8533, %v8531
    %v8628 = vpack.c.b16 %v8536, %v8534
    %v8629 = vpack.c.b16 %v8537, %v8535
    %v8630 = vpack.c.b16 %v8540, %v8538
    %v8631 = vpack.c.b16 %v8541, %v8539
    %v8632 = vpack.c.b16 %v8544, %v8542
    %v8633 = vpack.c.b16 %v8545, %v8543
    %v8634 = vpack.c.b16 %v8548, %v8546
    %v8635 = vpack.c.b16 %v8549, %v8547
    %v8636 = vpack.c.b16 %v8552, %v8550
    %v8637 = vpack.c.b16 %v8553, %v8551
    %v8638 = vpack.c.b16 %v8556, %v8554
    %v8639 = vpack.c.b16 %v8557, %v8555
    %v8640 = vpack.c.b16 %v8560, %v8558
    %v8641 = vpack.c.b16 %v8561, %v8559
    %v8642 = vpack.c.b16 %v8564, %v8562
    %v8643 = vpack.c.b16 %v8565, %v8563
    %v8644 = vpack.c.b16 %v8568, %v8566
    %v8645 = vpack.c.b16 %v8569, %v8567
    %v8646 = vpack.c.b16 %v8572, %v8570
    %v8647 = vpack.c.b16 %v8573, %v8571
    %v8648 = vpack.c.b16 %v8576, %v8574
    %v8649 = vpack.c.b16 %v8577, %v8575
    %v8650 = vpack.c.b16 %v8580, %v8578
    %v8651 = vpack.c.b16 %v8581, %v8579
    %v8652 = vpack.c.b16 %v8584, %v8582
    %v8653 = vpack.c.b16 %v8585, %v8583
    %v8654 = vpack.c.b16 %v8588, %v8586
    %v8655 = vpack.c.b16 %v8589, %v8587
    %v8656 = vpack.c.b16 %v8592, %v8590
    %v8657 = vpack.c.b16 %v8593, %v8591
    %8722 = vmatprep.subr.bf16.mxu0 %v8609
    %8723 = vmatpush1.bf16.msra.mxu0 %v8608
    %8724 = vmatprep.subr.bf16.mxu0 %v8607
    %8725 = vmatpush1.bf16.msra.mxu0 %v8606
    %8726 = vmatprep.subr.bf16.mxu0 %v8605
    %8727 = vmatpush1.bf16.msra.mxu0 %v8604
    %8728 = vmatprep.subr.bf16.mxu0 %v8603
    %8729 = vmatpush1.bf16.msra.mxu0 %v8602
    %8730 = vmatprep.subr.bf16.mxu0 %v8601
    %8731 = vmatpush1.bf16.msra.mxu0 %v8600
    %8732 = vmatprep.subr.bf16.mxu0 %v8599
    %8733 = vmatpush1.bf16.msra.mxu0 %v8598
    %8734 = vmatprep.subr.bf16.mxu0 %v8597
    %8735 = vmatpush1.bf16.msra.mxu0 %v8596
    %8736 = vmatprep.subr.bf16.mxu0 %v8595
    %8737 = vmatpush1.bf16.msra.mxu0 %v8594
    %8738 = vmatprep.subr.bf16.mxu0 %v8625
    %8739 = vmatpush2.bf16.msra.mxu0 %v8624
    %8740 = vmatprep.subr.bf16.mxu0 %v8623
    %8741 = vmatpush2.bf16.msra.mxu0 %v8622
    %8742 = vmatprep.subr.bf16.mxu0 %v8621
    %8743 = vmatpush2.bf16.msra.mxu0 %v8620
    %8744 = vmatprep.subr.bf16.mxu0 %v8619
    %8745 = vmatpush2.bf16.msra.mxu0 %v8618
    %8746 = vmatprep.subr.bf16.mxu0 %v8617
    %8747 = vmatpush2.bf16.msra.mxu0 %v8616
    %8748 = vmatprep.subr.bf16.mxu0 %v8615
    %8749 = vmatpush2.bf16.msra.mxu0 %v8614
    %8750 = vmatprep.subr.bf16.mxu0 %v8613
    %8751 = vmatpush2.bf16.msra.mxu0 %v8612
    %8752 = vmatprep.subr.bf16.mxu0 %v8611
    %8753 = vmatpush2.bf16.msra.mxu0 %v8610
    %8754 = vmatprep.mubr.bf16.mxu0 %v8263
    %8755 = vmatmul.mubr.bf16.gmra.mxu0 %v8262
    %v8756 = vpop.f32.mrf.mxu0
    %v8757 = vadd.f32 %v8395, %v8756
    %v8758 = vpop.f32.mrf.mxu0
    %v8759 = vadd.f32 %v8399, %v8758
    %v8760 = vpop.f32.mrf.mxu0
    %v8761 = vadd.f32 %v8395, %v8760
    %v8762 = vpop.f32.mrf.mxu0
    %v8763 = vadd.f32 %v8399, %v8762
    %8764 = vmatprep.mubr.bf16.mxu0 %v8267
    %8765 = vmatmul.mubr.bf16.gmra.mxu0 %v8266
    %v8766 = vpop.f32.mrf.mxu0
    %v8767 = vadd.f32 %v8395, %v8766
    %v8768 = vpop.f32.mrf.mxu0
    %v8769 = vadd.f32 %v8399, %v8768
    %v8770 = vpop.f32.mrf.mxu0
    %v8771 = vadd.f32 %v8395, %v8770
    %v8772 = vpop.f32.mrf.mxu0
    %v8773 = vadd.f32 %v8399, %v8772
    %8774 = vmatprep.mubr.bf16.mxu0 %v8271
    %8775 = vmatmul.mubr.bf16.gmra.mxu0 %v8270
    %v8776 = vpop.f32.mrf.mxu0
    %v8777 = vadd.f32 %v8395, %v8776
    %v8778 = vpop.f32.mrf.mxu0
    %v8779 = vadd.f32 %v8399, %v8778
    %v8780 = vpop.f32.mrf.mxu0
    %v8781 = vadd.f32 %v8395, %v8780
    %v8782 = vpop.f32.mrf.mxu0
    %v8783 = vadd.f32 %v8399, %v8782
    %8784 = vmatprep.mubr.bf16.mxu0 %v8275
    %8785 = vmatmul.mubr.bf16.gmra.mxu0 %v8274
    %v8786 = vpop.f32.mrf.mxu0
    %v8787 = vadd.f32 %v8395, %v8786
    %v8788 = vpop.f32.mrf.mxu0
    %v8789 = vadd.f32 %v8399, %v8788
    %v8790 = vpop.f32.mrf.mxu0
    %v8791 = vadd.f32 %v8395, %v8790
    %v8792 = vpop.f32.mrf.mxu0
    %v8793 = vadd.f32 %v8399, %v8792
    %8794 = vmatprep.mubr.bf16.mxu0 %v8279
    %8795 = vmatmul.mubr.bf16.gmra.mxu0 %v8278
    %v8796 = vpop.f32.mrf.mxu0
    %v8797 = vadd.f32 %v8395, %v8796
    %v8798 = vpop.f32.mrf.mxu0
    %v8799 = vadd.f32 %v8399, %v8798
    %v8800 = vpop.f32.mrf.mxu0
    %v8801 = vadd.f32 %v8395, %v8800
    %v8802 = vpop.f32.mrf.mxu0
    %v8803 = vadd.f32 %v8399, %v8802
    %8804 = vmatprep.mubr.bf16.mxu0 %v8283
    %8805 = vmatmul.mubr.bf16.gmra.mxu0 %v8282
    %v8806 = vpop.f32.mrf.mxu0
    %v8807 = vadd.f32 %v8395, %v8806
    %v8808 = vpop.f32.mrf.mxu0
    %v8809 = vadd.f32 %v8399, %v8808
    %v8810 = vpop.f32.mrf.mxu0
    %v8811 = vadd.f32 %v8395, %v8810
    %v8812 = vpop.f32.mrf.mxu0
    %v8813 = vadd.f32 %v8399, %v8812
    %8814 = vmatprep.mubr.bf16.mxu0 %v8287
    %8815 = vmatmul.mubr.bf16.gmra.mxu0 %v8286
    %v8816 = vpop.f32.mrf.mxu0
    %v8817 = vadd.f32 %v8395, %v8816
    %v8818 = vpop.f32.mrf.mxu0
    %v8819 = vadd.f32 %v8399, %v8818
    %v8820 = vpop.f32.mrf.mxu0
    %v8821 = vadd.f32 %v8395, %v8820
    %v8822 = vpop.f32.mrf.mxu0
    %v8823 = vadd.f32 %v8399, %v8822
    %8824 = vmatprep.mubr.bf16.mxu0 %v8291
    %8825 = vmatmul.mubr.bf16.gmra.mxu0 %v8290
    %v8826 = vpop.f32.mrf.mxu0
    %v8827 = vadd.f32 %v8395, %v8826
    %v8828 = vpop.f32.mrf.mxu0
    %v8829 = vadd.f32 %v8399, %v8828
    %v8830 = vpop.f32.mrf.mxu0
    %v8831 = vadd.f32 %v8395, %v8830
    %v8832 = vpop.f32.mrf.mxu0
    %v8833 = vadd.f32 %v8399, %v8832
    %8834 = vmatprep.mubr.bf16.mxu0 %v8295
    %8835 = vmatmul.mubr.bf16.gmra.mxu0 %v8294
    %v8836 = vpop.f32.mrf.mxu0
    %v8837 = vadd.f32 %v8395, %v8836
    %v8838 = vpop.f32.mrf.mxu0
    %v8839 = vadd.f32 %v8399, %v8838
    %v8840 = vpop.f32.mrf.mxu0
    %v8841 = vadd.f32 %v8395, %v8840
    %v8842 = vpop.f32.mrf.mxu0
    %v8843 = vadd.f32 %v8399, %v8842
    %8844 = vmatprep.mubr.bf16.mxu0 %v8299
    %8845 = vmatmul.mubr.bf16.gmra.mxu0 %v8298
    %v8846 = vpop.f32.mrf.mxu0
    %v8847 = vadd.f32 %v8395, %v8846
    %v8848 = vpop.f32.mrf.mxu0
    %v8849 = vadd.f32 %v8399, %v8848
    %v8850 = vpop.f32.mrf.mxu0
    %v8851 = vadd.f32 %v8395, %v8850
    %v8852 = vpop.f32.mrf.mxu0
    %v8853 = vadd.f32 %v8399, %v8852
    %8854 = vmatprep.mubr.bf16.mxu0 %v8303
    %8855 = vmatmul.mubr.bf16.gmra.mxu0 %v8302
    %v8856 = vpop.f32.mrf.mxu0
    %v8857 = vadd.f32 %v8395, %v8856
    %v8858 = vpop.f32.mrf.mxu0
    %v8859 = vadd.f32 %v8399, %v8858
    %v8860 = vpop.f32.mrf.mxu0
    %v8861 = vadd.f32 %v8395, %v8860
    %v8862 = vpop.f32.mrf.mxu0
    %v8863 = vadd.f32 %v8399, %v8862
    %8864 = vmatprep.mubr.bf16.mxu0 %v8307
    %8865 = vmatmul.mubr.bf16.gmra.mxu0 %v8306
    %v8866 = vpop.f32.mrf.mxu0
    %v8867 = vadd.f32 %v8395, %v8866
    %v8868 = vpop.f32.mrf.mxu0
    %v8869 = vadd.f32 %v8399, %v8868
    %v8870 = vpop.f32.mrf.mxu0
    %v8871 = vadd.f32 %v8395, %v8870
    %v8872 = vpop.f32.mrf.mxu0
    %v8873 = vadd.f32 %v8399, %v8872
    %8874 = vmatprep.mubr.bf16.mxu0 %v8311
    %8875 = vmatmul.mubr.bf16.gmra.mxu0 %v8310
    %v8876 = vpop.f32.mrf.mxu0
    %v8877 = vadd.f32 %v8395, %v8876
    %v8878 = vpop.f32.mrf.mxu0
    %v8879 = vadd.f32 %v8399, %v8878
    %v8880 = vpop.f32.mrf.mxu0
    %v8881 = vadd.f32 %v8395, %v8880
    %v8882 = vpop.f32.mrf.mxu0
    %v8883 = vadd.f32 %v8399, %v8882
    %8884 = vmatprep.mubr.bf16.mxu0 %v8315
    %8885 = vmatmul.mubr.bf16.gmra.mxu0 %v8314
    %v8886 = vpop.f32.mrf.mxu0
    %v8887 = vadd.f32 %v8395, %v8886
    %v8888 = vpop.f32.mrf.mxu0
    %v8889 = vadd.f32 %v8399, %v8888
    %v8890 = vpop.f32.mrf.mxu0
    %v8891 = vadd.f32 %v8395, %v8890
    %v8892 = vpop.f32.mrf.mxu0
    %v8893 = vadd.f32 %v8399, %v8892
    %8894 = vmatprep.mubr.bf16.mxu0 %v8319
    %8895 = vmatmul.mubr.bf16.gmra.mxu0 %v8318
    %v8896 = vpop.f32.mrf.mxu0
    %v8897 = vadd.f32 %v8395, %v8896
    %v8898 = vpop.f32.mrf.mxu0
    %v8899 = vadd.f32 %v8399, %v8898
    %v8900 = vpop.f32.mrf.mxu0
    %v8901 = vadd.f32 %v8395, %v8900
    %v8902 = vpop.f32.mrf.mxu0
    %v8903 = vadd.f32 %v8399, %v8902
    %8904 = vmatprep.mubr.bf16.mxu0 %v8323
    %8905 = vmatmul.mubr.bf16.gmra.mxu0 %v8322
    %v8906 = vpop.f32.mrf.mxu0
    %v8907 = vadd.f32 %v8395, %v8906
    %v8908 = vpop.f32.mrf.mxu0
    %v8909 = vadd.f32 %v8399, %v8908
    %v8910 = vpop.f32.mrf.mxu0
    %v8911 = vadd.f32 %v8395, %v8910
    %v8912 = vpop.f32.mrf.mxu0
    %v8913 = vadd.f32 %v8399, %v8912
    %8914 = vdwg.mxu0
    %8915 = vmatprep.subr.bf16.mxu0 %v8641
    %8916 = vmatpush1.bf16.msra.mxu0 %v8640
    %8917 = vmatprep.subr.bf16.mxu0 %v8639
    %8918 = vmatpush1.bf16.msra.mxu0 %v8638
    %8919 = vmatprep.subr.bf16.mxu0 %v8637
    %8920 = vmatpush1.bf16.msra.mxu0 %v8636
    %8921 = vmatprep.subr.bf16.mxu0 %v8635
    %8922 = vmatpush1.bf16.msra.mxu0 %v8634
    %8923 = vmatprep.subr.bf16.mxu0 %v8633
    %8924 = vmatpush1.bf16.msra.mxu0 %v8632
    %8925 = vmatprep.subr.bf16.mxu0 %v8631
    %8926 = vmatpush1.bf16.msra.mxu0 %v8630
    %8927 = vmatprep.subr.bf16.mxu0 %v8629
    %8928 = vmatpush1.bf16.msra.mxu0 %v8628
    %8929 = vmatprep.subr.bf16.mxu0 %v8627
    %8930 = vmatpush1.bf16.msra.mxu0 %v8626
    %8931 = vmatprep.subr.bf16.mxu0 %v8657
    %8932 = vmatpush2.bf16.msra.mxu0 %v8656
    %8933 = vmatprep.subr.bf16.mxu0 %v8655
    %8934 = vmatpush2.bf16.msra.mxu0 %v8654
    %8935 = vmatprep.subr.bf16.mxu0 %v8653
    %8936 = vmatpush2.bf16.msra.mxu0 %v8652
    %8937 = vmatprep.subr.bf16.mxu0 %v8651
    %8938 = vmatpush2.bf16.msra.mxu0 %v8650
    %8939 = vmatprep.subr.bf16.mxu0 %v8649
    %8940 = vmatpush2.bf16.msra.mxu0 %v8648
    %8941 = vmatprep.subr.bf16.mxu0 %v8647
    %8942 = vmatpush2.bf16.msra.mxu0 %v8646
    %8943 = vmatprep.subr.bf16.mxu0 %v8645
    %8944 = vmatpush2.bf16.msra.mxu0 %v8644
    %8945 = vmatprep.subr.bf16.mxu0 %v8643
    %8946 = vmatpush2.bf16.msra.mxu0 %v8642
    %8947 = vmatprep.mubr.bf16.mxu0 %v8265
    %8948 = vmatmul.mubr.bf16.gmra.mxu0 %v8264
    %v8949 = vpop.f32.mrf.mxu0
    %v8950 = vadd.f32 %v8757, %v8949
    %v8951 = vpop.f32.mrf.mxu0
    %v8952 = vadd.f32 %v8759, %v8951
    %v8953 = vpop.f32.mrf.mxu0
    %v8954 = vadd.f32 %v8761, %v8953
    %v8955 = vpop.f32.mrf.mxu0
    %v8956 = vadd.f32 %v8763, %v8955
    %8957 = vmatprep.mubr.bf16.mxu0 %v8269
    %8958 = vmatmul.mubr.bf16.gmra.mxu0 %v8268
    %v8959 = vpop.f32.mrf.mxu0
    %v8960 = vadd.f32 %v8767, %v8959
    %v8961 = vpop.f32.mrf.mxu0
    %v8962 = vadd.f32 %v8769, %v8961
    %v8963 = vpop.f32.mrf.mxu0
    %v8964 = vadd.f32 %v8771, %v8963
    %v8965 = vpop.f32.mrf.mxu0
    %v8966 = vadd.f32 %v8773, %v8965
    %8967 = vmatprep.mubr.bf16.mxu0 %v8273
    %8968 = vmatmul.mubr.bf16.gmra.mxu0 %v8272
    %v8969 = vpop.f32.mrf.mxu0
    %v8970 = vadd.f32 %v8777, %v8969
    %v8971 = vpop.f32.mrf.mxu0
    %v8972 = vadd.f32 %v8779, %v8971
    %v8973 = vpop.f32.mrf.mxu0
    %v8974 = vadd.f32 %v8781, %v8973
    %v8975 = vpop.f32.mrf.mxu0
    %v8976 = vadd.f32 %v8783, %v8975
    %8977 = vmatprep.mubr.bf16.mxu0 %v8277
    %8978 = vmatmul.mubr.bf16.gmra.mxu0 %v8276
    %v8979 = vpop.f32.mrf.mxu0
    %v8980 = vadd.f32 %v8787, %v8979
    %v8981 = vpop.f32.mrf.mxu0
    %v8982 = vadd.f32 %v8789, %v8981
    %v8983 = vpop.f32.mrf.mxu0
    %v8984 = vadd.f32 %v8791, %v8983
    %v8985 = vpop.f32.mrf.mxu0
    %v8986 = vadd.f32 %v8793, %v8985
    %8987 = vmatprep.mubr.bf16.mxu0 %v8281
    %8988 = vmatmul.mubr.bf16.gmra.mxu0 %v8280
    %v8989 = vpop.f32.mrf.mxu0
    %v8990 = vadd.f32 %v8797, %v8989
    %v8991 = vpop.f32.mrf.mxu0
    %v8992 = vadd.f32 %v8799, %v8991
    %v8993 = vpop.f32.mrf.mxu0
    %v8994 = vadd.f32 %v8801, %v8993
    %v8995 = vpop.f32.mrf.mxu0
    %v8996 = vadd.f32 %v8803, %v8995
    %8997 = vmatprep.mubr.bf16.mxu0 %v8285
    %8998 = vmatmul.mubr.bf16.gmra.mxu0 %v8284
    %v8999 = vpop.f32.mrf.mxu0
    %v9000 = vadd.f32 %v8807, %v8999
    %v9001 = vpop.f32.mrf.mxu0
    %v9002 = vadd.f32 %v8809, %v9001
    %v9003 = vpop.f32.mrf.mxu0
    %v9004 = vadd.f32 %v8811, %v9003
    %v9005 = vpop.f32.mrf.mxu0
    %v9006 = vadd.f32 %v8813, %v9005
    %9007 = vmatprep.mubr.bf16.mxu0 %v8289
    %9008 = vmatmul.mubr.bf16.gmra.mxu0 %v8288
    %v9009 = vpop.f32.mrf.mxu0
    %v9010 = vadd.f32 %v8817, %v9009
    %v9011 = vpop.f32.mrf.mxu0
    %v9012 = vadd.f32 %v8819, %v9011
    %v9013 = vpop.f32.mrf.mxu0
    %v9014 = vadd.f32 %v8821, %v9013
    %v9015 = vpop.f32.mrf.mxu0
    %v9016 = vadd.f32 %v8823, %v9015
    %9017 = vmatprep.mubr.bf16.mxu0 %v8293
    %9018 = vmatmul.mubr.bf16.gmra.mxu0 %v8292
    %v9019 = vpop.f32.mrf.mxu0
    %v9020 = vadd.f32 %v8827, %v9019
    %v9021 = vpop.f32.mrf.mxu0
    %v9022 = vadd.f32 %v8829, %v9021
    %v9023 = vpop.f32.mrf.mxu0
    %v9024 = vadd.f32 %v8831, %v9023
    %v9025 = vpop.f32.mrf.mxu0
    %v9026 = vadd.f32 %v8833, %v9025
    %9027 = vmatprep.mubr.bf16.mxu0 %v8297
    %9028 = vmatmul.mubr.bf16.gmra.mxu0 %v8296
    %v9029 = vpop.f32.mrf.mxu0
    %v9030 = vadd.f32 %v8837, %v9029
    %v9031 = vpop.f32.mrf.mxu0
    %v9032 = vadd.f32 %v8839, %v9031
    %v9033 = vpop.f32.mrf.mxu0
    %v9034 = vadd.f32 %v8841, %v9033
    %v9035 = vpop.f32.mrf.mxu0
    %v9036 = vadd.f32 %v8843, %v9035
    %9037 = vmatprep.mubr.bf16.mxu0 %v8301
    %9038 = vmatmul.mubr.bf16.gmra.mxu0 %v8300
    %v9039 = vpop.f32.mrf.mxu0
    %v9040 = vadd.f32 %v8847, %v9039
    %v9041 = vpop.f32.mrf.mxu0
    %v9042 = vadd.f32 %v8849, %v9041
    %v9043 = vpop.f32.mrf.mxu0
    %v9044 = vadd.f32 %v8851, %v9043
    %v9045 = vpop.f32.mrf.mxu0
    %v9046 = vadd.f32 %v8853, %v9045
    %9047 = vmatprep.mubr.bf16.mxu0 %v8305
    %9048 = vmatmul.mubr.bf16.gmra.mxu0 %v8304
    %v9049 = vpop.f32.mrf.mxu0
    %v9050 = vadd.f32 %v8857, %v9049
    %v9051 = vpop.f32.mrf.mxu0
    %v9052 = vadd.f32 %v8859, %v9051
    %v9053 = vpop.f32.mrf.mxu0
    %v9054 = vadd.f32 %v8861, %v9053
    %v9055 = vpop.f32.mrf.mxu0
    %v9056 = vadd.f32 %v8863, %v9055
    %9057 = vmatprep.mubr.bf16.mxu0 %v8309
    %9058 = vmatmul.mubr.bf16.gmra.mxu0 %v8308
    %v9059 = vpop.f32.mrf.mxu0
    %v9060 = vadd.f32 %v8867, %v9059
    %v9061 = vpop.f32.mrf.mxu0
    %v9062 = vadd.f32 %v8869, %v9061
    %v9063 = vpop.f32.mrf.mxu0
    %v9064 = vadd.f32 %v8871, %v9063
    %v9065 = vpop.f32.mrf.mxu0
    %v9066 = vadd.f32 %v8873, %v9065
    %9067 = vmatprep.mubr.bf16.mxu0 %v8313
    %9068 = vmatmul.mubr.bf16.gmra.mxu0 %v8312
    %v9069 = vpop.f32.mrf.mxu0
    %v9070 = vadd.f32 %v8877, %v9069
    %v9071 = vpop.f32.mrf.mxu0
    %v9072 = vadd.f32 %v8879, %v9071
    %v9073 = vpop.f32.mrf.mxu0
    %v9074 = vadd.f32 %v8881, %v9073
    %v9075 = vpop.f32.mrf.mxu0
    %v9076 = vadd.f32 %v8883, %v9075
    %9077 = vmatprep.mubr.bf16.mxu0 %v8317
    %9078 = vmatmul.mubr.bf16.gmra.mxu0 %v8316
    %v9079 = vpop.f32.mrf.mxu0
    %v9080 = vadd.f32 %v8887, %v9079
    %v9081 = vpop.f32.mrf.mxu0
    %v9082 = vadd.f32 %v8889, %v9081
    %v9083 = vpop.f32.mrf.mxu0
    %v9084 = vadd.f32 %v8891, %v9083
    %v9085 = vpop.f32.mrf.mxu0
    %v9086 = vadd.f32 %v8893, %v9085
    %9087 = vmatprep.mubr.bf16.mxu0 %v8321
    %9088 = vmatmul.mubr.bf16.gmra.mxu0 %v8320
    %v9089 = vpop.f32.mrf.mxu0
    %v9090 = vadd.f32 %v8897, %v9089
    %v9091 = vpop.f32.mrf.mxu0
    %v9092 = vadd.f32 %v8899, %v9091
    %v9093 = vpop.f32.mrf.mxu0
    %v9094 = vadd.f32 %v8901, %v9093
    %v9095 = vpop.f32.mrf.mxu0
    %v9096 = vadd.f32 %v8903, %v9095
    %9097 = vmatprep.mubr.bf16.mxu0 %v8325
    %9098 = vmatmul.mubr.bf16.gmra.mxu0 %v8324
    %v9099 = vpop.f32.mrf.mxu0
    %v9100 = vadd.f32 %v8907, %v9099
    %v9101 = vpop.f32.mrf.mxu0
    %v9102 = vadd.f32 %v8909, %v9101
    %v9103 = vpop.f32.mrf.mxu0
    %v9104 = vadd.f32 %v8911, %v9103
    %v9105 = vpop.f32.mrf.mxu0
    %v9106 = vadd.f32 %v8913, %v9105
    %9107 = vdwg.mxu0
    %v9108 = vmax.f32 %v8950, 0.0
    %v9109 = vmax.f32 %v8952, 0.0
    %v9110 = vmax.f32 %v8954, 0.0
    %v9111 = vmax.f32 %v8956, 0.0
    %v9112 = vmax.f32 %v8960, 0.0
    %v9113 = vmax.f32 %v8962, 0.0
    %v9114 = vmax.f32 %v8964, 0.0
    %v9115 = vmax.f32 %v8966, 0.0
    %v9116 = vmax.f32 %v8970, 0.0
    %v9117 = vmax.f32 %v8972, 0.0
    %v9118 = vmax.f32 %v8974, 0.0
    %v9119 = vmax.f32 %v8976, 0.0
    %v9120 = vmax.f32 %v8980, 0.0
    %v9121 = vmax.f32 %v8982, 0.0
    %v9122 = vmax.f32 %v8984, 0.0
    %v9123 = vmax.f32 %v8986, 0.0
    %v9124 = vmax.f32 %v8990, 0.0
    %v9125 = vmax.f32 %v8992, 0.0
    %v9126 = vmax.f32 %v8994, 0.0
    %v9127 = vmax.f32 %v8996, 0.0
    %v9128 = vmax.f32 %v9000, 0.0
    %v9129 = vmax.f32 %v9002, 0.0
    %v9130 = vmax.f32 %v9004, 0.0
    %v9131 = vmax.f32 %v9006, 0.0
    %v9132 = vmax.f32 %v9010, 0.0
    %v9133 = vmax.f32 %v9012, 0.0
    %v9134 = vmax.f32 %v9014, 0.0
    %v9135 = vmax.f32 %v9016, 0.0
    %v9136 = vmax.f32 %v9020, 0.0
    %v9137 = vmax.f32 %v9022, 0.0
    %v9138 = vmax.f32 %v9024, 0.0
    %v9139 = vmax.f32 %v9026, 0.0
    %v9140 = vmax.f32 %v9030, 0.0
    %v9141 = vmax.f32 %v9032, 0.0
    %v9142 = vmax.f32 %v9034, 0.0
    %v9143 = vmax.f32 %v9036, 0.0
    %v9144 = vmax.f32 %v9040, 0.0
    %v9145 = vmax.f32 %v9042, 0.0
    %v9146 = vmax.f32 %v9044, 0.0
    %v9147 = vmax.f32 %v9046, 0.0
    %v9148 = vmax.f32 %v9050, 0.0
    %v9149 = vmax.f32 %v9052, 0.0
    %v9150 = vmax.f32 %v9054, 0.0
    %v9151 = vmax.f32 %v9056, 0.0
    %v9152 = vmax.f32 %v9060, 0.0
    %v9153 = vmax.f32 %v9062, 0.0
    %v9154 = vmax.f32 %v9064, 0.0
    %v9155 = vmax.f32 %v9066, 0.0
    %v9156 = vmax.f32 %v9070, 0.0
    %v9157 = vmax.f32 %v9072, 0.0
    %v9158 = vmax.f32 %v9074, 0.0
    %v9159 = vmax.f32 %v9076, 0.0
    %v9160 = vmax.f32 %v9080, 0.0
    %v9161 = vmax.f32 %v9082, 0.0
    %v9162 = vmax.f32 %v9084, 0.0
    %v9163 = vmax.f32 %v9086, 0.0
    %v9164 = vmax.f32 %v9090, 0.0
    %v9165 = vmax.f32 %v9092, 0.0
    %v9166 = vmax.f32 %v9094, 0.0
    %v9167 = vmax.f32 %v9096, 0.0
    %v9168 = vmax.f32 %v9100, 0.0
    %v9169 = vmax.f32 %v9102, 0.0
    %v9170 = vmax.f32 %v9104, 0.0
    %v9171 = vmax.f32 %v9106, 0.0
    %v9172 = vpack.c.bf16 %v9110, %v9108
    %v9173 = vpack.c.bf16 %v9111, %v9109
    %v9174 = vpack.c.bf16 %v9114, %v9112
    %v9175 = vpack.c.bf16 %v9115, %v9113
    %v9176 = vpack.c.bf16 %v9118, %v9116
    %v9177 = vpack.c.bf16 %v9119, %v9117
    %v9178 = vpack.c.bf16 %v9122, %v9120
    %v9179 = vpack.c.bf16 %v9123, %v9121
    %v9180 = vpack.c.bf16 %v9126, %v9124
    %v9181 = vpack.c.bf16 %v9127, %v9125
    %v9182 = vpack.c.bf16 %v9130, %v9128
    %v9183 = vpack.c.bf16 %v9131, %v9129
    %v9184 = vpack.c.bf16 %v9134, %v9132
    %v9185 = vpack.c.bf16 %v9135, %v9133
    %v9186 = vpack.c.bf16 %v9138, %v9136
    %v9187 = vpack.c.bf16 %v9139, %v9137
    %v9188 = vpack.c.bf16 %v9142, %v9140
    %v9189 = vpack.c.bf16 %v9143, %v9141
    %v9190 = vpack.c.bf16 %v9146, %v9144
    %v9191 = vpack.c.bf16 %v9147, %v9145
    %v9192 = vpack.c.bf16 %v9150, %v9148
    %v9193 = vpack.c.bf16 %v9151, %v9149
    %v9194 = vpack.c.bf16 %v9154, %v9152
    %v9195 = vpack.c.bf16 %v9155, %v9153
    %v9196 = vpack.c.bf16 %v9158, %v9156
    %v9197 = vpack.c.bf16 %v9159, %v9157
    %v9198 = vpack.c.bf16 %v9162, %v9160
    %v9199 = vpack.c.bf16 %v9163, %v9161
    %v9200 = vpack.c.bf16 %v9166, %v9164
    %v9201 = vpack.c.bf16 %v9167, %v9165
    %v9202 = vpack.c.bf16 %v9170, %v9168
    %v9203 = vpack.c.bf16 %v9171, %v9169
    %v9204 = vld [vmem:[%s4] sm:$0xf]
    %v9205 = vld [vmem:[%s4 + $0x4] sm:$0xf]
    %v9206 = vld [vmem:[%s4 + $0x8] sm:$0xf]
    %v9207 = vld [vmem:[%s4 + $0xc] sm:$0xf]
    %v9208 = vld [vmem:[%s4 + $0x10] sm:$0xf]
    %v9209 = vld [vmem:[%s4 + $0x14] sm:$0xf]
    %v9210 = vld [vmem:[%s4 + $0x18] sm:$0xf]
    %v9211 = vld [vmem:[%s4 + $0x1c] sm:$0xf]
    %v9212 = vld [vmem:[%s4 + $0x20] sm:$0xf]
    %v9213 = vld [vmem:[%s4 + $0x24] sm:$0xf]
    %v9214 = vld [vmem:[%s4 + $0x28] sm:$0xf]
    %v9215 = vld [vmem:[%s4 + $0x2c] sm:$0xf]
    %v9216 = vld [vmem:[%s4 + $0x30] sm:$0xf]
    %v9217 = vld [vmem:[%s4 + $0x34] sm:$0xf]
    %v9218 = vld [vmem:[%s4 + $0x38] sm:$0xf]
    %v9219 = vld [vmem:[%s4 + $0x3c] sm:$0xf]
    %v9220 = vld [vmem:[%s4 + $0x40] sm:$0xf]
    %v9221 = vld [vmem:[%s4 + $0x44] sm:$0xf]
    %v9222 = vld [vmem:[%s4 + $0x48] sm:$0xf]
    %v9223 = vld [vmem:[%s4 + $0x4c] sm:$0xf]
    %v9224 = vld [vmem:[%s4 + $0x50] sm:$0xf]
    %v9225 = vld [vmem:[%s4 + $0x54] sm:$0xf]
    %v9226 = vld [vmem:[%s4 + $0x58] sm:$0xf]
    %v9227 = vld [vmem:[%s4 + $0x5c] sm:$0xf]
    %v9228 = vld [vmem:[%s4 + $0x60] sm:$0xf]
    %v9229 = vld [vmem:[%s4 + $0x64] sm:$0xf]
    %v9230 = vld [vmem:[%s4 + $0x68] sm:$0xf]
    %v9231 = vld [vmem:[%s4 + $0x6c] sm:$0xf]
    %v9232 = vld [vmem:[%s4 + $0x70] sm:$0xf]
    %v9233 = vld [vmem:[%s4 + $0x74] sm:$0xf]
    %v9234 = vld [vmem:[%s4 + $0x78] sm:$0xf]
    %v9235 = vld [vmem:[%s4 + $0x7c] sm:$0xf]
    %v9236 = vld [vmem:[%s6 + $0x6] sm:$0x1]
    %v9238 = vlaneseq
    %v9239 = vshrl.u32 %v9238, 7
    %v9240 = vsub.s32 0, %v9239
    %v9241 = vrot.slane %v9236, %v9240
    %v9275 = vunpack.c.l.b16 %v9204
    %v9276 = vunpack.c.l.b16 %v9205
    %v9277 = vunpack.c.l.b16 %v9206
    %v9278 = vunpack.c.l.b16 %v9207
    %v9279 = vunpack.c.l.b16 %v9208
    %v9280 = vunpack.c.l.b16 %v9209
    %v9281 = vunpack.c.l.b16 %v9210
    %v9282 = vunpack.c.l.b16 %v9211
    %v9283 = vunpack.c.l.b16 %v9212
    %v9284 = vunpack.c.l.b16 %v9213
    %v9285 = vunpack.c.l.b16 %v9214
    %v9286 = vunpack.c.l.b16 %v9215
    %v9287 = vunpack.c.l.b16 %v9216
    %v9288 = vunpack.c.l.b16 %v9217
    %v9289 = vunpack.c.l.b16 %v9218
    %v9290 = vunpack.c.l.b16 %v9219
    %v9291 = vunpack.c.l.b16 %v9220
    %v9292 = vunpack.c.l.b16 %v9221
    %v9293 = vunpack.c.l.b16 %v9222
    %v9294 = vunpack.c.l.b16 %v9223
    %v9295 = vunpack.c.l.b16 %v9224
    %v9296 = vunpack.c.l.b16 %v9225
    %v9297 = vunpack.c.l.b16 %v9226
    %v9298 = vunpack.c.l.b16 %v9227
    %v9299 = vunpack.c.l.b16 %v9228
    %v9300 = vunpack.c.l.b16 %v9229
    %v9301 = vunpack.c.l.b16 %v9230
    %v9302 = vunpack.c.l.b16 %v9231
    %v9303 = vunpack.c.l.b16 %v9232
    %v9304 = vunpack.c.l.b16 %v9233
    %v9305 = vunpack.c.l.b16 %v9234
    %v9306 = vunpack.c.l.b16 %v9235
    %v9307 = vpack.c.b16 %v9276, %v9275
    %v9308 = vpack.c.b16 %v9278, %v9277
    %v9309 = vpack.c.b16 %v9280, %v9279
    %v9310 = vpack.c.b16 %v9282, %v9281
    %v9311 = vpack.c.b16 %v9284, %v9283
    %v9312 = vpack.c.b16 %v9286, %v9285
    %v9313 = vpack.c.b16 %v9288, %v9287
    %v9314 = vpack.c.b16 %v9290, %v9289
    %v9315 = vpack.c.b16 %v9292, %v9291
    %v9316 = vpack.c.b16 %v9294, %v9293
    %v9317 = vpack.c.b16 %v9296, %v9295
    %v9318 = vpack.c.b16 %v9298, %v9297
    %v9319 = vpack.c.b16 %v9300, %v9299
    %v9320 = vpack.c.b16 %v9302, %v9301
    %v9321 = vpack.c.b16 %v9304, %v9303
    %v9322 = vpack.c.b16 %v9306, %v9305
    %9339 = vmatprep.subr.bf16.mxu0 0
    %9340 = vmatpush1.bf16.msra.mxu0 %v9314
    %9341 = vmatprep.subr.bf16.mxu0 0
    %9342 = vmatpush1.bf16.msra.mxu0 %v9313
    %9343 = vmatprep.subr.bf16.mxu0 0
    %9344 = vmatpush1.bf16.msra.mxu0 %v9312
    %9345 = vmatprep.subr.bf16.mxu0 0
    %9346 = vmatpush1.bf16.msra.mxu0 %v9311
    %9347 = vmatprep.subr.bf16.mxu0 0
    %9348 = vmatpush1.bf16.msra.mxu0 %v9310
    %9349 = vmatprep.subr.bf16.mxu0 0
    %9350 = vmatpush1.bf16.msra.mxu0 %v9309
    %9351 = vmatprep.subr.bf16.mxu0 0
    %9352 = vmatpush1.bf16.msra.mxu0 %v9308
    %9353 = vmatprep.subr.bf16.mxu0 0
    %9354 = vmatpush1.bf16.msra.mxu0 %v9307
    %9355 = vmatprep.subr.bf16.mxu0 0
    %9356 = vmatpush2.bf16.msra.mxu0 %v9322
    %9357 = vmatprep.subr.bf16.mxu0 0
    %9358 = vmatpush2.bf16.msra.mxu0 %v9321
    %9359 = vmatprep.subr.bf16.mxu0 0
    %9360 = vmatpush2.bf16.msra.mxu0 %v9320
    %9361 = vmatprep.subr.bf16.mxu0 0
    %9362 = vmatpush2.bf16.msra.mxu0 %v9319
    %9363 = vmatprep.subr.bf16.mxu0 0
    %9364 = vmatpush2.bf16.msra.mxu0 %v9318
    %9365 = vmatprep.subr.bf16.mxu0 0
    %9366 = vmatpush2.bf16.msra.mxu0 %v9317
    %9367 = vmatprep.subr.bf16.mxu0 0
    %9368 = vmatpush2.bf16.msra.mxu0 %v9316
    %9369 = vmatprep.subr.bf16.mxu0 0
    %9370 = vmatpush2.bf16.msra.mxu0 %v9315
    %9371 = vmatprep.mubr.bf16.mxu0 %v9173
    %9372 = vmatmul.mubr.bf16.gmra.mxu0 %v9172
    %v9373 = vpop.f32.mrf.mxu0
    %v9374 = vadd.f32 %v9241, %v9373
    %v9375 = vpop.f32.mrf.mxu0
    %v9376 = vpop.f32.mrf.mxu0
    %v9377 = vadd.f32 %v9241, %v9376
    %v9378 = vpop.f32.mrf.mxu0
    %9379 = vmatprep.mubr.bf16.mxu0 %v9175
    %9380 = vmatmul.mubr.bf16.gmra.mxu0 %v9174
    %v9381 = vpop.f32.mrf.mxu0
    %v9382 = vadd.f32 %v9241, %v9381
    %v9383 = vpop.f32.mrf.mxu0
    %v9384 = vpop.f32.mrf.mxu0
    %v9385 = vadd.f32 %v9241, %v9384
    %v9386 = vpop.f32.mrf.mxu0
    %9387 = vmatprep.mubr.bf16.mxu0 %v9177
    %9388 = vmatmul.mubr.bf16.gmra.mxu0 %v9176
    %v9389 = vpop.f32.mrf.mxu0
    %v9390 = vadd.f32 %v9241, %v9389
    %v9391 = vpop.f32.mrf.mxu0
    %v9392 = vpop.f32.mrf.mxu0
    %v9393 = vadd.f32 %v9241, %v9392
    %v9394 = vpop.f32.mrf.mxu0
    %9395 = vmatprep.mubr.bf16.mxu0 %v9179
    %9396 = vmatmul.mubr.bf16.gmra.mxu0 %v9178
    %v9397 = vpop.f32.mrf.mxu0
    %v9398 = vadd.f32 %v9241, %v9397
    %v9399 = vpop.f32.mrf.mxu0
    %v9400 = vpop.f32.mrf.mxu0
    %v9401 = vadd.f32 %v9241, %v9400
    %v9402 = vpop.f32.mrf.mxu0
    %9403 = vmatprep.mubr.bf16.mxu0 %v9181
    %9404 = vmatmul.mubr.bf16.gmra.mxu0 %v9180
    %v9405 = vpop.f32.mrf.mxu0
    %v9406 = vadd.f32 %v9241, %v9405
    %v9407 = vpop.f32.mrf.mxu0
    %v9408 = vpop.f32.mrf.mxu0
    %v9409 = vadd.f32 %v9241, %v9408
    %v9410 = vpop.f32.mrf.mxu0
    %9411 = vmatprep.mubr.bf16.mxu0 %v9183
    %9412 = vmatmul.mubr.bf16.gmra.mxu0 %v9182
    %v9413 = vpop.f32.mrf.mxu0
    %v9414 = vadd.f32 %v9241, %v9413
    %v9415 = vpop.f32.mrf.mxu0
    %v9416 = vpop.f32.mrf.mxu0
    %v9417 = vadd.f32 %v9241, %v9416
    %v9418 = vpop.f32.mrf.mxu0
    %9419 = vmatprep.mubr.bf16.mxu0 %v9185
    %9420 = vmatmul.mubr.bf16.gmra.mxu0 %v9184
    %v9421 = vpop.f32.mrf.mxu0
    %v9422 = vadd.f32 %v9241, %v9421
    %v9423 = vpop.f32.mrf.mxu0
    %v9424 = vpop.f32.mrf.mxu0
    %v9425 = vadd.f32 %v9241, %v9424
    %v9426 = vpop.f32.mrf.mxu0
    %9427 = vmatprep.mubr.bf16.mxu0 %v9187
    %9428 = vmatmul.mubr.bf16.gmra.mxu0 %v9186
    %v9429 = vpop.f32.mrf.mxu0
    %v9430 = vadd.f32 %v9241, %v9429
    %v9431 = vpop.f32.mrf.mxu0
    %v9432 = vpop.f32.mrf.mxu0
    %v9433 = vadd.f32 %v9241, %v9432
    %v9434 = vpop.f32.mrf.mxu0
    %9435 = vmatprep.mubr.bf16.mxu0 %v9189
    %9436 = vmatmul.mubr.bf16.gmra.mxu0 %v9188
    %v9437 = vpop.f32.mrf.mxu0
    %v9438 = vadd.f32 %v9241, %v9437
    %v9439 = vpop.f32.mrf.mxu0
    %v9440 = vpop.f32.mrf.mxu0
    %v9441 = vadd.f32 %v9241, %v9440
    %v9442 = vpop.f32.mrf.mxu0
    %9443 = vmatprep.mubr.bf16.mxu0 %v9191
    %9444 = vmatmul.mubr.bf16.gmra.mxu0 %v9190
    %v9445 = vpop.f32.mrf.mxu0
    %v9446 = vadd.f32 %v9241, %v9445
    %v9447 = vpop.f32.mrf.mxu0
    %v9448 = vpop.f32.mrf.mxu0
    %v9449 = vadd.f32 %v9241, %v9448
    %v9450 = vpop.f32.mrf.mxu0
    %9451 = vmatprep.mubr.bf16.mxu0 %v9193
    %9452 = vmatmul.mubr.bf16.gmra.mxu0 %v9192
    %v9453 = vpop.f32.mrf.mxu0
    %v9454 = vadd.f32 %v9241, %v9453
    %v9455 = vpop.f32.mrf.mxu0
    %v9456 = vpop.f32.mrf.mxu0
    %v9457 = vadd.f32 %v9241, %v9456
    %v9458 = vpop.f32.mrf.mxu0
    %9459 = vmatprep.mubr.bf16.mxu0 %v9195
    %9460 = vmatmul.mubr.bf16.gmra.mxu0 %v9194
    %v9461 = vpop.f32.mrf.mxu0
    %v9462 = vadd.f32 %v9241, %v9461
    %v9463 = vpop.f32.mrf.mxu0
    %v9464 = vpop.f32.mrf.mxu0
    %v9465 = vadd.f32 %v9241, %v9464
    %v9466 = vpop.f32.mrf.mxu0
    %9467 = vmatprep.mubr.bf16.mxu0 %v9197
    %9468 = vmatmul.mubr.bf16.gmra.mxu0 %v9196
    %v9469 = vpop.f32.mrf.mxu0
    %v9470 = vadd.f32 %v9241, %v9469
    %v9471 = vpop.f32.mrf.mxu0
    %v9472 = vpop.f32.mrf.mxu0
    %v9473 = vadd.f32 %v9241, %v9472
    %v9474 = vpop.f32.mrf.mxu0
    %9475 = vmatprep.mubr.bf16.mxu0 %v9199
    %9476 = vmatmul.mubr.bf16.gmra.mxu0 %v9198
    %v9477 = vpop.f32.mrf.mxu0
    %v9478 = vadd.f32 %v9241, %v9477
    %v9479 = vpop.f32.mrf.mxu0
    %v9480 = vpop.f32.mrf.mxu0
    %v9481 = vadd.f32 %v9241, %v9480
    %v9482 = vpop.f32.mrf.mxu0
    %9483 = vmatprep.mubr.bf16.mxu0 %v9201
    %9484 = vmatmul.mubr.bf16.gmra.mxu0 %v9200
    %v9485 = vpop.f32.mrf.mxu0
    %v9486 = vadd.f32 %v9241, %v9485
    %v9487 = vpop.f32.mrf.mxu0
    %v9488 = vpop.f32.mrf.mxu0
    %v9489 = vadd.f32 %v9241, %v9488
    %v9490 = vpop.f32.mrf.mxu0
    %9491 = vmatprep.mubr.bf16.mxu0 %v9203
    %9492 = vmatmul.mubr.bf16.gmra.mxu0 %v9202
    %v9493 = vpop.f32.mrf.mxu0
    %v9494 = vadd.f32 %v9241, %v9493
    %v9495 = vpop.f32.mrf.mxu0
    %v9496 = vpop.f32.mrf.mxu0
    %v9497 = vadd.f32 %v9241, %v9496
    %v9498 = vpop.f32.mrf.mxu0
    %9499 = vdwg.mxu0
    %v9500 = vmax.f32 %v9374, 0.0
    %v9501 = vmax.f32 %v9377, 0.0
    %v9502 = vmax.f32 %v9382, 0.0
    %v9503 = vmax.f32 %v9385, 0.0
    %v9504 = vmax.f32 %v9390, 0.0
    %v9505 = vmax.f32 %v9393, 0.0
    %v9506 = vmax.f32 %v9398, 0.0
    %v9507 = vmax.f32 %v9401, 0.0
    %v9508 = vmax.f32 %v9406, 0.0
    %v9509 = vmax.f32 %v9409, 0.0
    %v9510 = vmax.f32 %v9414, 0.0
    %v9511 = vmax.f32 %v9417, 0.0
    %v9512 = vmax.f32 %v9422, 0.0
    %v9513 = vmax.f32 %v9425, 0.0
    %v9514 = vmax.f32 %v9430, 0.0
    %v9515 = vmax.f32 %v9433, 0.0
    %v9516 = vmax.f32 %v9438, 0.0
    %v9517 = vmax.f32 %v9441, 0.0
    %v9518 = vmax.f32 %v9446, 0.0
    %v9519 = vmax.f32 %v9449, 0.0
    %v9520 = vmax.f32 %v9454, 0.0
    %v9521 = vmax.f32 %v9457, 0.0
    %v9522 = vmax.f32 %v9462, 0.0
    %v9523 = vmax.f32 %v9465, 0.0
    %v9524 = vmax.f32 %v9470, 0.0
    %v9525 = vmax.f32 %v9473, 0.0
    %v9526 = vmax.f32 %v9478, 0.0
    %v9527 = vmax.f32 %v9481, 0.0
    %v9528 = vmax.f32 %v9486, 0.0
    %v9529 = vmax.f32 %v9489, 0.0
    %v9530 = vmax.f32 %v9494, 0.0
    %v9531 = vmax.f32 %v9497, 0.0
    %v9532 = vpack.c.bf16 %v9501, %v9500
    %v9533 = vpack.c.bf16 %v9503, %v9502
    %v9534 = vpack.c.bf16 %v9505, %v9504
    %v9535 = vpack.c.bf16 %v9507, %v9506
    %v9536 = vpack.c.bf16 %v9509, %v9508
    %v9537 = vpack.c.bf16 %v9511, %v9510
    %v9538 = vpack.c.bf16 %v9513, %v9512
    %v9539 = vpack.c.bf16 %v9515, %v9514
    %v9540 = vpack.c.bf16 %v9517, %v9516
    %v9541 = vpack.c.bf16 %v9519, %v9518
    %v9542 = vpack.c.bf16 %v9521, %v9520
    %v9543 = vpack.c.bf16 %v9523, %v9522
    %v9544 = vpack.c.bf16 %v9525, %v9524
    %v9545 = vpack.c.bf16 %v9527, %v9526
    %v9546 = vpack.c.bf16 %v9529, %v9528
    %v9547 = vpack.c.bf16 %v9531, %v9530
    %v9548 = vld [vmem:[%s5] sm:$0x1]
    %v9549 = vld [vmem:[%s6 + $0x7] sm:$0x1]
    %9551 = vset.pattern.permute.xlu0 0
    %9552 = vperm.xlu0 %9551, %v9549
    %v9553 = vpop.permute.xlu0 %9552
    %v9555 = vlaneseq
    %v9556 = vshrl.u32 %v9555, 7
    %v9557 = vsub.s32 0, %v9556
    %v9558 = vrot.slane %v9553, %v9557
    %9559 = vmatprep.subr.bf16.mxu0 0
    %9560 = vmatpush1.bf16.xpose.msra.mxu0 %v9539
    %9561 = vmatprep.subr.bf16.mxu0 0
    %9562 = vmatpush1.bf16.xpose.msra.mxu0 %v9538
    %9563 = vmatprep.subr.bf16.mxu0 0
    %9564 = vmatpush1.bf16.xpose.msra.mxu0 %v9537
    %9565 = vmatprep.subr.bf16.mxu0 0
    %9566 = vmatpush1.bf16.xpose.msra.mxu0 %v9536
    %9567 = vmatprep.subr.bf16.mxu0 0
    %9568 = vmatpush1.bf16.xpose.msra.mxu0 %v9535
    %9569 = vmatprep.subr.bf16.mxu0 0
    %9570 = vmatpush1.bf16.xpose.msra.mxu0 %v9534
    %9571 = vmatprep.subr.bf16.mxu0 0
    %9572 = vmatpush1.bf16.xpose.msra.mxu0 %v9533
    %9573 = vmatprep.subr.bf16.mxu0 0
    %9574 = vmatpush1.bf16.xpose.msra.mxu0 %v9532
    %9575 = vmatprep.subr.bf16.mxu0 0
    %9576 = vmatpush2.bf16.xpose.msra.mxu0 %v9547
    %9577 = vmatprep.subr.bf16.mxu0 0
    %9578 = vmatpush2.bf16.xpose.msra.mxu0 %v9546
    %9579 = vmatprep.subr.bf16.mxu0 0
    %9580 = vmatpush2.bf16.xpose.msra.mxu0 %v9545
    %9581 = vmatprep.subr.bf16.mxu0 0
    %9582 = vmatpush2.bf16.xpose.msra.mxu0 %v9544
    %9583 = vmatprep.subr.bf16.mxu0 0
    %9584 = vmatpush2.bf16.xpose.msra.mxu0 %v9543
    %9585 = vmatprep.subr.bf16.mxu0 0
    %9586 = vmatpush2.bf16.xpose.msra.mxu0 %v9542
    %9587 = vmatprep.subr.bf16.mxu0 0
    %9588 = vmatpush2.bf16.xpose.msra.mxu0 %v9541
    %9589 = vmatprep.subr.bf16.mxu0 0
    %9590 = vmatpush2.bf16.xpose.msra.mxu0 %v9540
    %9591 = vmatprep.mubr.bf16.mxu0 0
    %9592 = vmatmul.mubr.bf16.gmra.mxu0 %v9548
    %v9593 = vpop.f32.mrf.mxu0
    %v9594 = vadd.f32 %v9558, %v9593
    %v9595 = vpop.f32.mrf.mxu0
    %v9596 = vadd.f32 %v9558, %v9595
    %v9597 = vpop.f32.mrf.mxu0
    %v9598 = vpop.f32.mrf.mxu0
    %9599 = vdwg.mxu0
    %v9602 = vcombine.low %v9594, %v9596
    %v9604 = vunpack.c.l.s4 1966171168
    %v9605 = vunpack.c.0.s8 %v9604
    %v9606 = vlaneseq
    %v9607 = vshrl.u32 %v9606, 7
    %v9608 = vsub.s32 %v9605, %v9607
    %v9609 = vrot.slane %v9602, %v9608
    %v9611 = vunpack.c.l.s4 1966171168
    %v9612 = vunpack.c.0.s8 %v9611
    %v9613 = vlaneseq
    %v9614 = vshrl.u32 %v9613, 7
    %v9615 = vsub.s32 %v9612, %v9614
    %v9616 = vrot.slane %v9609, %v9615
    %v9618 = vlaneseq
    %vm9619 = vcmp.ge.s32.totalorder %v9618, 0
    %vm9620 = vcmp.lt.s32.totalorder %v9618, 256
    %vm9621 = vmand %vm9619, %vm9620
    %9622 = vst.msk [vmem:[%s7] sm:$0x3] %vm9621, %v9616
    // Predicated region
    $region38: #{feedforward_nn.1} parent=1 // pred_check
      _
    $region39: #{feedforward_nn.1} parent=1 // pred_check_branch
      %9624 = sbr.rel (0) target = $region41
    $region40: #{feedforward_nn.1} parent=1 // pred_region
      _
    $region41: #{feedforward_nn.1} parent=1 // pred_fallthru
      _
    // Predicated region
    $region42: #{feedforward_nn.1} parent=1 // pred_check
      _
    $region43: #{feedforward_nn.1} parent=1 // pred_check_branch
      %9626 = sbr.rel (0) target = $region45
    $region44: #{feedforward_nn.1} parent=1 // pred_region
      _
    $region45: #{feedforward_nn.1} parent=1 // pred_fallthru
      _
    %9627 = vsyncpa [#allocation4], 1

</llo_original>
